<compile_context>
chip_gen: v6e
topology: v6e:2x2x1
jax: 0.10.0
libtpu: 0.0.40
codegen_flags: <defaults>
</compile_context>

<pallas_src>
import functools

import jax
import jax.numpy as jnp
from jax import lax
from jax.experimental import pallas as pl
from jax.experimental.pallas import tpu as pltpu


def _round_up(x, m):
    return (x + m - 1) // m * m


def _pick_row_tile(rows, max_tile=1024):
    """Largest row tile <= max_tile; prefer one that divides `rows` exactly."""
    if rows <= max_tile:
        return rows
    start = max_tile - (max_tile % 8)
    for t in range(start, 7, -8):
        if rows % t == 0:
            return t
    return start  # fallback: pad + slice


def _pick_strip(h, max_rows):
    """Largest strip height <= max_rows that divides H."""
    t = min(max_rows, h)
    while h % t:
        t -= 1
    return t


# ----------------------------------------------------------------------------
# 1x1 conv (row-strip tiled matmul over the channel axis), bf16 in / f32 acc
# ----------------------------------------------------------------------------
def _pointwise_kernel(x_ref, w_ref, b_ref, o_ref):
    o_ref[...] = (
        jnp.dot(x_ref[...], w_ref[...], preferred_element_type=jnp.float32)
        + b_ref[...]
    ).astype(o_ref.dtype)


def pointwise_conv(x, w, b, out_dtype=jnp.float32, block_rows=1024):
    """1x1 conv: x (N,H,W,Cin), w (Cin,Cout), b (Cout,) -> (N,H,W,Cout)."""
    N, H, W, Cin = x.shape
    Cout = w.shape[1]
    rows = N * H * W
    tr = _pick_row_tile(rows, block_rows)
    rows_p = _round_up(rows, tr)
    xf = x.astype(jnp.bfloat16).reshape(rows, Cin)
    if rows_p != rows:
        xf = jnp.pad(xf, ((0, rows_p - rows), (0, 0)))
    out = pl.pallas_call(
        _pointwise_kernel,
        out_shape=jax.ShapeDtypeStruct((rows_p, Cout), out_dtype),
        grid=(rows_p // tr,),
        in_specs=[
            pl.BlockSpec((tr, Cin), lambda i: (i, 0)),
            pl.BlockSpec((Cin, Cout), lambda i: (0, 0)),
            pl.BlockSpec((1, Cout), lambda i: (0, 0)),
        ],
        out_specs=pl.BlockSpec((tr, Cout), lambda i: (i, 0)),
        compiler_params=pltpu.CompilerParams(
            dimension_semantics=("parallel",)),
    )(xf, w.astype(jnp.bfloat16), b.reshape(1, Cout))
    if rows_p != rows:
        out = out[:rows]
    return out.reshape(N, H, W, Cout)


# ----------------------------------------------------------------------------
# 3x3 conv + BN(eval) + ReLU on (feature + upsampled), row-strip tiled.
# Strip bodies of both inputs are BlockSpec-pipelined; the two halo rows are
# fetched with tiny manual DMAs from raw HBM refs (zeros at image borders).
# ----------------------------------------------------------------------------
def _conv3x3_bn_relu_kernel(fb_ref, ub_ref, f_hbm, u_hbm, w_ref, scale_ref,
                            shift_ref, o_ref, halo_ref, sem_ref):
    th, W, C = o_ref.shape
    n = pl.program_id(0)
    h = pl.program_id(1)
    nh = pl.num_programs(1)

    def load_halo(row, slot):
        cf = pltpu.make_async_copy(f_hbm.at[n, row], halo_ref.at[slot, 0],
                                   sem_ref.at[slot, 0])
        cu = pltpu.make_async_copy(u_hbm.at[n, row], halo_ref.at[slot, 1],
                                   sem_ref.at[slot, 1])
        cf.start(); cu.start(); cf.wait(); cu.wait()

    def zero_halo(slot):
        z = jnp.zeros((W, C), jnp.bfloat16)
        halo_ref[slot, 0] = z
        halo_ref[slot, 1] = z

    # Top halo row (slot 0) and bottom halo row (slot 1).
    @pl.when(h > 0)
    def _():
        load_halo(h * th - 1, 0)

    @pl.when(h == 0)
    def _():
        zero_halo(0)

    @pl.when(h < nh - 1)
    def _():
        load_halo((h + 1) * th, 1)

    @pl.when(h == nh - 1)
    def _():
        zero_halo(1)

    # Fused add + padded-strip assembly (VMEM-local, never hits HBM).
    body = fb_ref[...] + ub_ref[...]                        # (th,   W, C) bf16
    top = (halo_ref[0, 0] + halo_ref[0, 1])[None, :, :]     # (1,    W, C)
    bot = (halo_ref[1, 0] + halo_ref[1, 1])[None, :, :]
    x = jnp.concatenate([top, body, bot], axis=0)           # (th+2, W, C)
    zcol = jnp.zeros((th + 2, 1, C), x.dtype)
    xw = jnp.concatenate([zcol, x, zcol], axis=1)           # (th+2, W+2, C)
    # Pack the three width shifts on the channel axis: each ky becomes a single
    # deep (K = 3*C) MXU contraction.
    xcat = jnp.concatenate(
        [xw[:, 0:W, :], xw[:, 1:W + 1, :], xw[:, 2:W + 2, :]], axis=-1)

    acc = lax.dot_general(xcat[0:th], w_ref[0],
                          dimension_numbers=(((2,), (0,)), ((), ())),
                          preferred_element_type=jnp.float32)
    for ky in (1, 2):
        acc = acc + lax.dot_general(xcat[ky:ky + th], w_ref[ky],
                                    dimension_numbers=(((2,), (0,)), ((), ())),
                                    preferred_element_type=jnp.float32)

    # BN (eval) + conv bias folded into scale/shift (f32 epilogue), then ReLU.
    o_ref[...] = jnp.maximum(
        acc * scale_ref[...] + shift_ref[...], 0.0).astype(o_ref.dtype)


def conv3x3_bn_relu(feat, up, w_packed, scale, shift,
                    out_dtype=jnp.bfloat16, max_strip_rows=8):
    """relu(BN(conv3x3(feat + up))).  feat/up: (N,H,W,C), w: (3, 3*C, C).

    max_strip_rows=8 keeps the demo multi-strip (exercises the halo DMA path);
    raise to 32+ at production widths to amortize the ~0.35us/step overhead.
    """
    N, H, W, C = feat.shape
    feat = feat.astype(jnp.bfloat16)
    up = up.astype(jnp.bfloat16)
    th = _pick_strip(H, max_strip_rows)
    nh = H // th

    # Strip working set (double-buffered bodies + out, weights, xcat, acc, halo)
    est = (2 * 2 * th * W * C * 2 + 2 * th * W * C * 2 + 2 * 9 * C * C * 2
           + (th + 2) * (W + 2) * 3 * C * 2 + th * W * C * 4 + 4 * W * C * 2)
    vmem_limit = int(min(max(2 * est, 32 * 1024 * 1024), 64 * 1024 * 1024))

    return pl.pallas_call(
        _conv3x3_bn_relu_kernel,
        out_shape=jax.ShapeDtypeStruct((N, H, W, C), out_dtype),
        grid=(N, nh),
        in_specs=[
            pl.BlockSpec((None, th, W, C), lambda n, h: (n, h, 0, 0)),   # feat body
            pl.BlockSpec((None, th, W, C), lambda n, h: (n, h, 0, 0)),   # up body
            pl.BlockSpec(memory_space=pl.ANY),                           # feat (halo rows)
            pl.BlockSpec(memory_space=pl.ANY),                           # up   (halo rows)
            pl.BlockSpec((3, 3 * C, C), lambda n, h: (0, 0, 0)),
            pl.BlockSpec((1, 1, C), lambda n, h: (0, 0, 0)),
            pl.BlockSpec((1, 1, C), lambda n, h: (0, 0, 0)),
        ],
        out_specs=pl.BlockSpec((None, th, W, C), lambda n, h: (n, h, 0, 0)),
        scratch_shapes=[
            pltpu.VMEM((2, 2, W, C), jnp.bfloat16),   # [top/bot, feat/up, W, C]
            pltpu.SemaphoreType.DMA((2, 2)),
        ],
        compiler_params=pltpu.CompilerParams(
            dimension_semantics=("parallel", "parallel"),
            vmem_limit_bytes=vmem_limit),
    )(feat, up, feat, up, w_packed,
      scale.reshape(1, 1, C), shift.reshape(1, 1, C))


# ----------------------------------------------------------------------------
# Fuse 1x1 conv over the implicit concat [c3, up2(c4), up4(c5)]
# (concat never materialized: three accumulated matmuls in one kernel)
# ----------------------------------------------------------------------------
def _fuse_kernel(x1_ref, x2_ref, x3_ref, w1_ref, w2_ref, w3_ref, b_ref, o_ref):
    acc = jnp.dot(x1_ref[...], w1_ref[...], preferred_element_type=jnp.float32)
    acc = acc + jnp.dot(x2_ref[...], w2_ref[...],
                        preferred_element_type=jnp.float32)
    acc = acc + jnp.dot(x3_ref[...], w3_ref[...],
                        preferred_element_type=jnp.float32)
    o_ref[...] = (acc + b_ref[...]).astype(o_ref.dtype)


def fuse_conv(x1, x2, x3, w1, w2, w3, b, block_rows=1024):
    N, H, W, C = x1.shape
    Cout = w1.shape[1]
    rows = N * H * W
    tr = _pick_row_tile(rows, block_rows)
    rows_p = _round_up(rows, tr)

    def prep(x):
        xf = x.astype(jnp.bfloat16).reshape(rows, C)
        if rows_p != rows:
            xf = jnp.pad(xf, ((0, rows_p - rows), (0, 0)))
        return xf

    out = pl.pallas_call(
        _fuse_kernel,
        out_shape=jax.ShapeDtypeStruct((rows_p, Cout), jnp.float32),
        grid=(rows_p // tr,),
        in_specs=[pl.BlockSpec((tr, C), lambda i: (i, 0))] * 3
                + [pl.BlockSpec((C, Cout), lambda i: (0, 0))] * 3
                + [pl.BlockSpec((1, Cout), lambda i: (0, 0))],
        out_specs=pl.BlockSpec((tr, Cout), lambda i: (i, 0)),
        compiler_params=pltpu.CompilerParams(
            dimension_semantics=("parallel",)),
    )(prep(x1), prep(x2), prep(x3), w1, w2, w3, b.reshape(1, Cout))
    if rows_p != rows:
        out = out[:rows]
    return out.reshape(N, H, W, Cout)


# ----------------------------------------------------------------------------
# Bilinear upsample matching PyTorch F.interpolate(align_corners=False),
# gather-free: fixed per-phase lerps of clamped-shifted slices + interleave.
# ----------------------------------------------------------------------------
def _upsample_axis(x, axis, scale):
    L = x.shape[axis]
    prev = jnp.concatenate(            # x[i-1] with edge clamp
        [lax.slice_in_dim(x, 0, 1, axis=axis),
         lax.slice_in_dim(x, 0, L - 1, axis=axis)], axis=axis)
    nxt = jnp.concatenate(             # x[i+1] with edge clamp
        [lax.slice_in_dim(x, 1, L, axis=axis),
         lax.slice_in_dim(x, L - 1, L, axis=axis)], axis=axis)
    phases = []
    for p in range(scale):
        d = (p + 0.5) / scale - 0.5
        if d < 0:
            phases.append((-d) * prev + (1.0 + d) * x)
        else:
            phases.append((1.0 - d) * x + d * nxt)
    y = jnp.stack(phases, axis=axis + 1)
    shape = list(x.shape)
    shape[axis] = L * scale
    return y.reshape(shape)


def bilinear_upsample(x, scale):
    y = _upsample_axis(x, 1, scale)    # H
    y = _upsample_axis(y, 2, scale)    # W
    return y


# ----------------------------------------------------------------------------
# AggregationBlock forward
# ----------------------------------------------------------------------------
def aggregation_block(params, c3, c4, c5):
    # squeeze (1x1), bf16 outputs to halve inter-kernel HBM traffic.
    c3 = pointwise_conv(c3, params["sq1_w"], params["sq1_b"],
                        out_dtype=jnp.bfloat16)
    c4 = pointwise_conv(c4, params["sq2_w"], params["sq2_b"],
                        out_dtype=jnp.bfloat16)
    c5 = pointwise_conv(c5, params["sq3_w"], params["sq3_b"],
                        out_dtype=jnp.bfloat16)

    # node1..3: relu(BN(conv3x3(a + up2(b)))) -- the add is done inside the
    # conv kernel (no x_sum / padded HBM intermediates).
    c3 = conv3x3_bn_relu(c3, bilinear_upsample(c4, 2),
                         params["node1_w"], params["node1_scale"],
                         params["node1_shift"])
    c4 = conv3x3_bn_relu(c4, bilinear_upsample(c5, 2),
                         params["node2_w"], params["node2_scale"],
                         params["node2_shift"])
    c3 = conv3x3_bn_relu(c3, bilinear_upsample(c4, 2),
                         params["node3_w"], params["node3_scale"],
                         params["node3_shift"])

    # fusing 1x1 over concat([c3, up2(c4), up4(c5)]) == sum of three matmuls.
    return fuse_conv(c3,
                     bilinear_upsample(c4, 2),
                     bilinear_upsample(c5, 4),
                     params["fuse_w1"], params["fuse_w2"], params["fuse_w3"],
                     params["fuse_b"])


# ----------------------------------------------------------------------------
# Deterministic parameter init (shapes match the PyTorch module's __init__)
# ----------------------------------------------------------------------------
def init_params(key, n_ch1, n_ch2, n_ch3, det=128, eps=1e-5):
    keys = iter(jax.random.split(key, 32))

    def nrm(shape, s=0.05):
        return (s * jax.random.normal(next(keys), shape)).astype(jnp.float32)

    p = {}
    # squeeze{1,2,3}: 1x1 convs (PyTorch weight (det, Cin, 1, 1) -> (Cin, det))
    p["sq1_w"], p["sq1_b"] = nrm((n_ch1, det)).astype(jnp.bfloat16), nrm((det,))
    p["sq2_w"], p["sq2_b"] = nrm((n_ch2, det)).astype(jnp.bfloat16), nrm((det,))
    p["sq3_w"], p["sq3_b"] = nrm((n_ch3, det)).astype(jnp.bfloat16), nrm((det,))

    # node{1,2,3}: 3x3 conv + BatchNorm2d (eval) + ReLU, BN folded to scale/shift
    for name in ("node1", "node2", "node3"):
        w = nrm((3, 3, det, det))               # (kh, kw, Cin, Cout)
        conv_b = nrm((det,))
        gamma = 1.0 + nrm((det,), 0.1)
        beta = nrm((det,), 0.1)
        run_mean = nrm((det,), 0.1)
        run_var = 1.0 + 0.1 * jnp.abs(jax.random.normal(next(keys), (det,)))
        scale = gamma / jnp.sqrt(run_var + eps)
        shift = beta + (conv_b - run_mean) * scale
        # Pack (kh, kw, Cin, Cout) -> (kh, kw*Cin, Cout): one K=3*Cin MXU
        # contraction per ky.  Weight stored bf16; accumulation stays f32.
        p[f"{name}_w"] = w.reshape(3, 3 * det, det).astype(jnp.bfloat16)
        p[f"{name}_scale"] = scale.astype(jnp.float32)
        p[f"{name}_shift"] = shift.astype(jnp.float32)

    # fusing: 1x1 conv 3*det -> det, split into the three concat branches.
    fuse_w = nrm((3 * det, det))
    p["fuse_w1"] = fuse_w[:det].astype(jnp.bfloat16)
    p["fuse_w2"] = fuse_w[det:2 * det].astype(jnp.bfloat16)
    p["fuse_w3"] = fuse_w[2 * det:].astype(jnp.bfloat16)
    p["fuse_b"] = nrm((det,))
    return p


# ----------------------------------------------------------------------------
# Demo
# ----------------------------------------------------------------------------
if __name__ == "__main__":
    key = jax.random.PRNGKey(0)
    k_in, k_p = jax.random.split(key)

    N = 2
    det_features = 128
    C1, C2, C3 = 8, 16, 24            # n_channels1/2/3
    H3, W3 = 16, 16                   # c3 spatial; c4 = /2, c5 = /4

    kc3, kc4, kc5 = jax.random.split(k_in, 3)
    c3 = jax.random.normal(kc3, (N, H3, W3, C1), jnp.float32)
    c4 = jax.random.normal(kc4, (N, H3 // 2, W3 // 2, C2), jnp.float32)
    c5 = jax.random.normal(kc5, (N, H3 // 4, W3 // 4, C3), jnp.float32)

    params = init_params(k_p, C1, C2, C3, det=det_features)

    fwd = jax.jit(functools.partial(aggregation_block, params))
    out = jax.block_until_ready(fwd(c3, c4, c5))

    assert out.shape == (N, H3, W3, det_features), out.shape
    assert bool(jnp.all(jnp.isfinite(out)))
    print("KERNEL_OK")
</pallas_src>

<mosaic_0001>
module attributes {stable_mosaic.version = 11 : i64} {
  func.func @_pointwise_kernel(%arg0: i32, %arg1: memref<32x24xbf16, #tpu.memory_space<vmem>>, %arg2: memref<24x128xbf16, #tpu.memory_space<vmem>>, %arg3: memref<1x128xf32, #tpu.memory_space<vmem>>, %arg4: memref<32x128xbf16, #tpu.memory_space<vmem>>) attributes {dimension_semantics = [#tpu.dimension_semantics<parallel>], iteration_bounds = array<i64: 1>, scalar_prefetch = 0 : i64, scratch_operands = 0 : i64, tpu.core_type = #tpu.core_type<tc>, window_params = [{transform_indices = @transform_0, window_bounds = array<i64: 32, 24>}, {pipeline_mode = #tpu.pipeline_mode<synchronous>, transform_indices = @transform_1, window_bounds = array<i64: 24, 128>}, {pipeline_mode = #tpu.pipeline_mode<synchronous>, transform_indices = @transform_2, window_bounds = array<i64: 1, 128>}, {transform_indices = @transform_3, window_bounds = array<i64: 32, 128>}]} {
    %c0 = arith.constant 0 : index
    %c0_0 = arith.constant 0 : index
    %0 = vector.load %arg1[%c0, %c0_0] : memref<32x24xbf16, #tpu.memory_space<vmem>>, vector<32x24xbf16>
    %c0_1 = arith.constant 0 : index
    %c0_2 = arith.constant 0 : index
    %1 = vector.load %arg2[%c0_1, %c0_2] : memref<24x128xbf16, #tpu.memory_space<vmem>>, vector<24x128xbf16>
    %cst = arith.constant dense<0.000000e+00> : vector<32x128xf32>
    %2 = tpu.matmul %0, %1, %cst {dimension_numbers = #tpu.dot_dimension_numbers<[1], [0], [0], [1], [0, 0, 1, 1], [], []>} : vector<32x24xbf16>, vector<24x128xbf16>, vector<32x128xf32> -> vector<32x128xf32>
    %c0_3 = arith.constant 0 : index
    %c0_4 = arith.constant 0 : index
    %3 = vector.load %arg3[%c0_3, %c0_4] : memref<1x128xf32, #tpu.memory_space<vmem>>, vector<1x128xf32>
    %4 = vector.broadcast %3 : vector<1x128xf32> to vector<32x128xf32>
    %5 = arith.addf %2, %4 : vector<32x128xf32>
    %6 = arith.truncf %5 : vector<32x128xf32> to vector<32x128xbf16>
    %c0_5 = arith.constant 0 : index
    %c0_6 = arith.constant 0 : index
    %7 = vector.load %arg4[%c0_5, %c0_6] : memref<32x128xbf16, #tpu.memory_space<vmem>>, vector<32x128xbf16>
    tpu.vector_store %arg4[%c0_5, %c0_6], %6 {strides = array<i32>} : memref<32x128xbf16, #tpu.memory_space<vmem>>, vector<32x128xbf16>,
    return
  }
  func.func @transform_0(%arg0: i32) -> (i32, i32) {
    %c0_i32 = arith.constant 0 : i32
    %c0_i32_0 = arith.constant 0 : i32
    return %arg0, %c0_i32 : i32, i32
  }
  func.func @transform_1(%arg0: i32) -> (i32, i32) {
    %c0_i32 = arith.constant 0 : i32
    %c0_i32_0 = arith.constant 0 : i32
    %c0_i32_1 = arith.constant 0 : i32
    return %c0_i32, %c0_i32_0 : i32, i32
  }
  func.func @transform_2(%arg0: i32) -> (i32, i32) {
    %c0_i32 = arith.constant 0 : i32
    %c0_i32_0 = arith.constant 0 : i32
    %c0_i32_1 = arith.constant 0 : i32
    return %c0_i32, %c0_i32_0 : i32, i32
  }
  func.func @transform_3(%arg0: i32) -> (i32, i32) {
    %c0_i32 = arith.constant 0 : i32
    %c0_i32_0 = arith.constant 0 : i32
    return %arg0, %c0_i32 : i32, i32
  }
}

module attributes {stable_mosaic.version = 11 : i64} {
  func.func @_conv3x3_bn_relu_kernel(%arg0: i32, %arg1: i32, %arg2: memref<1x8x8x128xbf16, #tpu.memory_space<vmem>>, %arg3: memref<1x8x8x128xbf16, #tpu.memory_space<vmem>>, %arg4: memref<2x8x8x128xbf16, #tpu.memory_space<any>>, %arg5: memref<2x8x8x128xbf16, #tpu.memory_space<any>>, %arg6: memref<3x384x128xbf16, #tpu.memory_space<vmem>>, %arg7: memref<1x1x128xf32, #tpu.memory_space<vmem>>, %arg8: memref<1x1x128xf32, #tpu.memory_space<vmem>>, %arg9: memref<1x8x8x128xbf16, #tpu.memory_space<vmem>>, %arg10: memref<2x2x8x128xbf16, #tpu.memory_space<vmem>>, %arg11: memref<2x2x!tpu.dma_semaphore, #tpu.memory_space<semaphore_mem>>) attributes {dimension_semantics = [#tpu.dimension_semantics<parallel>, #tpu.dimension_semantics<parallel>], iteration_bounds = array<i64: 2, 1>, scalar_prefetch = 0 : i64, scratch_operands = 2 : i64, tpu.core_type = #tpu.core_type<tc>, window_params = [{transform_indices = @transform_0, window_bounds = array<i64: 1, 8, 8, 128>}, {transform_indices = @transform_1, window_bounds = array<i64: 1, 8, 8, 128>}, {}, {}, {pipeline_mode = #tpu.pipeline_mode<synchronous>, transform_indices = @transform_4, window_bounds = array<i64: 3, 384, 128>}, {pipeline_mode = #tpu.pipeline_mode<synchronous>, transform_indices = @transform_5, window_bounds = array<i64: 1, 1, 128>}, {pipeline_mode = #tpu.pipeline_mode<synchronous>, transform_indices = @transform_6, window_bounds = array<i64: 1, 1, 128>}, {transform_indices = @transform_7, window_bounds = array<i64: 1, 8, 8, 128>}]} {
    %c0_i32 = arith.constant 0 : i32
    %0 = arith.cmpi sgt, %arg1, %c0_i32 : i32
    %1 = arith.extui %0 : i1 to i32
    %c0_i32_0 = arith.constant 0 : i32
    %2 = arith.cmpi ne, %1, %c0_i32_0 : i32
    scf.if %2 {
      %c8_i32 = arith.constant 8 : i32
      %62 = arith.muli %arg1, %c8_i32 : i32
      %c1_i32 = arith.constant 1 : i32
      %63 = arith.subi %62, %c1_i32 : i32
      %c0_i32_51 = arith.constant 0 : i32
      %c0_i32_52 = arith.constant 0 : i32
      %c0_i32_53 = arith.constant 0 : i32
      %c0_i32_54 = arith.constant 0 : i32
      %c0_i32_55 = arith.constant 0 : i32
      %c0_i32_56 = arith.constant 0 : i32
      %64 = tpu.memref_slice %arg4[%arg0, %63, %c0_i32_55, %c0_i32_56] : memref<2x8x8x128xbf16, #tpu.memory_space<any>> -> memref<1x1x8x128xbf16, #tpu.memory_space<any>>
      %65 = tpu.memref_squeeze %64 : memref<1x1x8x128xbf16, #tpu.memory_space<any>> -> memref<8x128xbf16, #tpu.memory_space<any>>
      %c0_i32_57 = arith.constant 0 : i32
      %c0_i32_58 = arith.constant 0 : i32
      %66 = tpu.memref_slice %arg10[%c0_i32_51, %c0_i32_52, %c0_i32_57, %c0_i32_58] : memref<2x2x8x128xbf16, #tpu.memory_space<vmem>> -> memref<1x1x8x128xbf16, #tpu.memory_space<vmem>>
      %67 = tpu.memref_squeeze %66 : memref<1x1x8x128xbf16, #tpu.memory_space<vmem>> -> memref<8x128xbf16, #tpu.memory_space<vmem>>
      %68 = tpu.memref_slice %arg11[%c0_i32_53, %c0_i32_54] : memref<2x2x!tpu.dma_semaphore, #tpu.memory_space<semaphore_mem>> -> memref<1x1x!tpu.dma_semaphore, #tpu.memory_space<semaphore_mem>>
      %69 = tpu.memref_squeeze %68 : memref<1x1x!tpu.dma_semaphore, #tpu.memory_space<semaphore_mem>> -> memref<!tpu.dma_semaphore, #tpu.memory_space<semaphore_mem>>
      tpu.enqueue_dma source(%65 : memref<8x128xbf16, #tpu.memory_space<any>>) target(%67 : memref<8x128xbf16, #tpu.memory_space<vmem>>) target_semaphore(%69 : memref<!tpu.dma_semaphore, #tpu.memory_space<semaphore_mem>>)
      %c0_i32_59 = arith.constant 0 : i32
      %c1_i32_60 = arith.constant 1 : i32
      %c0_i32_61 = arith.constant 0 : i32
      %c1_i32_62 = arith.constant 1 : i32
      %c0_i32_63 = arith.constant 0 : i32
      %c0_i32_64 = arith.constant 0 : i32
      %70 = tpu.memref_slice %arg5[%arg0, %63, %c0_i32_63, %c0_i32_64] : memref<2x8x8x128xbf16, #tpu.memory_space<any>> -> memref<1x1x8x128xbf16, #tpu.memory_space<any>>
      %71 = tpu.memref_squeeze %70 : memref<1x1x8x128xbf16, #tpu.memory_space<any>> -> memref<8x128xbf16, #tpu.memory_space<any>>
      %c0_i32_65 = arith.constant 0 : i32
      %c0_i32_66 = arith.constant 0 : i32
      %72 = tpu.memref_slice %arg10[%c0_i32_59, %c1_i32_60, %c0_i32_65, %c0_i32_66] : memref<2x2x8x128xbf16, #tpu.memory_space<vmem>> -> memref<1x1x8x128xbf16, #tpu.memory_space<vmem>>
      %73 = tpu.memref_squeeze %72 : memref<1x1x8x128xbf16, #tpu.memory_space<vmem>> -> memref<8x128xbf16, #tpu.memory_space<vmem>>
      %74 = tpu.memref_slice %arg11[%c0_i32_61, %c1_i32_62] : memref<2x2x!tpu.dma_semaphore, #tpu.memory_space<semaphore_mem>> -> memref<1x1x!tpu.dma_semaphore, #tpu.memory_space<semaphore_mem>>
      %75 = tpu.memref_squeeze %74 : memref<1x1x!tpu.dma_semaphore, #tpu.memory_space<semaphore_mem>> -> memref<!tpu.dma_semaphore, #tpu.memory_space<semaphore_mem>>
      tpu.enqueue_dma source(%71 : memref<8x128xbf16, #tpu.memory_space<any>>) target(%73 : memref<8x128xbf16, #tpu.memory_space<vmem>>) target_semaphore(%75 : memref<!tpu.dma_semaphore, #tpu.memory_space<semaphore_mem>>)
      %c0_i32_67 = arith.constant 0 : i32
      %c0_i32_68 = arith.constant 0 : i32
      %c0_i32_69 = arith.constant 0 : i32
      %c0_i32_70 = arith.constant 0 : i32
      %c0_i32_71 = arith.constant 0 : i32
      %c0_i32_72 = arith.constant 0 : i32
      %76 = tpu.memref_slice %arg4[%arg0, %63, %c0_i32_71, %c0_i32_72] : memref<2x8x8x128xbf16, #tpu.memory_space<any>> -> memref<1x1x8x128xbf16, #tpu.memory_space<any>>
      %77 = tpu.memref_squeeze %76 : memref<1x1x8x128xbf16, #tpu.memory_space<any>> -> memref<8x128xbf16, #tpu.memory_space<any>>
      %c0_i32_73 = arith.constant 0 : i32
      %c0_i32_74 = arith.constant 0 : i32
      %78 = tpu.memref_slice %arg10[%c0_i32_67, %c0_i32_68, %c0_i32_73, %c0_i32_74] : memref<2x2x8x128xbf16, #tpu.memory_space<vmem>> -> memref<1x1x8x128xbf16, #tpu.memory_space<vmem>>
      %79 = tpu.memref_squeeze %78 : memref<1x1x8x128xbf16, #tpu.memory_space<vmem>> -> memref<8x128xbf16, #tpu.memory_space<vmem>>
      %80 = tpu.memref_slice %arg11[%c0_i32_69, %c0_i32_70] : memref<2x2x!tpu.dma_semaphore, #tpu.memory_space<semaphore_mem>> -> memref<1x1x!tpu.dma_semaphore, #tpu.memory_space<semaphore_mem>>
      %81 = tpu.memref_squeeze %80 : memref<1x1x!tpu.dma_semaphore, #tpu.memory_space<semaphore_mem>> -> memref<!tpu.dma_semaphore, #tpu.memory_space<semaphore_mem>>
      tpu.wait_dma2 semaphore(%81 : memref<!tpu.dma_semaphore, #tpu.memory_space<semaphore_mem>>) src(%77 : memref<8x128xbf16, #tpu.memory_space<any>>) dst(%79 : memref<8x128xbf16, #tpu.memory_space<vmem>>)
      %c0_i32_75 = arith.constant 0 : i32
      %c1_i32_76 = arith.constant 1 : i32
      %c0_i32_77 = arith.constant 0 : i32
      %c1_i32_78 = arith.constant 1 : i32
      %c0_i32_79 = arith.constant 0 : i32
      %c0_i32_80 = arith.constant 0 : i32
      %82 = tpu.memref_slice %arg5[%arg0, %63, %c0_i32_79, %c0_i32_80] : memref<2x8x8x128xbf16, #tpu.memory_space<any>> -> memref<1x1x8x128xbf16, #tpu.memory_space<any>>
      %83 = tpu.memref_squeeze %82 : memref<1x1x8x128xbf16, #tpu.memory_space<any>> -> memref<8x128xbf16, #tpu.memory_space<any>>
      %c0_i32_81 = arith.constant 0 : i32
      %c0_i32_82 = arith.constant 0 : i32
      %84 = tpu.memref_slice %arg10[%c0_i32_75, %c1_i32_76, %c0_i32_81, %c0_i32_82] : memref<2x2x8x128xbf16, #tpu.memory_space<vmem>> -> memref<1x1x8x128xbf16, #tpu.memory_space<vmem>>
      %85 = tpu.memref_squeeze %84 : memref<1x1x8x128xbf16, #tpu.memory_space<vmem>> -> memref<8x128xbf16, #tpu.memory_space<vmem>>
      %86 = tpu.memref_slice %arg11[%c0_i32_77, %c1_i32_78] : memref<2x2x!tpu.dma_semaphore, #tpu.memory_space<semaphore_mem>> -> memref<1x1x!tpu.dma_semaphore, #tpu.memory_space<semaphore_mem>>
      %87 = tpu.memref_squeeze %86 : memref<1x1x!tpu.dma_semaphore, #tpu.memory_space<semaphore_mem>> -> memref<!tpu.dma_semaphore, #tpu.memory_space<semaphore_mem>>
      tpu.wait_dma2 semaphore(%87 : memref<!tpu.dma_semaphore, #tpu.memory_space<semaphore_mem>>) src(%83 : memref<8x128xbf16, #tpu.memory_space<any>>) dst(%85 : memref<8x128xbf16, #tpu.memory_space<vmem>>)
    } else {
    }
    %c0_i32_1 = arith.constant 0 : i32
    %3 = arith.cmpi eq, %arg1, %c0_i32_1 : i32
    %4 = arith.extui %3 : i1 to i32
    %c0_i32_2 = arith.constant 0 : i32
    %5 = arith.cmpi ne, %4, %c0_i32_2 : i32
    scf.if %5 {
      %cst_51 = arith.constant 0.000000e+00 : bf16
      %62 = vector.broadcast %cst_51 : bf16 to vector<8x128xbf16>
      %c0_52 = arith.constant 0 : index
      %c0_53 = arith.constant 0 : index
      %c0_54 = arith.constant 0 : index
      %c0_55 = arith.constant 0 : index
      %63 = vector.load %arg10[%c0_52, %c0_53, %c0_54, %c0_55] : memref<2x2x8x128xbf16, #tpu.memory_space<vmem>>, vector<1x1x8x128xbf16>
      %64 = vector.shape_cast %63 : vector<1x1x8x128xbf16> to vector<8x128xbf16>
      %65 = vector.shape_cast %62 : vector<8x128xbf16> to vector<1x1x8x128xbf16>
      tpu.vector_store %arg10[%c0_52, %c0_53, %c0_54, %c0_55], %65 {strides = array<i32>} : memref<2x2x8x128xbf16, #tpu.memory_space<vmem>>, vector<1x1x8x128xbf16>,
      %c0_56 = arith.constant 0 : index
      %c1_57 = arith.constant 1 : index
      %c0_58 = arith.constant 0 : index
      %c0_59 = arith.constant 0 : index
      %66 = vector.load %arg10[%c0_56, %c1_57, %c0_58, %c0_59] : memref<2x2x8x128xbf16, #tpu.memory_space<vmem>>, vector<1x1x8x128xbf16>
      %67 = vector.shape_cast %66 : vector<1x1x8x128xbf16> to vector<8x128xbf16>
      %68 = vector.shape_cast %62 : vector<8x128xbf16> to vector<1x1x8x128xbf16>
      tpu.vector_store %arg10[%c0_56, %c1_57, %c0_58, %c0_59], %68 {strides = array<i32>} : memref<2x2x8x128xbf16, #tpu.memory_space<vmem>>, vector<1x1x8x128xbf16>,
    } else {
    }
    %c0_i32_3 = arith.constant 0 : i32
    %6 = arith.cmpi slt, %arg1, %c0_i32_3 : i32
    %7 = arith.extui %6 : i1 to i32
    %c0_i32_4 = arith.constant 0 : i32
    %8 = arith.cmpi ne, %7, %c0_i32_4 : i32
    scf.if %8 {
      %c1_i32 = arith.constant 1 : i32
      %62 = arith.addi %arg1, %c1_i32 : i32
      %c8_i32 = arith.constant 8 : i32
      %63 = arith.muli %62, %c8_i32 : i32
      %c1_i32_51 = arith.constant 1 : i32
      %c0_i32_52 = arith.constant 0 : i32
      %c1_i32_53 = arith.constant 1 : i32
      %c0_i32_54 = arith.constant 0 : i32
      %c0_i32_55 = arith.constant 0 : i32
      %c0_i32_56 = arith.constant 0 : i32
      %64 = tpu.memref_slice %arg4[%arg0, %63, %c0_i32_55, %c0_i32_56] : memref<2x8x8x128xbf16, #tpu.memory_space<any>> -> memref<1x1x8x128xbf16, #tpu.memory_space<any>>
      %65 = tpu.memref_squeeze %64 : memref<1x1x8x128xbf16, #tpu.memory_space<any>> -> memref<8x128xbf16, #tpu.memory_space<any>>
      %c0_i32_57 = arith.constant 0 : i32
      %c0_i32_58 = arith.constant 0 : i32
      %66 = tpu.memref_slice %arg10[%c1_i32_51, %c0_i32_52, %c0_i32_57, %c0_i32_58] : memref<2x2x8x128xbf16, #tpu.memory_space<vmem>> -> memref<1x1x8x128xbf16, #tpu.memory_space<vmem>>
      %67 = tpu.memref_squeeze %66 : memref<1x1x8x128xbf16, #tpu.memory_space<vmem>> -> memref<8x128xbf16, #tpu.memory_space<vmem>>
      %68 = tpu.memref_slice %arg11[%c1_i32_53, %c0_i32_54] : memref<2x2x!tpu.dma_semaphore, #tpu.memory_space<semaphore_mem>> -> memref<1x1x!tpu.dma_semaphore, #tpu.memory_space<semaphore_mem>>
      %69 = tpu.memref_squeeze %68 : memref<1x1x!tpu.dma_semaphore, #tpu.memory_space<semaphore_mem>> -> memref<!tpu.dma_semaphore, #tpu.memory_space<semaphore_mem>>
      tpu.enqueue_dma source(%65 : memref<8x128xbf16, #tpu.memory_space<any>>) target(%67 : memref<8x128xbf16, #tpu.memory_space<vmem>>) target_semaphore(%69 : memref<!tpu.dma_semaphore, #tpu.memory_space<semaphore_mem>>)
      %c1_i32_59 = arith.constant 1 : i32
      %c1_i32_60 = arith.constant 1 : i32
      %c1_i32_61 = arith.constant 1 : i32
      %c1_i32_62 = arith.constant 1 : i32
      %c0_i32_63 = arith.constant 0 : i32
      %c0_i32_64 = arith.constant 0 : i32
      %70 = tpu.memref_slice %arg5[%arg0, %63, %c0_i32_63, %c0_i32_64] : memref<2x8x8x128xbf16, #tpu.memory_space<any>> -> memref<1x1x8x128xbf16, #tpu.memory_space<any>>
      %71 = tpu.memref_squeeze %70 : memref<1x1x8x128xbf16, #tpu.memory_space<any>> -> memref<8x128xbf16, #tpu.memory_space<any>>
      %c0_i32_65 = arith.constant 0 : i32
      %c0_i32_66 = arith.constant 0 : i32
      %72 = tpu.memref_slice %arg10[%c1_i32_59, %c1_i32_60, %c0_i32_65, %c0_i32_66] : memref<2x2x8x128xbf16, #tpu.memory_space<vmem>> -> memref<1x1x8x128xbf16, #tpu.memory_space<vmem>>
      %73 = tpu.memref_squeeze %72 : memref<1x1x8x128xbf16, #tpu.memory_space<vmem>> -> memref<8x128xbf16, #tpu.memory_space<vmem>>
      %74 = tpu.memref_slice %arg11[%c1_i32_61, %c1_i32_62] : memref<2x2x!tpu.dma_semaphore, #tpu.memory_space<semaphore_mem>> -> memref<1x1x!tpu.dma_semaphore, #tpu.memory_space<semaphore_mem>>
      %75 = tpu.memref_squeeze %74 : memref<1x1x!tpu.dma_semaphore, #tpu.memory_space<semaphore_mem>> -> memref<!tpu.dma_semaphore, #tpu.memory_space<semaphore_mem>>
      tpu.enqueue_dma source(%71 : memref<8x128xbf16, #tpu.memory_space<any>>) target(%73 : memref<8x128xbf16, #tpu.memory_space<vmem>>) target_semaphore(%75 : memref<!tpu.dma_semaphore, #tpu.memory_space<semaphore_mem>>)
      %c1_i32_67 = arith.constant 1 : i32
      %c0_i32_68 = arith.constant 0 : i32
      %c1_i32_69 = arith.constant 1 : i32
      %c0_i32_70 = arith.constant 0 : i32
      %c0_i32_71 = arith.constant 0 : i32
      %c0_i32_72 = arith.constant 0 : i32
      %76 = tpu.memref_slice %arg4[%arg0, %63, %c0_i32_71, %c0_i32_72] : memref<2x8x8x128xbf16, #tpu.memory_space<any>> -> memref<1x1x8x128xbf16, #tpu.memory_space<any>>
      %77 = tpu.memref_squeeze %76 : memref<1x1x8x128xbf16, #tpu.memory_space<any>> -> memref<8x128xbf16, #tpu.memory_space<any>>
      %c0_i32_73 = arith.constant 0 : i32
      %c0_i32_74 = arith.constant 0 : i32
      %78 = tpu.memref_slice %arg10[%c1_i32_67, %c0_i32_68, %c0_i32_73, %c0_i32_74] : memref<2x2x8x128xbf16, #tpu.memory_space<vmem>> -> memref<1x1x8x128xbf16, #tpu.memory_space<vmem>>
      %79 = tpu.memref_squeeze %78 : memref<1x1x8x128xbf16, #tpu.memory_space<vmem>> -> memref<8x128xbf16, #tpu.memory_space<vmem>>
      %80 = tpu.memref_slice %arg11[%c1_i32_69, %c0_i32_70] : memref<2x2x!tpu.dma_semaphore, #tpu.memory_space<semaphore_mem>> -> memref<1x1x!tpu.dma_semaphore, #tpu.memory_space<semaphore_mem>>
      %81 = tpu.memref_squeeze %80 : memref<1x1x!tpu.dma_semaphore, #tpu.memory_space<semaphore_mem>> -> memref<!tpu.dma_semaphore, #tpu.memory_space<semaphore_mem>>
      tpu.wait_dma2 semaphore(%81 : memref<!tpu.dma_semaphore, #tpu.memory_space<semaphore_mem>>) src(%77 : memref<8x128xbf16, #tpu.memory_space<any>>) dst(%79 : memref<8x128xbf16, #tpu.memory_space<vmem>>)
      %c1_i32_75 = arith.constant 1 : i32
      %c1_i32_76 = arith.constant 1 : i32
      %c1_i32_77 = arith.constant 1 : i32
      %c1_i32_78 = arith.constant 1 : i32
      %c0_i32_79 = arith.constant 0 : i32
      %c0_i32_80 = arith.constant 0 : i32
      %82 = tpu.memref_slice %arg5[%arg0, %63, %c0_i32_79, %c0_i32_80] : memref<2x8x8x128xbf16, #tpu.memory_space<any>> -> memref<1x1x8x128xbf16, #tpu.memory_space<any>>
      %83 = tpu.memref_squeeze %82 : memref<1x1x8x128xbf16, #tpu.memory_space<any>> -> memref<8x128xbf16, #tpu.memory_space<any>>
      %c0_i32_81 = arith.constant 0 : i32
      %c0_i32_82 = arith.constant 0 : i32
      %84 = tpu.memref_slice %arg10[%c1_i32_75, %c1_i32_76, %c0_i32_81, %c0_i32_82] : memref<2x2x8x128xbf16, #tpu.memory_space<vmem>> -> memref<1x1x8x128xbf16, #tpu.memory_space<vmem>>
      %85 = tpu.memref_squeeze %84 : memref<1x1x8x128xbf16, #tpu.memory_space<vmem>> -> memref<8x128xbf16, #tpu.memory_space<vmem>>
      %86 = tpu.memref_slice %arg11[%c1_i32_77, %c1_i32_78] : memref<2x2x!tpu.dma_semaphore, #tpu.memory_space<semaphore_mem>> -> memref<1x1x!tpu.dma_semaphore, #tpu.memory_space<semaphore_mem>>
      %87 = tpu.memref_squeeze %86 : memref<1x1x!tpu.dma_semaphore, #tpu.memory_space<semaphore_mem>> -> memref<!tpu.dma_semaphore, #tpu.memory_space<semaphore_mem>>
      tpu.wait_dma2 semaphore(%87 : memref<!tpu.dma_semaphore, #tpu.memory_space<semaphore_mem>>) src(%83 : memref<8x128xbf16, #tpu.memory_space<any>>) dst(%85 : memref<8x128xbf16, #tpu.memory_space<vmem>>)
    } else {
    }
    %c0_i32_5 = arith.constant 0 : i32
    %9 = arith.cmpi eq, %arg1, %c0_i32_5 : i32
    %10 = arith.extui %9 : i1 to i32
    %c0_i32_6 = arith.constant 0 : i32
    %11 = arith.cmpi ne, %10, %c0_i32_6 : i32
    scf.if %11 {
      %cst_51 = arith.constant 0.000000e+00 : bf16
      %62 = vector.broadcast %cst_51 : bf16 to vector<8x128xbf16>
      %c1_52 = arith.constant 1 : index
      %c0_53 = arith.constant 0 : index
      %c0_54 = arith.constant 0 : index
      %c0_55 = arith.constant 0 : index
      %63 = vector.load %arg10[%c1_52, %c0_53, %c0_54, %c0_55] : memref<2x2x8x128xbf16, #tpu.memory_space<vmem>>, vector<1x1x8x128xbf16>
      %64 = vector.shape_cast %63 : vector<1x1x8x128xbf16> to vector<8x128xbf16>
      %65 = vector.shape_cast %62 : vector<8x128xbf16> to vector<1x1x8x128xbf16>
      tpu.vector_store %arg10[%c1_52, %c0_53, %c0_54, %c0_55], %65 {strides = array<i32>} : memref<2x2x8x128xbf16, #tpu.memory_space<vmem>>, vector<1x1x8x128xbf16>,
      %c1_56 = arith.constant 1 : index
      %c1_57 = arith.constant 1 : index
      %c0_58 = arith.constant 0 : index
      %c0_59 = arith.constant 0 : index
      %66 = vector.load %arg10[%c1_56, %c1_57, %c0_58, %c0_59] : memref<2x2x8x128xbf16, #tpu.memory_space<vmem>>, vector<1x1x8x128xbf16>
      %67 = vector.shape_cast %66 : vector<1x1x8x128xbf16> to vector<8x128xbf16>
      %68 = vector.shape_cast %62 : vector<8x128xbf16> to vector<1x1x8x128xbf16>
      tpu.vector_store %arg10[%c1_56, %c1_57, %c0_58, %c0_59], %68 {strides = array<i32>} : memref<2x2x8x128xbf16, #tpu.memory_space<vmem>>, vector<1x1x8x128xbf16>,
    } else {
    }
    %c0 = arith.constant 0 : index
    %c0_7 = arith.constant 0 : index
    %c0_8 = arith.constant 0 : index
    %c0_9 = arith.constant 0 : index
    %12 = vector.load %arg2[%c0, %c0_7, %c0_8, %c0_9] : memref<1x8x8x128xbf16, #tpu.memory_space<vmem>>, vector<1x8x8x128xbf16>
    %13 = vector.shape_cast %12 : vector<1x8x8x128xbf16> to vector<8x8x128xbf16>
    %c0_10 = arith.constant 0 : index
    %c0_11 = arith.constant 0 : index
    %c0_12 = arith.constant 0 : index
    %c0_13 = arith.constant 0 : index
    %14 = vector.load %arg3[%c0_10, %c0_11, %c0_12, %c0_13] : memref<1x8x8x128xbf16, #tpu.memory_space<vmem>>, vector<1x8x8x128xbf16>
    %15 = vector.shape_cast %14 : vector<1x8x8x128xbf16> to vector<8x8x128xbf16>
    %16 = arith.addf %13, %15 : vector<8x8x128xbf16>
    %c0_14 = arith.constant 0 : index
    %c0_15 = arith.constant 0 : index
    %c0_16 = arith.constant 0 : index
    %c0_17 = arith.constant 0 : index
    %17 = vector.load %arg10[%c0_14, %c0_15, %c0_16, %c0_17] : memref<2x2x8x128xbf16, #tpu.memory_space<vmem>>, vector<1x1x8x128xbf16>
    %18 = vector.shape_cast %17 : vector<1x1x8x128xbf16> to vector<8x128xbf16>
    %c0_18 = arith.constant 0 : index
    %c1 = arith.constant 1 : index
    %c0_19 = arith.constant 0 : index
    %c0_20 = arith.constant 0 : index
    %19 = vector.load %arg10[%c0_18, %c1, %c0_19, %c0_20] : memref<2x2x8x128xbf16, #tpu.memory_space<vmem>>, vector<1x1x8x128xbf16>
    %20 = vector.shape_cast %19 : vector<1x1x8x128xbf16> to vector<8x128xbf16>
    %21 = arith.addf %18, %20 : vector<8x128xbf16>
    %22 = vector.shape_cast %21 : vector<8x128xbf16> to vector<1x8x128xbf16>
    %c1_21 = arith.constant 1 : index
    %c0_22 = arith.constant 0 : index
    %c0_23 = arith.constant 0 : index
    %c0_24 = arith.constant 0 : index
    %23 = vector.load %arg10[%c1_21, %c0_22, %c0_23, %c0_24] : memref<2x2x8x128xbf16, #tpu.memory_space<vmem>>, vector<1x1x8x128xbf16>
    %24 = vector.shape_cast %23 : vector<1x1x8x128xbf16> to vector<8x128xbf16>
    %c1_25 = arith.constant 1 : index
    %c1_26 = arith.constant 1 : index
    %c0_27 = arith.constant 0 : index
    %c0_28 = arith.constant 0 : index
    %25 = vector.load %arg10[%c1_25, %c1_26, %c0_27, %c0_28] : memref<2x2x8x128xbf16, #tpu.memory_space<vmem>>, vector<1x1x8x128xbf16>
    %26 = vector.shape_cast %25 : vector<1x1x8x128xbf16> to vector<8x128xbf16>
    %27 = arith.addf %24, %26 : vector<8x128xbf16>
    %28 = vector.shape_cast %27 : vector<8x128xbf16> to vector<1x8x128xbf16>
    %29 = tpu.concatenate %22, %16, %28 in 0 : vector<1x8x128xbf16>, vector<8x8x128xbf16>, vector<1x8x128xbf16> -> vector<10x8x128xbf16>
    %cst = arith.constant 0.000000e+00 : bf16
    %30 = vector.broadcast %cst : bf16 to vector<10x1x128xbf16>
    %31 = tpu.concatenate %30, %29, %30 in 1 : vector<10x1x128xbf16>, vector<10x8x128xbf16>, vector<10x1x128xbf16> -> vector<10x10x128xbf16>
    %32 = vector.extract_strided_slice %31 {offsets = [0, 0, 0], sizes = [10, 8, 128], strides = [1, 1, 1]} : vector<10x10x128xbf16> to vector<10x8x128xbf16>
    %33 = vector.extract_strided_slice %31 {offsets = [0, 1, 0], sizes = [10, 8, 128], strides = [1, 1, 1]} : vector<10x10x128xbf16> to vector<10x8x128xbf16>
    %34 = vector.extract_strided_slice %31 {offsets = [0, 2, 0], sizes = [10, 8, 128], strides = [1, 1, 1]} : vector<10x10x128xbf16> to vector<10x8x128xbf16>
    %35 = tpu.concatenate %32, %33, %34 in 2 : vector<10x8x128xbf16>, vector<10x8x128xbf16>, vector<10x8x128xbf16> -> vector<10x8x384xbf16>
    %36 = vector.extract_strided_slice %35 {offsets = [0, 0, 0], sizes = [8, 8, 384], strides = [1, 1, 1]} : vector<10x8x384xbf16> to vector<8x8x384xbf16>
    %c0_29 = arith.constant 0 : index
    %c0_30 = arith.constant 0 : index
    %c0_31 = arith.constant 0 : index
    %37 = vector.load %arg6[%c0_29, %c0_30, %c0_31] : memref<3x384x128xbf16, #tpu.memory_space<vmem>>, vector<1x384x128xbf16>
    %38 = vector.shape_cast %37 : vector<1x384x128xbf16> to vector<384x128xbf16>
    %cst_32 = arith.constant dense<0.000000e+00> : vector<8x8x128xf32>
    %39 = tpu.matmul %36, %38, %cst_32 {dimension_numbers = #tpu.dot_dimension_numbers<[2], [0], [0, 1], [1], [0, 0, 0, 1, 1, 1], [], []>} : vector<8x8x384xbf16>, vector<384x128xbf16>, vector<8x8x128xf32> -> vector<8x8x128xf32>
    %40 = vector.extract_strided_slice %35 {offsets = [1, 0, 0], sizes = [8, 8, 384], strides = [1, 1, 1]} : vector<10x8x384xbf16> to vector<8x8x384xbf16>
    %c1_33 = arith.constant 1 : index
    %c0_34 = arith.constant 0 : index
    %c0_35 = arith.constant 0 : index
    %41 = vector.load %arg6[%c1_33, %c0_34, %c0_35] : memref<3x384x128xbf16, #tpu.memory_space<vmem>>, vector<1x384x128xbf16>
    %42 = vector.shape_cast %41 : vector<1x384x128xbf16> to vector<384x128xbf16>
    %cst_36 = arith.constant dense<0.000000e+00> : vector<8x8x128xf32>
    %43 = tpu.matmul %40, %42, %cst_36 {dimension_numbers = #tpu.dot_dimension_numbers<[2], [0], [0, 1], [1], [0, 0, 0, 1, 1, 1], [], []>} : vector<8x8x384xbf16>, vector<384x128xbf16>, vector<8x8x128xf32> -> vector<8x8x128xf32>
    %44 = arith.addf %39, %43 : vector<8x8x128xf32>
    %45 = vector.extract_strided_slice %35 {offsets = [2, 0, 0], sizes = [8, 8, 384], strides = [1, 1, 1]} : vector<10x8x384xbf16> to vector<8x8x384xbf16>
    %c2 = arith.constant 2 : index
    %c0_37 = arith.constant 0 : index
    %c0_38 = arith.constant 0 : index
    %46 = vector.load %arg6[%c2, %c0_37, %c0_38] : memref<3x384x128xbf16, #tpu.memory_space<vmem>>, vector<1x384x128xbf16>
    %47 = vector.shape_cast %46 : vector<1x384x128xbf16> to vector<384x128xbf16>
    %cst_39 = arith.constant dense<0.000000e+00> : vector<8x8x128xf32>
    %48 = tpu.matmul %45, %47, %cst_39 {dimension_numbers = #tpu.dot_dimension_numbers<[2], [0], [0, 1], [1], [0, 0, 0, 1, 1, 1], [], []>} : vector<8x8x384xbf16>, vector<384x128xbf16>, vector<8x8x128xf32> -> vector<8x8x128xf32>
    %49 = arith.addf %44, %48 : vector<8x8x128xf32>
    %c0_40 = arith.constant 0 : index
    %c0_41 = arith.constant 0 : index
    %c0_42 = arith.constant 0 : index
    %50 = vector.load %arg7[%c0_40, %c0_41, %c0_42] : memref<1x1x128xf32, #tpu.memory_space<vmem>>, vector<1x1x128xf32>
    %51 = vector.broadcast %50 : vector<1x1x128xf32> to vector<8x8x128xf32>
    %52 = arith.mulf %49, %51 : vector<8x8x128xf32>
    %c0_43 = arith.constant 0 : index
    %c0_44 = arith.constant 0 : index
    %c0_45 = arith.constant 0 : index
    %53 = vector.load %arg8[%c0_43, %c0_44, %c0_45] : memref<1x1x128xf32, #tpu.memory_space<vmem>>, vector<1x1x128xf32>
    %54 = vector.broadcast %53 : vector<1x1x128xf32> to vector<8x8x128xf32>
    %55 = arith.addf %52, %54 : vector<8x8x128xf32>
    %cst_46 = arith.constant 0.000000e+00 : f32
    %56 = vector.broadcast %cst_46 : f32 to vector<8x8x128xf32>
    %57 = arith.maximumf %55, %56 : vector<8x8x128xf32>
    %58 = arith.truncf %57 : vector<8x8x128xf32> to vector<8x8x128xbf16>
    %c0_47 = arith.constant 0 : index
    %c0_48 = arith.constant 0 : index
    %c0_49 = arith.constant 0 : index
    %c0_50 = arith.constant 0 : index
    %59 = vector.load %arg9[%c0_47, %c0_48, %c0_49, %c0_50] : memref<1x8x8x128xbf16, #tpu.memory_space<vmem>>, vector<1x8x8x128xbf16>
    %60 = vector.shape_cast %59 : vector<1x8x8x128xbf16> to vector<8x8x128xbf16>
    %61 = vector.shape_cast %58 : vector<8x8x128xbf16> to vector<1x8x8x128xbf16>
    tpu.vector_store %arg9[%c0_47, %c0_48, %c0_49, %c0_50], %61 {strides = array<i32>} : memref<1x8x8x128xbf16, #tpu.memory_space<vmem>>, vector<1x8x8x128xbf16>,
    return
  }
  func.func @transform_0(%arg0: i32, %arg1: i32) -> (i32, i32, i32, i32) {
    %c0_i32 = arith.constant 0 : i32
    %c0_i32_0 = arith.constant 0 : i32
    %c0_i32_1 = arith.constant 0 : i32
    return %arg0, %arg1, %c0_i32, %c0_i32_0 : i32, i32, i32, i32
  }
  func.func @transform_1(%arg0: i32, %arg1: i32) -> (i32, i32, i32, i32) {
    %c0_i32 = arith.constant 0 : i32
    %c0_i32_0 = arith.constant 0 : i32
    %c0_i32_1 = arith.constant 0 : i32
    return %arg0, %arg1, %c0_i32, %c0_i32_0 : i32, i32, i32, i32
  }
  func.func @transform_4(%arg0: i32, %arg1: i32) -> (i32, i32, i32) {
    %c0_i32 = arith.constant 0 : i32
    %c0_i32_0 = arith.constant 0 : i32
    %c0_i32_1 = arith.constant 0 : i32
    %c0_i32_2 = arith.constant 0 : i32
    return %c0_i32, %c0_i32_0, %c0_i32_1 : i32, i32, i32
  }
  func.func @transform_5(%arg0: i32, %arg1: i32) -> (i32, i32, i32) {
    %c0_i32 = arith.constant 0 : i32
    %c0_i32_0 = arith.constant 0 : i32
    %c0_i32_1 = arith.constant 0 : i32
    %c0_i32_2 = arith.constant 0 : i32
    return %c0_i32, %c0_i32_0, %c0_i32_1 : i32, i32, i32
  }
  func.func @transform_6(%arg0: i32, %arg1: i32) -> (i32, i32, i32) {
    %c0_i32 = arith.constant 0 : i32
    %c0_i32_0 = arith.constant 0 : i32
    %c0_i32_1 = arith.constant 0 : i32
    %c0_i32_2 = arith.constant 0 : i32
    return %c0_i32, %c0_i32_0, %c0_i32_1 : i32, i32, i32
  }
  func.func @transform_7(%arg0: i32, %arg1: i32) -> (i32, i32, i32, i32) {
    %c0_i32 = arith.constant 0 : i32
    %c0_i32_0 = arith.constant 0 : i32
    %c0_i32_1 = arith.constant 0 : i32
    return %arg0, %arg1, %c0_i32, %c0_i32_0 : i32, i32, i32, i32
  }
}

module attributes {stable_mosaic.version = 11 : i64} {
  func.func @_pointwise_kernel(%arg0: i32, %arg1: memref<128x16xbf16, #tpu.memory_space<vmem>>, %arg2: memref<16x128xbf16, #tpu.memory_space<vmem>>, %arg3: memref<1x128xf32, #tpu.memory_space<vmem>>, %arg4: memref<128x128xbf16, #tpu.memory_space<vmem>>) attributes {dimension_semantics = [#tpu.dimension_semantics<parallel>], iteration_bounds = array<i64: 1>, scalar_prefetch = 0 : i64, scratch_operands = 0 : i64, tpu.core_type = #tpu.core_type<tc>, window_params = [{transform_indices = @transform_0, window_bounds = array<i64: 128, 16>}, {pipeline_mode = #tpu.pipeline_mode<synchronous>, transform_indices = @transform_1, window_bounds = array<i64: 16, 128>}, {pipeline_mode = #tpu.pipeline_mode<synchronous>, transform_indices = @transform_2, window_bounds = array<i64: 1, 128>}, {transform_indices = @transform_3, window_bounds = array<i64: 128, 128>}]} {
    %c0 = arith.constant 0 : index
    %c0_0 = arith.constant 0 : index
    %0 = vector.load %arg1[%c0, %c0_0] : memref<128x16xbf16, #tpu.memory_space<vmem>>, vector<128x16xbf16>
    %c0_1 = arith.constant 0 : index
    %c0_2 = arith.constant 0 : index
    %1 = vector.load %arg2[%c0_1, %c0_2] : memref<16x128xbf16, #tpu.memory_space<vmem>>, vector<16x128xbf16>
    %cst = arith.constant dense<0.000000e+00> : vector<128x128xf32>
    %2 = tpu.matmul %0, %1, %cst {dimension_numbers = #tpu.dot_dimension_numbers<[1], [0], [0], [1], [0, 0, 1, 1], [], []>} : vector<128x16xbf16>, vector<16x128xbf16>, vector<128x128xf32> -> vector<128x128xf32>
    %c0_3 = arith.constant 0 : index
    %c0_4 = arith.constant 0 : index
    %3 = vector.load %arg3[%c0_3, %c0_4] : memref<1x128xf32, #tpu.memory_space<vmem>>, vector<1x128xf32>
    %4 = vector.broadcast %3 : vector<1x128xf32> to vector<128x128xf32>
    %5 = arith.addf %2, %4 : vector<128x128xf32>
    %6 = arith.truncf %5 : vector<128x128xf32> to vector<128x128xbf16>
    %c0_5 = arith.constant 0 : index
    %c0_6 = arith.constant 0 : index
    %7 = vector.load %arg4[%c0_5, %c0_6] : memref<128x128xbf16, #tpu.memory_space<vmem>>, vector<128x128xbf16>
    tpu.vector_store %arg4[%c0_5, %c0_6], %6 {strides = array<i32>} : memref<128x128xbf16, #tpu.memory_space<vmem>>, vector<128x128xbf16>,
    return
  }
  func.func @transform_0(%arg0: i32) -> (i32, i32) {
    %c0_i32 = arith.constant 0 : i32
    %c0_i32_0 = arith.constant 0 : i32
    return %arg0, %c0_i32 : i32, i32
  }
  func.func @transform_1(%arg0: i32) -> (i32, i32) {
    %c0_i32 = arith.constant 0 : i32
    %c0_i32_0 = arith.constant 0 : i32
    %c0_i32_1 = arith.constant 0 : i32
    return %c0_i32, %c0_i32_0 : i32, i32
  }
  func.func @transform_2(%arg0: i32) -> (i32, i32) {
    %c0_i32 = arith.constant 0 : i32
    %c0_i32_0 = arith.constant 0 : i32
    %c0_i32_1 = arith.constant 0 : i32
    return %c0_i32, %c0_i32_0 : i32, i32
  }
  func.func @transform_3(%arg0: i32) -> (i32, i32) {
    %c0_i32 = arith.constant 0 : i32
    %c0_i32_0 = arith.constant 0 : i32
    return %arg0, %c0_i32 : i32, i32
  }
}

module attributes {stable_mosaic.version = 11 : i64} {
  func.func @_pointwise_kernel(%arg0: i32, %arg1: memref<512x8xbf16, #tpu.memory_space<vmem>>, %arg2: memref<8x128xbf16, #tpu.memory_space<vmem>>, %arg3: memref<1x128xf32, #tpu.memory_space<vmem>>, %arg4: memref<512x128xbf16, #tpu.memory_space<vmem>>) attributes {dimension_semantics = [#tpu.dimension_semantics<parallel>], iteration_bounds = array<i64: 1>, scalar_prefetch = 0 : i64, scratch_operands = 0 : i64, tpu.core_type = #tpu.core_type<tc>, window_params = [{transform_indices = @transform_0, window_bounds = array<i64: 512, 8>}, {pipeline_mode = #tpu.pipeline_mode<synchronous>, transform_indices = @transform_1, window_bounds = array<i64: 8, 128>}, {pipeline_mode = #tpu.pipeline_mode<synchronous>, transform_indices = @transform_2, window_bounds = array<i64: 1, 128>}, {transform_indices = @transform_3, window_bounds = array<i64: 512, 128>}]} {
    %c0 = arith.constant 0 : index
    %c0_0 = arith.constant 0 : index
    %0 = vector.load %arg1[%c0, %c0_0] : memref<512x8xbf16, #tpu.memory_space<vmem>>, vector<512x8xbf16>
    %c0_1 = arith.constant 0 : index
    %c0_2 = arith.constant 0 : index
    %1 = vector.load %arg2[%c0_1, %c0_2] : memref<8x128xbf16, #tpu.memory_space<vmem>>, vector<8x128xbf16>
    %cst = arith.constant dense<0.000000e+00> : vector<512x128xf32>
    %2 = tpu.matmul %0, %1, %cst {dimension_numbers = #tpu.dot_dimension_numbers<[1], [0], [0], [1], [0, 0, 1, 1], [], []>} : vector<512x8xbf16>, vector<8x128xbf16>, vector<512x128xf32> -> vector<512x128xf32>
    %c0_3 = arith.constant 0 : index
    %c0_4 = arith.constant 0 : index
    %3 = vector.load %arg3[%c0_3, %c0_4] : memref<1x128xf32, #tpu.memory_space<vmem>>, vector<1x128xf32>
    %4 = vector.broadcast %3 : vector<1x128xf32> to vector<512x128xf32>
    %5 = arith.addf %2, %4 : vector<512x128xf32>
    %6 = arith.truncf %5 : vector<512x128xf32> to vector<512x128xbf16>
    %c0_5 = arith.constant 0 : index
    %c0_6 = arith.constant 0 : index
    %7 = vector.load %arg4[%c0_5, %c0_6] : memref<512x128xbf16, #tpu.memory_space<vmem>>, vector<512x128xbf16>
    tpu.vector_store %arg4[%c0_5, %c0_6], %6 {strides = array<i32>} : memref<512x128xbf16, #tpu.memory_space<vmem>>, vector<512x128xbf16>,
    return
  }
  func.func @transform_0(%arg0: i32) -> (i32, i32) {
    %c0_i32 = arith.constant 0 : i32
    %c0_i32_0 = arith.constant 0 : i32
    return %arg0, %c0_i32 : i32, i32
  }
  func.func @transform_1(%arg0: i32) -> (i32, i32) {
    %c0_i32 = arith.constant 0 : i32
    %c0_i32_0 = arith.constant 0 : i32
    %c0_i32_1 = arith.constant 0 : i32
    return %c0_i32, %c0_i32_0 : i32, i32
  }
  func.func @transform_2(%arg0: i32) -> (i32, i32) {
    %c0_i32 = arith.constant 0 : i32
    %c0_i32_0 = arith.constant 0 : i32
    %c0_i32_1 = arith.constant 0 : i32
    return %c0_i32, %c0_i32_0 : i32, i32
  }
  func.func @transform_3(%arg0: i32) -> (i32, i32) {
    %c0_i32 = arith.constant 0 : i32
    %c0_i32_0 = arith.constant 0 : i32
    return %arg0, %c0_i32 : i32, i32
  }
}

module attributes {stable_mosaic.version = 11 : i64} {
  func.func @_fuse_kernel(%arg0: i32, %arg1: memref<512x128xbf16, #tpu.memory_space<vmem>>, %arg2: memref<512x128xbf16, #tpu.memory_space<vmem>>, %arg3: memref<512x128xbf16, #tpu.memory_space<vmem>>, %arg4: memref<128x128xbf16, #tpu.memory_space<vmem>>, %arg5: memref<128x128xbf16, #tpu.memory_space<vmem>>, %arg6: memref<128x128xbf16, #tpu.memory_space<vmem>>, %arg7: memref<1x128xf32, #tpu.memory_space<vmem>>, %arg8: memref<512x128xf32, #tpu.memory_space<vmem>>) attributes {dimension_semantics = [#tpu.dimension_semantics<parallel>], iteration_bounds = array<i64: 1>, scalar_prefetch = 0 : i64, scratch_operands = 0 : i64, tpu.core_type = #tpu.core_type<tc>, window_params = [{transform_indices = @transform_0, window_bounds = array<i64: 512, 128>}, {transform_indices = @transform_1, window_bounds = array<i64: 512, 128>}, {transform_indices = @transform_2, window_bounds = array<i64: 512, 128>}, {pipeline_mode = #tpu.pipeline_mode<synchronous>, transform_indices = @transform_3, window_bounds = array<i64: 128, 128>}, {pipeline_mode = #tpu.pipeline_mode<synchronous>, transform_indices = @transform_4, window_bounds = array<i64: 128, 128>}, {pipeline_mode = #tpu.pipeline_mode<synchronous>, transform_indices = @transform_5, window_bounds = array<i64: 128, 128>}, {pipeline_mode = #tpu.pipeline_mode<synchronous>, transform_indices = @transform_6, window_bounds = array<i64: 1, 128>}, {transform_indices = @transform_7, window_bounds = array<i64: 512, 128>}]} {
    %c0 = arith.constant 0 : index
    %c0_0 = arith.constant 0 : index
    %0 = vector.load %arg1[%c0, %c0_0] : memref<512x128xbf16, #tpu.memory_space<vmem>>, vector<512x128xbf16>
    %c0_1 = arith.constant 0 : index
    %c0_2 = arith.constant 0 : index
    %1 = vector.load %arg4[%c0_1, %c0_2] : memref<128x128xbf16, #tpu.memory_space<vmem>>, vector<128x128xbf16>
    %cst = arith.constant dense<0.000000e+00> : vector<512x128xf32>
    %2 = tpu.matmul %0, %1, %cst {dimension_numbers = #tpu.dot_dimension_numbers<[1], [0], [0], [1], [0, 0, 1, 1], [], []>} : vector<512x128xbf16>, vector<128x128xbf16>, vector<512x128xf32> -> vector<512x128xf32>
    %c0_3 = arith.constant 0 : index
    %c0_4 = arith.constant 0 : index
    %3 = vector.load %arg2[%c0_3, %c0_4] : memref<512x128xbf16, #tpu.memory_space<vmem>>, vector<512x128xbf16>
    %c0_5 = arith.constant 0 : index
    %c0_6 = arith.constant 0 : index
    %4 = vector.load %arg5[%c0_5, %c0_6] : memref<128x128xbf16, #tpu.memory_space<vmem>>, vector<128x128xbf16>
    %cst_7 = arith.constant dense<0.000000e+00> : vector<512x128xf32>
    %5 = tpu.matmul %3, %4, %cst_7 {dimension_numbers = #tpu.dot_dimension_numbers<[1], [0], [0], [1], [0, 0, 1, 1], [], []>} : vector<512x128xbf16>, vector<128x128xbf16>, vector<512x128xf32> -> vector<512x128xf32>
    %6 = arith.addf %2, %5 : vector<512x128xf32>
    %c0_8 = arith.constant 0 : index
    %c0_9 = arith.constant 0 : index
    %7 = vector.load %arg3[%c0_8, %c0_9] : memref<512x128xbf16, #tpu.memory_space<vmem>>, vector<512x128xbf16>
    %c0_10 = arith.constant 0 : index
    %c0_11 = arith.constant 0 : index
    %8 = vector.load %arg6[%c0_10, %c0_11] : memref<128x128xbf16, #tpu.memory_space<vmem>>, vector<128x128xbf16>
    %cst_12 = arith.constant dense<0.000000e+00> : vector<512x128xf32>
    %9 = tpu.matmul %7, %8, %cst_12 {dimension_numbers = #tpu.dot_dimension_numbers<[1], [0], [0], [1], [0, 0, 1, 1], [], []>} : vector<512x128xbf16>, vector<128x128xbf16>, vector<512x128xf32> -> vector<512x128xf32>
    %10 = arith.addf %6, %9 : vector<512x128xf32>
    %c0_13 = arith.constant 0 : index
    %c0_14 = arith.constant 0 : index
    %11 = vector.load %arg7[%c0_13, %c0_14] : memref<1x128xf32, #tpu.memory_space<vmem>>, vector<1x128xf32>
    %12 = vector.broadcast %11 : vector<1x128xf32> to vector<512x128xf32>
    %13 = arith.addf %10, %12 : vector<512x128xf32>
    %c0_15 = arith.constant 0 : index
    %c0_16 = arith.constant 0 : index
    %14 = vector.load %arg8[%c0_15, %c0_16] : memref<512x128xf32, #tpu.memory_space<vmem>>, vector<512x128xf32>
    tpu.vector_store %arg8[%c0_15, %c0_16], %13 {strides = array<i32>} : memref<512x128xf32, #tpu.memory_space<vmem>>, vector<512x128xf32>,
    return
  }
  func.func @transform_0(%arg0: i32) -> (i32, i32) {
    %c0_i32 = arith.constant 0 : i32
    %c0_i32_0 = arith.constant 0 : i32
    return %arg0, %c0_i32 : i32, i32
  }
  func.func @transform_1(%arg0: i32) -> (i32, i32) {
    %c0_i32 = arith.constant 0 : i32
    %c0_i32_0 = arith.constant 0 : i32
    return %arg0, %c0_i32 : i32, i32
  }
  func.func @transform_2(%arg0: i32) -> (i32, i32) {
    %c0_i32 = arith.constant 0 : i32
    %c0_i32_0 = arith.constant 0 : i32
    return %arg0, %c0_i32 : i32, i32
  }
  func.func @transform_3(%arg0: i32) -> (i32, i32) {
    %c0_i32 = arith.constant 0 : i32
    %c0_i32_0 = arith.constant 0 : i32
    %c0_i32_1 = arith.constant 0 : i32
    return %c0_i32, %c0_i32_0 : i32, i32
  }
  func.func @transform_4(%arg0: i32) -> (i32, i32) {
    %c0_i32 = arith.constant 0 : i32
    %c0_i32_0 = arith.constant 0 : i32
    %c0_i32_1 = arith.constant 0 : i32
    return %c0_i32, %c0_i32_0 : i32, i32
  }
  func.func @transform_5(%arg0: i32) -> (i32, i32) {
    %c0_i32 = arith.constant 0 : i32
    %c0_i32_0 = arith.constant 0 : i32
    %c0_i32_1 = arith.constant 0 : i32
    return %c0_i32, %c0_i32_0 : i32, i32
  }
  func.func @transform_6(%arg0: i32) -> (i32, i32) {
    %c0_i32 = arith.constant 0 : i32
    %c0_i32_0 = arith.constant 0 : i32
    %c0_i32_1 = arith.constant 0 : i32
    return %c0_i32, %c0_i32_0 : i32, i32
  }
  func.func @transform_7(%arg0: i32) -> (i32, i32) {
    %c0_i32 = arith.constant 0 : i32
    %c0_i32_0 = arith.constant 0 : i32
    return %arg0, %c0_i32 : i32, i32
  }
}

module attributes {stable_mosaic.version = 11 : i64} {
  func.func @_conv3x3_bn_relu_kernel(%arg0: i32, %arg1: i32, %arg2: memref<1x8x16x128xbf16, #tpu.memory_space<vmem>>, %arg3: memref<1x8x16x128xbf16, #tpu.memory_space<vmem>>, %arg4: memref<2x16x16x128xbf16, #tpu.memory_space<any>>, %arg5: memref<2x16x16x128xbf16, #tpu.memory_space<any>>, %arg6: memref<3x384x128xbf16, #tpu.memory_space<vmem>>, %arg7: memref<1x1x128xf32, #tpu.memory_space<vmem>>, %arg8: memref<1x1x128xf32, #tpu.memory_space<vmem>>, %arg9: memref<1x8x16x128xbf16, #tpu.memory_space<vmem>>, %arg10: memref<2x2x16x128xbf16, #tpu.memory_space<vmem>>, %arg11: memref<2x2x!tpu.dma_semaphore, #tpu.memory_space<semaphore_mem>>) attributes {dimension_semantics = [#tpu.dimension_semantics<parallel>, #tpu.dimension_semantics<parallel>], iteration_bounds = array<i64: 2, 2>, scalar_prefetch = 0 : i64, scratch_operands = 2 : i64, tpu.core_type = #tpu.core_type<tc>, window_params = [{transform_indices = @transform_0, window_bounds = array<i64: 1, 8, 16, 128>}, {transform_indices = @transform_1, window_bounds = array<i64: 1, 8, 16, 128>}, {}, {}, {pipeline_mode = #tpu.pipeline_mode<synchronous>, transform_indices = @transform_4, window_bounds = array<i64: 3, 384, 128>}, {pipeline_mode = #tpu.pipeline_mode<synchronous>, transform_indices = @transform_5, window_bounds = array<i64: 1, 1, 128>}, {pipeline_mode = #tpu.pipeline_mode<synchronous>, transform_indices = @transform_6, window_bounds = array<i64: 1, 1, 128>}, {transform_indices = @transform_7, window_bounds = array<i64: 1, 8, 16, 128>}]} {
    %c0_i32 = arith.constant 0 : i32
    %0 = arith.cmpi sgt, %arg1, %c0_i32 : i32
    %1 = arith.extui %0 : i1 to i32
    %c0_i32_0 = arith.constant 0 : i32
    %2 = arith.cmpi ne, %1, %c0_i32_0 : i32
    scf.if %2 {
      %c8_i32 = arith.constant 8 : i32
      %62 = arith.muli %arg1, %c8_i32 : i32
      %c1_i32_50 = arith.constant 1 : i32
      %63 = arith.subi %62, %c1_i32_50 : i32
      %c0_i32_51 = arith.constant 0 : i32
      %c0_i32_52 = arith.constant 0 : i32
      %c0_i32_53 = arith.constant 0 : i32
      %c0_i32_54 = arith.constant 0 : i32
      %c0_i32_55 = arith.constant 0 : i32
      %c0_i32_56 = arith.constant 0 : i32
      %64 = tpu.memref_slice %arg4[%arg0, %63, %c0_i32_55, %c0_i32_56] : memref<2x16x16x128xbf16, #tpu.memory_space<any>> -> memref<1x1x16x128xbf16, #tpu.memory_space<any>>
      %65 = tpu.memref_squeeze %64 : memref<1x1x16x128xbf16, #tpu.memory_space<any>> -> memref<16x128xbf16, #tpu.memory_space<any>>
      %c0_i32_57 = arith.constant 0 : i32
      %c0_i32_58 = arith.constant 0 : i32
      %66 = tpu.memref_slice %arg10[%c0_i32_51, %c0_i32_52, %c0_i32_57, %c0_i32_58] : memref<2x2x16x128xbf16, #tpu.memory_space<vmem>> -> memref<1x1x16x128xbf16, #tpu.memory_space<vmem>>
      %67 = tpu.memref_squeeze %66 : memref<1x1x16x128xbf16, #tpu.memory_space<vmem>> -> memref<16x128xbf16, #tpu.memory_space<vmem>>
      %68 = tpu.memref_slice %arg11[%c0_i32_53, %c0_i32_54] : memref<2x2x!tpu.dma_semaphore, #tpu.memory_space<semaphore_mem>> -> memref<1x1x!tpu.dma_semaphore, #tpu.memory_space<semaphore_mem>>
      %69 = tpu.memref_squeeze %68 : memref<1x1x!tpu.dma_semaphore, #tpu.memory_space<semaphore_mem>> -> memref<!tpu.dma_semaphore, #tpu.memory_space<semaphore_mem>>
      tpu.enqueue_dma source(%65 : memref<16x128xbf16, #tpu.memory_space<any>>) target(%67 : memref<16x128xbf16, #tpu.memory_space<vmem>>) target_semaphore(%69 : memref<!tpu.dma_semaphore, #tpu.memory_space<semaphore_mem>>)
      %c0_i32_59 = arith.constant 0 : i32
      %c1_i32_60 = arith.constant 1 : i32
      %c0_i32_61 = arith.constant 0 : i32
      %c1_i32_62 = arith.constant 1 : i32
      %c0_i32_63 = arith.constant 0 : i32
      %c0_i32_64 = arith.constant 0 : i32
      %70 = tpu.memref_slice %arg5[%arg0, %63, %c0_i32_63, %c0_i32_64] : memref<2x16x16x128xbf16, #tpu.memory_space<any>> -> memref<1x1x16x128xbf16, #tpu.memory_space<any>>
      %71 = tpu.memref_squeeze %70 : memref<1x1x16x128xbf16, #tpu.memory_space<any>> -> memref<16x128xbf16, #tpu.memory_space<any>>
      %c0_i32_65 = arith.constant 0 : i32
      %c0_i32_66 = arith.constant 0 : i32
      %72 = tpu.memref_slice %arg10[%c0_i32_59, %c1_i32_60, %c0_i32_65, %c0_i32_66] : memref<2x2x16x128xbf16, #tpu.memory_space<vmem>> -> memref<1x1x16x128xbf16, #tpu.memory_space<vmem>>
      %73 = tpu.memref_squeeze %72 : memref<1x1x16x128xbf16, #tpu.memory_space<vmem>> -> memref<16x128xbf16, #tpu.memory_space<vmem>>
      %74 = tpu.memref_slice %arg11[%c0_i32_61, %c1_i32_62] : memref<2x2x!tpu.dma_semaphore, #tpu.memory_space<semaphore_mem>> -> memref<1x1x!tpu.dma_semaphore, #tpu.memory_space<semaphore_mem>>
      %75 = tpu.memref_squeeze %74 : memref<1x1x!tpu.dma_semaphore, #tpu.memory_space<semaphore_mem>> -> memref<!tpu.dma_semaphore, #tpu.memory_space<semaphore_mem>>
      tpu.enqueue_dma source(%71 : memref<16x128xbf16, #tpu.memory_space<any>>) target(%73 : memref<16x128xbf16, #tpu.memory_space<vmem>>) target_semaphore(%75 : memref<!tpu.dma_semaphore, #tpu.memory_space<semaphore_mem>>)
      %c0_i32_67 = arith.constant 0 : i32
      %c0_i32_68 = arith.constant 0 : i32
      %c0_i32_69 = arith.constant 0 : i32
      %c0_i32_70 = arith.constant 0 : i32
      %c0_i32_71 = arith.constant 0 : i32
      %c0_i32_72 = arith.constant 0 : i32
      %76 = tpu.memref_slice %arg4[%arg0, %63, %c0_i32_71, %c0_i32_72] : memref<2x16x16x128xbf16, #tpu.memory_space<any>> -> memref<1x1x16x128xbf16, #tpu.memory_space<any>>
      %77 = tpu.memref_squeeze %76 : memref<1x1x16x128xbf16, #tpu.memory_space<any>> -> memref<16x128xbf16, #tpu.memory_space<any>>
      %c0_i32_73 = arith.constant 0 : i32
      %c0_i32_74 = arith.constant 0 : i32
      %78 = tpu.memref_slice %arg10[%c0_i32_67, %c0_i32_68, %c0_i32_73, %c0_i32_74] : memref<2x2x16x128xbf16, #tpu.memory_space<vmem>> -> memref<1x1x16x128xbf16, #tpu.memory_space<vmem>>
      %79 = tpu.memref_squeeze %78 : memref<1x1x16x128xbf16, #tpu.memory_space<vmem>> -> memref<16x128xbf16, #tpu.memory_space<vmem>>
      %80 = tpu.memref_slice %arg11[%c0_i32_69, %c0_i32_70] : memref<2x2x!tpu.dma_semaphore, #tpu.memory_space<semaphore_mem>> -> memref<1x1x!tpu.dma_semaphore, #tpu.memory_space<semaphore_mem>>
      %81 = tpu.memref_squeeze %80 : memref<1x1x!tpu.dma_semaphore, #tpu.memory_space<semaphore_mem>> -> memref<!tpu.dma_semaphore, #tpu.memory_space<semaphore_mem>>
      tpu.wait_dma2 semaphore(%81 : memref<!tpu.dma_semaphore, #tpu.memory_space<semaphore_mem>>) src(%77 : memref<16x128xbf16, #tpu.memory_space<any>>) dst(%79 : memref<16x128xbf16, #tpu.memory_space<vmem>>)
      %c0_i32_75 = arith.constant 0 : i32
      %c1_i32_76 = arith.constant 1 : i32
      %c0_i32_77 = arith.constant 0 : i32
      %c1_i32_78 = arith.constant 1 : i32
      %c0_i32_79 = arith.constant 0 : i32
      %c0_i32_80 = arith.constant 0 : i32
      %82 = tpu.memref_slice %arg5[%arg0, %63, %c0_i32_79, %c0_i32_80] : memref<2x16x16x128xbf16, #tpu.memory_space<any>> -> memref<1x1x16x128xbf16, #tpu.memory_space<any>>
      %83 = tpu.memref_squeeze %82 : memref<1x1x16x128xbf16, #tpu.memory_space<any>> -> memref<16x128xbf16, #tpu.memory_space<any>>
      %c0_i32_81 = arith.constant 0 : i32
      %c0_i32_82 = arith.constant 0 : i32
      %84 = tpu.memref_slice %arg10[%c0_i32_75, %c1_i32_76, %c0_i32_81, %c0_i32_82] : memref<2x2x16x128xbf16, #tpu.memory_space<vmem>> -> memref<1x1x16x128xbf16, #tpu.memory_space<vmem>>
      %85 = tpu.memref_squeeze %84 : memref<1x1x16x128xbf16, #tpu.memory_space<vmem>> -> memref<16x128xbf16, #tpu.memory_space<vmem>>
      %86 = tpu.memref_slice %arg11[%c0_i32_77, %c1_i32_78] : memref<2x2x!tpu.dma_semaphore, #tpu.memory_space<semaphore_mem>> -> memref<1x1x!tpu.dma_semaphore, #tpu.memory_space<semaphore_mem>>
      %87 = tpu.memref_squeeze %86 : memref<1x1x!tpu.dma_semaphore, #tpu.memory_space<semaphore_mem>> -> memref<!tpu.dma_semaphore, #tpu.memory_space<semaphore_mem>>
      tpu.wait_dma2 semaphore(%87 : memref<!tpu.dma_semaphore, #tpu.memory_space<semaphore_mem>>) src(%83 : memref<16x128xbf16, #tpu.memory_space<any>>) dst(%85 : memref<16x128xbf16, #tpu.memory_space<vmem>>)
    } else {
    }
    %c0_i32_1 = arith.constant 0 : i32
    %3 = arith.cmpi eq, %arg1, %c0_i32_1 : i32
    %4 = arith.extui %3 : i1 to i32
    %c0_i32_2 = arith.constant 0 : i32
    %5 = arith.cmpi ne, %4, %c0_i32_2 : i32
    scf.if %5 {
      %cst_50 = arith.constant 0.000000e+00 : bf16
      %62 = vector.broadcast %cst_50 : bf16 to vector<16x128xbf16>
      %c0_51 = arith.constant 0 : index
      %c0_52 = arith.constant 0 : index
      %c0_53 = arith.constant 0 : index
      %c0_54 = arith.constant 0 : index
      %63 = vector.load %arg10[%c0_51, %c0_52, %c0_53, %c0_54] : memref<2x2x16x128xbf16, #tpu.memory_space<vmem>>, vector<1x1x16x128xbf16>
      %64 = vector.shape_cast %63 : vector<1x1x16x128xbf16> to vector<16x128xbf16>
      %65 = vector.shape_cast %62 : vector<16x128xbf16> to vector<1x1x16x128xbf16>
      tpu.vector_store %arg10[%c0_51, %c0_52, %c0_53, %c0_54], %65 {strides = array<i32>} : memref<2x2x16x128xbf16, #tpu.memory_space<vmem>>, vector<1x1x16x128xbf16>,
      %c0_55 = arith.constant 0 : index
      %c1_56 = arith.constant 1 : index
      %c0_57 = arith.constant 0 : index
      %c0_58 = arith.constant 0 : index
      %66 = vector.load %arg10[%c0_55, %c1_56, %c0_57, %c0_58] : memref<2x2x16x128xbf16, #tpu.memory_space<vmem>>, vector<1x1x16x128xbf16>
      %67 = vector.shape_cast %66 : vector<1x1x16x128xbf16> to vector<16x128xbf16>
      %68 = vector.shape_cast %62 : vector<16x128xbf16> to vector<1x1x16x128xbf16>
      tpu.vector_store %arg10[%c0_55, %c1_56, %c0_57, %c0_58], %68 {strides = array<i32>} : memref<2x2x16x128xbf16, #tpu.memory_space<vmem>>, vector<1x1x16x128xbf16>,
    } else {
    }
    %c1_i32 = arith.constant 1 : i32
    %6 = arith.cmpi slt, %arg1, %c1_i32 : i32
    %7 = arith.extui %6 : i1 to i32
    %c0_i32_3 = arith.constant 0 : i32
    %8 = arith.cmpi ne, %7, %c0_i32_3 : i32
    scf.if %8 {
      %c1_i32_50 = arith.constant 1 : i32
      %62 = arith.addi %arg1, %c1_i32_50 : i32
      %c8_i32 = arith.constant 8 : i32
      %63 = arith.muli %62, %c8_i32 : i32
      %c1_i32_51 = arith.constant 1 : i32
      %c0_i32_52 = arith.constant 0 : i32
      %c1_i32_53 = arith.constant 1 : i32
      %c0_i32_54 = arith.constant 0 : i32
      %c0_i32_55 = arith.constant 0 : i32
      %c0_i32_56 = arith.constant 0 : i32
      %64 = tpu.memref_slice %arg4[%arg0, %63, %c0_i32_55, %c0_i32_56] : memref<2x16x16x128xbf16, #tpu.memory_space<any>> -> memref<1x1x16x128xbf16, #tpu.memory_space<any>>
      %65 = tpu.memref_squeeze %64 : memref<1x1x16x128xbf16, #tpu.memory_space<any>> -> memref<16x128xbf16, #tpu.memory_space<any>>
      %c0_i32_57 = arith.constant 0 : i32
      %c0_i32_58 = arith.constant 0 : i32
      %66 = tpu.memref_slice %arg10[%c1_i32_51, %c0_i32_52, %c0_i32_57, %c0_i32_58] : memref<2x2x16x128xbf16, #tpu.memory_space<vmem>> -> memref<1x1x16x128xbf16, #tpu.memory_space<vmem>>
      %67 = tpu.memref_squeeze %66 : memref<1x1x16x128xbf16, #tpu.memory_space<vmem>> -> memref<16x128xbf16, #tpu.memory_space<vmem>>
      %68 = tpu.memref_slice %arg11[%c1_i32_53, %c0_i32_54] : memref<2x2x!tpu.dma_semaphore, #tpu.memory_space<semaphore_mem>> -> memref<1x1x!tpu.dma_semaphore, #tpu.memory_space<semaphore_mem>>
      %69 = tpu.memref_squeeze %68 : memref<1x1x!tpu.dma_semaphore, #tpu.memory_space<semaphore_mem>> -> memref<!tpu.dma_semaphore, #tpu.memory_space<semaphore_mem>>
      tpu.enqueue_dma source(%65 : memref<16x128xbf16, #tpu.memory_space<any>>) target(%67 : memref<16x128xbf16, #tpu.memory_space<vmem>>) target_semaphore(%69 : memref<!tpu.dma_semaphore, #tpu.memory_space<semaphore_mem>>)
      %c1_i32_59 = arith.constant 1 : i32
      %c1_i32_60 = arith.constant 1 : i32
      %c1_i32_61 = arith.constant 1 : i32
      %c1_i32_62 = arith.constant 1 : i32
      %c0_i32_63 = arith.constant 0 : i32
      %c0_i32_64 = arith.constant 0 : i32
      %70 = tpu.memref_slice %arg5[%arg0, %63, %c0_i32_63, %c0_i32_64] : memref<2x16x16x128xbf16, #tpu.memory_space<any>> -> memref<1x1x16x128xbf16, #tpu.memory_space<any>>
      %71 = tpu.memref_squeeze %70 : memref<1x1x16x128xbf16, #tpu.memory_space<any>> -> memref<16x128xbf16, #tpu.memory_space<any>>
      %c0_i32_65 = arith.constant 0 : i32
      %c0_i32_66 = arith.constant 0 : i32
      %72 = tpu.memref_slice %arg10[%c1_i32_59, %c1_i32_60, %c0_i32_65, %c0_i32_66] : memref<2x2x16x128xbf16, #tpu.memory_space<vmem>> -> memref<1x1x16x128xbf16, #tpu.memory_space<vmem>>
      %73 = tpu.memref_squeeze %72 : memref<1x1x16x128xbf16, #tpu.memory_space<vmem>> -> memref<16x128xbf16, #tpu.memory_space<vmem>>
      %74 = tpu.memref_slice %arg11[%c1_i32_61, %c1_i32_62] : memref<2x2x!tpu.dma_semaphore, #tpu.memory_space<semaphore_mem>> -> memref<1x1x!tpu.dma_semaphore, #tpu.memory_space<semaphore_mem>>
      %75 = tpu.memref_squeeze %74 : memref<1x1x!tpu.dma_semaphore, #tpu.memory_space<semaphore_mem>> -> memref<!tpu.dma_semaphore, #tpu.memory_space<semaphore_mem>>
      tpu.enqueue_dma source(%71 : memref<16x128xbf16, #tpu.memory_space<any>>) target(%73 : memref<16x128xbf16, #tpu.memory_space<vmem>>) target_semaphore(%75 : memref<!tpu.dma_semaphore, #tpu.memory_space<semaphore_mem>>)
      %c1_i32_67 = arith.constant 1 : i32
      %c0_i32_68 = arith.constant 0 : i32
      %c1_i32_69 = arith.constant 1 : i32
      %c0_i32_70 = arith.constant 0 : i32
      %c0_i32_71 = arith.constant 0 : i32
      %c0_i32_72 = arith.constant 0 : i32
      %76 = tpu.memref_slice %arg4[%arg0, %63, %c0_i32_71, %c0_i32_72] : memref<2x16x16x128xbf16, #tpu.memory_space<any>> -> memref<1x1x16x128xbf16, #tpu.memory_space<any>>
      %77 = tpu.memref_squeeze %76 : memref<1x1x16x128xbf16, #tpu.memory_space<any>> -> memref<16x128xbf16, #tpu.memory_space<any>>
      %c0_i32_73 = arith.constant 0 : i32
      %c0_i32_74 = arith.constant 0 : i32
      %78 = tpu.memref_slice %arg10[%c1_i32_67, %c0_i32_68, %c0_i32_73, %c0_i32_74] : memref<2x2x16x128xbf16, #tpu.memory_space<vmem>> -> memref<1x1x16x128xbf16, #tpu.memory_space<vmem>>
      %79 = tpu.memref_squeeze %78 : memref<1x1x16x128xbf16, #tpu.memory_space<vmem>> -> memref<16x128xbf16, #tpu.memory_space<vmem>>
      %80 = tpu.memref_slice %arg11[%c1_i32_69, %c0_i32_70] : memref<2x2x!tpu.dma_semaphore, #tpu.memory_space<semaphore_mem>> -> memref<1x1x!tpu.dma_semaphore, #tpu.memory_space<semaphore_mem>>
      %81 = tpu.memref_squeeze %80 : memref<1x1x!tpu.dma_semaphore, #tpu.memory_space<semaphore_mem>> -> memref<!tpu.dma_semaphore, #tpu.memory_space<semaphore_mem>>
      tpu.wait_dma2 semaphore(%81 : memref<!tpu.dma_semaphore, #tpu.memory_space<semaphore_mem>>) src(%77 : memref<16x128xbf16, #tpu.memory_space<any>>) dst(%79 : memref<16x128xbf16, #tpu.memory_space<vmem>>)
      %c1_i32_75 = arith.constant 1 : i32
      %c1_i32_76 = arith.constant 1 : i32
      %c1_i32_77 = arith.constant 1 : i32
      %c1_i32_78 = arith.constant 1 : i32
      %c0_i32_79 = arith.constant 0 : i32
      %c0_i32_80 = arith.constant 0 : i32
      %82 = tpu.memref_slice %arg5[%arg0, %63, %c0_i32_79, %c0_i32_80] : memref<2x16x16x128xbf16, #tpu.memory_space<any>> -> memref<1x1x16x128xbf16, #tpu.memory_space<any>>
      %83 = tpu.memref_squeeze %82 : memref<1x1x16x128xbf16, #tpu.memory_space<any>> -> memref<16x128xbf16, #tpu.memory_space<any>>
      %c0_i32_81 = arith.constant 0 : i32
      %c0_i32_82 = arith.constant 0 : i32
      %84 = tpu.memref_slice %arg10[%c1_i32_75, %c1_i32_76, %c0_i32_81, %c0_i32_82] : memref<2x2x16x128xbf16, #tpu.memory_space<vmem>> -> memref<1x1x16x128xbf16, #tpu.memory_space<vmem>>
      %85 = tpu.memref_squeeze %84 : memref<1x1x16x128xbf16, #tpu.memory_space<vmem>> -> memref<16x128xbf16, #tpu.memory_space<vmem>>
      %86 = tpu.memref_slice %arg11[%c1_i32_77, %c1_i32_78] : memref<2x2x!tpu.dma_semaphore, #tpu.memory_space<semaphore_mem>> -> memref<1x1x!tpu.dma_semaphore, #tpu.memory_space<semaphore_mem>>
      %87 = tpu.memref_squeeze %86 : memref<1x1x!tpu.dma_semaphore, #tpu.memory_space<semaphore_mem>> -> memref<!tpu.dma_semaphore, #tpu.memory_space<semaphore_mem>>
      tpu.wait_dma2 semaphore(%87 : memref<!tpu.dma_semaphore, #tpu.memory_space<semaphore_mem>>) src(%83 : memref<16x128xbf16, #tpu.memory_space<any>>) dst(%85 : memref<16x128xbf16, #tpu.memory_space<vmem>>)
    } else {
    }
    %c1_i32_4 = arith.constant 1 : i32
    %9 = arith.cmpi eq, %arg1, %c1_i32_4 : i32
    %10 = arith.extui %9 : i1 to i32
    %c0_i32_5 = arith.constant 0 : i32
    %11 = arith.cmpi ne, %10, %c0_i32_5 : i32
    scf.if %11 {
      %cst_50 = arith.constant 0.000000e+00 : bf16
      %62 = vector.broadcast %cst_50 : bf16 to vector<16x128xbf16>
      %c1_51 = arith.constant 1 : index
      %c0_52 = arith.constant 0 : index
      %c0_53 = arith.constant 0 : index
      %c0_54 = arith.constant 0 : index
      %63 = vector.load %arg10[%c1_51, %c0_52, %c0_53, %c0_54] : memref<2x2x16x128xbf16, #tpu.memory_space<vmem>>, vector<1x1x16x128xbf16>
      %64 = vector.shape_cast %63 : vector<1x1x16x128xbf16> to vector<16x128xbf16>
      %65 = vector.shape_cast %62 : vector<16x128xbf16> to vector<1x1x16x128xbf16>
      tpu.vector_store %arg10[%c1_51, %c0_52, %c0_53, %c0_54], %65 {strides = array<i32>} : memref<2x2x16x128xbf16, #tpu.memory_space<vmem>>, vector<1x1x16x128xbf16>,
      %c1_55 = arith.constant 1 : index
      %c1_56 = arith.constant 1 : index
      %c0_57 = arith.constant 0 : index
      %c0_58 = arith.constant 0 : index
      %66 = vector.load %arg10[%c1_55, %c1_56, %c0_57, %c0_58] : memref<2x2x16x128xbf16, #tpu.memory_space<vmem>>, vector<1x1x16x128xbf16>
      %67 = vector.shape_cast %66 : vector<1x1x16x128xbf16> to vector<16x128xbf16>
      %68 = vector.shape_cast %62 : vector<16x128xbf16> to vector<1x1x16x128xbf16>
      tpu.vector_store %arg10[%c1_55, %c1_56, %c0_57, %c0_58], %68 {strides = array<i32>} : memref<2x2x16x128xbf16, #tpu.memory_space<vmem>>, vector<1x1x16x128xbf16>,
    } else {
    }
    %c0 = arith.constant 0 : index
    %c0_6 = arith.constant 0 : index
    %c0_7 = arith.constant 0 : index
    %c0_8 = arith.constant 0 : index
    %12 = vector.load %arg2[%c0, %c0_6, %c0_7, %c0_8] : memref<1x8x16x128xbf16, #tpu.memory_space<vmem>>, vector<1x8x16x128xbf16>
    %13 = vector.shape_cast %12 : vector<1x8x16x128xbf16> to vector<8x16x128xbf16>
    %c0_9 = arith.constant 0 : index
    %c0_10 = arith.constant 0 : index
    %c0_11 = arith.constant 0 : index
    %c0_12 = arith.constant 0 : index
    %14 = vector.load %arg3[%c0_9, %c0_10, %c0_11, %c0_12] : memref<1x8x16x128xbf16, #tpu.memory_space<vmem>>, vector<1x8x16x128xbf16>
    %15 = vector.shape_cast %14 : vector<1x8x16x128xbf16> to vector<8x16x128xbf16>
    %16 = arith.addf %13, %15 : vector<8x16x128xbf16>
    %c0_13 = arith.constant 0 : index
    %c0_14 = arith.constant 0 : index
    %c0_15 = arith.constant 0 : index
    %c0_16 = arith.constant 0 : index
    %17 = vector.load %arg10[%c0_13, %c0_14, %c0_15, %c0_16] : memref<2x2x16x128xbf16, #tpu.memory_space<vmem>>, vector<1x1x16x128xbf16>
    %18 = vector.shape_cast %17 : vector<1x1x16x128xbf16> to vector<16x128xbf16>
    %c0_17 = arith.constant 0 : index
    %c1 = arith.constant 1 : index
    %c0_18 = arith.constant 0 : index
    %c0_19 = arith.constant 0 : index
    %19 = vector.load %arg10[%c0_17, %c1, %c0_18, %c0_19] : memref<2x2x16x128xbf16, #tpu.memory_space<vmem>>, vector<1x1x16x128xbf16>
    %20 = vector.shape_cast %19 : vector<1x1x16x128xbf16> to vector<16x128xbf16>
    %21 = arith.addf %18, %20 : vector<16x128xbf16>
    %22 = vector.shape_cast %21 : vector<16x128xbf16> to vector<1x16x128xbf16>
    %c1_20 = arith.constant 1 : index
    %c0_21 = arith.constant 0 : index
    %c0_22 = arith.constant 0 : index
    %c0_23 = arith.constant 0 : index
    %23 = vector.load %arg10[%c1_20, %c0_21, %c0_22, %c0_23] : memref<2x2x16x128xbf16, #tpu.memory_space<vmem>>, vector<1x1x16x128xbf16>
    %24 = vector.shape_cast %23 : vector<1x1x16x128xbf16> to vector<16x128xbf16>
    %c1_24 = arith.constant 1 : index
    %c1_25 = arith.constant 1 : index
    %c0_26 = arith.constant 0 : index
    %c0_27 = arith.constant 0 : index
    %25 = vector.load %arg10[%c1_24, %c1_25, %c0_26, %c0_27] : memref<2x2x16x128xbf16, #tpu.memory_space<vmem>>, vector<1x1x16x128xbf16>
    %26 = vector.shape_cast %25 : vector<1x1x16x128xbf16> to vector<16x128xbf16>
    %27 = arith.addf %24, %26 : vector<16x128xbf16>
    %28 = vector.shape_cast %27 : vector<16x128xbf16> to vector<1x16x128xbf16>
    %29 = tpu.concatenate %22, %16, %28 in 0 : vector<1x16x128xbf16>, vector<8x16x128xbf16>, vector<1x16x128xbf16> -> vector<10x16x128xbf16>
    %cst = arith.constant 0.000000e+00 : bf16
    %30 = vector.broadcast %cst : bf16 to vector<10x1x128xbf16>
    %31 = tpu.concatenate %30, %29, %30 in 1 : vector<10x1x128xbf16>, vector<10x16x128xbf16>, vector<10x1x128xbf16> -> vector<10x18x128xbf16>
    %32 = vector.extract_strided_slice %31 {offsets = [0, 0, 0], sizes = [10, 16, 128], strides = [1, 1, 1]} : vector<10x18x128xbf16> to vector<10x16x128xbf16>
    %33 = vector.extract_strided_slice %31 {offsets = [0, 1, 0], sizes = [10, 16, 128], strides = [1, 1, 1]} : vector<10x18x128xbf16> to vector<10x16x128xbf16>
    %34 = vector.extract_strided_slice %31 {offsets = [0, 2, 0], sizes = [10, 16, 128], strides = [1, 1, 1]} : vector<10x18x128xbf16> to vector<10x16x128xbf16>
    %35 = tpu.concatenate %32, %33, %34 in 2 : vector<10x16x128xbf16>, vector<10x16x128xbf16>, vector<10x16x128xbf16> -> vector<10x16x384xbf16>
    %36 = vector.extract_strided_slice %35 {offsets = [0, 0, 0], sizes = [8, 16, 384], strides = [1, 1, 1]} : vector<10x16x384xbf16> to vector<8x16x384xbf16>
    %c0_28 = arith.constant 0 : index
    %c0_29 = arith.constant 0 : index
    %c0_30 = arith.constant 0 : index
    %37 = vector.load %arg6[%c0_28, %c0_29, %c0_30] : memref<3x384x128xbf16, #tpu.memory_space<vmem>>, vector<1x384x128xbf16>
    %38 = vector.shape_cast %37 : vector<1x384x128xbf16> to vector<384x128xbf16>
    %cst_31 = arith.constant dense<0.000000e+00> : vector<8x16x128xf32>
    %39 = tpu.matmul %36, %38, %cst_31 {dimension_numbers = #tpu.dot_dimension_numbers<[2], [0], [0, 1], [1], [0, 0, 0, 1, 1, 1], [], []>} : vector<8x16x384xbf16>, vector<384x128xbf16>, vector<8x16x128xf32> -> vector<8x16x128xf32>
    %40 = vector.extract_strided_slice %35 {offsets = [1, 0, 0], sizes = [8, 16, 384], strides = [1, 1, 1]} : vector<10x16x384xbf16> to vector<8x16x384xbf16>
    %c1_32 = arith.constant 1 : index
    %c0_33 = arith.constant 0 : index
    %c0_34 = arith.constant 0 : index
    %41 = vector.load %arg6[%c1_32, %c0_33, %c0_34] : memref<3x384x128xbf16, #tpu.memory_space<vmem>>, vector<1x384x128xbf16>
    %42 = vector.shape_cast %41 : vector<1x384x128xbf16> to vector<384x128xbf16>
    %cst_35 = arith.constant dense<0.000000e+00> : vector<8x16x128xf32>
    %43 = tpu.matmul %40, %42, %cst_35 {dimension_numbers = #tpu.dot_dimension_numbers<[2], [0], [0, 1], [1], [0, 0, 0, 1, 1, 1], [], []>} : vector<8x16x384xbf16>, vector<384x128xbf16>, vector<8x16x128xf32> -> vector<8x16x128xf32>
    %44 = arith.addf %39, %43 : vector<8x16x128xf32>
    %45 = vector.extract_strided_slice %35 {offsets = [2, 0, 0], sizes = [8, 16, 384], strides = [1, 1, 1]} : vector<10x16x384xbf16> to vector<8x16x384xbf16>
    %c2 = arith.constant 2 : index
    %c0_36 = arith.constant 0 : index
    %c0_37 = arith.constant 0 : index
    %46 = vector.load %arg6[%c2, %c0_36, %c0_37] : memref<3x384x128xbf16, #tpu.memory_space<vmem>>, vector<1x384x128xbf16>
    %47 = vector.shape_cast %46 : vector<1x384x128xbf16> to vector<384x128xbf16>
    %cst_38 = arith.constant dense<0.000000e+00> : vector<8x16x128xf32>
    %48 = tpu.matmul %45, %47, %cst_38 {dimension_numbers = #tpu.dot_dimension_numbers<[2], [0], [0, 1], [1], [0, 0, 0, 1, 1, 1], [], []>} : vector<8x16x384xbf16>, vector<384x128xbf16>, vector<8x16x128xf32> -> vector<8x16x128xf32>
    %49 = arith.addf %44, %48 : vector<8x16x128xf32>
    %c0_39 = arith.constant 0 : index
    %c0_40 = arith.constant 0 : index
    %c0_41 = arith.constant 0 : index
    %50 = vector.load %arg7[%c0_39, %c0_40, %c0_41] : memref<1x1x128xf32, #tpu.memory_space<vmem>>, vector<1x1x128xf32>
    %51 = vector.broadcast %50 : vector<1x1x128xf32> to vector<8x16x128xf32>
    %52 = arith.mulf %49, %51 : vector<8x16x128xf32>
    %c0_42 = arith.constant 0 : index
    %c0_43 = arith.constant 0 : index
    %c0_44 = arith.constant 0 : index
    %53 = vector.load %arg8[%c0_42, %c0_43, %c0_44] : memref<1x1x128xf32, #tpu.memory_space<vmem>>, vector<1x1x128xf32>
    %54 = vector.broadcast %53 : vector<1x1x128xf32> to vector<8x16x128xf32>
    %55 = arith.addf %52, %54 : vector<8x16x128xf32>
    %cst_45 = arith.constant 0.000000e+00 : f32
    %56 = vector.broadcast %cst_45 : f32 to vector<8x16x128xf32>
    %57 = arith.maximumf %55, %56 : vector<8x16x128xf32>
    %58 = arith.truncf %57 : vector<8x16x128xf32> to vector<8x16x128xbf16>
    %c0_46 = arith.constant 0 : index
    %c0_47 = arith.constant 0 : index
    %c0_48 = arith.constant 0 : index
    %c0_49 = arith.constant 0 : index
    %59 = vector.load %arg9[%c0_46, %c0_47, %c0_48, %c0_49] : memref<1x8x16x128xbf16, #tpu.memory_space<vmem>>, vector<1x8x16x128xbf16>
    %60 = vector.shape_cast %59 : vector<1x8x16x128xbf16> to vector<8x16x128xbf16>
    %61 = vector.shape_cast %58 : vector<8x16x128xbf16> to vector<1x8x16x128xbf16>
    tpu.vector_store %arg9[%c0_46, %c0_47, %c0_48, %c0_49], %61 {strides = array<i32>} : memref<1x8x16x128xbf16, #tpu.memory_space<vmem>>, vector<1x8x16x128xbf16>,
    return
  }
  func.func @transform_0(%arg0: i32, %arg1: i32) -> (i32, i32, i32, i32) {
    %c0_i32 = arith.constant 0 : i32
    %c0_i32_0 = arith.constant 0 : i32
    %c0_i32_1 = arith.constant 0 : i32
    return %arg0, %arg1, %c0_i32, %c0_i32_0 : i32, i32, i32, i32
  }
  func.func @transform_1(%arg0: i32, %arg1: i32) -> (i32, i32, i32, i32) {
    %c0_i32 = arith.constant 0 : i32
    %c0_i32_0 = arith.constant 0 : i32
    %c0_i32_1 = arith.constant 0 : i32
    return %arg0, %arg1, %c0_i32, %c0_i32_0 : i32, i32, i32, i32
  }
  func.func @transform_4(%arg0: i32, %arg1: i32) -> (i32, i32, i32) {
    %c0_i32 = arith.constant 0 : i32
    %c0_i32_0 = arith.constant 0 : i32
    %c0_i32_1 = arith.constant 0 : i32
    %c0_i32_2 = arith.constant 0 : i32
    return %c0_i32, %c0_i32_0, %c0_i32_1 : i32, i32, i32
  }
  func.func @transform_5(%arg0: i32, %arg1: i32) -> (i32, i32, i32) {
    %c0_i32 = arith.constant 0 : i32
    %c0_i32_0 = arith.constant 0 : i32
    %c0_i32_1 = arith.constant 0 : i32
    %c0_i32_2 = arith.constant 0 : i32
    return %c0_i32, %c0_i32_0, %c0_i32_1 : i32, i32, i32
  }
  func.func @transform_6(%arg0: i32, %arg1: i32) -> (i32, i32, i32) {
    %c0_i32 = arith.constant 0 : i32
    %c0_i32_0 = arith.constant 0 : i32
    %c0_i32_1 = arith.constant 0 : i32
    %c0_i32_2 = arith.constant 0 : i32
    return %c0_i32, %c0_i32_0, %c0_i32_1 : i32, i32, i32
  }
  func.func @transform_7(%arg0: i32, %arg1: i32) -> (i32, i32, i32, i32) {
    %c0_i32 = arith.constant 0 : i32
    %c0_i32_0 = arith.constant 0 : i32
    %c0_i32_1 = arith.constant 0 : i32
    return %arg0, %arg1, %c0_i32, %c0_i32_0 : i32, i32, i32, i32
  }
}

</mosaic_0001>

<llo_original>
// kernel: aggregation_block.9
$region0: #{aggregation_block.9}
  #allocation0 [shape = 'u32[]', space=smem, size = 0x4, offset = 0x4, fixed_abs, tag = 'smem constant byte address 0x4 - core index']
  #allocation1 [shape = 'u32[144,128]{1,0:T(1,128)}', space=vmem, size = 0x12000, scoped, tag = 'internal scratch']
  %s0 = inlined_call_operand.vmem [shape: bf16[32,24], index: 0, kind: input, shape index: {}]
  %s1 = inlined_call_operand.vmem [shape: bf16[24,128], index: 1, kind: input, shape index: {}]
  %s2 = inlined_call_operand.vmem [shape: f32[1,128], index: 2, kind: input, shape index: {}]
  %s3 = inlined_call_operand.vmem [shape: bf16[32,128], index: 3, kind: output, shape index: {}]
  %s4 = sld [smem:[#allocation0]]
  $region22: #{aggregation_block.9} parent=0
    _
  %s6 = ssub.s32 1, %s4
  %s7 = scalar_select 0, %s6, %s4
  // Predicated region
  $region2: #{aggregation_block.9} parent=0 // pred_check
    _
  $region3: #{aggregation_block.9} parent=0 // pred_check_branch
    %9 = sbr.rel (0) target = $region5
  $region4: #{aggregation_block.9} parent=0 // pred_region
    _
  $region5: #{aggregation_block.9} parent=0 // pred_fallthru
    _
  // Predicated region
  $region6: #{aggregation_block.9} parent=0 // pred_check
    _
  $region7: #{aggregation_block.9} parent=0 // pred_check_branch
    %11 = sbr.rel (0) target = $region9
  $region8: #{aggregation_block.9} parent=0 // pred_region
    _
  $region9: #{aggregation_block.9} parent=0 // pred_fallthru
    _
  // Predicated region
  $region10: #{aggregation_block.9} parent=0 // pred_check
    _
  $region11: #{aggregation_block.9} parent=0 // pred_check_branch
    %13 = sbr.rel (0) target = $region13
  $region12: #{aggregation_block.9} parent=0 // pred_region
    _
  $region13: #{aggregation_block.9} parent=0 // pred_fallthru
    _
  %v15 = vld [vmem:[%s0] sm:$0xf]
  %v16 = vld [vmem:[%s0 + $0x4] sm:$0xf]
  %v17 = vld [vmem:[%s0 + $0x8] sm:$0xf]
  %v18 = vld [vmem:[%s0 + $0xc] sm:$0xf]
  %v19 = vld [vmem:[%s1] sm:$0xf]
  %v20 = vld [vmem:[%s1 + $0x4] sm:$0xf]
  %v21 = vld [vmem:[%s1 + $0x8] sm:$0xf]
  %v22 = vld [vmem:[%s2] sm:$0x1]
  %v24 = vlaneseq
  %v25 = vshrl.u32 %v24, 7
  %v26 = vsub.s32 0, %v25
  %v27 = vrot.slane %v22, %v26
  %v33 = vunpack.c.l.b16 %v15
  %v34 = vunpack.c.l.b16 %v16
  %v35 = vunpack.c.l.b16 %v17
  %v36 = vunpack.c.l.b16 %v18
  %v37 = vpack.c.b16 %v34, %v33
  %v38 = vpack.c.b16 %v36, %v35
  %v42 = vunpack.c.l.b16 %v19
  %v43 = vunpack.c.l.b16 %v20
  %v44 = vunpack.c.l.b16 %v21
  %v45 = vpack.c.b16 %v43, %v42
  %v46 = vpack.c.b16 %v44, %v44
  %vm48 = vcmask 195584
  %v50 = vsel %vm48, %v37, 0
  %v53 = vsel %vm48, %v38, 0
  %vm55 = vcmask 1043456
  %v57 = vsel %vm55, %v46, 0
  %59 = vmatprep.subr.bf16.mxu0 0
  %60 = vmatpush1.bf16.msra.mxu0 0
  %61 = vmatprep.subr.bf16.mxu0 0
  %62 = vmatpush1.bf16.msra.mxu0 0
  %63 = vmatprep.subr.bf16.mxu0 0
  %64 = vmatpush1.bf16.msra.mxu0 0
  %65 = vmatprep.subr.bf16.mxu0 0
  %66 = vmatpush1.bf16.msra.mxu0 0
  %67 = vmatprep.subr.bf16.mxu0 0
  %68 = vmatpush1.bf16.msra.mxu0 0
  %69 = vmatprep.subr.bf16.mxu0 0
  %70 = vmatpush1.bf16.msra.mxu0 0
  %71 = vmatprep.subr.bf16.mxu0 0
  %72 = vmatpush1.bf16.msra.mxu0 %v57
  %73 = vmatprep.subr.bf16.mxu0 0
  %74 = vmatpush1.bf16.msra.mxu0 %v45
  %75 = vmatprep.subr.bf16.mxu0 0
  %76 = vmatpush2.bf16.msra.mxu0 0
  %77 = vmatprep.subr.bf16.mxu0 0
  %78 = vmatpush2.bf16.msra.mxu0 0
  %79 = vmatprep.subr.bf16.mxu0 0
  %80 = vmatpush2.bf16.msra.mxu0 0
  %81 = vmatprep.subr.bf16.mxu0 0
  %82 = vmatpush2.bf16.msra.mxu0 0
  %83 = vmatprep.subr.bf16.mxu0 0
  %84 = vmatpush2.bf16.msra.mxu0 0
  %85 = vmatprep.subr.bf16.mxu0 0
  %86 = vmatpush2.bf16.msra.mxu0 0
  %87 = vmatprep.subr.bf16.mxu0 0
  %88 = vmatpush2.bf16.msra.mxu0 0
  %89 = vmatprep.subr.bf16.mxu0 0
  %90 = vmatpush2.bf16.msra.mxu0 0
  %91 = vmatprep.mubr.bf16.mxu0 0
  %92 = vmatmul.mubr.bf16.gmra.mxu0 %v50
  %v93 = vpop.f32.mrf.mxu0
  %v94 = vadd.f32 %v27, %v93
  %v95 = vpop.f32.mrf.mxu0
  %v96 = vpop.f32.mrf.mxu0
  %v97 = vadd.f32 %v27, %v96
  %v98 = vpop.f32.mrf.mxu0
  %99 = vmatprep.mubr.bf16.mxu0 0
  %100 = vmatmul.mubr.bf16.gmra.mxu0 %v53
  %v101 = vpop.f32.mrf.mxu0
  %v102 = vadd.f32 %v27, %v101
  %v103 = vpop.f32.mrf.mxu0
  %v104 = vpop.f32.mrf.mxu0
  %v105 = vadd.f32 %v27, %v104
  %v106 = vpop.f32.mrf.mxu0
  %107 = vdwg.mxu0
  %v108 = vpack.c.bf16 %v97, %v94
  %v109 = vpack.c.bf16 %v105, %v102
  %v112 = vunpack.c.l.b16 %v108
  %v113 = vunpack.c.h.b16 %v108
  %v114 = vunpack.c.l.b16 %v109
  %v115 = vunpack.c.h.b16 %v109
  %v116 = vpack.c.b16 %v112, %v112
  %v117 = vpack.c.b16 %v113, %v113
  %v118 = vpack.c.b16 %v114, %v114
  %v119 = vpack.c.b16 %v115, %v115
  %124 = vst [vmem:[%s3] sm:$0xf] %v116
  %125 = vst [vmem:[%s3 + $0x4] sm:$0xf] %v117
  %126 = vst [vmem:[%s3 + $0x8] sm:$0xf] %v118
  %127 = vst [vmem:[%s3 + $0xc] sm:$0xf] %v119
  // Predicated region
  $region14: #{aggregation_block.9} parent=0 // pred_check
    _
  $region15: #{aggregation_block.9} parent=0 // pred_check_branch
    %129 = sbr.rel (0) target = $region17
  $region16: #{aggregation_block.9} parent=0 // pred_region
    _
  $region17: #{aggregation_block.9} parent=0 // pred_fallthru
    _
  // Predicated region
  $region18: #{aggregation_block.9} parent=0 // pred_check
    _
  $region19: #{aggregation_block.9} parent=0 // pred_check_branch
    %131 = sbr.rel (0) target = $region21
  $region20: #{aggregation_block.9} parent=0 // pred_region
    _
  $region21: #{aggregation_block.9} parent=0 // pred_fallthru
    _

// kernel: aggregation_block.8
$region0: #{aggregation_block.8}
  #allocation0 [shape = 'u32[]', space=smem, size = 0x4, offset = 0x4, fixed_abs, tag = 'smem constant byte address 0x4 - core index']
  #allocation1 [shape = 'u32[144,128]{1,0:T(1,128)}', space=vmem, size = 0x12000, scoped, tag = 'internal scratch']
  %s0 = inlined_call_operand.vmem [shape: bf16[128,16], index: 0, kind: input, shape index: {}]
  %s1 = inlined_call_operand.vmem [shape: bf16[16,128], index: 1, kind: input, shape index: {}]
  %s2 = inlined_call_operand.vmem [shape: f32[1,128], index: 2, kind: input, shape index: {}]
  %s3 = inlined_call_operand.vmem [shape: bf16[128,128], index: 3, kind: output, shape index: {}]
  %s4 = sld [smem:[#allocation0]]
  $region22: #{aggregation_block.8} parent=0
    _
  %s6 = ssub.s32 1, %s4
  %s7 = scalar_select 0, %s6, %s4
  // Predicated region
  $region2: #{aggregation_block.8} parent=0 // pred_check
    _
  $region3: #{aggregation_block.8} parent=0 // pred_check_branch
    %9 = sbr.rel (0) target = $region5
  $region4: #{aggregation_block.8} parent=0 // pred_region
    _
  $region5: #{aggregation_block.8} parent=0 // pred_fallthru
    _
  // Predicated region
  $region6: #{aggregation_block.8} parent=0 // pred_check
    _
  $region7: #{aggregation_block.8} parent=0 // pred_check_branch
    %11 = sbr.rel (0) target = $region9
  $region8: #{aggregation_block.8} parent=0 // pred_region
    _
  $region9: #{aggregation_block.8} parent=0 // pred_fallthru
    _
  // Predicated region
  $region10: #{aggregation_block.8} parent=0 // pred_check
    _
  $region11: #{aggregation_block.8} parent=0 // pred_check_branch
    %13 = sbr.rel (0) target = $region13
  $region12: #{aggregation_block.8} parent=0 // pred_region
    _
  $region13: #{aggregation_block.8} parent=0 // pred_fallthru
    _
  %v15 = vld [vmem:[%s0] sm:$0xf]
  %v16 = vld [vmem:[%s0 + $0x4] sm:$0xf]
  %v17 = vld [vmem:[%s0 + $0x8] sm:$0xf]
  %v18 = vld [vmem:[%s0 + $0xc] sm:$0xf]
  %v19 = vld [vmem:[%s0 + $0x10] sm:$0xf]
  %v20 = vld [vmem:[%s0 + $0x14] sm:$0xf]
  %v21 = vld [vmem:[%s0 + $0x18] sm:$0xf]
  %v22 = vld [vmem:[%s0 + $0x1c] sm:$0xf]
  %v23 = vld [vmem:[%s0 + $0x20] sm:$0xf]
  %v24 = vld [vmem:[%s0 + $0x24] sm:$0xf]
  %v25 = vld [vmem:[%s0 + $0x28] sm:$0xf]
  %v26 = vld [vmem:[%s0 + $0x2c] sm:$0xf]
  %v27 = vld [vmem:[%s0 + $0x30] sm:$0xf]
  %v28 = vld [vmem:[%s0 + $0x34] sm:$0xf]
  %v29 = vld [vmem:[%s0 + $0x38] sm:$0xf]
  %v30 = vld [vmem:[%s0 + $0x3c] sm:$0xf]
  %v31 = vld [vmem:[%s1] sm:$0xf]
  %v32 = vld [vmem:[%s1 + $0x4] sm:$0xf]
  %v33 = vld [vmem:[%s2] sm:$0x1]
  %v35 = vlaneseq
  %v36 = vshrl.u32 %v35, 7
  %v37 = vsub.s32 0, %v36
  %v38 = vrot.slane %v33, %v37
  %v56 = vunpack.c.l.b16 %v15
  %v57 = vunpack.c.l.b16 %v16
  %v58 = vunpack.c.l.b16 %v17
  %v59 = vunpack.c.l.b16 %v18
  %v60 = vunpack.c.l.b16 %v19
  %v61 = vunpack.c.l.b16 %v20
  %v62 = vunpack.c.l.b16 %v21
  %v63 = vunpack.c.l.b16 %v22
  %v64 = vunpack.c.l.b16 %v23
  %v65 = vunpack.c.l.b16 %v24
  %v66 = vunpack.c.l.b16 %v25
  %v67 = vunpack.c.l.b16 %v26
  %v68 = vunpack.c.l.b16 %v27
  %v69 = vunpack.c.l.b16 %v28
  %v70 = vunpack.c.l.b16 %v29
  %v71 = vunpack.c.l.b16 %v30
  %v72 = vpack.c.b16 %v57, %v56
  %v73 = vpack.c.b16 %v59, %v58
  %v74 = vpack.c.b16 %v61, %v60
  %v75 = vpack.c.b16 %v63, %v62
  %v76 = vpack.c.b16 %v65, %v64
  %v77 = vpack.c.b16 %v67, %v66
  %v78 = vpack.c.b16 %v69, %v68
  %v79 = vpack.c.b16 %v71, %v70
  %v82 = vunpack.c.l.b16 %v31
  %v83 = vunpack.c.l.b16 %v32
  %v84 = vpack.c.b16 %v83, %v82
  %vm86 = vcmask 130048
  %v88 = vsel %vm86, %v72, 0
  %v91 = vsel %vm86, %v73, 0
  %v94 = vsel %vm86, %v74, 0
  %v97 = vsel %vm86, %v75, 0
  %v100 = vsel %vm86, %v76, 0
  %v103 = vsel %vm86, %v77, 0
  %v106 = vsel %vm86, %v78, 0
  %v109 = vsel %vm86, %v79, 0
  %111 = vmatprep.subr.bf16.mxu0 0
  %112 = vmatpush1.bf16.msra.mxu0 0
  %113 = vmatprep.subr.bf16.mxu0 0
  %114 = vmatpush1.bf16.msra.mxu0 0
  %115 = vmatprep.subr.bf16.mxu0 0
  %116 = vmatpush1.bf16.msra.mxu0 0
  %117 = vmatprep.subr.bf16.mxu0 0
  %118 = vmatpush1.bf16.msra.mxu0 0
  %119 = vmatprep.subr.bf16.mxu0 0
  %120 = vmatpush1.bf16.msra.mxu0 0
  %121 = vmatprep.subr.bf16.mxu0 0
  %122 = vmatpush1.bf16.msra.mxu0 0
  %123 = vmatprep.subr.bf16.mxu0 0
  %124 = vmatpush1.bf16.msra.mxu0 0
  %125 = vmatprep.subr.bf16.mxu0 0
  %126 = vmatpush1.bf16.msra.mxu0 %v84
  %127 = vmatprep.subr.bf16.mxu0 0
  %128 = vmatpush2.bf16.msra.mxu0 0
  %129 = vmatprep.subr.bf16.mxu0 0
  %130 = vmatpush2.bf16.msra.mxu0 0
  %131 = vmatprep.subr.bf16.mxu0 0
  %132 = vmatpush2.bf16.msra.mxu0 0
  %133 = vmatprep.subr.bf16.mxu0 0
  %134 = vmatpush2.bf16.msra.mxu0 0
  %135 = vmatprep.subr.bf16.mxu0 0
  %136 = vmatpush2.bf16.msra.mxu0 0
  %137 = vmatprep.subr.bf16.mxu0 0
  %138 = vmatpush2.bf16.msra.mxu0 0
  %139 = vmatprep.subr.bf16.mxu0 0
  %140 = vmatpush2.bf16.msra.mxu0 0
  %141 = vmatprep.subr.bf16.mxu0 0
  %142 = vmatpush2.bf16.msra.mxu0 0
  %143 = vmatprep.mubr.bf16.mxu0 0
  %144 = vmatmul.mubr.bf16.gmra.mxu0 %v88
  %v145 = vpop.f32.mrf.mxu0
  %v146 = vadd.f32 %v38, %v145
  %v147 = vpop.f32.mrf.mxu0
  %v148 = vpop.f32.mrf.mxu0
  %v149 = vadd.f32 %v38, %v148
  %v150 = vpop.f32.mrf.mxu0
  %151 = vmatprep.mubr.bf16.mxu0 0
  %152 = vmatmul.mubr.bf16.gmra.mxu0 %v91
  %v153 = vpop.f32.mrf.mxu0
  %v154 = vadd.f32 %v38, %v153
  %v155 = vpop.f32.mrf.mxu0
  %v156 = vpop.f32.mrf.mxu0
  %v157 = vadd.f32 %v38, %v156
  %v158 = vpop.f32.mrf.mxu0
  %159 = vmatprep.mubr.bf16.mxu0 0
  %160 = vmatmul.mubr.bf16.gmra.mxu0 %v94
  %v161 = vpop.f32.mrf.mxu0
  %v162 = vadd.f32 %v38, %v161
  %v163 = vpop.f32.mrf.mxu0
  %v164 = vpop.f32.mrf.mxu0
  %v165 = vadd.f32 %v38, %v164
  %v166 = vpop.f32.mrf.mxu0
  %167 = vmatprep.mubr.bf16.mxu0 0
  %168 = vmatmul.mubr.bf16.gmra.mxu0 %v97
  %v169 = vpop.f32.mrf.mxu0
  %v170 = vadd.f32 %v38, %v169
  %v171 = vpop.f32.mrf.mxu0
  %v172 = vpop.f32.mrf.mxu0
  %v173 = vadd.f32 %v38, %v172
  %v174 = vpop.f32.mrf.mxu0
  %175 = vmatprep.mubr.bf16.mxu0 0
  %176 = vmatmul.mubr.bf16.gmra.mxu0 %v100
  %v177 = vpop.f32.mrf.mxu0
  %v178 = vadd.f32 %v38, %v177
  %v179 = vpop.f32.mrf.mxu0
  %v180 = vpop.f32.mrf.mxu0
  %v181 = vadd.f32 %v38, %v180
  %v182 = vpop.f32.mrf.mxu0
  %183 = vmatprep.mubr.bf16.mxu0 0
  %184 = vmatmul.mubr.bf16.gmra.mxu0 %v103
  %v185 = vpop.f32.mrf.mxu0
  %v186 = vadd.f32 %v38, %v185
  %v187 = vpop.f32.mrf.mxu0
  %v188 = vpop.f32.mrf.mxu0
  %v189 = vadd.f32 %v38, %v188
  %v190 = vpop.f32.mrf.mxu0
  %191 = vmatprep.mubr.bf16.mxu0 0
  %192 = vmatmul.mubr.bf16.gmra.mxu0 %v106
  %v193 = vpop.f32.mrf.mxu0
  %v194 = vadd.f32 %v38, %v193
  %v195 = vpop.f32.mrf.mxu0
  %v196 = vpop.f32.mrf.mxu0
  %v197 = vadd.f32 %v38, %v196
  %v198 = vpop.f32.mrf.mxu0
  %199 = vmatprep.mubr.bf16.mxu0 0
  %200 = vmatmul.mubr.bf16.gmra.mxu0 %v109
  %v201 = vpop.f32.mrf.mxu0
  %v202 = vadd.f32 %v38, %v201
  %v203 = vpop.f32.mrf.mxu0
  %v204 = vpop.f32.mrf.mxu0
  %v205 = vadd.f32 %v38, %v204
  %v206 = vpop.f32.mrf.mxu0
  %207 = vdwg.mxu0
  %v208 = vpack.c.bf16 %v149, %v146
  %v209 = vpack.c.bf16 %v157, %v154
  %v210 = vpack.c.bf16 %v165, %v162
  %v211 = vpack.c.bf16 %v173, %v170
  %v212 = vpack.c.bf16 %v181, %v178
  %v213 = vpack.c.bf16 %v189, %v186
  %v214 = vpack.c.bf16 %v197, %v194
  %v215 = vpack.c.bf16 %v205, %v202
  %v224 = vunpack.c.l.b16 %v208
  %v225 = vunpack.c.h.b16 %v208
  %v226 = vunpack.c.l.b16 %v209
  %v227 = vunpack.c.h.b16 %v209
  %v228 = vunpack.c.l.b16 %v210
  %v229 = vunpack.c.h.b16 %v210
  %v230 = vunpack.c.l.b16 %v211
  %v231 = vunpack.c.h.b16 %v211
  %v232 = vunpack.c.l.b16 %v212
  %v233 = vunpack.c.h.b16 %v212
  %v234 = vunpack.c.l.b16 %v213
  %v235 = vunpack.c.h.b16 %v213
  %v236 = vunpack.c.l.b16 %v214
  %v237 = vunpack.c.h.b16 %v214
  %v238 = vunpack.c.l.b16 %v215
  %v239 = vunpack.c.h.b16 %v215
  %v240 = vpack.c.b16 %v224, %v224
  %v241 = vpack.c.b16 %v225, %v225
  %v242 = vpack.c.b16 %v226, %v226
  %v243 = vpack.c.b16 %v227, %v227
  %v244 = vpack.c.b16 %v228, %v228
  %v245 = vpack.c.b16 %v229, %v229
  %v246 = vpack.c.b16 %v230, %v230
  %v247 = vpack.c.b16 %v231, %v231
  %v248 = vpack.c.b16 %v232, %v232
  %v249 = vpack.c.b16 %v233, %v233
  %v250 = vpack.c.b16 %v234, %v234
  %v251 = vpack.c.b16 %v235, %v235
  %v252 = vpack.c.b16 %v236, %v236
  %v253 = vpack.c.b16 %v237, %v237
  %v254 = vpack.c.b16 %v238, %v238
  %v255 = vpack.c.b16 %v239, %v239
  %272 = vst [vmem:[%s3] sm:$0xf] %v240
  %273 = vst [vmem:[%s3 + $0x4] sm:$0xf] %v241
  %274 = vst [vmem:[%s3 + $0x8] sm:$0xf] %v242
  %275 = vst [vmem:[%s3 + $0xc] sm:$0xf] %v243
  %276 = vst [vmem:[%s3 + $0x10] sm:$0xf] %v244
  %277 = vst [vmem:[%s3 + $0x14] sm:$0xf] %v245
  %278 = vst [vmem:[%s3 + $0x18] sm:$0xf] %v246
  %279 = vst [vmem:[%s3 + $0x1c] sm:$0xf] %v247
  %280 = vst [vmem:[%s3 + $0x20] sm:$0xf] %v248
  %281 = vst [vmem:[%s3 + $0x24] sm:$0xf] %v249
  %282 = vst [vmem:[%s3 + $0x28] sm:$0xf] %v250
  %283 = vst [vmem:[%s3 + $0x2c] sm:$0xf] %v251
  %284 = vst [vmem:[%s3 + $0x30] sm:$0xf] %v252
  %285 = vst [vmem:[%s3 + $0x34] sm:$0xf] %v253
  %286 = vst [vmem:[%s3 + $0x38] sm:$0xf] %v254
  %287 = vst [vmem:[%s3 + $0x3c] sm:$0xf] %v255
  // Predicated region
  $region14: #{aggregation_block.8} parent=0 // pred_check
    _
  $region15: #{aggregation_block.8} parent=0 // pred_check_branch
    %289 = sbr.rel (0) target = $region17
  $region16: #{aggregation_block.8} parent=0 // pred_region
    _
  $region17: #{aggregation_block.8} parent=0 // pred_fallthru
    _
  // Predicated region
  $region18: #{aggregation_block.8} parent=0 // pred_check
    _
  $region19: #{aggregation_block.8} parent=0 // pred_check_branch
    %291 = sbr.rel (0) target = $region21
  $region20: #{aggregation_block.8} parent=0 // pred_region
    _
  $region21: #{aggregation_block.8} parent=0 // pred_fallthru
    _

// kernel: aggregation_block.11
$region0: #{aggregation_block.11}
  #allocation0 [shape = 'u32[]', space=smem, size = 0x4, offset = 0x4, fixed_abs, tag = 'smem constant byte address 0x4 - core index']
  #allocation1 [shape = 'u32[144,128]{1,0:T(1,128)}', space=vmem, size = 0x12000, scoped, tag = 'internal scratch']
  #allocation2 [shape = 'bf16[2,2,8,128]{3,2,1,0:T(8,128)(2,1)}', space=vmem, size = 0x2000, scoped, tag = 'scratch operand']
  #allocation3 [shape = 's32[4]{0}', space=sflag, size = 0x10, scoped, tag = 'scratch operand']
  #allocation4 [shape = 's32[]', space=sflag, size = 0x4, offset = 0, fixed_abs, tag = 'sflag constant byte address 0x0 - dummy sync flag']
  #allocation5 [shape = 's32[]', space=sflag, size = 0x4, offset = 0, fixed_abs, tag = 'sflag constant byte address 0x0 - dummy sync flag']
  #allocation6 [shape = 's32[]', space=sflag, size = 0x4, offset = 0, fixed_abs, tag = 'sflag constant byte address 0x0 - dummy sync flag']
  #allocation7 [shape = 's32[]', space=sflag, size = 0x4, offset = 0, fixed_abs, tag = 'sflag constant byte address 0x0 - dummy sync flag']
  %s0 = inlined_call_operand.vmem [shape: bf16[2,8,8,128], index: 0, kind: input, shape index: {}, may-alias: {0,2}]
  %s1 = inlined_call_operand.vmem [shape: bf16[2,8,8,128], index: 1, kind: input, shape index: {}, may-alias: {1,3}]
  %s2 = inlined_call_operand.vmem [shape: bf16[2,8,8,128], index: 2, kind: input, shape index: {}, may-alias: {0,2}]
  %s3 = inlined_call_operand.vmem [shape: bf16[2,8,8,128], index: 3, kind: input, shape index: {}, may-alias: {1,3}]
  %s4 = inlined_call_operand.vmem [shape: bf16[3,384,128], index: 4, kind: input, shape index: {}]
  %s5 = inlined_call_operand.vmem [shape: f32[1,1,128], index: 5, kind: input, shape index: {}]
  %s6 = inlined_call_operand.vmem [shape: f32[1,1,128], index: 6, kind: input, shape index: {}]
  %s7 = inlined_call_operand.vmem [shape: bf16[2,8,8,128], index: 7, kind: output, shape index: {}]
  %s8 = sld [smem:[#allocation0]]
  $region189: #{aggregation_block.11} parent=0
    _
  %s10 = ssub.s32 1, %s8
  %s11 = scalar_select 0, %s10, %s8
  loop: start=0, step=1, limit=4
  $region2: #{aggregation_block.11} parent=0 // loop_pre_header
    _
  $region3: #{aggregation_block.11} parent=0 // loop_header
    %s13 = sphi 0, %s17
    %p14 = scmp.ge.s32.totalorder %s13, 4
    %s20 = sphi 0, %s32
    %s21 = sphi 0, %s28
    %s22 = sphi 0, %s20
    %s23 = sphi 0, %s21
    %s24 = sphi 0, %s22
    %s25 = sphi 0, %s23
    %s37 = sphi 0, %s39
    %s40 = sphi 0, %s37
    %s41 = sphi 0, %s40
    %s57 = sphi 0, %s41
    %s65 = sphi 0, %s67
    %s68 = sphi 0, %s65
    %s69 = sphi 0, %s68
    %s85 = sphi 0, %s69
    %s89 = sphi 0, %s89
    %s91 = sphi 0, %s89
    %s92 = sphi 0, %s91
    %s106 = sphi 0, %s92
    %s110 = sphi 0, %s110
    %s112 = sphi 0, %s110
    %s113 = sphi 0, %s112
    %s127 = sphi 0, %s113
    %s131 = sphi 0, %s131
    %s133 = sphi 0, %s131
    %s134 = sphi 0, %s133
    %s148 = sphi 0, %s134
    %s156 = sphi 0, %s158
    %s159 = sphi 0, %s156
    %s160 = sphi 0, %s159
    %s176 = sphi 0, %s160
  $region4: #{aggregation_block.11} parent=0 // loop_header_branch
    %16 = sbr.rel (%p14) target = $region8
  $region5: #{aggregation_block.11} parent=0 // loop_body
    %s18 = ssub.s32 %s13, 1
    %s19 = ssub.s32 %s13, 2
    %s26 = sadd.s32 1, %s21
    %p27 = scmp.ge.s32.totalorder %s26, 1
    %s28 = scalar_select %p27, 0, %s26
    %s29 = sadd.s32 1, %s20
    %s30 = scalar_select %p27, %s29, %s20
    %p31 = scmp.ge.s32.totalorder %s30, 2
    %s32 = scalar_select %p31, 0, %s30
    %s33 = ssub.s32 %s20, %s32
    %s34 = ssub.s32 %s21, %s28
    %s35 = sor.u32 %s33, %s34
    %p36 = scmp.eq.s32.totalorder %s35, 0
    %s38 = sadd.s32 %s37, 1
    %s39 = scalar_select %p36, %s37, %s38
    %p42 = pneg %p36
    %p43 = scmp.eq.s32.totalorder %s13, 1
    %p44 = por %p42, %p43
    %p45 = scmp.ne.s32.totalorder %s37, %s40
    %p46 = scmp.eq.s32.totalorder %s13, 0
    %p47 = por %p45, %p46
    %p48 = scmp.ne.s32.totalorder %s37, %s40
    %p49 = scmp.eq.s32.totalorder %s18, 1
    %p50 = por %p48, %p49
    %p51 = scmp.ne.s32.totalorder %s40, %s41
    %p52 = scmp.eq.s32.totalorder %s18, 0
    %p53 = por %p51, %p52
    %p54 = scmp.ne.s32.totalorder %s40, %s41
    %p55 = scmp.eq.s32.totalorder %s19, 1
    %p56 = por %p54, %p55
    %p58 = scmp.ne.s32.totalorder %s41, %s57
    %p59 = scmp.eq.s32.totalorder %s19, 0
    %p60 = por %p58, %p59
    %s61 = ssub.s32 %s20, %s32
    %s62 = ssub.s32 %s21, %s28
    %s63 = sor.u32 %s61, %s62
    %p64 = scmp.eq.s32.totalorder %s63, 0
    %s66 = sadd.s32 %s65, 1
    %s67 = scalar_select %p64, %s65, %s66
    %p70 = pneg %p64
    %p71 = scmp.eq.s32.totalorder %s13, 1
    %p72 = por %p70, %p71
    %p73 = scmp.ne.s32.totalorder %s65, %s68
    %p74 = scmp.eq.s32.totalorder %s13, 0
    %p75 = por %p73, %p74
    %p76 = scmp.ne.s32.totalorder %s65, %s68
    %p77 = scmp.eq.s32.totalorder %s18, 1
    %p78 = por %p76, %p77
    %p79 = scmp.ne.s32.totalorder %s68, %s69
    %p80 = scmp.eq.s32.totalorder %s18, 0
    %p81 = por %p79, %p80
    %p82 = scmp.ne.s32.totalorder %s68, %s69
    %p83 = scmp.eq.s32.totalorder %s19, 1
    %p84 = por %p82, %p83
    %p86 = scmp.ne.s32.totalorder %s69, %s85
    %p87 = scmp.eq.s32.totalorder %s19, 0
    %p88 = por %p86, %p87
    %s90 = sadd.s32 %s89, 1
    %p93 = scmp.eq.s32.totalorder %s13, 1
    %p94 = scmp.ne.s32.totalorder %s89, %s91
    %p95 = scmp.eq.s32.totalorder %s13, 0
    %p96 = por %p94, %p95
    %p97 = scmp.ne.s32.totalorder %s89, %s91
    %p98 = scmp.eq.s32.totalorder %s18, 1
    %p99 = por %p97, %p98
    %p100 = scmp.ne.s32.totalorder %s91, %s92
    %p101 = scmp.eq.s32.totalorder %s18, 0
    %p102 = por %p100, %p101
    %p103 = scmp.ne.s32.totalorder %s91, %s92
    %p104 = scmp.eq.s32.totalorder %s19, 1
    %p105 = por %p103, %p104
    %p107 = scmp.ne.s32.totalorder %s92, %s106
    %p108 = scmp.eq.s32.totalorder %s19, 0
    %p109 = por %p107, %p108
    %s111 = sadd.s32 %s110, 1
    %p114 = scmp.eq.s32.totalorder %s13, 1
    %p115 = scmp.ne.s32.totalorder %s110, %s112
    %p116 = scmp.eq.s32.totalorder %s13, 0
    %p117 = por %p115, %p116
    %p118 = scmp.ne.s32.totalorder %s110, %s112
    %p119 = scmp.eq.s32.totalorder %s18, 1
    %p120 = por %p118, %p119
    %p121 = scmp.ne.s32.totalorder %s112, %s113
    %p122 = scmp.eq.s32.totalorder %s18, 0
    %p123 = por %p121, %p122
    %p124 = scmp.ne.s32.totalorder %s112, %s113
    %p125 = scmp.eq.s32.totalorder %s19, 1
    %p126 = por %p124, %p125
    %p128 = scmp.ne.s32.totalorder %s113, %s127
    %p129 = scmp.eq.s32.totalorder %s19, 0
    %p130 = por %p128, %p129
    %s132 = sadd.s32 %s131, 1
    %p135 = scmp.eq.s32.totalorder %s13, 1
    %p136 = scmp.ne.s32.totalorder %s131, %s133
    %p137 = scmp.eq.s32.totalorder %s13, 0
    %p138 = por %p136, %p137
    %p139 = scmp.ne.s32.totalorder %s131, %s133
    %p140 = scmp.eq.s32.totalorder %s18, 1
    %p141 = por %p139, %p140
    %p142 = scmp.ne.s32.totalorder %s133, %s134
    %p143 = scmp.eq.s32.totalorder %s18, 0
    %p144 = por %p142, %p143
    %p145 = scmp.ne.s32.totalorder %s133, %s134
    %p146 = scmp.eq.s32.totalorder %s19, 1
    %p147 = por %p145, %p146
    %p149 = scmp.ne.s32.totalorder %s134, %s148
    %p150 = scmp.eq.s32.totalorder %s19, 0
    %p151 = por %p149, %p150
    %s152 = ssub.s32 %s20, %s32
    %s153 = ssub.s32 %s21, %s28
    %s154 = sor.u32 %s152, %s153
    %p155 = scmp.eq.s32.totalorder %s154, 0
    %s157 = sadd.s32 %s156, 1
    %s158 = scalar_select %p155, %s156, %s157
    %p161 = pneg %p155
    %p162 = scmp.eq.s32.totalorder %s13, 1
    %p163 = por %p161, %p162
    %p164 = scmp.ne.s32.totalorder %s156, %s159
    %p165 = scmp.eq.s32.totalorder %s13, 0
    %p166 = por %p164, %p165
    %p167 = scmp.ne.s32.totalorder %s156, %s159
    %p168 = scmp.eq.s32.totalorder %s18, 1
    %p169 = por %p167, %p168
    %p170 = scmp.ne.s32.totalorder %s159, %s160
    %p171 = scmp.eq.s32.totalorder %s18, 0
    %p172 = por %p170, %p171
    %p173 = scmp.ne.s32.totalorder %s159, %s160
    %p174 = scmp.eq.s32.totalorder %s19, 1
    %p175 = por %p173, %p174
    %p177 = scmp.ne.s32.totalorder %s160, %s176
    %p178 = scmp.eq.s32.totalorder %s19, 0
    %p179 = por %p177, %p178
    %p180 = scmp.le.s32.totalorder 1, %s13
    %p181 = scmp.lt.s32.totalorder %s13, 3
    %p182 = pnand %p180, %p181
    %p183 = pneg %p182
    // Predicated region
    $region9: #{aggregation_block.11} parent=5 // pred_check
      _
    $region10: #{aggregation_block.11} parent=5 // pred_check_branch
      %185 = sbr.rel (%p182) target = $region12
    $region11: #{aggregation_block.11} parent=5 // pred_region
      %s186 = ssub.s32 %s13, 1
      // Predicated region
      $region13: #{aggregation_block.11} parent=11 // pred_check
        %p187 = pneg %p102
      $region14: #{aggregation_block.11} parent=11 // pred_check_branch
        %189 = sbr.rel (%p187) target = $region16
      $region15: #{aggregation_block.11} parent=11 // pred_region
        _
      $region16: #{aggregation_block.11} parent=11 // pred_fallthru
        _
      // Predicated region
      $region17: #{aggregation_block.11} parent=11 // pred_check
        %p190 = pneg %p123
      $region18: #{aggregation_block.11} parent=11 // pred_check_branch
        %192 = sbr.rel (%p190) target = $region20
      $region19: #{aggregation_block.11} parent=11 // pred_region
        _
      $region20: #{aggregation_block.11} parent=11 // pred_fallthru
        _
      // Predicated region
      $region21: #{aggregation_block.11} parent=11 // pred_check
        %p193 = pneg %p144
      $region22: #{aggregation_block.11} parent=11 // pred_check_branch
        %195 = sbr.rel (%p193) target = $region24
      $region23: #{aggregation_block.11} parent=11 // pred_region
        _
      $region24: #{aggregation_block.11} parent=11 // pred_fallthru
        _
    $region12: #{aggregation_block.11} parent=5 // pred_fallthru
      _
    %p196 = scmp.lt.s32.totalorder %s13, 2
    // Predicated region
    $region25: #{aggregation_block.11} parent=5 // pred_check
      %p197 = pneg %p196
    $region26: #{aggregation_block.11} parent=5 // pred_check_branch
      %199 = sbr.rel (%p197) target = $region28
    $region27: #{aggregation_block.11} parent=5 // pred_region
      // Predicated region
      $region29: #{aggregation_block.11} parent=27 // pred_check
        %p200 = pneg %p47
      $region30: #{aggregation_block.11} parent=27 // pred_check_branch
        %202 = sbr.rel (%p200) target = $region32
      $region31: #{aggregation_block.11} parent=27 // pred_region
        %s203 = smul.u32 8, %s21
        %p204 = scmp.lt.s32.totalorder %s20, 1
        %s205 = scalar_select %p204, %s20, 1
        %p206 = scmp.lt.s32.totalorder %s203, 7
        %s207 = scalar_select %p206, %s203, 7
        %s208 = smul.addr %s205, 8
        %s209 = sadd.s32 %s207, %s208
        %s210 = smul.addr %s209, 4
        %s211 = scalar_lea.vmem %s0, %s210
        %s212 = smul.u32 8, %s21
      $region32: #{aggregation_block.11} parent=27 // pred_fallthru
        _
      // Predicated region
      $region33: #{aggregation_block.11} parent=27 // pred_check
        %p213 = pneg %p75
      $region34: #{aggregation_block.11} parent=27 // pred_check_branch
        %215 = sbr.rel (%p213) target = $region36
      $region35: #{aggregation_block.11} parent=27 // pred_region
        %s216 = smul.u32 8, %s21
        %p217 = scmp.lt.s32.totalorder %s20, 1
        %s218 = scalar_select %p217, %s20, 1
        %p219 = scmp.lt.s32.totalorder %s216, 7
        %s220 = scalar_select %p219, %s216, 7
        %s221 = smul.addr %s218, 8
        %s222 = sadd.s32 %s220, %s221
        %s223 = smul.addr %s222, 4
        %s224 = scalar_lea.vmem %s1, %s223
        %s225 = smul.u32 8, %s21
      $region36: #{aggregation_block.11} parent=27 // pred_fallthru
        _
    $region28: #{aggregation_block.11} parent=5 // pred_fallthru
      _
    %p226 = scmp.le.s32.totalorder 1, %s13
    %p227 = scmp.lt.s32.totalorder %s13, 3
    %p228 = pnand %p226, %p227
    %p229 = pneg %p228
    // Predicated region
    $region37: #{aggregation_block.11} parent=5 // pred_check
      _
    $region38: #{aggregation_block.11} parent=5 // pred_check_branch
      %231 = sbr.rel (%p228) target = $region40
    $region39: #{aggregation_block.11} parent=5 // pred_region
      %s232 = ssub.s32 %s13, 1
      %s233 = smul.u32 8, %s23
      %p234 = scmp.lt.s32.totalorder %s22, 1
      %s235 = scalar_select %p234, %s22, 1
      %p236 = scmp.lt.s32.totalorder %s233, 7
      %s237 = scalar_select %p236, %s233, 7
      %s238 = smul.addr %s235, 8
      %s239 = sadd.s32 %s237, %s238
      %s240 = smul.addr %s239, 4
      %s241 = scalar_lea.vmem %s0, %s240
      %p242 = pneg %p53
      %p243 = pneg %p50
      %s244 = smul.u32 8, %s23
      %p245 = scmp.lt.s32.totalorder %s22, 1
      %s246 = scalar_select %p245, %s22, 1
      %p247 = scmp.lt.s32.totalorder %s244, 7
      %s248 = scalar_select %p247, %s244, 7
      %s249 = smul.addr %s246, 8
      %s250 = sadd.s32 %s248, %s249
      %s251 = smul.addr %s250, 4
      %s252 = scalar_lea.vmem %s1, %s251
      %p253 = pneg %p81
      %p254 = pneg %p78
      %p255 = pneg %p102
      %p256 = pneg %p99
      %p257 = pneg %p123
      %p258 = pneg %p120
      %p259 = pneg %p144
      %p260 = pneg %p141
      %p261 = pneg %p172
      %p262 = pneg %p169
      %s263 = smul.u32 8, %s23
      %p264 = scmp.lt.s32.totalorder %s22, 1
      %s265 = scalar_select %p264, %s22, 1
      %p266 = scmp.lt.s32.totalorder %s263, 7
      %s267 = scalar_select %p266, %s263, 7
      %s268 = smul.addr %s265, 8
      %s269 = sadd.s32 %s267, %s268
      %s270 = smul.addr %s269, 4
      %s271 = scalar_lea.vmem %s7, %s270
      %s272 = smul.u32 8, %s23
      %p273 = scmp.lt.s32.totalorder %s22, 1
      %s274 = scalar_select %p273, %s22, 1
      %p275 = scmp.lt.s32.totalorder %s272, 7
      %s276 = scalar_select %p275, %s272, 7
      %s277 = smul.addr %s274, 8
      %s278 = sadd.s32 %s276, %s277
      %s279 = smul.addr %s278, 4
      %s280 = scalar_lea.vmem %s0, %s279
      %s281 = smul.u32 8, %s23
      %s282 = smul.u32 8, %s23
      %p283 = scmp.lt.s32.totalorder %s22, 1
      %s284 = scalar_select %p283, %s22, 1
      %p285 = scmp.lt.s32.totalorder %s282, 7
      %s286 = scalar_select %p285, %s282, 7
      %s287 = smul.addr %s284, 8
      %s288 = sadd.s32 %s286, %s287
      %s289 = smul.addr %s288, 4
      %s290 = scalar_lea.vmem %s1, %s289
      %s291 = smul.u32 8, %s23
      %s292 = smul.u32 8, %s23
      %p293 = scmp.lt.s32.totalorder %s22, 1
      %s294 = scalar_select %p293, %s22, 1
      %p295 = scmp.lt.s32.totalorder %s292, 7
      %s296 = scalar_select %p295, %s292, 7
      %s297 = smul.addr %s294, 8
      %s298 = sadd.s32 %s296, %s297
      %s299 = smul.addr %s298, 4
      %s300 = scalar_lea.vmem %s7, %s299
      %s301 = smul.u32 8, %s23
      %p303 = scmp.gt.s32.totalorder %s23, 0
      // Predicated region
      $region41: #{aggregation_block.11} parent=39 // pred_check
        %p304 = pneg %p303
      $region42: #{aggregation_block.11} parent=39 // pred_check_branch
        %306 = sbr.rel (%p304) target = $region44
      $region43: #{aggregation_block.11} parent=39 // pred_region
        %s307 = smul.u32 %s23, 8
        %s308 = ssub.s32 %s307, 1
        %s309 = smul.u32 %s22, 8
        %s310 = sadd.s32 %s308, %s309
        %s311 = smul.addr %s310, 4
        %s312 = scalar_lea.vmem %s2, %s311
        %p314 = scmp.lt.u32.totalorder 4, 8
        %p315 = pneg %p314
        // Predicated region
        $region45: #{aggregation_block.11} parent=43 // pred_check
          _
        $region46: #{aggregation_block.11} parent=43 // pred_check_branch
          %317 = sbr.rel (%p314) target = $region48
        $region47: #{aggregation_block.11} parent=43 // pred_region
          %s333 = sand.u32 4, 7
          %p334 = scmp.eq.s32.totalorder %s333, 0
          %p335 = pneg %p334
          // Predicated region
          $region60: #{aggregation_block.11} parent=47 // pred_check
            _
          $region61: #{aggregation_block.11} parent=47 // pred_check_branch
            %337 = sbr.rel (%p334) target = $region63
          $region62: #{aggregation_block.11} parent=47 // pred_region
            %s338 = sand.u32 4, 7
            %s339 = ssub.s32 4, %s338
            %s340 = scalar_lea.vmem %s312, %s339
            %s341 = ssub.s32 4, %s338
            %s342 = scalar_lea.vmem [#allocation2], %s341
            %s343 = sshll.u32 1, %s338
            %s344 = ssub.s32 %s343, 1
            loop: start=0, step=1, limit=1
            $region64: #{aggregation_block.11} parent=62 // loop_pre_header
              _
            $region65: #{aggregation_block.11} parent=62 // loop_header
              %s346 = sphi 0, %s350
              %p347 = scmp.ge.s32.totalorder %s346, 1
              %s351 = sphi %s340, %s340
              %s352 = sphi %s342, %s342
            $region66: #{aggregation_block.11} parent=62 // loop_header_branch
              %349 = sbr.rel (%p347) target = $region70
            $region67: #{aggregation_block.11} parent=62 // loop_body
              %v353 = vld [vmem:[%s351] sm:%s344]
              %354 = vst [vmem:[%s352] sm:%s344] %v353
            $region68: #{aggregation_block.11} parent=62 // loop_footer
              %s350 = sadd.s32 1, %s346
            $region69: #{aggregation_block.11} parent=62 // loop_footer_branch
              %345 = sbr.rel target = $region65
            $region70: #{aggregation_block.11} parent=62 // loop_exit
              _
          $region63: #{aggregation_block.11} parent=47 // pred_fallthru
            _
        $region48: #{aggregation_block.11} parent=43 // pred_fallthru
          _
        // Predicated region
        $region49: #{aggregation_block.11} parent=43 // pred_check
          %p318 = pneg %p314
        $region50: #{aggregation_block.11} parent=43 // pred_check_branch
          %320 = sbr.rel (%p318) target = $region52
        $region51: #{aggregation_block.11} parent=43 // pred_region
          %s321 = sshll.u32 1, 4
          %s322 = ssub.s32 %s321, 1
          loop: start=0, step=1, limit=1
          $region53: #{aggregation_block.11} parent=51 // loop_pre_header
            _
          $region54: #{aggregation_block.11} parent=51 // loop_header
            %s324 = sphi 0, %s328
            %p325 = scmp.ge.s32.totalorder %s324, 1
            %s329 = sphi %s312, %s312
            %s330 = sphi [#allocation2], [#allocation2]
          $region55: #{aggregation_block.11} parent=51 // loop_header_branch
            %327 = sbr.rel (%p325) target = $region59
          $region56: #{aggregation_block.11} parent=51 // loop_body
            %v331 = vld [vmem:[%s329] sm:%s322]
            %332 = vst [vmem:[%s330] sm:%s322] %v331
          $region57: #{aggregation_block.11} parent=51 // loop_footer
            %s328 = sadd.s32 1, %s324
          $region58: #{aggregation_block.11} parent=51 // loop_footer_branch
            %323 = sbr.rel target = $region54
          $region59: #{aggregation_block.11} parent=51 // loop_exit
            _
        $region52: #{aggregation_block.11} parent=43 // pred_fallthru
          _
        // Predicated region
        $region71: #{aggregation_block.11} parent=43 // pred_check
          _
        $region72: #{aggregation_block.11} parent=43 // pred_check_branch
          %357 = sbr.rel (0) target = $region74
        $region73: #{aggregation_block.11} parent=43 // pred_region
          %358 = vsyncadd [#allocation3], 64
        $region74: #{aggregation_block.11} parent=43 // pred_fallthru
          _
        %s359 = smul.addr %s310, 4
        %s360 = scalar_lea.vmem %s3, %s359
        %s361 = scalar_lea.vmem [#allocation2], 4
        %s362 = scalar_lea.sflag [#allocation3], 1
        %p364 = scmp.lt.u32.totalorder 4, 8
        %p365 = pneg %p364
        // Predicated region
        $region75: #{aggregation_block.11} parent=43 // pred_check
          _
        $region76: #{aggregation_block.11} parent=43 // pred_check_branch
          %367 = sbr.rel (%p364) target = $region78
        $region77: #{aggregation_block.11} parent=43 // pred_region
          %s383 = sand.u32 4, 7
          %p384 = scmp.eq.s32.totalorder %s383, 0
          %p385 = pneg %p384
          // Predicated region
          $region90: #{aggregation_block.11} parent=77 // pred_check
            _
          $region91: #{aggregation_block.11} parent=77 // pred_check_branch
            %387 = sbr.rel (%p384) target = $region93
          $region92: #{aggregation_block.11} parent=77 // pred_region
            %s388 = sand.u32 4, 7
            %s389 = ssub.s32 4, %s388
            %s390 = scalar_lea.vmem %s360, %s389
            %s391 = ssub.s32 4, %s388
            %s392 = scalar_lea.vmem %s361, %s391 [#allocation2]
            %s393 = sshll.u32 1, %s388
            %s394 = ssub.s32 %s393, 1
            loop: start=0, step=1, limit=1
            $region94: #{aggregation_block.11} parent=92 // loop_pre_header
              _
            $region95: #{aggregation_block.11} parent=92 // loop_header
              %s396 = sphi 0, %s400
              %p397 = scmp.ge.s32.totalorder %s396, 1
              %s401 = sphi %s390, %s390
              %s402 = sphi %s392, %s392
            $region96: #{aggregation_block.11} parent=92 // loop_header_branch
              %399 = sbr.rel (%p397) target = $region100
            $region97: #{aggregation_block.11} parent=92 // loop_body
              %v403 = vld [vmem:[%s401] sm:%s394]
              %404 = vst [vmem:[%s402] sm:%s394] %v403
            $region98: #{aggregation_block.11} parent=92 // loop_footer
              %s400 = sadd.s32 1, %s396
            $region99: #{aggregation_block.11} parent=92 // loop_footer_branch
              %395 = sbr.rel target = $region95
            $region100: #{aggregation_block.11} parent=92 // loop_exit
              _
          $region93: #{aggregation_block.11} parent=77 // pred_fallthru
            _
        $region78: #{aggregation_block.11} parent=43 // pred_fallthru
          _
        // Predicated region
        $region79: #{aggregation_block.11} parent=43 // pred_check
          %p368 = pneg %p364
        $region80: #{aggregation_block.11} parent=43 // pred_check_branch
          %370 = sbr.rel (%p368) target = $region82
        $region81: #{aggregation_block.11} parent=43 // pred_region
          %s371 = sshll.u32 1, 4
          %s372 = ssub.s32 %s371, 1
          loop: start=0, step=1, limit=1
          $region83: #{aggregation_block.11} parent=81 // loop_pre_header
            _
          $region84: #{aggregation_block.11} parent=81 // loop_header
            %s374 = sphi 0, %s378
            %p375 = scmp.ge.s32.totalorder %s374, 1
            %s379 = sphi %s360, %s360
            %s380 = sphi %s361, %s361
          $region85: #{aggregation_block.11} parent=81 // loop_header_branch
            %377 = sbr.rel (%p375) target = $region89
          $region86: #{aggregation_block.11} parent=81 // loop_body
            %v381 = vld [vmem:[%s379] sm:%s372]
            %382 = vst [vmem:[%s380] sm:%s372] %v381
          $region87: #{aggregation_block.11} parent=81 // loop_footer
            %s378 = sadd.s32 1, %s374
          $region88: #{aggregation_block.11} parent=81 // loop_footer_branch
            %373 = sbr.rel target = $region84
          $region89: #{aggregation_block.11} parent=81 // loop_exit
            _
        $region82: #{aggregation_block.11} parent=43 // pred_fallthru
          _
        // Predicated region
        $region101: #{aggregation_block.11} parent=43 // pred_check
          _
        $region102: #{aggregation_block.11} parent=43 // pred_check_branch
          %407 = sbr.rel (0) target = $region104
        $region103: #{aggregation_block.11} parent=43 // pred_region
          %408 = vsyncadd %s362, 64
        $region104: #{aggregation_block.11} parent=43 // pred_fallthru
          _
        %s409 = smul.u32 4, 1
        %s410 = smul.u32 %s409, 1
        %s411 = sshll.u32 %s410, 4
        %412 = dma.done [#allocation3], %s411
        %s413 = sshll.u32 %s410, 4
        %414 = dma.done %s362, %s413
      $region44: #{aggregation_block.11} parent=39 // pred_fallthru
        _
      %p415 = scmp.eq.s32.totalorder %s23, 0
      // Predicated region
      $region105: #{aggregation_block.11} parent=39 // pred_check
        %p416 = pneg %p415
      $region106: #{aggregation_block.11} parent=39 // pred_check_branch
        %418 = sbr.rel (%p416) target = $region108
      $region107: #{aggregation_block.11} parent=39 // pred_region
        %419 = vst [vmem:[#allocation2] sm:$0xf] 0
        %s420 = scalar_lea.vmem [#allocation2], 4
        %421 = vst [vmem:[%s420] sm:$0xf] 0
      $region108: #{aggregation_block.11} parent=39 // pred_fallthru
        _
      %p422 = scmp.lt.s32.totalorder %s23, 0
      // Predicated region
      $region109: #{aggregation_block.11} parent=39 // pred_check
        %p423 = pneg %p422
      $region110: #{aggregation_block.11} parent=39 // pred_check_branch
        %425 = sbr.rel (%p423) target = $region112
      $region111: #{aggregation_block.11} parent=39 // pred_region
        %s426 = sadd.s32 %s23, 1
        %s427 = smul.u32 %s426, 8
        %s428 = smul.u32 %s22, 8
        %s429 = sadd.s32 %s427, %s428
        %s430 = smul.addr %s429, 4
        %s431 = scalar_lea.vmem %s2, %s430
        %s432 = scalar_lea.vmem [#allocation2], 8
        %s433 = scalar_lea.sflag [#allocation3], 2
        %p435 = scmp.lt.u32.totalorder 4, 8
        %p436 = pneg %p435
        // Predicated region
        $region113: #{aggregation_block.11} parent=111 // pred_check
          _
        $region114: #{aggregation_block.11} parent=111 // pred_check_branch
          %438 = sbr.rel (%p435) target = $region116
        $region115: #{aggregation_block.11} parent=111 // pred_region
          %s454 = sand.u32 4, 7
          %p455 = scmp.eq.s32.totalorder %s454, 0
          %p456 = pneg %p455
          // Predicated region
          $region128: #{aggregation_block.11} parent=115 // pred_check
            _
          $region129: #{aggregation_block.11} parent=115 // pred_check_branch
            %458 = sbr.rel (%p455) target = $region131
          $region130: #{aggregation_block.11} parent=115 // pred_region
            %s459 = sand.u32 4, 7
            %s460 = ssub.s32 4, %s459
            %s461 = scalar_lea.vmem %s431, %s460
            %s462 = ssub.s32 4, %s459
            %s463 = scalar_lea.vmem %s432, %s462 [#allocation2]
            %s464 = sshll.u32 1, %s459
            %s465 = ssub.s32 %s464, 1
            loop: start=0, step=1, limit=1
            $region132: #{aggregation_block.11} parent=130 // loop_pre_header
              _
            $region133: #{aggregation_block.11} parent=130 // loop_header
              %s467 = sphi 0, %s471
              %p468 = scmp.ge.s32.totalorder %s467, 1
              %s472 = sphi %s461, %s461
              %s473 = sphi %s463, %s463
            $region134: #{aggregation_block.11} parent=130 // loop_header_branch
              %470 = sbr.rel (%p468) target = $region138
            $region135: #{aggregation_block.11} parent=130 // loop_body
              %v474 = vld [vmem:[%s472] sm:%s465]
              %475 = vst [vmem:[%s473] sm:%s465] %v474
            $region136: #{aggregation_block.11} parent=130 // loop_footer
              %s471 = sadd.s32 1, %s467
            $region137: #{aggregation_block.11} parent=130 // loop_footer_branch
              %466 = sbr.rel target = $region133
            $region138: #{aggregation_block.11} parent=130 // loop_exit
              _
          $region131: #{aggregation_block.11} parent=115 // pred_fallthru
            _
        $region116: #{aggregation_block.11} parent=111 // pred_fallthru
          _
        // Predicated region
        $region117: #{aggregation_block.11} parent=111 // pred_check
          %p439 = pneg %p435
        $region118: #{aggregation_block.11} parent=111 // pred_check_branch
          %441 = sbr.rel (%p439) target = $region120
        $region119: #{aggregation_block.11} parent=111 // pred_region
          %s442 = sshll.u32 1, 4
          %s443 = ssub.s32 %s442, 1
          loop: start=0, step=1, limit=1
          $region121: #{aggregation_block.11} parent=119 // loop_pre_header
            _
          $region122: #{aggregation_block.11} parent=119 // loop_header
            %s445 = sphi 0, %s449
            %p446 = scmp.ge.s32.totalorder %s445, 1
            %s450 = sphi %s431, %s431
            %s451 = sphi %s432, %s432
          $region123: #{aggregation_block.11} parent=119 // loop_header_branch
            %448 = sbr.rel (%p446) target = $region127
          $region124: #{aggregation_block.11} parent=119 // loop_body
            %v452 = vld [vmem:[%s450] sm:%s443]
            %453 = vst [vmem:[%s451] sm:%s443] %v452
          $region125: #{aggregation_block.11} parent=119 // loop_footer
            %s449 = sadd.s32 1, %s445
          $region126: #{aggregation_block.11} parent=119 // loop_footer_branch
            %444 = sbr.rel target = $region122
          $region127: #{aggregation_block.11} parent=119 // loop_exit
            _
        $region120: #{aggregation_block.11} parent=111 // pred_fallthru
          _
        // Predicated region
        $region139: #{aggregation_block.11} parent=111 // pred_check
          _
        $region140: #{aggregation_block.11} parent=111 // pred_check_branch
          %478 = sbr.rel (0) target = $region142
        $region141: #{aggregation_block.11} parent=111 // pred_region
          %479 = vsyncadd %s433, 64
        $region142: #{aggregation_block.11} parent=111 // pred_fallthru
          _
        %s480 = smul.addr %s429, 4
        %s481 = scalar_lea.vmem %s3, %s480
        %s482 = scalar_lea.vmem [#allocation2], 12
        %s483 = scalar_lea.sflag [#allocation3], 3
        %p485 = scmp.lt.u32.totalorder 4, 8
        %p486 = pneg %p485
        // Predicated region
        $region143: #{aggregation_block.11} parent=111 // pred_check
          _
        $region144: #{aggregation_block.11} parent=111 // pred_check_branch
          %488 = sbr.rel (%p485) target = $region146
        $region145: #{aggregation_block.11} parent=111 // pred_region
          %s504 = sand.u32 4, 7
          %p505 = scmp.eq.s32.totalorder %s504, 0
          %p506 = pneg %p505
          // Predicated region
          $region158: #{aggregation_block.11} parent=145 // pred_check
            _
          $region159: #{aggregation_block.11} parent=145 // pred_check_branch
            %508 = sbr.rel (%p505) target = $region161
          $region160: #{aggregation_block.11} parent=145 // pred_region
            %s509 = sand.u32 4, 7
            %s510 = ssub.s32 4, %s509
            %s511 = scalar_lea.vmem %s481, %s510
            %s512 = ssub.s32 4, %s509
            %s513 = scalar_lea.vmem %s482, %s512 [#allocation2]
            %s514 = sshll.u32 1, %s509
            %s515 = ssub.s32 %s514, 1
            loop: start=0, step=1, limit=1
            $region162: #{aggregation_block.11} parent=160 // loop_pre_header
              _
            $region163: #{aggregation_block.11} parent=160 // loop_header
              %s517 = sphi 0, %s521
              %p518 = scmp.ge.s32.totalorder %s517, 1
              %s522 = sphi %s511, %s511
              %s523 = sphi %s513, %s513
            $region164: #{aggregation_block.11} parent=160 // loop_header_branch
              %520 = sbr.rel (%p518) target = $region168
            $region165: #{aggregation_block.11} parent=160 // loop_body
              %v524 = vld [vmem:[%s522] sm:%s515]
              %525 = vst [vmem:[%s523] sm:%s515] %v524
            $region166: #{aggregation_block.11} parent=160 // loop_footer
              %s521 = sadd.s32 1, %s517
            $region167: #{aggregation_block.11} parent=160 // loop_footer_branch
              %516 = sbr.rel target = $region163
            $region168: #{aggregation_block.11} parent=160 // loop_exit
              _
          $region161: #{aggregation_block.11} parent=145 // pred_fallthru
            _
        $region146: #{aggregation_block.11} parent=111 // pred_fallthru
          _
        // Predicated region
        $region147: #{aggregation_block.11} parent=111 // pred_check
          %p489 = pneg %p485
        $region148: #{aggregation_block.11} parent=111 // pred_check_branch
          %491 = sbr.rel (%p489) target = $region150
        $region149: #{aggregation_block.11} parent=111 // pred_region
          %s492 = sshll.u32 1, 4
          %s493 = ssub.s32 %s492, 1
          loop: start=0, step=1, limit=1
          $region151: #{aggregation_block.11} parent=149 // loop_pre_header
            _
          $region152: #{aggregation_block.11} parent=149 // loop_header
            %s495 = sphi 0, %s499
            %p496 = scmp.ge.s32.totalorder %s495, 1
            %s500 = sphi %s481, %s481
            %s501 = sphi %s482, %s482
          $region153: #{aggregation_block.11} parent=149 // loop_header_branch
            %498 = sbr.rel (%p496) target = $region157
          $region154: #{aggregation_block.11} parent=149 // loop_body
            %v502 = vld [vmem:[%s500] sm:%s493]
            %503 = vst [vmem:[%s501] sm:%s493] %v502
          $region155: #{aggregation_block.11} parent=149 // loop_footer
            %s499 = sadd.s32 1, %s495
          $region156: #{aggregation_block.11} parent=149 // loop_footer_branch
            %494 = sbr.rel target = $region152
          $region157: #{aggregation_block.11} parent=149 // loop_exit
            _
        $region150: #{aggregation_block.11} parent=111 // pred_fallthru
          _
        // Predicated region
        $region169: #{aggregation_block.11} parent=111 // pred_check
          _
        $region170: #{aggregation_block.11} parent=111 // pred_check_branch
          %528 = sbr.rel (0) target = $region172
        $region171: #{aggregation_block.11} parent=111 // pred_region
          %529 = vsyncadd %s483, 64
        $region172: #{aggregation_block.11} parent=111 // pred_fallthru
          _
        %s530 = smul.u32 4, 1
        %s531 = smul.u32 %s530, 1
        %s532 = sshll.u32 %s531, 4
        %533 = dma.done %s433, %s532
        %s534 = sshll.u32 %s531, 4
        %535 = dma.done %s483, %s534
      $region112: #{aggregation_block.11} parent=39 // pred_fallthru
        _
      // Predicated region
      $region173: #{aggregation_block.11} parent=39 // pred_check
        %p536 = pneg %p415
      $region174: #{aggregation_block.11} parent=39 // pred_check_branch
        %538 = sbr.rel (%p536) target = $region176
      $region175: #{aggregation_block.11} parent=39 // pred_region
        %s539 = scalar_lea.vmem [#allocation2], 8
        %540 = vst [vmem:[%s539] sm:$0xf] 0
        %s541 = scalar_lea.vmem [#allocation2], 12
        %542 = vst [vmem:[%s541] sm:$0xf] 0
      $region176: #{aggregation_block.11} parent=39 // pred_fallthru
        _
      %v543 = vld [vmem:[%s280] sm:$0xf]
      %v544 = vld [vmem:[%s280 + $0x4] sm:$0xf]
      %v545 = vld [vmem:[%s280 + $0x8] sm:$0xf]
      %v546 = vld [vmem:[%s280 + $0xc] sm:$0xf]
      %v547 = vld [vmem:[%s280 + $0x10] sm:$0xf]
      %v548 = vld [vmem:[%s280 + $0x14] sm:$0xf]
      %v549 = vld [vmem:[%s280 + $0x18] sm:$0xf]
      %v550 = vld [vmem:[%s280 + $0x1c] sm:$0xf]
      %v551 = vld [vmem:[%s290] sm:$0xf]
      %v552 = vld [vmem:[%s290 + $0x4] sm:$0xf]
      %v553 = vld [vmem:[%s290 + $0x8] sm:$0xf]
      %v554 = vld [vmem:[%s290 + $0xc] sm:$0xf]
      %v555 = vld [vmem:[%s290 + $0x10] sm:$0xf]
      %v556 = vld [vmem:[%s290 + $0x14] sm:$0xf]
      %v557 = vld [vmem:[%s290 + $0x18] sm:$0xf]
      %v558 = vld [vmem:[%s290 + $0x1c] sm:$0xf]
      %v559 = vadd.bf16 %v543, %v551
      %v560 = vadd.bf16 %v544, %v552
      %v561 = vadd.bf16 %v545, %v553
      %v562 = vadd.bf16 %v546, %v554
      %v563 = vadd.bf16 %v547, %v555
      %v564 = vadd.bf16 %v548, %v556
      %v565 = vadd.bf16 %v549, %v557
      %v566 = vadd.bf16 %v550, %v558
      %v567 = vld [vmem:[#allocation2] sm:$0xf]
      %s568 = scalar_lea.vmem [#allocation2], 4
      %v569 = vld [vmem:[%s568] sm:$0xf]
      %v570 = vadd.bf16 %v567, %v569
      %s571 = scalar_lea.vmem [#allocation2], 8
      %v572 = vld [vmem:[%s571] sm:$0xf]
      %s573 = scalar_lea.vmem [#allocation2], 12
      %v574 = vld [vmem:[%s573] sm:$0xf]
      %v575 = vadd.bf16 %v572, %v574
      %v586 = vunpack.c.l.b16 %v570
      %v587 = vunpack.c.l.b16 %v559
      %v588 = vunpack.c.l.b16 %v560
      %v589 = vunpack.c.l.b16 %v561
      %v590 = vunpack.c.l.b16 %v562
      %v591 = vunpack.c.l.b16 %v563
      %v592 = vunpack.c.l.b16 %v564
      %v593 = vunpack.c.l.b16 %v565
      %v594 = vunpack.c.l.b16 %v566
      %v595 = vunpack.c.l.b16 %v575
      %v596 = vpack.c.b16 %v586, %v586
      %v597 = vpack.c.b16 %v587, %v587
      %v598 = vpack.c.b16 %v588, %v588
      %v599 = vpack.c.b16 %v589, %v589
      %v600 = vpack.c.b16 %v590, %v590
      %v601 = vpack.c.b16 %v591, %v591
      %v602 = vpack.c.b16 %v592, %v592
      %v603 = vpack.c.b16 %v593, %v593
      %v604 = vpack.c.b16 %v594, %v594
      %v605 = vpack.c.b16 %v595, %v595
      %v607 = vshrl.u32 %v596, 16
      %v609 = vrot.slane %v607, 7
      %v610 = vshll.u32 %v596, 16
      %v612 = vor.u32 %v609, %v610
      %v614 = vshrl.u32 %v597, 16
      %v616 = vrot.slane %v614, 7
      %v617 = vshll.u32 %v597, 16
      %v619 = vor.u32 %v616, %v617
      %v621 = vshrl.u32 %v598, 16
      %v623 = vrot.slane %v621, 7
      %v624 = vshll.u32 %v598, 16
      %v626 = vor.u32 %v623, %v624
      %v628 = vshrl.u32 %v599, 16
      %v630 = vrot.slane %v628, 7
      %v631 = vshll.u32 %v599, 16
      %v633 = vor.u32 %v630, %v631
      %v635 = vshrl.u32 %v600, 16
      %v637 = vrot.slane %v635, 7
      %v638 = vshll.u32 %v600, 16
      %v640 = vor.u32 %v637, %v638
      %v642 = vshrl.u32 %v601, 16
      %v644 = vrot.slane %v642, 7
      %v645 = vshll.u32 %v601, 16
      %v647 = vor.u32 %v644, %v645
      %v649 = vshrl.u32 %v602, 16
      %v651 = vrot.slane %v649, 7
      %v652 = vshll.u32 %v602, 16
      %v654 = vor.u32 %v651, %v652
      %v656 = vshrl.u32 %v603, 16
      %v658 = vrot.slane %v656, 7
      %v659 = vshll.u32 %v603, 16
      %v661 = vor.u32 %v658, %v659
      %v663 = vshrl.u32 %v604, 16
      %v665 = vrot.slane %v663, 7
      %v666 = vshll.u32 %v604, 16
      %v668 = vor.u32 %v665, %v666
      %v670 = vshrl.u32 %v605, 16
      %v672 = vrot.slane %v670, 7
      %v673 = vshll.u32 %v605, 16
      %v675 = vor.u32 %v672, %v673
      %vm686 = vcmask 1040384
      %vm687 = vsmask.f32 256
      %vm688 = vmand %vm686, %vm687
      %v689 = vsel %vm688, 0, %v612
      %v690 = vsel %vm688, 0, %v619
      %v691 = vsel %vm688, 0, %v626
      %v692 = vsel %vm688, 0, %v633
      %v693 = vsel %vm688, 0, %v640
      %v694 = vsel %vm688, 0, %v647
      %v695 = vsel %vm688, 0, %v654
      %v696 = vsel %vm688, 0, %v661
      %v697 = vsel %vm688, 0, %v668
      %v698 = vsel %vm688, 0, %v675
      %vm699 = vcmask 1044480
      %vm700 = vsmask.f32 4352
      %vm701 = vmand %vm699, %vm700
      %v702 = vsel %vm701, %v689, 0
      %v703 = vsel %vm701, %v690, 0
      %v704 = vsel %vm701, %v691, 0
      %v705 = vsel %vm701, %v692, 0
      %v706 = vsel %vm701, %v693, 0
      %v707 = vsel %vm701, %v694, 0
      %v708 = vsel %vm701, %v695, 0
      %v709 = vsel %vm701, %v696, 0
      %v710 = vsel %vm701, %v697, 0
      %v711 = vsel %vm701, %v698, 0
      %v713 = vshrl.u32 %v702, 16
      %v715 = vshll.u32 %v702, 16
      %v717 = vrot.slane %v715, 1
      %v718 = vor.u32 %v713, %v717
      %v720 = vshrl.u32 %v703, 16
      %v722 = vshll.u32 %v703, 16
      %v724 = vrot.slane %v722, 1
      %v725 = vor.u32 %v720, %v724
      %v727 = vshrl.u32 %v704, 16
      %v729 = vshll.u32 %v704, 16
      %v731 = vrot.slane %v729, 1
      %v732 = vor.u32 %v727, %v731
      %v734 = vshrl.u32 %v705, 16
      %v736 = vshll.u32 %v705, 16
      %v738 = vrot.slane %v736, 1
      %v739 = vor.u32 %v734, %v738
      %v741 = vshrl.u32 %v706, 16
      %v743 = vshll.u32 %v706, 16
      %v745 = vrot.slane %v743, 1
      %v746 = vor.u32 %v741, %v745
      %v748 = vshrl.u32 %v707, 16
      %v750 = vshll.u32 %v707, 16
      %v752 = vrot.slane %v750, 1
      %v753 = vor.u32 %v748, %v752
      %v755 = vshrl.u32 %v708, 16
      %v757 = vshll.u32 %v708, 16
      %v759 = vrot.slane %v757, 1
      %v760 = vor.u32 %v755, %v759
      %v762 = vshrl.u32 %v709, 16
      %v764 = vshll.u32 %v709, 16
      %v766 = vrot.slane %v764, 1
      %v767 = vor.u32 %v762, %v766
      %v769 = vshrl.u32 %v710, 16
      %v771 = vshll.u32 %v710, 16
      %v773 = vrot.slane %v771, 1
      %v774 = vor.u32 %v769, %v773
      %v776 = vshrl.u32 %v711, 16
      %v778 = vshll.u32 %v711, 16
      %v780 = vrot.slane %v778, 1
      %v781 = vor.u32 %v776, %v780
      %v792 = vrot.slane %v702, 1
      %v793 = vrot.slane %v703, 1
      %v794 = vrot.slane %v704, 1
      %v795 = vrot.slane %v705, 1
      %v796 = vrot.slane %v706, 1
      %v797 = vrot.slane %v707, 1
      %v798 = vrot.slane %v708, 1
      %v799 = vrot.slane %v709, 1
      %v800 = vrot.slane %v710, 1
      %v801 = vrot.slane %v711, 1
      %v802 = vld [vmem:[%s4] sm:$0xf]
      %v803 = vld [vmem:[%s4 + $0x4] sm:$0xf]
      %v804 = vld [vmem:[%s4 + $0x8] sm:$0xf]
      %v805 = vld [vmem:[%s4 + $0xc] sm:$0xf]
      %v806 = vld [vmem:[%s4 + $0x10] sm:$0xf]
      %v807 = vld [vmem:[%s4 + $0x14] sm:$0xf]
      %v808 = vld [vmem:[%s4 + $0x18] sm:$0xf]
      %v809 = vld [vmem:[%s4 + $0x1c] sm:$0xf]
      %v810 = vld [vmem:[%s4 + $0x20] sm:$0xf]
      %v811 = vld [vmem:[%s4 + $0x24] sm:$0xf]
      %v812 = vld [vmem:[%s4 + $0x28] sm:$0xf]
      %v813 = vld [vmem:[%s4 + $0x2c] sm:$0xf]
      %v814 = vld [vmem:[%s4 + $0x30] sm:$0xf]
      %v815 = vld [vmem:[%s4 + $0x34] sm:$0xf]
      %v816 = vld [vmem:[%s4 + $0x38] sm:$0xf]
      %v817 = vld [vmem:[%s4 + $0x3c] sm:$0xf]
      %v818 = vld [vmem:[%s4 + $0x40] sm:$0xf]
      %v819 = vld [vmem:[%s4 + $0x44] sm:$0xf]
      %v820 = vld [vmem:[%s4 + $0x48] sm:$0xf]
      %v821 = vld [vmem:[%s4 + $0x4c] sm:$0xf]
      %v822 = vld [vmem:[%s4 + $0x50] sm:$0xf]
      %v823 = vld [vmem:[%s4 + $0x54] sm:$0xf]
      %v824 = vld [vmem:[%s4 + $0x58] sm:$0xf]
      %v825 = vld [vmem:[%s4 + $0x5c] sm:$0xf]
      %v826 = vld [vmem:[%s4 + $0x60] sm:$0xf]
      %v827 = vld [vmem:[%s4 + $0x64] sm:$0xf]
      %v828 = vld [vmem:[%s4 + $0x68] sm:$0xf]
      %v829 = vld [vmem:[%s4 + $0x6c] sm:$0xf]
      %v830 = vld [vmem:[%s4 + $0x70] sm:$0xf]
      %v831 = vld [vmem:[%s4 + $0x74] sm:$0xf]
      %v832 = vld [vmem:[%s4 + $0x78] sm:$0xf]
      %v833 = vld [vmem:[%s4 + $0x7c] sm:$0xf]
      %v834 = vld [vmem:[%s4 + $0x80] sm:$0xf]
      %v835 = vld [vmem:[%s4 + $0x84] sm:$0xf]
      %v836 = vld [vmem:[%s4 + $0x88] sm:$0xf]
      %v837 = vld [vmem:[%s4 + $0x8c] sm:$0xf]
      %v838 = vld [vmem:[%s4 + $0x90] sm:$0xf]
      %v839 = vld [vmem:[%s4 + $0x94] sm:$0xf]
      %v840 = vld [vmem:[%s4 + $0x98] sm:$0xf]
      %v841 = vld [vmem:[%s4 + $0x9c] sm:$0xf]
      %v842 = vld [vmem:[%s4 + $0xa0] sm:$0xf]
      %v843 = vld [vmem:[%s4 + $0xa4] sm:$0xf]
      %v844 = vld [vmem:[%s4 + $0xa8] sm:$0xf]
      %v845 = vld [vmem:[%s4 + $0xac] sm:$0xf]
      %v846 = vld [vmem:[%s4 + $0xb0] sm:$0xf]
      %v847 = vld [vmem:[%s4 + $0xb4] sm:$0xf]
      %v848 = vld [vmem:[%s4 + $0xb8] sm:$0xf]
      %v849 = vld [vmem:[%s4 + $0xbc] sm:$0xf]
      %s850 = scalar_lea.vmem %s4, 192
      %v851 = vld [vmem:[%s850] sm:$0xf]
      %v852 = vld [vmem:[%s850 + $0x4] sm:$0xf]
      %v853 = vld [vmem:[%s850 + $0x8] sm:$0xf]
      %v854 = vld [vmem:[%s850 + $0xc] sm:$0xf]
      %v855 = vld [vmem:[%s850 + $0x10] sm:$0xf]
      %v856 = vld [vmem:[%s850 + $0x14] sm:$0xf]
      %v857 = vld [vmem:[%s850 + $0x18] sm:$0xf]
      %v858 = vld [vmem:[%s850 + $0x1c] sm:$0xf]
      %v859 = vld [vmem:[%s850 + $0x20] sm:$0xf]
      %v860 = vld [vmem:[%s850 + $0x24] sm:$0xf]
      %v861 = vld [vmem:[%s850 + $0x28] sm:$0xf]
      %v862 = vld [vmem:[%s850 + $0x2c] sm:$0xf]
      %v863 = vld [vmem:[%s850 + $0x30] sm:$0xf]
      %v864 = vld [vmem:[%s850 + $0x34] sm:$0xf]
      %v865 = vld [vmem:[%s850 + $0x38] sm:$0xf]
      %v866 = vld [vmem:[%s850 + $0x3c] sm:$0xf]
      %v867 = vld [vmem:[%s850 + $0x40] sm:$0xf]
      %v868 = vld [vmem:[%s850 + $0x44] sm:$0xf]
      %v869 = vld [vmem:[%s850 + $0x48] sm:$0xf]
      %v870 = vld [vmem:[%s850 + $0x4c] sm:$0xf]
      %v871 = vld [vmem:[%s850 + $0x50] sm:$0xf]
      %v872 = vld [vmem:[%s850 + $0x54] sm:$0xf]
      %v873 = vld [vmem:[%s850 + $0x58] sm:$0xf]
      %v874 = vld [vmem:[%s850 + $0x5c] sm:$0xf]
      %v875 = vld [vmem:[%s850 + $0x60] sm:$0xf]
      %v876 = vld [vmem:[%s850 + $0x64] sm:$0xf]
      %v877 = vld [vmem:[%s850 + $0x68] sm:$0xf]
      %v878 = vld [vmem:[%s850 + $0x6c] sm:$0xf]
      %v879 = vld [vmem:[%s850 + $0x70] sm:$0xf]
      %v880 = vld [vmem:[%s850 + $0x74] sm:$0xf]
      %v881 = vld [vmem:[%s850 + $0x78] sm:$0xf]
      %v882 = vld [vmem:[%s850 + $0x7c] sm:$0xf]
      %v883 = vld [vmem:[%s850 + $0x80] sm:$0xf]
      %v884 = vld [vmem:[%s850 + $0x84] sm:$0xf]
      %v885 = vld [vmem:[%s850 + $0x88] sm:$0xf]
      %v886 = vld [vmem:[%s850 + $0x8c] sm:$0xf]
      %v887 = vld [vmem:[%s850 + $0x90] sm:$0xf]
      %v888 = vld [vmem:[%s850 + $0x94] sm:$0xf]
      %v889 = vld [vmem:[%s850 + $0x98] sm:$0xf]
      %v890 = vld [vmem:[%s850 + $0x9c] sm:$0xf]
      %v891 = vld [vmem:[%s850 + $0xa0] sm:$0xf]
      %v892 = vld [vmem:[%s850 + $0xa4] sm:$0xf]
      %v893 = vld [vmem:[%s850 + $0xa8] sm:$0xf]
      %v894 = vld [vmem:[%s850 + $0xac] sm:$0xf]
      %v895 = vld [vmem:[%s850 + $0xb0] sm:$0xf]
      %v896 = vld [vmem:[%s850 + $0xb4] sm:$0xf]
      %v897 = vld [vmem:[%s850 + $0xb8] sm:$0xf]
      %v898 = vld [vmem:[%s850 + $0xbc] sm:$0xf]
      %v899 = vunpack.c.l.b16 %v703
      %v900 = vunpack.c.l.b16 %v725
      %v901 = vunpack.c.l.b16 %v793
      %v902 = vunpack.c.l.b16 %v704
      %v903 = vunpack.c.l.b16 %v732
      %v904 = vunpack.c.l.b16 %v794
      %v905 = vunpack.c.l.b16 %v705
      %v906 = vunpack.c.l.b16 %v739
      %v907 = vunpack.c.l.b16 %v795
      %v908 = vunpack.c.l.b16 %v706
      %v909 = vunpack.c.l.b16 %v746
      %v910 = vunpack.c.l.b16 %v796
      %v911 = vunpack.c.l.b16 %v707
      %v912 = vunpack.c.l.b16 %v753
      %v913 = vunpack.c.l.b16 %v797
      %v914 = vunpack.c.l.b16 %v708
      %v915 = vunpack.c.l.b16 %v760
      %v916 = vunpack.c.l.b16 %v798
      %v917 = vunpack.c.l.b16 %v709
      %v918 = vunpack.c.l.b16 %v767
      %v919 = vunpack.c.l.b16 %v799
      %v920 = vunpack.c.l.b16 %v710
      %v921 = vunpack.c.l.b16 %v774
      %v922 = vunpack.c.l.b16 %v800
      %v923 = vpack.c.b16 %v902, %v899
      %v924 = vpack.c.b16 %v903, %v900
      %v925 = vpack.c.b16 %v904, %v901
      %v926 = vpack.c.b16 %v908, %v905
      %v927 = vpack.c.b16 %v909, %v906
      %v928 = vpack.c.b16 %v910, %v907
      %v929 = vpack.c.b16 %v914, %v911
      %v930 = vpack.c.b16 %v915, %v912
      %v931 = vpack.c.b16 %v916, %v913
      %v932 = vpack.c.b16 %v920, %v917
      %v933 = vpack.c.b16 %v921, %v918
      %v934 = vpack.c.b16 %v922, %v919
      %v995 = vunpack.c.l.b16 %v851
      %v996 = vunpack.c.l.b16 %v852
      %v997 = vunpack.c.l.b16 %v853
      %v998 = vunpack.c.l.b16 %v854
      %v999 = vunpack.c.l.b16 %v855
      %v1000 = vunpack.c.l.b16 %v856
      %v1001 = vunpack.c.l.b16 %v857
      %v1002 = vunpack.c.l.b16 %v858
      %v1003 = vunpack.c.l.b16 %v859
      %v1004 = vunpack.c.l.b16 %v860
      %v1005 = vunpack.c.l.b16 %v861
      %v1006 = vunpack.c.l.b16 %v862
      %v1007 = vunpack.c.l.b16 %v863
      %v1008 = vunpack.c.l.b16 %v864
      %v1009 = vunpack.c.l.b16 %v865
      %v1010 = vunpack.c.l.b16 %v866
      %v1011 = vunpack.c.l.b16 %v867
      %v1012 = vunpack.c.l.b16 %v868
      %v1013 = vunpack.c.l.b16 %v869
      %v1014 = vunpack.c.l.b16 %v870
      %v1015 = vunpack.c.l.b16 %v871
      %v1016 = vunpack.c.l.b16 %v872
      %v1017 = vunpack.c.l.b16 %v873
      %v1018 = vunpack.c.l.b16 %v874
      %v1019 = vunpack.c.l.b16 %v875
      %v1020 = vunpack.c.l.b16 %v876
      %v1021 = vunpack.c.l.b16 %v877
      %v1022 = vunpack.c.l.b16 %v878
      %v1023 = vunpack.c.l.b16 %v879
      %v1024 = vunpack.c.l.b16 %v880
      %v1025 = vunpack.c.l.b16 %v881
      %v1026 = vunpack.c.l.b16 %v882
      %v1027 = vunpack.c.l.b16 %v883
      %v1028 = vunpack.c.l.b16 %v884
      %v1029 = vunpack.c.l.b16 %v885
      %v1030 = vunpack.c.l.b16 %v886
      %v1031 = vunpack.c.l.b16 %v887
      %v1032 = vunpack.c.l.b16 %v888
      %v1033 = vunpack.c.l.b16 %v889
      %v1034 = vunpack.c.l.b16 %v890
      %v1035 = vunpack.c.l.b16 %v891
      %v1036 = vunpack.c.l.b16 %v892
      %v1037 = vunpack.c.l.b16 %v893
      %v1038 = vunpack.c.l.b16 %v894
      %v1039 = vunpack.c.l.b16 %v895
      %v1040 = vunpack.c.l.b16 %v896
      %v1041 = vunpack.c.l.b16 %v897
      %v1042 = vunpack.c.l.b16 %v898
      %v1043 = vpack.c.b16 %v996, %v995
      %v1044 = vpack.c.b16 %v998, %v997
      %v1045 = vpack.c.b16 %v1000, %v999
      %v1046 = vpack.c.b16 %v1002, %v1001
      %v1047 = vpack.c.b16 %v1004, %v1003
      %v1048 = vpack.c.b16 %v1006, %v1005
      %v1049 = vpack.c.b16 %v1008, %v1007
      %v1050 = vpack.c.b16 %v1010, %v1009
      %v1051 = vpack.c.b16 %v1012, %v1011
      %v1052 = vpack.c.b16 %v1014, %v1013
      %v1053 = vpack.c.b16 %v1016, %v1015
      %v1054 = vpack.c.b16 %v1018, %v1017
      %v1055 = vpack.c.b16 %v1020, %v1019
      %v1056 = vpack.c.b16 %v1022, %v1021
      %v1057 = vpack.c.b16 %v1024, %v1023
      %v1058 = vpack.c.b16 %v1026, %v1025
      %v1059 = vpack.c.b16 %v1028, %v1027
      %v1060 = vpack.c.b16 %v1030, %v1029
      %v1061 = vpack.c.b16 %v1032, %v1031
      %v1062 = vpack.c.b16 %v1034, %v1033
      %v1063 = vpack.c.b16 %v1036, %v1035
      %v1064 = vpack.c.b16 %v1038, %v1037
      %v1065 = vpack.c.b16 %v1040, %v1039
      %v1066 = vpack.c.b16 %v1042, %v1041
      %1091 = vmatprep.subr.bf16.mxu0 0
      %1092 = vmatpush1.bf16.msra.mxu0 %v1050
      %1093 = vmatprep.subr.bf16.mxu0 0
      %1094 = vmatpush1.bf16.msra.mxu0 %v1049
      %1095 = vmatprep.subr.bf16.mxu0 0
      %1096 = vmatpush1.bf16.msra.mxu0 %v1048
      %1097 = vmatprep.subr.bf16.mxu0 0
      %1098 = vmatpush1.bf16.msra.mxu0 %v1047
      %1099 = vmatprep.subr.bf16.mxu0 0
      %1100 = vmatpush1.bf16.msra.mxu0 %v1046
      %1101 = vmatprep.subr.bf16.mxu0 0
      %1102 = vmatpush1.bf16.msra.mxu0 %v1045
      %1103 = vmatprep.subr.bf16.mxu0 0
      %1104 = vmatpush1.bf16.msra.mxu0 %v1044
      %1105 = vmatprep.subr.bf16.mxu0 0
      %1106 = vmatpush1.bf16.msra.mxu0 %v1043
      %1107 = vmatprep.subr.bf16.mxu0 0
      %1108 = vmatpush2.bf16.msra.mxu0 %v1058
      %1109 = vmatprep.subr.bf16.mxu0 0
      %1110 = vmatpush2.bf16.msra.mxu0 %v1057
      %1111 = vmatprep.subr.bf16.mxu0 0
      %1112 = vmatpush2.bf16.msra.mxu0 %v1056
      %1113 = vmatprep.subr.bf16.mxu0 0
      %1114 = vmatpush2.bf16.msra.mxu0 %v1055
      %1115 = vmatprep.subr.bf16.mxu0 0
      %1116 = vmatpush2.bf16.msra.mxu0 %v1054
      %1117 = vmatprep.subr.bf16.mxu0 0
      %1118 = vmatpush2.bf16.msra.mxu0 %v1053
      %1119 = vmatprep.subr.bf16.mxu0 0
      %1120 = vmatpush2.bf16.msra.mxu0 %v1052
      %1121 = vmatprep.subr.bf16.mxu0 0
      %1122 = vmatpush2.bf16.msra.mxu0 %v1051
      %1123 = vmatprep.mubr.bf16.mxu0 %v924
      %1124 = vmatmul.mubr.bf16.gmra.mxu0 %v923
      %v1125 = vpop.f32.mrf.mxu0
      %v1126 = vadd.f32 0.0, %v1125
      %v1127 = vpop.f32.mrf.mxu0
      %v1128 = vpop.f32.mrf.mxu0
      %v1129 = vadd.f32 0.0, %v1128
      %v1130 = vpop.f32.mrf.mxu0
      %1131 = vmatprep.mubr.bf16.mxu0 %v927
      %1132 = vmatmul.mubr.bf16.gmra.mxu0 %v926
      %v1133 = vpop.f32.mrf.mxu0
      %v1134 = vadd.f32 0.0, %v1133
      %v1135 = vpop.f32.mrf.mxu0
      %v1136 = vpop.f32.mrf.mxu0
      %v1137 = vadd.f32 0.0, %v1136
      %v1138 = vpop.f32.mrf.mxu0
      %1139 = vmatprep.mubr.bf16.mxu0 %v930
      %1140 = vmatmul.mubr.bf16.gmra.mxu0 %v929
      %v1141 = vpop.f32.mrf.mxu0
      %v1142 = vadd.f32 0.0, %v1141
      %v1143 = vpop.f32.mrf.mxu0
      %v1144 = vpop.f32.mrf.mxu0
      %v1145 = vadd.f32 0.0, %v1144
      %v1146 = vpop.f32.mrf.mxu0
      %1147 = vmatprep.mubr.bf16.mxu0 %v933
      %1148 = vmatmul.mubr.bf16.gmra.mxu0 %v932
      %v1149 = vpop.f32.mrf.mxu0
      %v1150 = vadd.f32 0.0, %v1149
      %v1151 = vpop.f32.mrf.mxu0
      %v1152 = vpop.f32.mrf.mxu0
      %v1153 = vadd.f32 0.0, %v1152
      %v1154 = vpop.f32.mrf.mxu0
      %1155 = vdwg.mxu0
      %1156 = vmatprep.subr.bf16.mxu0 0
      %1157 = vmatpush1.bf16.msra.mxu0 %v1066
      %1158 = vmatprep.subr.bf16.mxu0 0
      %1159 = vmatpush1.bf16.msra.mxu0 %v1065
      %1160 = vmatprep.subr.bf16.mxu0 0
      %1161 = vmatpush1.bf16.msra.mxu0 %v1064
      %1162 = vmatprep.subr.bf16.mxu0 0
      %1163 = vmatpush1.bf16.msra.mxu0 %v1063
      %1164 = vmatprep.subr.bf16.mxu0 0
      %1165 = vmatpush1.bf16.msra.mxu0 %v1062
      %1166 = vmatprep.subr.bf16.mxu0 0
      %1167 = vmatpush1.bf16.msra.mxu0 %v1061
      %1168 = vmatprep.subr.bf16.mxu0 0
      %1169 = vmatpush1.bf16.msra.mxu0 %v1060
      %1170 = vmatprep.subr.bf16.mxu0 0
      %1171 = vmatpush1.bf16.msra.mxu0 %v1059
      %1172 = vmatprep.subr.bf16.mxu0 0
      %1173 = vmatpush2.bf16.msra.mxu0 0
      %1174 = vmatprep.subr.bf16.mxu0 0
      %1175 = vmatpush2.bf16.msra.mxu0 0
      %1176 = vmatprep.subr.bf16.mxu0 0
      %1177 = vmatpush2.bf16.msra.mxu0 0
      %1178 = vmatprep.subr.bf16.mxu0 0
      %1179 = vmatpush2.bf16.msra.mxu0 0
      %1180 = vmatprep.subr.bf16.mxu0 0
      %1181 = vmatpush2.bf16.msra.mxu0 0
      %1182 = vmatprep.subr.bf16.mxu0 0
      %1183 = vmatpush2.bf16.msra.mxu0 0
      %1184 = vmatprep.subr.bf16.mxu0 0
      %1185 = vmatpush2.bf16.msra.mxu0 0
      %1186 = vmatprep.subr.bf16.mxu0 0
      %1187 = vmatpush2.bf16.msra.mxu0 0
      %1188 = vmatprep.mubr.bf16.mxu0 0
      %1189 = vmatmul.mubr.bf16.gmra.mxu0 %v925
      %v1190 = vpop.f32.mrf.mxu0
      %v1191 = vadd.f32 %v1126, %v1190
      %v1192 = vpop.f32.mrf.mxu0
      %v1193 = vpop.f32.mrf.mxu0
      %v1194 = vadd.f32 %v1129, %v1193
      %v1195 = vpop.f32.mrf.mxu0
      %1196 = vmatprep.mubr.bf16.mxu0 0
      %1197 = vmatmul.mubr.bf16.gmra.mxu0 %v928
      %v1198 = vpop.f32.mrf.mxu0
      %v1199 = vadd.f32 %v1134, %v1198
      %v1200 = vpop.f32.mrf.mxu0
      %v1201 = vpop.f32.mrf.mxu0
      %v1202 = vadd.f32 %v1137, %v1201
      %v1203 = vpop.f32.mrf.mxu0
      %1204 = vmatprep.mubr.bf16.mxu0 0
      %1205 = vmatmul.mubr.bf16.gmra.mxu0 %v931
      %v1206 = vpop.f32.mrf.mxu0
      %v1207 = vadd.f32 %v1142, %v1206
      %v1208 = vpop.f32.mrf.mxu0
      %v1209 = vpop.f32.mrf.mxu0
      %v1210 = vadd.f32 %v1145, %v1209
      %v1211 = vpop.f32.mrf.mxu0
      %1212 = vmatprep.mubr.bf16.mxu0 0
      %1213 = vmatmul.mubr.bf16.gmra.mxu0 %v934
      %v1214 = vpop.f32.mrf.mxu0
      %v1215 = vadd.f32 %v1150, %v1214
      %v1216 = vpop.f32.mrf.mxu0
      %v1217 = vpop.f32.mrf.mxu0
      %v1218 = vadd.f32 %v1153, %v1217
      %v1219 = vpop.f32.mrf.mxu0
      %1220 = vdwg.mxu0
      %v1221 = vunpack.c.l.b16 %v702
      %v1222 = vunpack.c.l.b16 %v718
      %v1223 = vunpack.c.l.b16 %v792
      %v1224 = vpack.c.b16 %v899, %v1221
      %v1225 = vpack.c.b16 %v900, %v1222
      %v1226 = vpack.c.b16 %v901, %v1223
      %v1227 = vpack.c.b16 %v905, %v902
      %v1228 = vpack.c.b16 %v906, %v903
      %v1229 = vpack.c.b16 %v907, %v904
      %v1230 = vpack.c.b16 %v911, %v908
      %v1231 = vpack.c.b16 %v912, %v909
      %v1232 = vpack.c.b16 %v913, %v910
      %v1233 = vpack.c.b16 %v917, %v914
      %v1234 = vpack.c.b16 %v918, %v915
      %v1235 = vpack.c.b16 %v919, %v916
      %v1296 = vunpack.c.l.b16 %v802
      %v1297 = vunpack.c.l.b16 %v803
      %v1298 = vunpack.c.l.b16 %v804
      %v1299 = vunpack.c.l.b16 %v805
      %v1300 = vunpack.c.l.b16 %v806
      %v1301 = vunpack.c.l.b16 %v807
      %v1302 = vunpack.c.l.b16 %v808
      %v1303 = vunpack.c.l.b16 %v809
      %v1304 = vunpack.c.l.b16 %v810
      %v1305 = vunpack.c.l.b16 %v811
      %v1306 = vunpack.c.l.b16 %v812
      %v1307 = vunpack.c.l.b16 %v813
      %v1308 = vunpack.c.l.b16 %v814
      %v1309 = vunpack.c.l.b16 %v815
      %v1310 = vunpack.c.l.b16 %v816
      %v1311 = vunpack.c.l.b16 %v817
      %v1312 = vunpack.c.l.b16 %v818
      %v1313 = vunpack.c.l.b16 %v819
      %v1314 = vunpack.c.l.b16 %v820
      %v1315 = vunpack.c.l.b16 %v821
      %v1316 = vunpack.c.l.b16 %v822
      %v1317 = vunpack.c.l.b16 %v823
      %v1318 = vunpack.c.l.b16 %v824
      %v1319 = vunpack.c.l.b16 %v825
      %v1320 = vunpack.c.l.b16 %v826
      %v1321 = vunpack.c.l.b16 %v827
      %v1322 = vunpack.c.l.b16 %v828
      %v1323 = vunpack.c.l.b16 %v829
      %v1324 = vunpack.c.l.b16 %v830
      %v1325 = vunpack.c.l.b16 %v831
      %v1326 = vunpack.c.l.b16 %v832
      %v1327 = vunpack.c.l.b16 %v833
      %v1328 = vunpack.c.l.b16 %v834
      %v1329 = vunpack.c.l.b16 %v835
      %v1330 = vunpack.c.l.b16 %v836
      %v1331 = vunpack.c.l.b16 %v837
      %v1332 = vunpack.c.l.b16 %v838
      %v1333 = vunpack.c.l.b16 %v839
      %v1334 = vunpack.c.l.b16 %v840
      %v1335 = vunpack.c.l.b16 %v841
      %v1336 = vunpack.c.l.b16 %v842
      %v1337 = vunpack.c.l.b16 %v843
      %v1338 = vunpack.c.l.b16 %v844
      %v1339 = vunpack.c.l.b16 %v845
      %v1340 = vunpack.c.l.b16 %v846
      %v1341 = vunpack.c.l.b16 %v847
      %v1342 = vunpack.c.l.b16 %v848
      %v1343 = vunpack.c.l.b16 %v849
      %v1344 = vpack.c.b16 %v1297, %v1296
      %v1345 = vpack.c.b16 %v1299, %v1298
      %v1346 = vpack.c.b16 %v1301, %v1300
      %v1347 = vpack.c.b16 %v1303, %v1302
      %v1348 = vpack.c.b16 %v1305, %v1304
      %v1349 = vpack.c.b16 %v1307, %v1306
      %v1350 = vpack.c.b16 %v1309, %v1308
      %v1351 = vpack.c.b16 %v1311, %v1310
      %v1352 = vpack.c.b16 %v1313, %v1312
      %v1353 = vpack.c.b16 %v1315, %v1314
      %v1354 = vpack.c.b16 %v1317, %v1316
      %v1355 = vpack.c.b16 %v1319, %v1318
      %v1356 = vpack.c.b16 %v1321, %v1320
      %v1357 = vpack.c.b16 %v1323, %v1322
      %v1358 = vpack.c.b16 %v1325, %v1324
      %v1359 = vpack.c.b16 %v1327, %v1326
      %v1360 = vpack.c.b16 %v1329, %v1328
      %v1361 = vpack.c.b16 %v1331, %v1330
      %v1362 = vpack.c.b16 %v1333, %v1332
      %v1363 = vpack.c.b16 %v1335, %v1334
      %v1364 = vpack.c.b16 %v1337, %v1336
      %v1365 = vpack.c.b16 %v1339, %v1338
      %v1366 = vpack.c.b16 %v1341, %v1340
      %v1367 = vpack.c.b16 %v1343, %v1342
      %1392 = vmatprep.subr.bf16.mxu0 0
      %1393 = vmatpush1.bf16.msra.mxu0 %v1351
      %1394 = vmatprep.subr.bf16.mxu0 0
      %1395 = vmatpush1.bf16.msra.mxu0 %v1350
      %1396 = vmatprep.subr.bf16.mxu0 0
      %1397 = vmatpush1.bf16.msra.mxu0 %v1349
      %1398 = vmatprep.subr.bf16.mxu0 0
      %1399 = vmatpush1.bf16.msra.mxu0 %v1348
      %1400 = vmatprep.subr.bf16.mxu0 0
      %1401 = vmatpush1.bf16.msra.mxu0 %v1347
      %1402 = vmatprep.subr.bf16.mxu0 0
      %1403 = vmatpush1.bf16.msra.mxu0 %v1346
      %1404 = vmatprep.subr.bf16.mxu0 0
      %1405 = vmatpush1.bf16.msra.mxu0 %v1345
      %1406 = vmatprep.subr.bf16.mxu0 0
      %1407 = vmatpush1.bf16.msra.mxu0 %v1344
      %1408 = vmatprep.subr.bf16.mxu0 0
      %1409 = vmatpush2.bf16.msra.mxu0 %v1359
      %1410 = vmatprep.subr.bf16.mxu0 0
      %1411 = vmatpush2.bf16.msra.mxu0 %v1358
      %1412 = vmatprep.subr.bf16.mxu0 0
      %1413 = vmatpush2.bf16.msra.mxu0 %v1357
      %1414 = vmatprep.subr.bf16.mxu0 0
      %1415 = vmatpush2.bf16.msra.mxu0 %v1356
      %1416 = vmatprep.subr.bf16.mxu0 0
      %1417 = vmatpush2.bf16.msra.mxu0 %v1355
      %1418 = vmatprep.subr.bf16.mxu0 0
      %1419 = vmatpush2.bf16.msra.mxu0 %v1354
      %1420 = vmatprep.subr.bf16.mxu0 0
      %1421 = vmatpush2.bf16.msra.mxu0 %v1353
      %1422 = vmatprep.subr.bf16.mxu0 0
      %1423 = vmatpush2.bf16.msra.mxu0 %v1352
      %1424 = vmatprep.mubr.bf16.mxu0 %v1225
      %1425 = vmatmul.mubr.bf16.gmra.mxu0 %v1224
      %v1426 = vpop.f32.mrf.mxu0
      %v1427 = vadd.f32 %v1191, %v1426
      %v1428 = vpop.f32.mrf.mxu0
      %v1429 = vpop.f32.mrf.mxu0
      %v1430 = vadd.f32 %v1194, %v1429
      %v1431 = vpop.f32.mrf.mxu0
      %1432 = vmatprep.mubr.bf16.mxu0 %v1228
      %1433 = vmatmul.mubr.bf16.gmra.mxu0 %v1227
      %v1434 = vpop.f32.mrf.mxu0
      %v1435 = vadd.f32 %v1199, %v1434
      %v1436 = vpop.f32.mrf.mxu0
      %v1437 = vpop.f32.mrf.mxu0
      %v1438 = vadd.f32 %v1202, %v1437
      %v1439 = vpop.f32.mrf.mxu0
      %1440 = vmatprep.mubr.bf16.mxu0 %v1231
      %1441 = vmatmul.mubr.bf16.gmra.mxu0 %v1230
      %v1442 = vpop.f32.mrf.mxu0
      %v1443 = vadd.f32 %v1207, %v1442
      %v1444 = vpop.f32.mrf.mxu0
      %v1445 = vpop.f32.mrf.mxu0
      %v1446 = vadd.f32 %v1210, %v1445
      %v1447 = vpop.f32.mrf.mxu0
      %1448 = vmatprep.mubr.bf16.mxu0 %v1234
      %1449 = vmatmul.mubr.bf16.gmra.mxu0 %v1233
      %v1450 = vpop.f32.mrf.mxu0
      %v1451 = vadd.f32 %v1215, %v1450
      %v1452 = vpop.f32.mrf.mxu0
      %v1453 = vpop.f32.mrf.mxu0
      %v1454 = vadd.f32 %v1218, %v1453
      %v1455 = vpop.f32.mrf.mxu0
      %1456 = vdwg.mxu0
      %1457 = vmatprep.subr.bf16.mxu0 0
      %1458 = vmatpush1.bf16.msra.mxu0 %v1367
      %1459 = vmatprep.subr.bf16.mxu0 0
      %1460 = vmatpush1.bf16.msra.mxu0 %v1366
      %1461 = vmatprep.subr.bf16.mxu0 0
      %1462 = vmatpush1.bf16.msra.mxu0 %v1365
      %1463 = vmatprep.subr.bf16.mxu0 0
      %1464 = vmatpush1.bf16.msra.mxu0 %v1364
      %1465 = vmatprep.subr.bf16.mxu0 0
      %1466 = vmatpush1.bf16.msra.mxu0 %v1363
      %1467 = vmatprep.subr.bf16.mxu0 0
      %1468 = vmatpush1.bf16.msra.mxu0 %v1362
      %1469 = vmatprep.subr.bf16.mxu0 0
      %1470 = vmatpush1.bf16.msra.mxu0 %v1361
      %1471 = vmatprep.subr.bf16.mxu0 0
      %1472 = vmatpush1.bf16.msra.mxu0 %v1360
      %1473 = vmatprep.subr.bf16.mxu0 0
      %1474 = vmatpush2.bf16.msra.mxu0 0
      %1475 = vmatprep.subr.bf16.mxu0 0
      %1476 = vmatpush2.bf16.msra.mxu0 0
      %1477 = vmatprep.subr.bf16.mxu0 0
      %1478 = vmatpush2.bf16.msra.mxu0 0
      %1479 = vmatprep.subr.bf16.mxu0 0
      %1480 = vmatpush2.bf16.msra.mxu0 0
      %1481 = vmatprep.subr.bf16.mxu0 0
      %1482 = vmatpush2.bf16.msra.mxu0 0
      %1483 = vmatprep.subr.bf16.mxu0 0
      %1484 = vmatpush2.bf16.msra.mxu0 0
      %1485 = vmatprep.subr.bf16.mxu0 0
      %1486 = vmatpush2.bf16.msra.mxu0 0
      %1487 = vmatprep.subr.bf16.mxu0 0
      %1488 = vmatpush2.bf16.msra.mxu0 0
      %1489 = vmatprep.mubr.bf16.mxu0 0
      %1490 = vmatmul.mubr.bf16.gmra.mxu0 %v1226
      %v1491 = vpop.f32.mrf.mxu0
      %v1492 = vadd.f32 %v1427, %v1491
      %v1493 = vpop.f32.mrf.mxu0
      %v1494 = vpop.f32.mrf.mxu0
      %v1495 = vadd.f32 %v1430, %v1494
      %v1496 = vpop.f32.mrf.mxu0
      %1497 = vmatprep.mubr.bf16.mxu0 0
      %1498 = vmatmul.mubr.bf16.gmra.mxu0 %v1229
      %v1499 = vpop.f32.mrf.mxu0
      %v1500 = vadd.f32 %v1435, %v1499
      %v1501 = vpop.f32.mrf.mxu0
      %v1502 = vpop.f32.mrf.mxu0
      %v1503 = vadd.f32 %v1438, %v1502
      %v1504 = vpop.f32.mrf.mxu0
      %1505 = vmatprep.mubr.bf16.mxu0 0
      %1506 = vmatmul.mubr.bf16.gmra.mxu0 %v1232
      %v1507 = vpop.f32.mrf.mxu0
      %v1508 = vadd.f32 %v1443, %v1507
      %v1509 = vpop.f32.mrf.mxu0
      %v1510 = vpop.f32.mrf.mxu0
      %v1511 = vadd.f32 %v1446, %v1510
      %v1512 = vpop.f32.mrf.mxu0
      %1513 = vmatprep.mubr.bf16.mxu0 0
      %1514 = vmatmul.mubr.bf16.gmra.mxu0 %v1235
      %v1515 = vpop.f32.mrf.mxu0
      %v1516 = vadd.f32 %v1451, %v1515
      %v1517 = vpop.f32.mrf.mxu0
      %v1518 = vpop.f32.mrf.mxu0
      %v1519 = vadd.f32 %v1454, %v1518
      %v1520 = vpop.f32.mrf.mxu0
      %1521 = vdwg.mxu0
      %s1522 = scalar_lea.vmem %s4, 384
      %v1523 = vld [vmem:[%s1522] sm:$0xf]
      %v1524 = vld [vmem:[%s1522 + $0x4] sm:$0xf]
      %v1525 = vld [vmem:[%s1522 + $0x8] sm:$0xf]
      %v1526 = vld [vmem:[%s1522 + $0xc] sm:$0xf]
      %v1527 = vld [vmem:[%s1522 + $0x10] sm:$0xf]
      %v1528 = vld [vmem:[%s1522 + $0x14] sm:$0xf]
      %v1529 = vld [vmem:[%s1522 + $0x18] sm:$0xf]
      %v1530 = vld [vmem:[%s1522 + $0x1c] sm:$0xf]
      %v1531 = vld [vmem:[%s1522 + $0x20] sm:$0xf]
      %v1532 = vld [vmem:[%s1522 + $0x24] sm:$0xf]
      %v1533 = vld [vmem:[%s1522 + $0x28] sm:$0xf]
      %v1534 = vld [vmem:[%s1522 + $0x2c] sm:$0xf]
      %v1535 = vld [vmem:[%s1522 + $0x30] sm:$0xf]
      %v1536 = vld [vmem:[%s1522 + $0x34] sm:$0xf]
      %v1537 = vld [vmem:[%s1522 + $0x38] sm:$0xf]
      %v1538 = vld [vmem:[%s1522 + $0x3c] sm:$0xf]
      %v1539 = vld [vmem:[%s1522 + $0x40] sm:$0xf]
      %v1540 = vld [vmem:[%s1522 + $0x44] sm:$0xf]
      %v1541 = vld [vmem:[%s1522 + $0x48] sm:$0xf]
      %v1542 = vld [vmem:[%s1522 + $0x4c] sm:$0xf]
      %v1543 = vld [vmem:[%s1522 + $0x50] sm:$0xf]
      %v1544 = vld [vmem:[%s1522 + $0x54] sm:$0xf]
      %v1545 = vld [vmem:[%s1522 + $0x58] sm:$0xf]
      %v1546 = vld [vmem:[%s1522 + $0x5c] sm:$0xf]
      %v1547 = vld [vmem:[%s1522 + $0x60] sm:$0xf]
      %v1548 = vld [vmem:[%s1522 + $0x64] sm:$0xf]
      %v1549 = vld [vmem:[%s1522 + $0x68] sm:$0xf]
      %v1550 = vld [vmem:[%s1522 + $0x6c] sm:$0xf]
      %v1551 = vld [vmem:[%s1522 + $0x70] sm:$0xf]
      %v1552 = vld [vmem:[%s1522 + $0x74] sm:$0xf]
      %v1553 = vld [vmem:[%s1522 + $0x78] sm:$0xf]
      %v1554 = vld [vmem:[%s1522 + $0x7c] sm:$0xf]
      %v1555 = vld [vmem:[%s1522 + $0x80] sm:$0xf]
      %v1556 = vld [vmem:[%s1522 + $0x84] sm:$0xf]
      %v1557 = vld [vmem:[%s1522 + $0x88] sm:$0xf]
      %v1558 = vld [vmem:[%s1522 + $0x8c] sm:$0xf]
      %v1559 = vld [vmem:[%s1522 + $0x90] sm:$0xf]
      %v1560 = vld [vmem:[%s1522 + $0x94] sm:$0xf]
      %v1561 = vld [vmem:[%s1522 + $0x98] sm:$0xf]
      %v1562 = vld [vmem:[%s1522 + $0x9c] sm:$0xf]
      %v1563 = vld [vmem:[%s1522 + $0xa0] sm:$0xf]
      %v1564 = vld [vmem:[%s1522 + $0xa4] sm:$0xf]
      %v1565 = vld [vmem:[%s1522 + $0xa8] sm:$0xf]
      %v1566 = vld [vmem:[%s1522 + $0xac] sm:$0xf]
      %v1567 = vld [vmem:[%s1522 + $0xb0] sm:$0xf]
      %v1568 = vld [vmem:[%s1522 + $0xb4] sm:$0xf]
      %v1569 = vld [vmem:[%s1522 + $0xb8] sm:$0xf]
      %v1570 = vld [vmem:[%s1522 + $0xbc] sm:$0xf]
      %v1571 = vunpack.c.l.b16 %v711
      %v1572 = vunpack.c.l.b16 %v781
      %v1573 = vunpack.c.l.b16 %v801
      %v1574 = vpack.c.b16 %v1571, %v920
      %v1575 = vpack.c.b16 %v1572, %v921
      %v1576 = vpack.c.b16 %v1573, %v922
      %v1628 = vunpack.c.l.b16 %v1523
      %v1629 = vunpack.c.l.b16 %v1524
      %v1630 = vunpack.c.l.b16 %v1525
      %v1631 = vunpack.c.l.b16 %v1526
      %v1632 = vunpack.c.l.b16 %v1527
      %v1633 = vunpack.c.l.b16 %v1528
      %v1634 = vunpack.c.l.b16 %v1529
      %v1635 = vunpack.c.l.b16 %v1530
      %v1636 = vunpack.c.l.b16 %v1531
      %v1637 = vunpack.c.l.b16 %v1532
      %v1638 = vunpack.c.l.b16 %v1533
      %v1639 = vunpack.c.l.b16 %v1534
      %v1640 = vunpack.c.l.b16 %v1535
      %v1641 = vunpack.c.l.b16 %v1536
      %v1642 = vunpack.c.l.b16 %v1537
      %v1643 = vunpack.c.l.b16 %v1538
      %v1644 = vunpack.c.l.b16 %v1539
      %v1645 = vunpack.c.l.b16 %v1540
      %v1646 = vunpack.c.l.b16 %v1541
      %v1647 = vunpack.c.l.b16 %v1542
      %v1648 = vunpack.c.l.b16 %v1543
      %v1649 = vunpack.c.l.b16 %v1544
      %v1650 = vunpack.c.l.b16 %v1545
      %v1651 = vunpack.c.l.b16 %v1546
      %v1652 = vunpack.c.l.b16 %v1547
      %v1653 = vunpack.c.l.b16 %v1548
      %v1654 = vunpack.c.l.b16 %v1549
      %v1655 = vunpack.c.l.b16 %v1550
      %v1656 = vunpack.c.l.b16 %v1551
      %v1657 = vunpack.c.l.b16 %v1552
      %v1658 = vunpack.c.l.b16 %v1553
      %v1659 = vunpack.c.l.b16 %v1554
      %v1660 = vunpack.c.l.b16 %v1555
      %v1661 = vunpack.c.l.b16 %v1556
      %v1662 = vunpack.c.l.b16 %v1557
      %v1663 = vunpack.c.l.b16 %v1558
      %v1664 = vunpack.c.l.b16 %v1559
      %v1665 = vunpack.c.l.b16 %v1560
      %v1666 = vunpack.c.l.b16 %v1561
      %v1667 = vunpack.c.l.b16 %v1562
      %v1668 = vunpack.c.l.b16 %v1563
      %v1669 = vunpack.c.l.b16 %v1564
      %v1670 = vunpack.c.l.b16 %v1565
      %v1671 = vunpack.c.l.b16 %v1566
      %v1672 = vunpack.c.l.b16 %v1567
      %v1673 = vunpack.c.l.b16 %v1568
      %v1674 = vunpack.c.l.b16 %v1569
      %v1675 = vunpack.c.l.b16 %v1570
      %v1676 = vpack.c.b16 %v1629, %v1628
      %v1677 = vpack.c.b16 %v1631, %v1630
      %v1678 = vpack.c.b16 %v1633, %v1632
      %v1679 = vpack.c.b16 %v1635, %v1634
      %v1680 = vpack.c.b16 %v1637, %v1636
      %v1681 = vpack.c.b16 %v1639, %v1638
      %v1682 = vpack.c.b16 %v1641, %v1640
      %v1683 = vpack.c.b16 %v1643, %v1642
      %v1684 = vpack.c.b16 %v1645, %v1644
      %v1685 = vpack.c.b16 %v1647, %v1646
      %v1686 = vpack.c.b16 %v1649, %v1648
      %v1687 = vpack.c.b16 %v1651, %v1650
      %v1688 = vpack.c.b16 %v1653, %v1652
      %v1689 = vpack.c.b16 %v1655, %v1654
      %v1690 = vpack.c.b16 %v1657, %v1656
      %v1691 = vpack.c.b16 %v1659, %v1658
      %v1692 = vpack.c.b16 %v1661, %v1660
      %v1693 = vpack.c.b16 %v1663, %v1662
      %v1694 = vpack.c.b16 %v1665, %v1664
      %v1695 = vpack.c.b16 %v1667, %v1666
      %v1696 = vpack.c.b16 %v1669, %v1668
      %v1697 = vpack.c.b16 %v1671, %v1670
      %v1698 = vpack.c.b16 %v1673, %v1672
      %v1699 = vpack.c.b16 %v1675, %v1674
      %1724 = vmatprep.subr.bf16.mxu0 0
      %1725 = vmatpush1.bf16.msra.mxu0 %v1683
      %1726 = vmatprep.subr.bf16.mxu0 0
      %1727 = vmatpush1.bf16.msra.mxu0 %v1682
      %1728 = vmatprep.subr.bf16.mxu0 0
      %1729 = vmatpush1.bf16.msra.mxu0 %v1681
      %1730 = vmatprep.subr.bf16.mxu0 0
      %1731 = vmatpush1.bf16.msra.mxu0 %v1680
      %1732 = vmatprep.subr.bf16.mxu0 0
      %1733 = vmatpush1.bf16.msra.mxu0 %v1679
      %1734 = vmatprep.subr.bf16.mxu0 0
      %1735 = vmatpush1.bf16.msra.mxu0 %v1678
      %1736 = vmatprep.subr.bf16.mxu0 0
      %1737 = vmatpush1.bf16.msra.mxu0 %v1677
      %1738 = vmatprep.subr.bf16.mxu0 0
      %1739 = vmatpush1.bf16.msra.mxu0 %v1676
      %1740 = vmatprep.subr.bf16.mxu0 0
      %1741 = vmatpush2.bf16.msra.mxu0 %v1691
      %1742 = vmatprep.subr.bf16.mxu0 0
      %1743 = vmatpush2.bf16.msra.mxu0 %v1690
      %1744 = vmatprep.subr.bf16.mxu0 0
      %1745 = vmatpush2.bf16.msra.mxu0 %v1689
      %1746 = vmatprep.subr.bf16.mxu0 0
      %1747 = vmatpush2.bf16.msra.mxu0 %v1688
      %1748 = vmatprep.subr.bf16.mxu0 0
      %1749 = vmatpush2.bf16.msra.mxu0 %v1687
      %1750 = vmatprep.subr.bf16.mxu0 0
      %1751 = vmatpush2.bf16.msra.mxu0 %v1686
      %1752 = vmatprep.subr.bf16.mxu0 0
      %1753 = vmatpush2.bf16.msra.mxu0 %v1685
      %1754 = vmatprep.subr.bf16.mxu0 0
      %1755 = vmatpush2.bf16.msra.mxu0 %v1684
      %1756 = vmatprep.mubr.bf16.mxu0 %v1228
      %1757 = vmatmul.mubr.bf16.gmra.mxu0 %v1227
      %v1758 = vpop.f32.mrf.mxu0
      %v1759 = vadd.f32 0.0, %v1758
      %v1760 = vpop.f32.mrf.mxu0
      %v1761 = vpop.f32.mrf.mxu0
      %v1762 = vadd.f32 0.0, %v1761
      %v1763 = vpop.f32.mrf.mxu0
      %1764 = vmatprep.mubr.bf16.mxu0 %v1231
      %1765 = vmatmul.mubr.bf16.gmra.mxu0 %v1230
      %v1766 = vpop.f32.mrf.mxu0
      %v1767 = vadd.f32 0.0, %v1766
      %v1768 = vpop.f32.mrf.mxu0
      %v1769 = vpop.f32.mrf.mxu0
      %v1770 = vadd.f32 0.0, %v1769
      %v1771 = vpop.f32.mrf.mxu0
      %1772 = vmatprep.mubr.bf16.mxu0 %v1234
      %1773 = vmatmul.mubr.bf16.gmra.mxu0 %v1233
      %v1774 = vpop.f32.mrf.mxu0
      %v1775 = vadd.f32 0.0, %v1774
      %v1776 = vpop.f32.mrf.mxu0
      %v1777 = vpop.f32.mrf.mxu0
      %v1778 = vadd.f32 0.0, %v1777
      %v1779 = vpop.f32.mrf.mxu0
      %1780 = vmatprep.mubr.bf16.mxu0 %v1575
      %1781 = vmatmul.mubr.bf16.gmra.mxu0 %v1574
      %v1782 = vpop.f32.mrf.mxu0
      %v1783 = vadd.f32 0.0, %v1782
      %v1784 = vpop.f32.mrf.mxu0
      %v1785 = vpop.f32.mrf.mxu0
      %v1786 = vadd.f32 0.0, %v1785
      %v1787 = vpop.f32.mrf.mxu0
      %1788 = vdwg.mxu0
      %1789 = vmatprep.subr.bf16.mxu0 0
      %1790 = vmatpush1.bf16.msra.mxu0 %v1699
      %1791 = vmatprep.subr.bf16.mxu0 0
      %1792 = vmatpush1.bf16.msra.mxu0 %v1698
      %1793 = vmatprep.subr.bf16.mxu0 0
      %1794 = vmatpush1.bf16.msra.mxu0 %v1697
      %1795 = vmatprep.subr.bf16.mxu0 0
      %1796 = vmatpush1.bf16.msra.mxu0 %v1696
      %1797 = vmatprep.subr.bf16.mxu0 0
      %1798 = vmatpush1.bf16.msra.mxu0 %v1695
      %1799 = vmatprep.subr.bf16.mxu0 0
      %1800 = vmatpush1.bf16.msra.mxu0 %v1694
      %1801 = vmatprep.subr.bf16.mxu0 0
      %1802 = vmatpush1.bf16.msra.mxu0 %v1693
      %1803 = vmatprep.subr.bf16.mxu0 0
      %1804 = vmatpush1.bf16.msra.mxu0 %v1692
      %1805 = vmatprep.subr.bf16.mxu0 0
      %1806 = vmatpush2.bf16.msra.mxu0 0
      %1807 = vmatprep.subr.bf16.mxu0 0
      %1808 = vmatpush2.bf16.msra.mxu0 0
      %1809 = vmatprep.subr.bf16.mxu0 0
      %1810 = vmatpush2.bf16.msra.mxu0 0
      %1811 = vmatprep.subr.bf16.mxu0 0
      %1812 = vmatpush2.bf16.msra.mxu0 0
      %1813 = vmatprep.subr.bf16.mxu0 0
      %1814 = vmatpush2.bf16.msra.mxu0 0
      %1815 = vmatprep.subr.bf16.mxu0 0
      %1816 = vmatpush2.bf16.msra.mxu0 0
      %1817 = vmatprep.subr.bf16.mxu0 0
      %1818 = vmatpush2.bf16.msra.mxu0 0
      %1819 = vmatprep.subr.bf16.mxu0 0
      %1820 = vmatpush2.bf16.msra.mxu0 0
      %1821 = vmatprep.mubr.bf16.mxu0 0
      %1822 = vmatmul.mubr.bf16.gmra.mxu0 %v1229
      %v1823 = vpop.f32.mrf.mxu0
      %v1824 = vadd.f32 %v1759, %v1823
      %v1825 = vpop.f32.mrf.mxu0
      %v1826 = vpop.f32.mrf.mxu0
      %v1827 = vadd.f32 %v1762, %v1826
      %v1828 = vpop.f32.mrf.mxu0
      %1829 = vmatprep.mubr.bf16.mxu0 0
      %1830 = vmatmul.mubr.bf16.gmra.mxu0 %v1232
      %v1831 = vpop.f32.mrf.mxu0
      %v1832 = vadd.f32 %v1767, %v1831
      %v1833 = vpop.f32.mrf.mxu0
      %v1834 = vpop.f32.mrf.mxu0
      %v1835 = vadd.f32 %v1770, %v1834
      %v1836 = vpop.f32.mrf.mxu0
      %1837 = vmatprep.mubr.bf16.mxu0 0
      %1838 = vmatmul.mubr.bf16.gmra.mxu0 %v1235
      %v1839 = vpop.f32.mrf.mxu0
      %v1840 = vadd.f32 %v1775, %v1839
      %v1841 = vpop.f32.mrf.mxu0
      %v1842 = vpop.f32.mrf.mxu0
      %v1843 = vadd.f32 %v1778, %v1842
      %v1844 = vpop.f32.mrf.mxu0
      %1845 = vmatprep.mubr.bf16.mxu0 0
      %1846 = vmatmul.mubr.bf16.gmra.mxu0 %v1576
      %v1847 = vpop.f32.mrf.mxu0
      %v1848 = vadd.f32 %v1783, %v1847
      %v1849 = vpop.f32.mrf.mxu0
      %v1850 = vpop.f32.mrf.mxu0
      %v1851 = vadd.f32 %v1786, %v1850
      %v1852 = vpop.f32.mrf.mxu0
      %1853 = vdwg.mxu0
      %v1854 = vadd.f32 %v1492, %v1824
      %v1855 = vadd.f32 %v1495, %v1827
      %v1856 = vadd.f32 %v1500, %v1832
      %v1857 = vadd.f32 %v1503, %v1835
      %v1858 = vadd.f32 %v1508, %v1840
      %v1859 = vadd.f32 %v1511, %v1843
      %v1860 = vadd.f32 %v1516, %v1848
      %v1861 = vadd.f32 %v1519, %v1851
      %v1862 = vld [vmem:[%s5] sm:$0x1]
      %v1864 = vlaneseq
      %v1865 = vshrl.u32 %v1864, 7
      %v1866 = vsub.s32 0, %v1865
      %v1867 = vrot.slane %v1862, %v1866
      %v1869 = vmul.f32 %v1854, %v1867
      %v1870 = vmul.f32 %v1855, %v1867
      %v1871 = vmul.f32 %v1856, %v1867
      %v1872 = vmul.f32 %v1857, %v1867
      %v1873 = vmul.f32 %v1858, %v1867
      %v1874 = vmul.f32 %v1859, %v1867
      %v1875 = vmul.f32 %v1860, %v1867
      %v1876 = vmul.f32 %v1861, %v1867
      %v1877 = vld [vmem:[%s6] sm:$0x1]
      %v1879 = vlaneseq
      %v1880 = vshrl.u32 %v1879, 7
      %v1881 = vsub.s32 0, %v1880
      %v1882 = vrot.slane %v1877, %v1881
      %v1884 = vadd.f32 %v1869, %v1882
      %v1885 = vadd.f32 %v1870, %v1882
      %v1886 = vadd.f32 %v1871, %v1882
      %v1887 = vadd.f32 %v1872, %v1882
      %v1888 = vadd.f32 %v1873, %v1882
      %v1889 = vadd.f32 %v1874, %v1882
      %v1890 = vadd.f32 %v1875, %v1882
      %v1891 = vadd.f32 %v1876, %v1882
      %v1892 = vmax.f32 %v1884, 0.0
      %v1893 = vmax.f32 %v1885, 0.0
      %v1894 = vmax.f32 %v1886, 0.0
      %v1895 = vmax.f32 %v1887, 0.0
      %v1896 = vmax.f32 %v1888, 0.0
      %v1897 = vmax.f32 %v1889, 0.0
      %v1898 = vmax.f32 %v1890, 0.0
      %v1899 = vmax.f32 %v1891, 0.0
      %v1900 = vpack.c.bf16 %v1892, %v1892
      %v1901 = vpack.c.bf16 %v1893, %v1893
      %v1902 = vpack.c.bf16 %v1894, %v1894
      %v1903 = vpack.c.bf16 %v1895, %v1895
      %v1904 = vpack.c.bf16 %v1896, %v1896
      %v1905 = vpack.c.bf16 %v1897, %v1897
      %v1906 = vpack.c.bf16 %v1898, %v1898
      %v1907 = vpack.c.bf16 %v1899, %v1899
      %1908 = vst [vmem:[%s300] sm:$0xf] %v1900
      %1909 = vst [vmem:[%s300 + $0x4] sm:$0xf] %v1901
      %1910 = vst [vmem:[%s300 + $0x8] sm:$0xf] %v1902
      %1911 = vst [vmem:[%s300 + $0xc] sm:$0xf] %v1903
      %1912 = vst [vmem:[%s300 + $0x10] sm:$0xf] %v1904
      %1913 = vst [vmem:[%s300 + $0x14] sm:$0xf] %v1905
      %1914 = vst [vmem:[%s300 + $0x18] sm:$0xf] %v1906
      %1915 = vst [vmem:[%s300 + $0x1c] sm:$0xf] %v1907
      %s1916 = smul.u32 8, %s23
      %p1917 = scmp.lt.s32.totalorder %s22, 1
      %s1918 = scalar_select %p1917, %s22, 1
      %p1919 = scmp.lt.s32.totalorder %s1916, 7
      %s1920 = scalar_select %p1919, %s1916, 7
      %s1921 = smul.addr %s1918, 8
      %s1922 = sadd.s32 %s1920, %s1921
      %s1923 = smul.addr %s1922, 4
      %s1924 = scalar_lea.vmem %s7, %s1923
      // Predicated region
      $region177: #{aggregation_block.11} parent=39 // pred_check
        %p1925 = pneg %p169
      $region178: #{aggregation_block.11} parent=39 // pred_check_branch
        %1927 = sbr.rel (%p1925) target = $region180
      $region179: #{aggregation_block.11} parent=39 // pred_region
        %s1928 = smul.u32 8, %s23
      $region180: #{aggregation_block.11} parent=39 // pred_fallthru
        _
    $region40: #{aggregation_block.11} parent=5 // pred_fallthru
      _
    %p1929 = scmp.le.s32.totalorder 2, %s13
    // Predicated region
    $region181: #{aggregation_block.11} parent=5 // pred_check
      %p1930 = pneg %p1929
    $region182: #{aggregation_block.11} parent=5 // pred_check_branch
      %1932 = sbr.rel (%p1930) target = $region184
    $region183: #{aggregation_block.11} parent=5 // pred_region
      %s1933 = ssub.s32 %s13, 2
      // Predicated region
      $region185: #{aggregation_block.11} parent=183 // pred_check
        %p1934 = pneg %p175
      $region186: #{aggregation_block.11} parent=183 // pred_check_branch
        %1936 = sbr.rel (%p1934) target = $region188
      $region187: #{aggregation_block.11} parent=183 // pred_region
        %s1937 = smul.u32 8, %s25
        %p1938 = scmp.lt.s32.totalorder %s24, 1
        %s1939 = scalar_select %p1938, %s24, 1
        %p1940 = scmp.lt.s32.totalorder %s1937, 7
        %s1941 = scalar_select %p1940, %s1937, 7
        %s1942 = smul.addr %s1939, 8
        %s1943 = sadd.s32 %s1941, %s1942
        %s1944 = smul.addr %s1943, 4
        %s1945 = scalar_lea.vmem %s7, %s1944
      $region188: #{aggregation_block.11} parent=183 // pred_fallthru
        _
    $region184: #{aggregation_block.11} parent=5 // pred_fallthru
      _
  $region6: #{aggregation_block.11} parent=0 // loop_footer
    %s17 = sadd.s32 1, %s13
  $region7: #{aggregation_block.11} parent=0 // loop_footer_branch
    %12 = sbr.rel target = $region3
  $region8: #{aggregation_block.11} parent=0 // loop_exit
    _
  %1946 = vsyncmov [#allocation3]
  %s1947 = vpop.sfrf %1946
  %p1948 = scmp.eq.s32.totalorder %s1947, 0
  %p1949 = pneg %p1948
  %1951 = shalt.err (%p1949)
  %s1952 = scalar_lea.sflag [#allocation3], 1
  %1953 = vsyncmov %s1952
  %s1954 = vpop.sfrf %1953
  %p1955 = scmp.eq.s32.totalorder %s1954, 0
  %p1956 = pneg %p1955
  %1958 = shalt.err (%p1956)
  %s1959 = scalar_lea.sflag [#allocation3], 2
  %1960 = vsyncmov %s1959
  %s1961 = vpop.sfrf %1960
  %p1962 = scmp.eq.s32.totalorder %s1961, 0
  %p1963 = pneg %p1962
  %1965 = shalt.err (%p1963)
  %s1966 = scalar_lea.sflag [#allocation3], 3
  %1967 = vsyncmov %s1966
  %s1968 = vpop.sfrf %1967
  %p1969 = scmp.eq.s32.totalorder %s1968, 0
  %p1970 = pneg %p1969
  %1972 = shalt.err (%p1970)

// kernel: aggregation_block.7
$region0: #{aggregation_block.7}
  #allocation0 [shape = 'u32[]', space=smem, size = 0x4, offset = 0x4, fixed_abs, tag = 'smem constant byte address 0x4 - core index']
  #allocation1 [shape = 'u32[144,128]{1,0:T(1,128)}', space=vmem, size = 0x12000, scoped, tag = 'internal scratch']
  %s0 = inlined_call_operand.vmem [shape: bf16[512,8], index: 0, kind: input, shape index: {}]
  %s1 = inlined_call_operand.vmem [shape: bf16[8,128], index: 1, kind: input, shape index: {}]
  %s2 = inlined_call_operand.vmem [shape: f32[1,128], index: 2, kind: input, shape index: {}]
  %s3 = inlined_call_operand.vmem [shape: bf16[512,128], index: 3, kind: output, shape index: {}]
  %s4 = sld [smem:[#allocation0]]
  $region22: #{aggregation_block.7} parent=0
    _
  %s6 = ssub.s32 1, %s4
  %s7 = scalar_select 0, %s6, %s4
  // Predicated region
  $region2: #{aggregation_block.7} parent=0 // pred_check
    _
  $region3: #{aggregation_block.7} parent=0 // pred_check_branch
    %9 = sbr.rel (0) target = $region5
  $region4: #{aggregation_block.7} parent=0 // pred_region
    _
  $region5: #{aggregation_block.7} parent=0 // pred_fallthru
    _
  // Predicated region
  $region6: #{aggregation_block.7} parent=0 // pred_check
    _
  $region7: #{aggregation_block.7} parent=0 // pred_check_branch
    %11 = sbr.rel (0) target = $region9
  $region8: #{aggregation_block.7} parent=0 // pred_region
    _
  $region9: #{aggregation_block.7} parent=0 // pred_fallthru
    _
  // Predicated region
  $region10: #{aggregation_block.7} parent=0 // pred_check
    _
  $region11: #{aggregation_block.7} parent=0 // pred_check_branch
    %13 = sbr.rel (0) target = $region13
  $region12: #{aggregation_block.7} parent=0 // pred_region
    _
  $region13: #{aggregation_block.7} parent=0 // pred_fallthru
    _
  %v15 = vld [vmem:[%s0] sm:$0xf]
  %v16 = vld [vmem:[%s0 + $0x4] sm:$0xf]
  %v17 = vld [vmem:[%s0 + $0x8] sm:$0xf]
  %v18 = vld [vmem:[%s0 + $0xc] sm:$0xf]
  %v19 = vld [vmem:[%s0 + $0x10] sm:$0xf]
  %v20 = vld [vmem:[%s0 + $0x14] sm:$0xf]
  %v21 = vld [vmem:[%s0 + $0x18] sm:$0xf]
  %v22 = vld [vmem:[%s0 + $0x1c] sm:$0xf]
  %v23 = vld [vmem:[%s0 + $0x20] sm:$0xf]
  %v24 = vld [vmem:[%s0 + $0x24] sm:$0xf]
  %v25 = vld [vmem:[%s0 + $0x28] sm:$0xf]
  %v26 = vld [vmem:[%s0 + $0x2c] sm:$0xf]
  %v27 = vld [vmem:[%s0 + $0x30] sm:$0xf]
  %v28 = vld [vmem:[%s0 + $0x34] sm:$0xf]
  %v29 = vld [vmem:[%s0 + $0x38] sm:$0xf]
  %v30 = vld [vmem:[%s0 + $0x3c] sm:$0xf]
  %v31 = vld [vmem:[%s0 + $0x40] sm:$0xf]
  %v32 = vld [vmem:[%s0 + $0x44] sm:$0xf]
  %v33 = vld [vmem:[%s0 + $0x48] sm:$0xf]
  %v34 = vld [vmem:[%s0 + $0x4c] sm:$0xf]
  %v35 = vld [vmem:[%s0 + $0x50] sm:$0xf]
  %v36 = vld [vmem:[%s0 + $0x54] sm:$0xf]
  %v37 = vld [vmem:[%s0 + $0x58] sm:$0xf]
  %v38 = vld [vmem:[%s0 + $0x5c] sm:$0xf]
  %v39 = vld [vmem:[%s0 + $0x60] sm:$0xf]
  %v40 = vld [vmem:[%s0 + $0x64] sm:$0xf]
  %v41 = vld [vmem:[%s0 + $0x68] sm:$0xf]
  %v42 = vld [vmem:[%s0 + $0x6c] sm:$0xf]
  %v43 = vld [vmem:[%s0 + $0x70] sm:$0xf]
  %v44 = vld [vmem:[%s0 + $0x74] sm:$0xf]
  %v45 = vld [vmem:[%s0 + $0x78] sm:$0xf]
  %v46 = vld [vmem:[%s0 + $0x7c] sm:$0xf]
  %v47 = vld [vmem:[%s0 + $0x80] sm:$0xf]
  %v48 = vld [vmem:[%s0 + $0x84] sm:$0xf]
  %v49 = vld [vmem:[%s0 + $0x88] sm:$0xf]
  %v50 = vld [vmem:[%s0 + $0x8c] sm:$0xf]
  %v51 = vld [vmem:[%s0 + $0x90] sm:$0xf]
  %v52 = vld [vmem:[%s0 + $0x94] sm:$0xf]
  %v53 = vld [vmem:[%s0 + $0x98] sm:$0xf]
  %v54 = vld [vmem:[%s0 + $0x9c] sm:$0xf]
  %v55 = vld [vmem:[%s0 + $0xa0] sm:$0xf]
  %v56 = vld [vmem:[%s0 + $0xa4] sm:$0xf]
  %v57 = vld [vmem:[%s0 + $0xa8] sm:$0xf]
  %v58 = vld [vmem:[%s0 + $0xac] sm:$0xf]
  %v59 = vld [vmem:[%s0 + $0xb0] sm:$0xf]
  %v60 = vld [vmem:[%s0 + $0xb4] sm:$0xf]
  %v61 = vld [vmem:[%s0 + $0xb8] sm:$0xf]
  %v62 = vld [vmem:[%s0 + $0xbc] sm:$0xf]
  %v63 = vld [vmem:[%s0 + $0xc0] sm:$0xf]
  %v64 = vld [vmem:[%s0 + $0xc4] sm:$0xf]
  %v65 = vld [vmem:[%s0 + $0xc8] sm:$0xf]
  %v66 = vld [vmem:[%s0 + $0xcc] sm:$0xf]
  %v67 = vld [vmem:[%s0 + $0xd0] sm:$0xf]
  %v68 = vld [vmem:[%s0 + $0xd4] sm:$0xf]
  %v69 = vld [vmem:[%s0 + $0xd8] sm:$0xf]
  %v70 = vld [vmem:[%s0 + $0xdc] sm:$0xf]
  %v71 = vld [vmem:[%s0 + $0xe0] sm:$0xf]
  %v72 = vld [vmem:[%s0 + $0xe4] sm:$0xf]
  %v73 = vld [vmem:[%s0 + $0xe8] sm:$0xf]
  %v74 = vld [vmem:[%s0 + $0xec] sm:$0xf]
  %v75 = vld [vmem:[%s0 + $0xf0] sm:$0xf]
  %v76 = vld [vmem:[%s0 + $0xf4] sm:$0xf]
  %v77 = vld [vmem:[%s0 + $0xf8] sm:$0xf]
  %v78 = vld [vmem:[%s0 + $0xfc] sm:$0xf]
  %v79 = vld [vmem:[%s1] sm:$0xf]
  %v80 = vld [vmem:[%s2] sm:$0x1]
  %v82 = vlaneseq
  %v83 = vshrl.u32 %v82, 7
  %v84 = vsub.s32 0, %v83
  %v85 = vrot.slane %v80, %v84
  %v151 = vunpack.c.l.b16 %v15
  %v152 = vunpack.c.l.b16 %v16
  %v153 = vunpack.c.l.b16 %v17
  %v154 = vunpack.c.l.b16 %v18
  %v155 = vunpack.c.l.b16 %v19
  %v156 = vunpack.c.l.b16 %v20
  %v157 = vunpack.c.l.b16 %v21
  %v158 = vunpack.c.l.b16 %v22
  %v159 = vunpack.c.l.b16 %v23
  %v160 = vunpack.c.l.b16 %v24
  %v161 = vunpack.c.l.b16 %v25
  %v162 = vunpack.c.l.b16 %v26
  %v163 = vunpack.c.l.b16 %v27
  %v164 = vunpack.c.l.b16 %v28
  %v165 = vunpack.c.l.b16 %v29
  %v166 = vunpack.c.l.b16 %v30
  %v167 = vunpack.c.l.b16 %v31
  %v168 = vunpack.c.l.b16 %v32
  %v169 = vunpack.c.l.b16 %v33
  %v170 = vunpack.c.l.b16 %v34
  %v171 = vunpack.c.l.b16 %v35
  %v172 = vunpack.c.l.b16 %v36
  %v173 = vunpack.c.l.b16 %v37
  %v174 = vunpack.c.l.b16 %v38
  %v175 = vunpack.c.l.b16 %v39
  %v176 = vunpack.c.l.b16 %v40
  %v177 = vunpack.c.l.b16 %v41
  %v178 = vunpack.c.l.b16 %v42
  %v179 = vunpack.c.l.b16 %v43
  %v180 = vunpack.c.l.b16 %v44
  %v181 = vunpack.c.l.b16 %v45
  %v182 = vunpack.c.l.b16 %v46
  %v183 = vunpack.c.l.b16 %v47
  %v184 = vunpack.c.l.b16 %v48
  %v185 = vunpack.c.l.b16 %v49
  %v186 = vunpack.c.l.b16 %v50
  %v187 = vunpack.c.l.b16 %v51
  %v188 = vunpack.c.l.b16 %v52
  %v189 = vunpack.c.l.b16 %v53
  %v190 = vunpack.c.l.b16 %v54
  %v191 = vunpack.c.l.b16 %v55
  %v192 = vunpack.c.l.b16 %v56
  %v193 = vunpack.c.l.b16 %v57
  %v194 = vunpack.c.l.b16 %v58
  %v195 = vunpack.c.l.b16 %v59
  %v196 = vunpack.c.l.b16 %v60
  %v197 = vunpack.c.l.b16 %v61
  %v198 = vunpack.c.l.b16 %v62
  %v199 = vunpack.c.l.b16 %v63
  %v200 = vunpack.c.l.b16 %v64
  %v201 = vunpack.c.l.b16 %v65
  %v202 = vunpack.c.l.b16 %v66
  %v203 = vunpack.c.l.b16 %v67
  %v204 = vunpack.c.l.b16 %v68
  %v205 = vunpack.c.l.b16 %v69
  %v206 = vunpack.c.l.b16 %v70
  %v207 = vunpack.c.l.b16 %v71
  %v208 = vunpack.c.l.b16 %v72
  %v209 = vunpack.c.l.b16 %v73
  %v210 = vunpack.c.l.b16 %v74
  %v211 = vunpack.c.l.b16 %v75
  %v212 = vunpack.c.l.b16 %v76
  %v213 = vunpack.c.l.b16 %v77
  %v214 = vunpack.c.l.b16 %v78
  %v215 = vpack.c.b16 %v152, %v151
  %v216 = vpack.c.b16 %v154, %v153
  %v217 = vpack.c.b16 %v156, %v155
  %v218 = vpack.c.b16 %v158, %v157
  %v219 = vpack.c.b16 %v160, %v159
  %v220 = vpack.c.b16 %v162, %v161
  %v221 = vpack.c.b16 %v164, %v163
  %v222 = vpack.c.b16 %v166, %v165
  %v223 = vpack.c.b16 %v168, %v167
  %v224 = vpack.c.b16 %v170, %v169
  %v225 = vpack.c.b16 %v172, %v171
  %v226 = vpack.c.b16 %v174, %v173
  %v227 = vpack.c.b16 %v176, %v175
  %v228 = vpack.c.b16 %v178, %v177
  %v229 = vpack.c.b16 %v180, %v179
  %v230 = vpack.c.b16 %v182, %v181
  %v231 = vpack.c.b16 %v184, %v183
  %v232 = vpack.c.b16 %v186, %v185
  %v233 = vpack.c.b16 %v188, %v187
  %v234 = vpack.c.b16 %v190, %v189
  %v235 = vpack.c.b16 %v192, %v191
  %v236 = vpack.c.b16 %v194, %v193
  %v237 = vpack.c.b16 %v196, %v195
  %v238 = vpack.c.b16 %v198, %v197
  %v239 = vpack.c.b16 %v200, %v199
  %v240 = vpack.c.b16 %v202, %v201
  %v241 = vpack.c.b16 %v204, %v203
  %v242 = vpack.c.b16 %v206, %v205
  %v243 = vpack.c.b16 %v208, %v207
  %v244 = vpack.c.b16 %v210, %v209
  %v245 = vpack.c.b16 %v212, %v211
  %v246 = vpack.c.b16 %v214, %v213
  %vm247 = vcmask 64512
  %v249 = vsel %vm247, %v215, 0
  %v252 = vsel %vm247, %v216, 0
  %v255 = vsel %vm247, %v217, 0
  %v258 = vsel %vm247, %v218, 0
  %v261 = vsel %vm247, %v219, 0
  %v264 = vsel %vm247, %v220, 0
  %v267 = vsel %vm247, %v221, 0
  %v270 = vsel %vm247, %v222, 0
  %v273 = vsel %vm247, %v223, 0
  %v276 = vsel %vm247, %v224, 0
  %v279 = vsel %vm247, %v225, 0
  %v282 = vsel %vm247, %v226, 0
  %v285 = vsel %vm247, %v227, 0
  %v288 = vsel %vm247, %v228, 0
  %v291 = vsel %vm247, %v229, 0
  %v294 = vsel %vm247, %v230, 0
  %v297 = vsel %vm247, %v231, 0
  %v300 = vsel %vm247, %v232, 0
  %v303 = vsel %vm247, %v233, 0
  %v306 = vsel %vm247, %v234, 0
  %v309 = vsel %vm247, %v235, 0
  %v312 = vsel %vm247, %v236, 0
  %v315 = vsel %vm247, %v237, 0
  %v318 = vsel %vm247, %v238, 0
  %v321 = vsel %vm247, %v239, 0
  %v324 = vsel %vm247, %v240, 0
  %v327 = vsel %vm247, %v241, 0
  %v330 = vsel %vm247, %v242, 0
  %v333 = vsel %vm247, %v243, 0
  %v336 = vsel %vm247, %v244, 0
  %v339 = vsel %vm247, %v245, 0
  %v342 = vsel %vm247, %v246, 0
  %vm344 = vcmask 1043456
  %v346 = vsel %vm344, %v79, 0
  %348 = vmatprep.subr.bf16.mxu0 0
  %349 = vmatpush1.bf16.msra.mxu0 0
  %350 = vmatprep.subr.bf16.mxu0 0
  %351 = vmatpush1.bf16.msra.mxu0 0
  %352 = vmatprep.subr.bf16.mxu0 0
  %353 = vmatpush1.bf16.msra.mxu0 0
  %354 = vmatprep.subr.bf16.mxu0 0
  %355 = vmatpush1.bf16.msra.mxu0 0
  %356 = vmatprep.subr.bf16.mxu0 0
  %357 = vmatpush1.bf16.msra.mxu0 0
  %358 = vmatprep.subr.bf16.mxu0 0
  %359 = vmatpush1.bf16.msra.mxu0 0
  %360 = vmatprep.subr.bf16.mxu0 0
  %361 = vmatpush1.bf16.msra.mxu0 0
  %362 = vmatprep.subr.bf16.mxu0 0
  %363 = vmatpush1.bf16.msra.mxu0 %v346
  %364 = vmatprep.subr.bf16.mxu0 0
  %365 = vmatpush2.bf16.msra.mxu0 0
  %366 = vmatprep.subr.bf16.mxu0 0
  %367 = vmatpush2.bf16.msra.mxu0 0
  %368 = vmatprep.subr.bf16.mxu0 0
  %369 = vmatpush2.bf16.msra.mxu0 0
  %370 = vmatprep.subr.bf16.mxu0 0
  %371 = vmatpush2.bf16.msra.mxu0 0
  %372 = vmatprep.subr.bf16.mxu0 0
  %373 = vmatpush2.bf16.msra.mxu0 0
  %374 = vmatprep.subr.bf16.mxu0 0
  %375 = vmatpush2.bf16.msra.mxu0 0
  %376 = vmatprep.subr.bf16.mxu0 0
  %377 = vmatpush2.bf16.msra.mxu0 0
  %378 = vmatprep.subr.bf16.mxu0 0
  %379 = vmatpush2.bf16.msra.mxu0 0
  %380 = vmatprep.mubr.bf16.mxu0 0
  %381 = vmatmul.mubr.bf16.gmra.mxu0 %v249
  %v382 = vpop.f32.mrf.mxu0
  %v383 = vadd.f32 %v85, %v382
  %v384 = vpop.f32.mrf.mxu0
  %v385 = vpop.f32.mrf.mxu0
  %v386 = vadd.f32 %v85, %v385
  %v387 = vpop.f32.mrf.mxu0
  %388 = vmatprep.mubr.bf16.mxu0 0
  %389 = vmatmul.mubr.bf16.gmra.mxu0 %v252
  %v390 = vpop.f32.mrf.mxu0
  %v391 = vadd.f32 %v85, %v390
  %v392 = vpop.f32.mrf.mxu0
  %v393 = vpop.f32.mrf.mxu0
  %v394 = vadd.f32 %v85, %v393
  %v395 = vpop.f32.mrf.mxu0
  %396 = vmatprep.mubr.bf16.mxu0 0
  %397 = vmatmul.mubr.bf16.gmra.mxu0 %v255
  %v398 = vpop.f32.mrf.mxu0
  %v399 = vadd.f32 %v85, %v398
  %v400 = vpop.f32.mrf.mxu0
  %v401 = vpop.f32.mrf.mxu0
  %v402 = vadd.f32 %v85, %v401
  %v403 = vpop.f32.mrf.mxu0
  %404 = vmatprep.mubr.bf16.mxu0 0
  %405 = vmatmul.mubr.bf16.gmra.mxu0 %v258
  %v406 = vpop.f32.mrf.mxu0
  %v407 = vadd.f32 %v85, %v406
  %v408 = vpop.f32.mrf.mxu0
  %v409 = vpop.f32.mrf.mxu0
  %v410 = vadd.f32 %v85, %v409
  %v411 = vpop.f32.mrf.mxu0
  %412 = vmatprep.mubr.bf16.mxu0 0
  %413 = vmatmul.mubr.bf16.gmra.mxu0 %v261
  %v414 = vpop.f32.mrf.mxu0
  %v415 = vadd.f32 %v85, %v414
  %v416 = vpop.f32.mrf.mxu0
  %v417 = vpop.f32.mrf.mxu0
  %v418 = vadd.f32 %v85, %v417
  %v419 = vpop.f32.mrf.mxu0
  %420 = vmatprep.mubr.bf16.mxu0 0
  %421 = vmatmul.mubr.bf16.gmra.mxu0 %v264
  %v422 = vpop.f32.mrf.mxu0
  %v423 = vadd.f32 %v85, %v422
  %v424 = vpop.f32.mrf.mxu0
  %v425 = vpop.f32.mrf.mxu0
  %v426 = vadd.f32 %v85, %v425
  %v427 = vpop.f32.mrf.mxu0
  %428 = vmatprep.mubr.bf16.mxu0 0
  %429 = vmatmul.mubr.bf16.gmra.mxu0 %v267
  %v430 = vpop.f32.mrf.mxu0
  %v431 = vadd.f32 %v85, %v430
  %v432 = vpop.f32.mrf.mxu0
  %v433 = vpop.f32.mrf.mxu0
  %v434 = vadd.f32 %v85, %v433
  %v435 = vpop.f32.mrf.mxu0
  %436 = vmatprep.mubr.bf16.mxu0 0
  %437 = vmatmul.mubr.bf16.gmra.mxu0 %v270
  %v438 = vpop.f32.mrf.mxu0
  %v439 = vadd.f32 %v85, %v438
  %v440 = vpop.f32.mrf.mxu0
  %v441 = vpop.f32.mrf.mxu0
  %v442 = vadd.f32 %v85, %v441
  %v443 = vpop.f32.mrf.mxu0
  %444 = vmatprep.mubr.bf16.mxu0 0
  %445 = vmatmul.mubr.bf16.gmra.mxu0 %v273
  %v446 = vpop.f32.mrf.mxu0
  %v447 = vadd.f32 %v85, %v446
  %v448 = vpop.f32.mrf.mxu0
  %v449 = vpop.f32.mrf.mxu0
  %v450 = vadd.f32 %v85, %v449
  %v451 = vpop.f32.mrf.mxu0
  %452 = vmatprep.mubr.bf16.mxu0 0
  %453 = vmatmul.mubr.bf16.gmra.mxu0 %v276
  %v454 = vpop.f32.mrf.mxu0
  %v455 = vadd.f32 %v85, %v454
  %v456 = vpop.f32.mrf.mxu0
  %v457 = vpop.f32.mrf.mxu0
  %v458 = vadd.f32 %v85, %v457
  %v459 = vpop.f32.mrf.mxu0
  %460 = vmatprep.mubr.bf16.mxu0 0
  %461 = vmatmul.mubr.bf16.gmra.mxu0 %v279
  %v462 = vpop.f32.mrf.mxu0
  %v463 = vadd.f32 %v85, %v462
  %v464 = vpop.f32.mrf.mxu0
  %v465 = vpop.f32.mrf.mxu0
  %v466 = vadd.f32 %v85, %v465
  %v467 = vpop.f32.mrf.mxu0
  %468 = vmatprep.mubr.bf16.mxu0 0
  %469 = vmatmul.mubr.bf16.gmra.mxu0 %v282
  %v470 = vpop.f32.mrf.mxu0
  %v471 = vadd.f32 %v85, %v470
  %v472 = vpop.f32.mrf.mxu0
  %v473 = vpop.f32.mrf.mxu0
  %v474 = vadd.f32 %v85, %v473
  %v475 = vpop.f32.mrf.mxu0
  %476 = vmatprep.mubr.bf16.mxu0 0
  %477 = vmatmul.mubr.bf16.gmra.mxu0 %v285
  %v478 = vpop.f32.mrf.mxu0
  %v479 = vadd.f32 %v85, %v478
  %v480 = vpop.f32.mrf.mxu0
  %v481 = vpop.f32.mrf.mxu0
  %v482 = vadd.f32 %v85, %v481
  %v483 = vpop.f32.mrf.mxu0
  %484 = vmatprep.mubr.bf16.mxu0 0
  %485 = vmatmul.mubr.bf16.gmra.mxu0 %v288
  %v486 = vpop.f32.mrf.mxu0
  %v487 = vadd.f32 %v85, %v486
  %v488 = vpop.f32.mrf.mxu0
  %v489 = vpop.f32.mrf.mxu0
  %v490 = vadd.f32 %v85, %v489
  %v491 = vpop.f32.mrf.mxu0
  %492 = vmatprep.mubr.bf16.mxu0 0
  %493 = vmatmul.mubr.bf16.gmra.mxu0 %v291
  %v494 = vpop.f32.mrf.mxu0
  %v495 = vadd.f32 %v85, %v494
  %v496 = vpop.f32.mrf.mxu0
  %v497 = vpop.f32.mrf.mxu0
  %v498 = vadd.f32 %v85, %v497
  %v499 = vpop.f32.mrf.mxu0
  %500 = vmatprep.mubr.bf16.mxu0 0
  %501 = vmatmul.mubr.bf16.gmra.mxu0 %v294
  %v502 = vpop.f32.mrf.mxu0
  %v503 = vadd.f32 %v85, %v502
  %v504 = vpop.f32.mrf.mxu0
  %v505 = vpop.f32.mrf.mxu0
  %v506 = vadd.f32 %v85, %v505
  %v507 = vpop.f32.mrf.mxu0
  %508 = vmatprep.mubr.bf16.mxu0 0
  %509 = vmatmul.mubr.bf16.gmra.mxu0 %v297
  %v510 = vpop.f32.mrf.mxu0
  %v511 = vadd.f32 %v85, %v510
  %v512 = vpop.f32.mrf.mxu0
  %v513 = vpop.f32.mrf.mxu0
  %v514 = vadd.f32 %v85, %v513
  %v515 = vpop.f32.mrf.mxu0
  %516 = vmatprep.mubr.bf16.mxu0 0
  %517 = vmatmul.mubr.bf16.gmra.mxu0 %v300
  %v518 = vpop.f32.mrf.mxu0
  %v519 = vadd.f32 %v85, %v518
  %v520 = vpop.f32.mrf.mxu0
  %v521 = vpop.f32.mrf.mxu0
  %v522 = vadd.f32 %v85, %v521
  %v523 = vpop.f32.mrf.mxu0
  %524 = vmatprep.mubr.bf16.mxu0 0
  %525 = vmatmul.mubr.bf16.gmra.mxu0 %v303
  %v526 = vpop.f32.mrf.mxu0
  %v527 = vadd.f32 %v85, %v526
  %v528 = vpop.f32.mrf.mxu0
  %v529 = vpop.f32.mrf.mxu0
  %v530 = vadd.f32 %v85, %v529
  %v531 = vpop.f32.mrf.mxu0
  %532 = vmatprep.mubr.bf16.mxu0 0
  %533 = vmatmul.mubr.bf16.gmra.mxu0 %v306
  %v534 = vpop.f32.mrf.mxu0
  %v535 = vadd.f32 %v85, %v534
  %v536 = vpop.f32.mrf.mxu0
  %v537 = vpop.f32.mrf.mxu0
  %v538 = vadd.f32 %v85, %v537
  %v539 = vpop.f32.mrf.mxu0
  %540 = vmatprep.mubr.bf16.mxu0 0
  %541 = vmatmul.mubr.bf16.gmra.mxu0 %v309
  %v542 = vpop.f32.mrf.mxu0
  %v543 = vadd.f32 %v85, %v542
  %v544 = vpop.f32.mrf.mxu0
  %v545 = vpop.f32.mrf.mxu0
  %v546 = vadd.f32 %v85, %v545
  %v547 = vpop.f32.mrf.mxu0
  %548 = vmatprep.mubr.bf16.mxu0 0
  %549 = vmatmul.mubr.bf16.gmra.mxu0 %v312
  %v550 = vpop.f32.mrf.mxu0
  %v551 = vadd.f32 %v85, %v550
  %v552 = vpop.f32.mrf.mxu0
  %v553 = vpop.f32.mrf.mxu0
  %v554 = vadd.f32 %v85, %v553
  %v555 = vpop.f32.mrf.mxu0
  %556 = vmatprep.mubr.bf16.mxu0 0
  %557 = vmatmul.mubr.bf16.gmra.mxu0 %v315
  %v558 = vpop.f32.mrf.mxu0
  %v559 = vadd.f32 %v85, %v558
  %v560 = vpop.f32.mrf.mxu0
  %v561 = vpop.f32.mrf.mxu0
  %v562 = vadd.f32 %v85, %v561
  %v563 = vpop.f32.mrf.mxu0
  %564 = vmatprep.mubr.bf16.mxu0 0
  %565 = vmatmul.mubr.bf16.gmra.mxu0 %v318
  %v566 = vpop.f32.mrf.mxu0
  %v567 = vadd.f32 %v85, %v566
  %v568 = vpop.f32.mrf.mxu0
  %v569 = vpop.f32.mrf.mxu0
  %v570 = vadd.f32 %v85, %v569
  %v571 = vpop.f32.mrf.mxu0
  %572 = vmatprep.mubr.bf16.mxu0 0
  %573 = vmatmul.mubr.bf16.gmra.mxu0 %v321
  %v574 = vpop.f32.mrf.mxu0
  %v575 = vadd.f32 %v85, %v574
  %v576 = vpop.f32.mrf.mxu0
  %v577 = vpop.f32.mrf.mxu0
  %v578 = vadd.f32 %v85, %v577
  %v579 = vpop.f32.mrf.mxu0
  %580 = vmatprep.mubr.bf16.mxu0 0
  %581 = vmatmul.mubr.bf16.gmra.mxu0 %v324
  %v582 = vpop.f32.mrf.mxu0
  %v583 = vadd.f32 %v85, %v582
  %v584 = vpop.f32.mrf.mxu0
  %v585 = vpop.f32.mrf.mxu0
  %v586 = vadd.f32 %v85, %v585
  %v587 = vpop.f32.mrf.mxu0
  %588 = vmatprep.mubr.bf16.mxu0 0
  %589 = vmatmul.mubr.bf16.gmra.mxu0 %v327
  %v590 = vpop.f32.mrf.mxu0
  %v591 = vadd.f32 %v85, %v590
  %v592 = vpop.f32.mrf.mxu0
  %v593 = vpop.f32.mrf.mxu0
  %v594 = vadd.f32 %v85, %v593
  %v595 = vpop.f32.mrf.mxu0
  %596 = vmatprep.mubr.bf16.mxu0 0
  %597 = vmatmul.mubr.bf16.gmra.mxu0 %v330
  %v598 = vpop.f32.mrf.mxu0
  %v599 = vadd.f32 %v85, %v598
  %v600 = vpop.f32.mrf.mxu0
  %v601 = vpop.f32.mrf.mxu0
  %v602 = vadd.f32 %v85, %v601
  %v603 = vpop.f32.mrf.mxu0
  %604 = vmatprep.mubr.bf16.mxu0 0
  %605 = vmatmul.mubr.bf16.gmra.mxu0 %v333
  %v606 = vpop.f32.mrf.mxu0
  %v607 = vadd.f32 %v85, %v606
  %v608 = vpop.f32.mrf.mxu0
  %v609 = vpop.f32.mrf.mxu0
  %v610 = vadd.f32 %v85, %v609
  %v611 = vpop.f32.mrf.mxu0
  %612 = vmatprep.mubr.bf16.mxu0 0
  %613 = vmatmul.mubr.bf16.gmra.mxu0 %v336
  %v614 = vpop.f32.mrf.mxu0
  %v615 = vadd.f32 %v85, %v614
  %v616 = vpop.f32.mrf.mxu0
  %v617 = vpop.f32.mrf.mxu0
  %v618 = vadd.f32 %v85, %v617
  %v619 = vpop.f32.mrf.mxu0
  %620 = vmatprep.mubr.bf16.mxu0 0
  %621 = vmatmul.mubr.bf16.gmra.mxu0 %v339
  %v622 = vpop.f32.mrf.mxu0
  %v623 = vadd.f32 %v85, %v622
  %v624 = vpop.f32.mrf.mxu0
  %v625 = vpop.f32.mrf.mxu0
  %v626 = vadd.f32 %v85, %v625
  %v627 = vpop.f32.mrf.mxu0
  %628 = vmatprep.mubr.bf16.mxu0 0
  %629 = vmatmul.mubr.bf16.gmra.mxu0 %v342
  %v630 = vpop.f32.mrf.mxu0
  %v631 = vadd.f32 %v85, %v630
  %v632 = vpop.f32.mrf.mxu0
  %v633 = vpop.f32.mrf.mxu0
  %v634 = vadd.f32 %v85, %v633
  %v635 = vpop.f32.mrf.mxu0
  %636 = vdwg.mxu0
  %v637 = vpack.c.bf16 %v386, %v383
  %v638 = vpack.c.bf16 %v394, %v391
  %v639 = vpack.c.bf16 %v402, %v399
  %v640 = vpack.c.bf16 %v410, %v407
  %v641 = vpack.c.bf16 %v418, %v415
  %v642 = vpack.c.bf16 %v426, %v423
  %v643 = vpack.c.bf16 %v434, %v431
  %v644 = vpack.c.bf16 %v442, %v439
  %v645 = vpack.c.bf16 %v450, %v447
  %v646 = vpack.c.bf16 %v458, %v455
  %v647 = vpack.c.bf16 %v466, %v463
  %v648 = vpack.c.bf16 %v474, %v471
  %v649 = vpack.c.bf16 %v482, %v479
  %v650 = vpack.c.bf16 %v490, %v487
  %v651 = vpack.c.bf16 %v498, %v495
  %v652 = vpack.c.bf16 %v506, %v503
  %v653 = vpack.c.bf16 %v514, %v511
  %v654 = vpack.c.bf16 %v522, %v519
  %v655 = vpack.c.bf16 %v530, %v527
  %v656 = vpack.c.bf16 %v538, %v535
  %v657 = vpack.c.bf16 %v546, %v543
  %v658 = vpack.c.bf16 %v554, %v551
  %v659 = vpack.c.bf16 %v562, %v559
  %v660 = vpack.c.bf16 %v570, %v567
  %v661 = vpack.c.bf16 %v578, %v575
  %v662 = vpack.c.bf16 %v586, %v583
  %v663 = vpack.c.bf16 %v594, %v591
  %v664 = vpack.c.bf16 %v602, %v599
  %v665 = vpack.c.bf16 %v610, %v607
  %v666 = vpack.c.bf16 %v618, %v615
  %v667 = vpack.c.bf16 %v626, %v623
  %v668 = vpack.c.bf16 %v634, %v631
  %v701 = vunpack.c.l.b16 %v637
  %v702 = vunpack.c.h.b16 %v637
  %v703 = vunpack.c.l.b16 %v638
  %v704 = vunpack.c.h.b16 %v638
  %v705 = vunpack.c.l.b16 %v639
  %v706 = vunpack.c.h.b16 %v639
  %v707 = vunpack.c.l.b16 %v640
  %v708 = vunpack.c.h.b16 %v640
  %v709 = vunpack.c.l.b16 %v641
  %v710 = vunpack.c.h.b16 %v641
  %v711 = vunpack.c.l.b16 %v642
  %v712 = vunpack.c.h.b16 %v642
  %v713 = vunpack.c.l.b16 %v643
  %v714 = vunpack.c.h.b16 %v643
  %v715 = vunpack.c.l.b16 %v644
  %v716 = vunpack.c.h.b16 %v644
  %v717 = vunpack.c.l.b16 %v645
  %v718 = vunpack.c.h.b16 %v645
  %v719 = vunpack.c.l.b16 %v646
  %v720 = vunpack.c.h.b16 %v646
  %v721 = vunpack.c.l.b16 %v647
  %v722 = vunpack.c.h.b16 %v647
  %v723 = vunpack.c.l.b16 %v648
  %v724 = vunpack.c.h.b16 %v648
  %v725 = vunpack.c.l.b16 %v649
  %v726 = vunpack.c.h.b16 %v649
  %v727 = vunpack.c.l.b16 %v650
  %v728 = vunpack.c.h.b16 %v650
  %v729 = vunpack.c.l.b16 %v651
  %v730 = vunpack.c.h.b16 %v651
  %v731 = vunpack.c.l.b16 %v652
  %v732 = vunpack.c.h.b16 %v652
  %v733 = vunpack.c.l.b16 %v653
  %v734 = vunpack.c.h.b16 %v653
  %v735 = vunpack.c.l.b16 %v654
  %v736 = vunpack.c.h.b16 %v654
  %v737 = vunpack.c.l.b16 %v655
  %v738 = vunpack.c.h.b16 %v655
  %v739 = vunpack.c.l.b16 %v656
  %v740 = vunpack.c.h.b16 %v656
  %v741 = vunpack.c.l.b16 %v657
  %v742 = vunpack.c.h.b16 %v657
  %v743 = vunpack.c.l.b16 %v658
  %v744 = vunpack.c.h.b16 %v658
  %v745 = vunpack.c.l.b16 %v659
  %v746 = vunpack.c.h.b16 %v659
  %v747 = vunpack.c.l.b16 %v660
  %v748 = vunpack.c.h.b16 %v660
  %v749 = vunpack.c.l.b16 %v661
  %v750 = vunpack.c.h.b16 %v661
  %v751 = vunpack.c.l.b16 %v662
  %v752 = vunpack.c.h.b16 %v662
  %v753 = vunpack.c.l.b16 %v663
  %v754 = vunpack.c.h.b16 %v663
  %v755 = vunpack.c.l.b16 %v664
  %v756 = vunpack.c.h.b16 %v664
  %v757 = vunpack.c.l.b16 %v665
  %v758 = vunpack.c.h.b16 %v665
  %v759 = vunpack.c.l.b16 %v666
  %v760 = vunpack.c.h.b16 %v666
  %v761 = vunpack.c.l.b16 %v667
  %v762 = vunpack.c.h.b16 %v667
  %v763 = vunpack.c.l.b16 %v668
  %v764 = vunpack.c.h.b16 %v668
  %v765 = vpack.c.b16 %v701, %v701
  %v766 = vpack.c.b16 %v702, %v702
  %v767 = vpack.c.b16 %v703, %v703
  %v768 = vpack.c.b16 %v704, %v704
  %v769 = vpack.c.b16 %v705, %v705
  %v770 = vpack.c.b16 %v706, %v706
  %v771 = vpack.c.b16 %v707, %v707
  %v772 = vpack.c.b16 %v708, %v708
  %v773 = vpack.c.b16 %v709, %v709
  %v774 = vpack.c.b16 %v710, %v710
  %v775 = vpack.c.b16 %v711, %v711
  %v776 = vpack.c.b16 %v712, %v712
  %v777 = vpack.c.b16 %v713, %v713
  %v778 = vpack.c.b16 %v714, %v714
  %v779 = vpack.c.b16 %v715, %v715
  %v780 = vpack.c.b16 %v716, %v716
  %v781 = vpack.c.b16 %v717, %v717
  %v782 = vpack.c.b16 %v718, %v718
  %v783 = vpack.c.b16 %v719, %v719
  %v784 = vpack.c.b16 %v720, %v720
  %v785 = vpack.c.b16 %v721, %v721
  %v786 = vpack.c.b16 %v722, %v722
  %v787 = vpack.c.b16 %v723, %v723
  %v788 = vpack.c.b16 %v724, %v724
  %v789 = vpack.c.b16 %v725, %v725
  %v790 = vpack.c.b16 %v726, %v726
  %v791 = vpack.c.b16 %v727, %v727
  %v792 = vpack.c.b16 %v728, %v728
  %v793 = vpack.c.b16 %v729, %v729
  %v794 = vpack.c.b16 %v730, %v730
  %v795 = vpack.c.b16 %v731, %v731
  %v796 = vpack.c.b16 %v732, %v732
  %v797 = vpack.c.b16 %v733, %v733
  %v798 = vpack.c.b16 %v734, %v734
  %v799 = vpack.c.b16 %v735, %v735
  %v800 = vpack.c.b16 %v736, %v736
  %v801 = vpack.c.b16 %v737, %v737
  %v802 = vpack.c.b16 %v738, %v738
  %v803 = vpack.c.b16 %v739, %v739
  %v804 = vpack.c.b16 %v740, %v740
  %v805 = vpack.c.b16 %v741, %v741
  %v806 = vpack.c.b16 %v742, %v742
  %v807 = vpack.c.b16 %v743, %v743
  %v808 = vpack.c.b16 %v744, %v744
  %v809 = vpack.c.b16 %v745, %v745
  %v810 = vpack.c.b16 %v746, %v746
  %v811 = vpack.c.b16 %v747, %v747
  %v812 = vpack.c.b16 %v748, %v748
  %v813 = vpack.c.b16 %v749, %v749
  %v814 = vpack.c.b16 %v750, %v750
  %v815 = vpack.c.b16 %v751, %v751
  %v816 = vpack.c.b16 %v752, %v752
  %v817 = vpack.c.b16 %v753, %v753
  %v818 = vpack.c.b16 %v754, %v754
  %v819 = vpack.c.b16 %v755, %v755
  %v820 = vpack.c.b16 %v756, %v756
  %v821 = vpack.c.b16 %v757, %v757
  %v822 = vpack.c.b16 %v758, %v758
  %v823 = vpack.c.b16 %v759, %v759
  %v824 = vpack.c.b16 %v760, %v760
  %v825 = vpack.c.b16 %v761, %v761
  %v826 = vpack.c.b16 %v762, %v762
  %v827 = vpack.c.b16 %v763, %v763
  %v828 = vpack.c.b16 %v764, %v764
  %893 = vst [vmem:[%s3] sm:$0xf] %v765
  %894 = vst [vmem:[%s3 + $0x4] sm:$0xf] %v766
  %895 = vst [vmem:[%s3 + $0x8] sm:$0xf] %v767
  %896 = vst [vmem:[%s3 + $0xc] sm:$0xf] %v768
  %897 = vst [vmem:[%s3 + $0x10] sm:$0xf] %v769
  %898 = vst [vmem:[%s3 + $0x14] sm:$0xf] %v770
  %899 = vst [vmem:[%s3 + $0x18] sm:$0xf] %v771
  %900 = vst [vmem:[%s3 + $0x1c] sm:$0xf] %v772
  %901 = vst [vmem:[%s3 + $0x20] sm:$0xf] %v773
  %902 = vst [vmem:[%s3 + $0x24] sm:$0xf] %v774
  %903 = vst [vmem:[%s3 + $0x28] sm:$0xf] %v775
  %904 = vst [vmem:[%s3 + $0x2c] sm:$0xf] %v776
  %905 = vst [vmem:[%s3 + $0x30] sm:$0xf] %v777
  %906 = vst [vmem:[%s3 + $0x34] sm:$0xf] %v778
  %907 = vst [vmem:[%s3 + $0x38] sm:$0xf] %v779
  %908 = vst [vmem:[%s3 + $0x3c] sm:$0xf] %v780
  %909 = vst [vmem:[%s3 + $0x40] sm:$0xf] %v781
  %910 = vst [vmem:[%s3 + $0x44] sm:$0xf] %v782
  %911 = vst [vmem:[%s3 + $0x48] sm:$0xf] %v783
  %912 = vst [vmem:[%s3 + $0x4c] sm:$0xf] %v784
  %913 = vst [vmem:[%s3 + $0x50] sm:$0xf] %v785
  %914 = vst [vmem:[%s3 + $0x54] sm:$0xf] %v786
  %915 = vst [vmem:[%s3 + $0x58] sm:$0xf] %v787
  %916 = vst [vmem:[%s3 + $0x5c] sm:$0xf] %v788
  %917 = vst [vmem:[%s3 + $0x60] sm:$0xf] %v789
  %918 = vst [vmem:[%s3 + $0x64] sm:$0xf] %v790
  %919 = vst [vmem:[%s3 + $0x68] sm:$0xf] %v791
  %920 = vst [vmem:[%s3 + $0x6c] sm:$0xf] %v792
  %921 = vst [vmem:[%s3 + $0x70] sm:$0xf] %v793
  %922 = vst [vmem:[%s3 + $0x74] sm:$0xf] %v794
  %923 = vst [vmem:[%s3 + $0x78] sm:$0xf] %v795
  %924 = vst [vmem:[%s3 + $0x7c] sm:$0xf] %v796
  %925 = vst [vmem:[%s3 + $0x80] sm:$0xf] %v797
  %926 = vst [vmem:[%s3 + $0x84] sm:$0xf] %v798
  %927 = vst [vmem:[%s3 + $0x88] sm:$0xf] %v799
  %928 = vst [vmem:[%s3 + $0x8c] sm:$0xf] %v800
  %929 = vst [vmem:[%s3 + $0x90] sm:$0xf] %v801
  %930 = vst [vmem:[%s3 + $0x94] sm:$0xf] %v802
  %931 = vst [vmem:[%s3 + $0x98] sm:$0xf] %v803
  %932 = vst [vmem:[%s3 + $0x9c] sm:$0xf] %v804
  %933 = vst [vmem:[%s3 + $0xa0] sm:$0xf] %v805
  %934 = vst [vmem:[%s3 + $0xa4] sm:$0xf] %v806
  %935 = vst [vmem:[%s3 + $0xa8] sm:$0xf] %v807
  %936 = vst [vmem:[%s3 + $0xac] sm:$0xf] %v808
  %937 = vst [vmem:[%s3 + $0xb0] sm:$0xf] %v809
  %938 = vst [vmem:[%s3 + $0xb4] sm:$0xf] %v810
  %939 = vst [vmem:[%s3 + $0xb8] sm:$0xf] %v811
  %940 = vst [vmem:[%s3 + $0xbc] sm:$0xf] %v812
  %941 = vst [vmem:[%s3 + $0xc0] sm:$0xf] %v813
  %942 = vst [vmem:[%s3 + $0xc4] sm:$0xf] %v814
  %943 = vst [vmem:[%s3 + $0xc8] sm:$0xf] %v815
  %944 = vst [vmem:[%s3 + $0xcc] sm:$0xf] %v816
  %945 = vst [vmem:[%s3 + $0xd0] sm:$0xf] %v817
  %946 = vst [vmem:[%s3 + $0xd4] sm:$0xf] %v818
  %947 = vst [vmem:[%s3 + $0xd8] sm:$0xf] %v819
  %948 = vst [vmem:[%s3 + $0xdc] sm:$0xf] %v820
  %949 = vst [vmem:[%s3 + $0xe0] sm:$0xf] %v821
  %950 = vst [vmem:[%s3 + $0xe4] sm:$0xf] %v822
  %951 = vst [vmem:[%s3 + $0xe8] sm:$0xf] %v823
  %952 = vst [vmem:[%s3 + $0xec] sm:$0xf] %v824
  %953 = vst [vmem:[%s3 + $0xf0] sm:$0xf] %v825
  %954 = vst [vmem:[%s3 + $0xf4] sm:$0xf] %v826
  %955 = vst [vmem:[%s3 + $0xf8] sm:$0xf] %v827
  %956 = vst [vmem:[%s3 + $0xfc] sm:$0xf] %v828
  // Predicated region
  $region14: #{aggregation_block.7} parent=0 // pred_check
    _
  $region15: #{aggregation_block.7} parent=0 // pred_check_branch
    %958 = sbr.rel (0) target = $region17
  $region16: #{aggregation_block.7} parent=0 // pred_region
    _
  $region17: #{aggregation_block.7} parent=0 // pred_fallthru
    _
  // Predicated region
  $region18: #{aggregation_block.7} parent=0 // pred_check
    _
  $region19: #{aggregation_block.7} parent=0 // pred_check_branch
    %960 = sbr.rel (0) target = $region21
  $region20: #{aggregation_block.7} parent=0 // pred_region
    _
  $region21: #{aggregation_block.7} parent=0 // pred_fallthru
    _

// kernel: aggregation_block.13
$region0: #{aggregation_block.13}
  #allocation0 [shape = 'u32[]', space=smem, size = 0x4, offset = 0x4, fixed_abs, tag = 'smem constant byte address 0x4 - core index']
  #allocation1 [shape = 'u32[144,128]{1,0:T(1,128)}', space=vmem, size = 0x12000, scoped, tag = 'internal scratch']
  %s0 = inlined_call_operand.vmem [shape: bf16[512,128], index: 0, kind: input, shape index: {}]
  %s1 = inlined_call_operand.vmem [shape: bf16[512,128], index: 1, kind: input, shape index: {}]
  %s2 = inlined_call_operand.vmem [shape: bf16[512,128], index: 2, kind: input, shape index: {}]
  %s3 = inlined_call_operand.vmem [shape: bf16[128,128], index: 3, kind: input, shape index: {}]
  %s4 = inlined_call_operand.vmem [shape: bf16[128,128], index: 4, kind: input, shape index: {}]
  %s5 = inlined_call_operand.vmem [shape: bf16[128,128], index: 5, kind: input, shape index: {}]
  %s6 = inlined_call_operand.vmem [shape: f32[1,128], index: 6, kind: input, shape index: {}]
  %s7 = inlined_call_operand.hbm [shape: f32[512,128], index: 7, kind: output, shape index: {}]
  %s8 = sld [smem:[#allocation0]]
  $region38: #{aggregation_block.13} parent=0
    _
  %s10 = ssub.s32 1, %s8
  %s11 = scalar_select 0, %s10, %s8
  $region1: #{aggregation_block.13} parent=0
    #allocation2 [shape = 'u8[262144]{0}', space=vmem, size = 0x40000, scoped, tag = 'output window, operand 0, single buffered']
    #allocation3 [shape = 's32[1]{0}', space=sflag, size = 0x4, scoped, tag = 'scoped memory for aggregation_block.13']
    %12 = vsyncpa [#allocation3], 0
    // Predicated region
    $region2: #{aggregation_block.13} parent=1 // pred_check
      _
    $region3: #{aggregation_block.13} parent=1 // pred_check_branch
      %14 = sbr.rel (0) target = $region5
    $region4: #{aggregation_block.13} parent=1 // pred_region
      _
    $region5: #{aggregation_block.13} parent=1 // pred_fallthru
      _
    // Predicated region
    $region6: #{aggregation_block.13} parent=1 // pred_check
      _
    $region7: #{aggregation_block.13} parent=1 // pred_check_branch
      %16 = sbr.rel (0) target = $region9
    $region8: #{aggregation_block.13} parent=1 // pred_region
      _
    $region9: #{aggregation_block.13} parent=1 // pred_fallthru
      _
    // Predicated region
    $region10: #{aggregation_block.13} parent=1 // pred_check
      _
    $region11: #{aggregation_block.13} parent=1 // pred_check_branch
      %18 = sbr.rel (0) target = $region13
    $region12: #{aggregation_block.13} parent=1 // pred_region
      _
    $region13: #{aggregation_block.13} parent=1 // pred_fallthru
      _
    // Predicated region
    $region14: #{aggregation_block.13} parent=1 // pred_check
      _
    $region15: #{aggregation_block.13} parent=1 // pred_check_branch
      %20 = sbr.rel (0) target = $region17
    $region16: #{aggregation_block.13} parent=1 // pred_region
      _
    $region17: #{aggregation_block.13} parent=1 // pred_fallthru
      _
    // Predicated region
    $region18: #{aggregation_block.13} parent=1 // pred_check
      _
    $region19: #{aggregation_block.13} parent=1 // pred_check_branch
      %22 = sbr.rel (0) target = $region21
    $region20: #{aggregation_block.13} parent=1 // pred_region
      _
    $region21: #{aggregation_block.13} parent=1 // pred_fallthru
      _
    // Predicated region
    $region22: #{aggregation_block.13} parent=1 // pred_check
      _
    $region23: #{aggregation_block.13} parent=1 // pred_check_branch
      %24 = sbr.rel (0) target = $region25
    $region24: #{aggregation_block.13} parent=1 // pred_region
      _
    $region25: #{aggregation_block.13} parent=1 // pred_fallthru
      _
    // Predicated region
    $region26: #{aggregation_block.13} parent=1 // pred_check
      _
    $region27: #{aggregation_block.13} parent=1 // pred_check_branch
      %26 = sbr.rel (0) target = $region29
    $region28: #{aggregation_block.13} parent=1 // pred_region
      _
    $region29: #{aggregation_block.13} parent=1 // pred_fallthru
      _
    %v28 = vld [vmem:[%s0] sm:$0xf]
    %v29 = vld [vmem:[%s0 + $0x4] sm:$0xf]
    %v30 = vld [vmem:[%s0 + $0x8] sm:$0xf]
    %v31 = vld [vmem:[%s0 + $0xc] sm:$0xf]
    %v32 = vld [vmem:[%s0 + $0x10] sm:$0xf]
    %v33 = vld [vmem:[%s0 + $0x14] sm:$0xf]
    %v34 = vld [vmem:[%s0 + $0x18] sm:$0xf]
    %v35 = vld [vmem:[%s0 + $0x1c] sm:$0xf]
    %v36 = vld [vmem:[%s0 + $0x20] sm:$0xf]
    %v37 = vld [vmem:[%s0 + $0x24] sm:$0xf]
    %v38 = vld [vmem:[%s0 + $0x28] sm:$0xf]
    %v39 = vld [vmem:[%s0 + $0x2c] sm:$0xf]
    %v40 = vld [vmem:[%s0 + $0x30] sm:$0xf]
    %v41 = vld [vmem:[%s0 + $0x34] sm:$0xf]
    %v42 = vld [vmem:[%s0 + $0x38] sm:$0xf]
    %v43 = vld [vmem:[%s0 + $0x3c] sm:$0xf]
    %v44 = vld [vmem:[%s0 + $0x40] sm:$0xf]
    %v45 = vld [vmem:[%s0 + $0x44] sm:$0xf]
    %v46 = vld [vmem:[%s0 + $0x48] sm:$0xf]
    %v47 = vld [vmem:[%s0 + $0x4c] sm:$0xf]
    %v48 = vld [vmem:[%s0 + $0x50] sm:$0xf]
    %v49 = vld [vmem:[%s0 + $0x54] sm:$0xf]
    %v50 = vld [vmem:[%s0 + $0x58] sm:$0xf]
    %v51 = vld [vmem:[%s0 + $0x5c] sm:$0xf]
    %v52 = vld [vmem:[%s0 + $0x60] sm:$0xf]
    %v53 = vld [vmem:[%s0 + $0x64] sm:$0xf]
    %v54 = vld [vmem:[%s0 + $0x68] sm:$0xf]
    %v55 = vld [vmem:[%s0 + $0x6c] sm:$0xf]
    %v56 = vld [vmem:[%s0 + $0x70] sm:$0xf]
    %v57 = vld [vmem:[%s0 + $0x74] sm:$0xf]
    %v58 = vld [vmem:[%s0 + $0x78] sm:$0xf]
    %v59 = vld [vmem:[%s0 + $0x7c] sm:$0xf]
    %v60 = vld [vmem:[%s0 + $0x80] sm:$0xf]
    %v61 = vld [vmem:[%s0 + $0x84] sm:$0xf]
    %v62 = vld [vmem:[%s0 + $0x88] sm:$0xf]
    %v63 = vld [vmem:[%s0 + $0x8c] sm:$0xf]
    %v64 = vld [vmem:[%s0 + $0x90] sm:$0xf]
    %v65 = vld [vmem:[%s0 + $0x94] sm:$0xf]
    %v66 = vld [vmem:[%s0 + $0x98] sm:$0xf]
    %v67 = vld [vmem:[%s0 + $0x9c] sm:$0xf]
    %v68 = vld [vmem:[%s0 + $0xa0] sm:$0xf]
    %v69 = vld [vmem:[%s0 + $0xa4] sm:$0xf]
    %v70 = vld [vmem:[%s0 + $0xa8] sm:$0xf]
    %v71 = vld [vmem:[%s0 + $0xac] sm:$0xf]
    %v72 = vld [vmem:[%s0 + $0xb0] sm:$0xf]
    %v73 = vld [vmem:[%s0 + $0xb4] sm:$0xf]
    %v74 = vld [vmem:[%s0 + $0xb8] sm:$0xf]
    %v75 = vld [vmem:[%s0 + $0xbc] sm:$0xf]
    %v76 = vld [vmem:[%s0 + $0xc0] sm:$0xf]
    %v77 = vld [vmem:[%s0 + $0xc4] sm:$0xf]
    %v78 = vld [vmem:[%s0 + $0xc8] sm:$0xf]
    %v79 = vld [vmem:[%s0 + $0xcc] sm:$0xf]
    %v80 = vld [vmem:[%s0 + $0xd0] sm:$0xf]
    %v81 = vld [vmem:[%s0 + $0xd4] sm:$0xf]
    %v82 = vld [vmem:[%s0 + $0xd8] sm:$0xf]
    %v83 = vld [vmem:[%s0 + $0xdc] sm:$0xf]
    %v84 = vld [vmem:[%s0 + $0xe0] sm:$0xf]
    %v85 = vld [vmem:[%s0 + $0xe4] sm:$0xf]
    %v86 = vld [vmem:[%s0 + $0xe8] sm:$0xf]
    %v87 = vld [vmem:[%s0 + $0xec] sm:$0xf]
    %v88 = vld [vmem:[%s0 + $0xf0] sm:$0xf]
    %v89 = vld [vmem:[%s0 + $0xf4] sm:$0xf]
    %v90 = vld [vmem:[%s0 + $0xf8] sm:$0xf]
    %v91 = vld [vmem:[%s0 + $0xfc] sm:$0xf]
    %v92 = vld [vmem:[%s3] sm:$0xf]
    %v93 = vld [vmem:[%s3 + $0x4] sm:$0xf]
    %v94 = vld [vmem:[%s3 + $0x8] sm:$0xf]
    %v95 = vld [vmem:[%s3 + $0xc] sm:$0xf]
    %v96 = vld [vmem:[%s3 + $0x10] sm:$0xf]
    %v97 = vld [vmem:[%s3 + $0x14] sm:$0xf]
    %v98 = vld [vmem:[%s3 + $0x18] sm:$0xf]
    %v99 = vld [vmem:[%s3 + $0x1c] sm:$0xf]
    %v100 = vld [vmem:[%s3 + $0x20] sm:$0xf]
    %v101 = vld [vmem:[%s3 + $0x24] sm:$0xf]
    %v102 = vld [vmem:[%s3 + $0x28] sm:$0xf]
    %v103 = vld [vmem:[%s3 + $0x2c] sm:$0xf]
    %v104 = vld [vmem:[%s3 + $0x30] sm:$0xf]
    %v105 = vld [vmem:[%s3 + $0x34] sm:$0xf]
    %v106 = vld [vmem:[%s3 + $0x38] sm:$0xf]
    %v107 = vld [vmem:[%s3 + $0x3c] sm:$0xf]
    %v108 = vld [vmem:[%s1] sm:$0xf]
    %v109 = vld [vmem:[%s1 + $0x4] sm:$0xf]
    %v110 = vld [vmem:[%s1 + $0x8] sm:$0xf]
    %v111 = vld [vmem:[%s1 + $0xc] sm:$0xf]
    %v112 = vld [vmem:[%s1 + $0x10] sm:$0xf]
    %v113 = vld [vmem:[%s1 + $0x14] sm:$0xf]
    %v114 = vld [vmem:[%s1 + $0x18] sm:$0xf]
    %v115 = vld [vmem:[%s1 + $0x1c] sm:$0xf]
    %v116 = vld [vmem:[%s1 + $0x20] sm:$0xf]
    %v117 = vld [vmem:[%s1 + $0x24] sm:$0xf]
    %v118 = vld [vmem:[%s1 + $0x28] sm:$0xf]
    %v119 = vld [vmem:[%s1 + $0x2c] sm:$0xf]
    %v120 = vld [vmem:[%s1 + $0x30] sm:$0xf]
    %v121 = vld [vmem:[%s1 + $0x34] sm:$0xf]
    %v122 = vld [vmem:[%s1 + $0x38] sm:$0xf]
    %v123 = vld [vmem:[%s1 + $0x3c] sm:$0xf]
    %v124 = vld [vmem:[%s1 + $0x40] sm:$0xf]
    %v125 = vld [vmem:[%s1 + $0x44] sm:$0xf]
    %v126 = vld [vmem:[%s1 + $0x48] sm:$0xf]
    %v127 = vld [vmem:[%s1 + $0x4c] sm:$0xf]
    %v128 = vld [vmem:[%s1 + $0x50] sm:$0xf]
    %v129 = vld [vmem:[%s1 + $0x54] sm:$0xf]
    %v130 = vld [vmem:[%s1 + $0x58] sm:$0xf]
    %v131 = vld [vmem:[%s1 + $0x5c] sm:$0xf]
    %v132 = vld [vmem:[%s1 + $0x60] sm:$0xf]
    %v133 = vld [vmem:[%s1 + $0x64] sm:$0xf]
    %v134 = vld [vmem:[%s1 + $0x68] sm:$0xf]
    %v135 = vld [vmem:[%s1 + $0x6c] sm:$0xf]
    %v136 = vld [vmem:[%s1 + $0x70] sm:$0xf]
    %v137 = vld [vmem:[%s1 + $0x74] sm:$0xf]
    %v138 = vld [vmem:[%s1 + $0x78] sm:$0xf]
    %v139 = vld [vmem:[%s1 + $0x7c] sm:$0xf]
    %v140 = vld [vmem:[%s1 + $0x80] sm:$0xf]
    %v141 = vld [vmem:[%s1 + $0x84] sm:$0xf]
    %v142 = vld [vmem:[%s1 + $0x88] sm:$0xf]
    %v143 = vld [vmem:[%s1 + $0x8c] sm:$0xf]
    %v144 = vld [vmem:[%s1 + $0x90] sm:$0xf]
    %v145 = vld [vmem:[%s1 + $0x94] sm:$0xf]
    %v146 = vld [vmem:[%s1 + $0x98] sm:$0xf]
    %v147 = vld [vmem:[%s1 + $0x9c] sm:$0xf]
    %v148 = vld [vmem:[%s1 + $0xa0] sm:$0xf]
    %v149 = vld [vmem:[%s1 + $0xa4] sm:$0xf]
    %v150 = vld [vmem:[%s1 + $0xa8] sm:$0xf]
    %v151 = vld [vmem:[%s1 + $0xac] sm:$0xf]
    %v152 = vld [vmem:[%s1 + $0xb0] sm:$0xf]
    %v153 = vld [vmem:[%s1 + $0xb4] sm:$0xf]
    %v154 = vld [vmem:[%s1 + $0xb8] sm:$0xf]
    %v155 = vld [vmem:[%s1 + $0xbc] sm:$0xf]
    %v156 = vld [vmem:[%s1 + $0xc0] sm:$0xf]
    %v157 = vld [vmem:[%s1 + $0xc4] sm:$0xf]
    %v158 = vld [vmem:[%s1 + $0xc8] sm:$0xf]
    %v159 = vld [vmem:[%s1 + $0xcc] sm:$0xf]
    %v160 = vld [vmem:[%s1 + $0xd0] sm:$0xf]
    %v161 = vld [vmem:[%s1 + $0xd4] sm:$0xf]
    %v162 = vld [vmem:[%s1 + $0xd8] sm:$0xf]
    %v163 = vld [vmem:[%s1 + $0xdc] sm:$0xf]
    %v164 = vld [vmem:[%s1 + $0xe0] sm:$0xf]
    %v165 = vld [vmem:[%s1 + $0xe4] sm:$0xf]
    %v166 = vld [vmem:[%s1 + $0xe8] sm:$0xf]
    %v167 = vld [vmem:[%s1 + $0xec] sm:$0xf]
    %v168 = vld [vmem:[%s1 + $0xf0] sm:$0xf]
    %v169 = vld [vmem:[%s1 + $0xf4] sm:$0xf]
    %v170 = vld [vmem:[%s1 + $0xf8] sm:$0xf]
    %v171 = vld [vmem:[%s1 + $0xfc] sm:$0xf]
    %v172 = vld [vmem:[%s4] sm:$0xf]
    %v173 = vld [vmem:[%s4 + $0x4] sm:$0xf]
    %v174 = vld [vmem:[%s4 + $0x8] sm:$0xf]
    %v175 = vld [vmem:[%s4 + $0xc] sm:$0xf]
    %v176 = vld [vmem:[%s4 + $0x10] sm:$0xf]
    %v177 = vld [vmem:[%s4 + $0x14] sm:$0xf]
    %v178 = vld [vmem:[%s4 + $0x18] sm:$0xf]
    %v179 = vld [vmem:[%s4 + $0x1c] sm:$0xf]
    %v180 = vld [vmem:[%s4 + $0x20] sm:$0xf]
    %v181 = vld [vmem:[%s4 + $0x24] sm:$0xf]
    %v182 = vld [vmem:[%s4 + $0x28] sm:$0xf]
    %v183 = vld [vmem:[%s4 + $0x2c] sm:$0xf]
    %v184 = vld [vmem:[%s4 + $0x30] sm:$0xf]
    %v185 = vld [vmem:[%s4 + $0x34] sm:$0xf]
    %v186 = vld [vmem:[%s4 + $0x38] sm:$0xf]
    %v187 = vld [vmem:[%s4 + $0x3c] sm:$0xf]
    %v252 = vunpack.c.l.b16 %v108
    %v253 = vunpack.c.l.b16 %v109
    %v254 = vunpack.c.l.b16 %v110
    %v255 = vunpack.c.l.b16 %v111
    %v256 = vunpack.c.l.b16 %v112
    %v257 = vunpack.c.l.b16 %v113
    %v258 = vunpack.c.l.b16 %v114
    %v259 = vunpack.c.l.b16 %v115
    %v260 = vunpack.c.l.b16 %v116
    %v261 = vunpack.c.l.b16 %v117
    %v262 = vunpack.c.l.b16 %v118
    %v263 = vunpack.c.l.b16 %v119
    %v264 = vunpack.c.l.b16 %v120
    %v265 = vunpack.c.l.b16 %v121
    %v266 = vunpack.c.l.b16 %v122
    %v267 = vunpack.c.l.b16 %v123
    %v268 = vunpack.c.l.b16 %v124
    %v269 = vunpack.c.l.b16 %v125
    %v270 = vunpack.c.l.b16 %v126
    %v271 = vunpack.c.l.b16 %v127
    %v272 = vunpack.c.l.b16 %v128
    %v273 = vunpack.c.l.b16 %v129
    %v274 = vunpack.c.l.b16 %v130
    %v275 = vunpack.c.l.b16 %v131
    %v276 = vunpack.c.l.b16 %v132
    %v277 = vunpack.c.l.b16 %v133
    %v278 = vunpack.c.l.b16 %v134
    %v279 = vunpack.c.l.b16 %v135
    %v280 = vunpack.c.l.b16 %v136
    %v281 = vunpack.c.l.b16 %v137
    %v282 = vunpack.c.l.b16 %v138
    %v283 = vunpack.c.l.b16 %v139
    %v284 = vunpack.c.l.b16 %v140
    %v285 = vunpack.c.l.b16 %v141
    %v286 = vunpack.c.l.b16 %v142
    %v287 = vunpack.c.l.b16 %v143
    %v288 = vunpack.c.l.b16 %v144
    %v289 = vunpack.c.l.b16 %v145
    %v290 = vunpack.c.l.b16 %v146
    %v291 = vunpack.c.l.b16 %v147
    %v292 = vunpack.c.l.b16 %v148
    %v293 = vunpack.c.l.b16 %v149
    %v294 = vunpack.c.l.b16 %v150
    %v295 = vunpack.c.l.b16 %v151
    %v296 = vunpack.c.l.b16 %v152
    %v297 = vunpack.c.l.b16 %v153
    %v298 = vunpack.c.l.b16 %v154
    %v299 = vunpack.c.l.b16 %v155
    %v300 = vunpack.c.l.b16 %v156
    %v301 = vunpack.c.l.b16 %v157
    %v302 = vunpack.c.l.b16 %v158
    %v303 = vunpack.c.l.b16 %v159
    %v304 = vunpack.c.l.b16 %v160
    %v305 = vunpack.c.l.b16 %v161
    %v306 = vunpack.c.l.b16 %v162
    %v307 = vunpack.c.l.b16 %v163
    %v308 = vunpack.c.l.b16 %v164
    %v309 = vunpack.c.l.b16 %v165
    %v310 = vunpack.c.l.b16 %v166
    %v311 = vunpack.c.l.b16 %v167
    %v312 = vunpack.c.l.b16 %v168
    %v313 = vunpack.c.l.b16 %v169
    %v314 = vunpack.c.l.b16 %v170
    %v315 = vunpack.c.l.b16 %v171
    %v316 = vpack.c.b16 %v253, %v252
    %v317 = vpack.c.b16 %v255, %v254
    %v318 = vpack.c.b16 %v257, %v256
    %v319 = vpack.c.b16 %v259, %v258
    %v320 = vpack.c.b16 %v261, %v260
    %v321 = vpack.c.b16 %v263, %v262
    %v322 = vpack.c.b16 %v265, %v264
    %v323 = vpack.c.b16 %v267, %v266
    %v324 = vpack.c.b16 %v269, %v268
    %v325 = vpack.c.b16 %v271, %v270
    %v326 = vpack.c.b16 %v273, %v272
    %v327 = vpack.c.b16 %v275, %v274
    %v328 = vpack.c.b16 %v277, %v276
    %v329 = vpack.c.b16 %v279, %v278
    %v330 = vpack.c.b16 %v281, %v280
    %v331 = vpack.c.b16 %v283, %v282
    %v332 = vpack.c.b16 %v285, %v284
    %v333 = vpack.c.b16 %v287, %v286
    %v334 = vpack.c.b16 %v289, %v288
    %v335 = vpack.c.b16 %v291, %v290
    %v336 = vpack.c.b16 %v293, %v292
    %v337 = vpack.c.b16 %v295, %v294
    %v338 = vpack.c.b16 %v297, %v296
    %v339 = vpack.c.b16 %v299, %v298
    %v340 = vpack.c.b16 %v301, %v300
    %v341 = vpack.c.b16 %v303, %v302
    %v342 = vpack.c.b16 %v305, %v304
    %v343 = vpack.c.b16 %v307, %v306
    %v344 = vpack.c.b16 %v309, %v308
    %v345 = vpack.c.b16 %v311, %v310
    %v346 = vpack.c.b16 %v313, %v312
    %v347 = vpack.c.b16 %v315, %v314
    %v396 = vunpack.c.l.b16 %v172
    %v397 = vunpack.c.l.b16 %v173
    %v398 = vunpack.c.l.b16 %v174
    %v399 = vunpack.c.l.b16 %v175
    %v400 = vunpack.c.l.b16 %v176
    %v401 = vunpack.c.l.b16 %v177
    %v402 = vunpack.c.l.b16 %v178
    %v403 = vunpack.c.l.b16 %v179
    %v404 = vunpack.c.l.b16 %v180
    %v405 = vunpack.c.l.b16 %v181
    %v406 = vunpack.c.l.b16 %v182
    %v407 = vunpack.c.l.b16 %v183
    %v408 = vunpack.c.l.b16 %v184
    %v409 = vunpack.c.l.b16 %v185
    %v410 = vunpack.c.l.b16 %v186
    %v411 = vunpack.c.l.b16 %v187
    %v412 = vpack.c.b16 %v397, %v396
    %v413 = vpack.c.b16 %v399, %v398
    %v414 = vpack.c.b16 %v401, %v400
    %v415 = vpack.c.b16 %v403, %v402
    %v416 = vpack.c.b16 %v405, %v404
    %v417 = vpack.c.b16 %v407, %v406
    %v418 = vpack.c.b16 %v409, %v408
    %v419 = vpack.c.b16 %v411, %v410
    %428 = vmatprep.subr.bf16.mxu0 0
    %429 = vmatpush1.bf16.msra.mxu0 %v419
    %430 = vmatprep.subr.bf16.mxu0 0
    %431 = vmatpush1.bf16.msra.mxu0 %v418
    %432 = vmatprep.subr.bf16.mxu0 0
    %433 = vmatpush1.bf16.msra.mxu0 %v417
    %434 = vmatprep.subr.bf16.mxu0 0
    %435 = vmatpush1.bf16.msra.mxu0 %v416
    %436 = vmatprep.subr.bf16.mxu0 0
    %437 = vmatpush1.bf16.msra.mxu0 %v415
    %438 = vmatprep.subr.bf16.mxu0 0
    %439 = vmatpush1.bf16.msra.mxu0 %v414
    %440 = vmatprep.subr.bf16.mxu0 0
    %441 = vmatpush1.bf16.msra.mxu0 %v413
    %442 = vmatprep.subr.bf16.mxu0 0
    %443 = vmatpush1.bf16.msra.mxu0 %v412
    %444 = vmatprep.subr.bf16.mxu0 0
    %445 = vmatpush2.bf16.msra.mxu0 0
    %446 = vmatprep.subr.bf16.mxu0 0
    %447 = vmatpush2.bf16.msra.mxu0 0
    %448 = vmatprep.subr.bf16.mxu0 0
    %449 = vmatpush2.bf16.msra.mxu0 0
    %450 = vmatprep.subr.bf16.mxu0 0
    %451 = vmatpush2.bf16.msra.mxu0 0
    %452 = vmatprep.subr.bf16.mxu0 0
    %453 = vmatpush2.bf16.msra.mxu0 0
    %454 = vmatprep.subr.bf16.mxu0 0
    %455 = vmatpush2.bf16.msra.mxu0 0
    %456 = vmatprep.subr.bf16.mxu0 0
    %457 = vmatpush2.bf16.msra.mxu0 0
    %458 = vmatprep.subr.bf16.mxu0 0
    %459 = vmatpush2.bf16.msra.mxu0 0
    %460 = vmatprep.mubr.bf16.mxu0 0
    %461 = vmatmul.mubr.bf16.gmra.mxu0 %v316
    %v462 = vpop.f32.mrf.mxu0
    %v463 = vadd.f32 0.0, %v462
    %v464 = vpop.f32.mrf.mxu0
    %v465 = vpop.f32.mrf.mxu0
    %v466 = vadd.f32 0.0, %v465
    %v467 = vpop.f32.mrf.mxu0
    %468 = vmatprep.mubr.bf16.mxu0 0
    %469 = vmatmul.mubr.bf16.gmra.mxu0 %v317
    %v470 = vpop.f32.mrf.mxu0
    %v471 = vadd.f32 0.0, %v470
    %v472 = vpop.f32.mrf.mxu0
    %v473 = vpop.f32.mrf.mxu0
    %v474 = vadd.f32 0.0, %v473
    %v475 = vpop.f32.mrf.mxu0
    %476 = vmatprep.mubr.bf16.mxu0 0
    %477 = vmatmul.mubr.bf16.gmra.mxu0 %v318
    %v478 = vpop.f32.mrf.mxu0
    %v479 = vadd.f32 0.0, %v478
    %v480 = vpop.f32.mrf.mxu0
    %v481 = vpop.f32.mrf.mxu0
    %v482 = vadd.f32 0.0, %v481
    %v483 = vpop.f32.mrf.mxu0
    %484 = vmatprep.mubr.bf16.mxu0 0
    %485 = vmatmul.mubr.bf16.gmra.mxu0 %v319
    %v486 = vpop.f32.mrf.mxu0
    %v487 = vadd.f32 0.0, %v486
    %v488 = vpop.f32.mrf.mxu0
    %v489 = vpop.f32.mrf.mxu0
    %v490 = vadd.f32 0.0, %v489
    %v491 = vpop.f32.mrf.mxu0
    %492 = vmatprep.mubr.bf16.mxu0 0
    %493 = vmatmul.mubr.bf16.gmra.mxu0 %v320
    %v494 = vpop.f32.mrf.mxu0
    %v495 = vadd.f32 0.0, %v494
    %v496 = vpop.f32.mrf.mxu0
    %v497 = vpop.f32.mrf.mxu0
    %v498 = vadd.f32 0.0, %v497
    %v499 = vpop.f32.mrf.mxu0
    %500 = vmatprep.mubr.bf16.mxu0 0
    %501 = vmatmul.mubr.bf16.gmra.mxu0 %v321
    %v502 = vpop.f32.mrf.mxu0
    %v503 = vadd.f32 0.0, %v502
    %v504 = vpop.f32.mrf.mxu0
    %v505 = vpop.f32.mrf.mxu0
    %v506 = vadd.f32 0.0, %v505
    %v507 = vpop.f32.mrf.mxu0
    %508 = vmatprep.mubr.bf16.mxu0 0
    %509 = vmatmul.mubr.bf16.gmra.mxu0 %v322
    %v510 = vpop.f32.mrf.mxu0
    %v511 = vadd.f32 0.0, %v510
    %v512 = vpop.f32.mrf.mxu0
    %v513 = vpop.f32.mrf.mxu0
    %v514 = vadd.f32 0.0, %v513
    %v515 = vpop.f32.mrf.mxu0
    %516 = vmatprep.mubr.bf16.mxu0 0
    %517 = vmatmul.mubr.bf16.gmra.mxu0 %v323
    %v518 = vpop.f32.mrf.mxu0
    %v519 = vadd.f32 0.0, %v518
    %v520 = vpop.f32.mrf.mxu0
    %v521 = vpop.f32.mrf.mxu0
    %v522 = vadd.f32 0.0, %v521
    %v523 = vpop.f32.mrf.mxu0
    %524 = vmatprep.mubr.bf16.mxu0 0
    %525 = vmatmul.mubr.bf16.gmra.mxu0 %v324
    %v526 = vpop.f32.mrf.mxu0
    %v527 = vadd.f32 0.0, %v526
    %v528 = vpop.f32.mrf.mxu0
    %v529 = vpop.f32.mrf.mxu0
    %v530 = vadd.f32 0.0, %v529
    %v531 = vpop.f32.mrf.mxu0
    %532 = vmatprep.mubr.bf16.mxu0 0
    %533 = vmatmul.mubr.bf16.gmra.mxu0 %v325
    %v534 = vpop.f32.mrf.mxu0
    %v535 = vadd.f32 0.0, %v534
    %v536 = vpop.f32.mrf.mxu0
    %v537 = vpop.f32.mrf.mxu0
    %v538 = vadd.f32 0.0, %v537
    %v539 = vpop.f32.mrf.mxu0
    %540 = vmatprep.mubr.bf16.mxu0 0
    %541 = vmatmul.mubr.bf16.gmra.mxu0 %v326
    %v542 = vpop.f32.mrf.mxu0
    %v543 = vadd.f32 0.0, %v542
    %v544 = vpop.f32.mrf.mxu0
    %v545 = vpop.f32.mrf.mxu0
    %v546 = vadd.f32 0.0, %v545
    %v547 = vpop.f32.mrf.mxu0
    %548 = vmatprep.mubr.bf16.mxu0 0
    %549 = vmatmul.mubr.bf16.gmra.mxu0 %v327
    %v550 = vpop.f32.mrf.mxu0
    %v551 = vadd.f32 0.0, %v550
    %v552 = vpop.f32.mrf.mxu0
    %v553 = vpop.f32.mrf.mxu0
    %v554 = vadd.f32 0.0, %v553
    %v555 = vpop.f32.mrf.mxu0
    %556 = vmatprep.mubr.bf16.mxu0 0
    %557 = vmatmul.mubr.bf16.gmra.mxu0 %v328
    %v558 = vpop.f32.mrf.mxu0
    %v559 = vadd.f32 0.0, %v558
    %v560 = vpop.f32.mrf.mxu0
    %v561 = vpop.f32.mrf.mxu0
    %v562 = vadd.f32 0.0, %v561
    %v563 = vpop.f32.mrf.mxu0
    %564 = vmatprep.mubr.bf16.mxu0 0
    %565 = vmatmul.mubr.bf16.gmra.mxu0 %v329
    %v566 = vpop.f32.mrf.mxu0
    %v567 = vadd.f32 0.0, %v566
    %v568 = vpop.f32.mrf.mxu0
    %v569 = vpop.f32.mrf.mxu0
    %v570 = vadd.f32 0.0, %v569
    %v571 = vpop.f32.mrf.mxu0
    %572 = vmatprep.mubr.bf16.mxu0 0
    %573 = vmatmul.mubr.bf16.gmra.mxu0 %v330
    %v574 = vpop.f32.mrf.mxu0
    %v575 = vadd.f32 0.0, %v574
    %v576 = vpop.f32.mrf.mxu0
    %v577 = vpop.f32.mrf.mxu0
    %v578 = vadd.f32 0.0, %v577
    %v579 = vpop.f32.mrf.mxu0
    %580 = vmatprep.mubr.bf16.mxu0 0
    %581 = vmatmul.mubr.bf16.gmra.mxu0 %v331
    %v582 = vpop.f32.mrf.mxu0
    %v583 = vadd.f32 0.0, %v582
    %v584 = vpop.f32.mrf.mxu0
    %v585 = vpop.f32.mrf.mxu0
    %v586 = vadd.f32 0.0, %v585
    %v587 = vpop.f32.mrf.mxu0
    %588 = vmatprep.mubr.bf16.mxu0 0
    %589 = vmatmul.mubr.bf16.gmra.mxu0 %v332
    %v590 = vpop.f32.mrf.mxu0
    %v591 = vadd.f32 0.0, %v590
    %v592 = vpop.f32.mrf.mxu0
    %v593 = vpop.f32.mrf.mxu0
    %v594 = vadd.f32 0.0, %v593
    %v595 = vpop.f32.mrf.mxu0
    %596 = vmatprep.mubr.bf16.mxu0 0
    %597 = vmatmul.mubr.bf16.gmra.mxu0 %v333
    %v598 = vpop.f32.mrf.mxu0
    %v599 = vadd.f32 0.0, %v598
    %v600 = vpop.f32.mrf.mxu0
    %v601 = vpop.f32.mrf.mxu0
    %v602 = vadd.f32 0.0, %v601
    %v603 = vpop.f32.mrf.mxu0
    %604 = vmatprep.mubr.bf16.mxu0 0
    %605 = vmatmul.mubr.bf16.gmra.mxu0 %v334
    %v606 = vpop.f32.mrf.mxu0
    %v607 = vadd.f32 0.0, %v606
    %v608 = vpop.f32.mrf.mxu0
    %v609 = vpop.f32.mrf.mxu0
    %v610 = vadd.f32 0.0, %v609
    %v611 = vpop.f32.mrf.mxu0
    %612 = vmatprep.mubr.bf16.mxu0 0
    %613 = vmatmul.mubr.bf16.gmra.mxu0 %v335
    %v614 = vpop.f32.mrf.mxu0
    %v615 = vadd.f32 0.0, %v614
    %v616 = vpop.f32.mrf.mxu0
    %v617 = vpop.f32.mrf.mxu0
    %v618 = vadd.f32 0.0, %v617
    %v619 = vpop.f32.mrf.mxu0
    %620 = vmatprep.mubr.bf16.mxu0 0
    %621 = vmatmul.mubr.bf16.gmra.mxu0 %v336
    %v622 = vpop.f32.mrf.mxu0
    %v623 = vadd.f32 0.0, %v622
    %v624 = vpop.f32.mrf.mxu0
    %v625 = vpop.f32.mrf.mxu0
    %v626 = vadd.f32 0.0, %v625
    %v627 = vpop.f32.mrf.mxu0
    %628 = vmatprep.mubr.bf16.mxu0 0
    %629 = vmatmul.mubr.bf16.gmra.mxu0 %v337
    %v630 = vpop.f32.mrf.mxu0
    %v631 = vadd.f32 0.0, %v630
    %v632 = vpop.f32.mrf.mxu0
    %v633 = vpop.f32.mrf.mxu0
    %v634 = vadd.f32 0.0, %v633
    %v635 = vpop.f32.mrf.mxu0
    %636 = vmatprep.mubr.bf16.mxu0 0
    %637 = vmatmul.mubr.bf16.gmra.mxu0 %v338
    %v638 = vpop.f32.mrf.mxu0
    %v639 = vadd.f32 0.0, %v638
    %v640 = vpop.f32.mrf.mxu0
    %v641 = vpop.f32.mrf.mxu0
    %v642 = vadd.f32 0.0, %v641
    %v643 = vpop.f32.mrf.mxu0
    %644 = vmatprep.mubr.bf16.mxu0 0
    %645 = vmatmul.mubr.bf16.gmra.mxu0 %v339
    %v646 = vpop.f32.mrf.mxu0
    %v647 = vadd.f32 0.0, %v646
    %v648 = vpop.f32.mrf.mxu0
    %v649 = vpop.f32.mrf.mxu0
    %v650 = vadd.f32 0.0, %v649
    %v651 = vpop.f32.mrf.mxu0
    %652 = vmatprep.mubr.bf16.mxu0 0
    %653 = vmatmul.mubr.bf16.gmra.mxu0 %v340
    %v654 = vpop.f32.mrf.mxu0
    %v655 = vadd.f32 0.0, %v654
    %v656 = vpop.f32.mrf.mxu0
    %v657 = vpop.f32.mrf.mxu0
    %v658 = vadd.f32 0.0, %v657
    %v659 = vpop.f32.mrf.mxu0
    %660 = vmatprep.mubr.bf16.mxu0 0
    %661 = vmatmul.mubr.bf16.gmra.mxu0 %v341
    %v662 = vpop.f32.mrf.mxu0
    %v663 = vadd.f32 0.0, %v662
    %v664 = vpop.f32.mrf.mxu0
    %v665 = vpop.f32.mrf.mxu0
    %v666 = vadd.f32 0.0, %v665
    %v667 = vpop.f32.mrf.mxu0
    %668 = vmatprep.mubr.bf16.mxu0 0
    %669 = vmatmul.mubr.bf16.gmra.mxu0 %v342
    %v670 = vpop.f32.mrf.mxu0
    %v671 = vadd.f32 0.0, %v670
    %v672 = vpop.f32.mrf.mxu0
    %v673 = vpop.f32.mrf.mxu0
    %v674 = vadd.f32 0.0, %v673
    %v675 = vpop.f32.mrf.mxu0
    %676 = vmatprep.mubr.bf16.mxu0 0
    %677 = vmatmul.mubr.bf16.gmra.mxu0 %v343
    %v678 = vpop.f32.mrf.mxu0
    %v679 = vadd.f32 0.0, %v678
    %v680 = vpop.f32.mrf.mxu0
    %v681 = vpop.f32.mrf.mxu0
    %v682 = vadd.f32 0.0, %v681
    %v683 = vpop.f32.mrf.mxu0
    %684 = vmatprep.mubr.bf16.mxu0 0
    %685 = vmatmul.mubr.bf16.gmra.mxu0 %v344
    %v686 = vpop.f32.mrf.mxu0
    %v687 = vadd.f32 0.0, %v686
    %v688 = vpop.f32.mrf.mxu0
    %v689 = vpop.f32.mrf.mxu0
    %v690 = vadd.f32 0.0, %v689
    %v691 = vpop.f32.mrf.mxu0
    %692 = vmatprep.mubr.bf16.mxu0 0
    %693 = vmatmul.mubr.bf16.gmra.mxu0 %v345
    %v694 = vpop.f32.mrf.mxu0
    %v695 = vadd.f32 0.0, %v694
    %v696 = vpop.f32.mrf.mxu0
    %v697 = vpop.f32.mrf.mxu0
    %v698 = vadd.f32 0.0, %v697
    %v699 = vpop.f32.mrf.mxu0
    %700 = vmatprep.mubr.bf16.mxu0 0
    %701 = vmatmul.mubr.bf16.gmra.mxu0 %v346
    %v702 = vpop.f32.mrf.mxu0
    %v703 = vadd.f32 0.0, %v702
    %v704 = vpop.f32.mrf.mxu0
    %v705 = vpop.f32.mrf.mxu0
    %v706 = vadd.f32 0.0, %v705
    %v707 = vpop.f32.mrf.mxu0
    %708 = vmatprep.mubr.bf16.mxu0 0
    %709 = vmatmul.mubr.bf16.gmra.mxu0 %v347
    %v710 = vpop.f32.mrf.mxu0
    %v711 = vadd.f32 0.0, %v710
    %v712 = vpop.f32.mrf.mxu0
    %v713 = vpop.f32.mrf.mxu0
    %v714 = vadd.f32 0.0, %v713
    %v715 = vpop.f32.mrf.mxu0
    %716 = vdwg.mxu0
    %v781 = vunpack.c.l.b16 %v28
    %v782 = vunpack.c.l.b16 %v29
    %v783 = vunpack.c.l.b16 %v30
    %v784 = vunpack.c.l.b16 %v31
    %v785 = vunpack.c.l.b16 %v32
    %v786 = vunpack.c.l.b16 %v33
    %v787 = vunpack.c.l.b16 %v34
    %v788 = vunpack.c.l.b16 %v35
    %v789 = vunpack.c.l.b16 %v36
    %v790 = vunpack.c.l.b16 %v37
    %v791 = vunpack.c.l.b16 %v38
    %v792 = vunpack.c.l.b16 %v39
    %v793 = vunpack.c.l.b16 %v40
    %v794 = vunpack.c.l.b16 %v41
    %v795 = vunpack.c.l.b16 %v42
    %v796 = vunpack.c.l.b16 %v43
    %v797 = vunpack.c.l.b16 %v44
    %v798 = vunpack.c.l.b16 %v45
    %v799 = vunpack.c.l.b16 %v46
    %v800 = vunpack.c.l.b16 %v47
    %v801 = vunpack.c.l.b16 %v48
    %v802 = vunpack.c.l.b16 %v49
    %v803 = vunpack.c.l.b16 %v50
    %v804 = vunpack.c.l.b16 %v51
    %v805 = vunpack.c.l.b16 %v52
    %v806 = vunpack.c.l.b16 %v53
    %v807 = vunpack.c.l.b16 %v54
    %v808 = vunpack.c.l.b16 %v55
    %v809 = vunpack.c.l.b16 %v56
    %v810 = vunpack.c.l.b16 %v57
    %v811 = vunpack.c.l.b16 %v58
    %v812 = vunpack.c.l.b16 %v59
    %v813 = vunpack.c.l.b16 %v60
    %v814 = vunpack.c.l.b16 %v61
    %v815 = vunpack.c.l.b16 %v62
    %v816 = vunpack.c.l.b16 %v63
    %v817 = vunpack.c.l.b16 %v64
    %v818 = vunpack.c.l.b16 %v65
    %v819 = vunpack.c.l.b16 %v66
    %v820 = vunpack.c.l.b16 %v67
    %v821 = vunpack.c.l.b16 %v68
    %v822 = vunpack.c.l.b16 %v69
    %v823 = vunpack.c.l.b16 %v70
    %v824 = vunpack.c.l.b16 %v71
    %v825 = vunpack.c.l.b16 %v72
    %v826 = vunpack.c.l.b16 %v73
    %v827 = vunpack.c.l.b16 %v74
    %v828 = vunpack.c.l.b16 %v75
    %v829 = vunpack.c.l.b16 %v76
    %v830 = vunpack.c.l.b16 %v77
    %v831 = vunpack.c.l.b16 %v78
    %v832 = vunpack.c.l.b16 %v79
    %v833 = vunpack.c.l.b16 %v80
    %v834 = vunpack.c.l.b16 %v81
    %v835 = vunpack.c.l.b16 %v82
    %v836 = vunpack.c.l.b16 %v83
    %v837 = vunpack.c.l.b16 %v84
    %v838 = vunpack.c.l.b16 %v85
    %v839 = vunpack.c.l.b16 %v86
    %v840 = vunpack.c.l.b16 %v87
    %v841 = vunpack.c.l.b16 %v88
    %v842 = vunpack.c.l.b16 %v89
    %v843 = vunpack.c.l.b16 %v90
    %v844 = vunpack.c.l.b16 %v91
    %v845 = vpack.c.b16 %v782, %v781
    %v846 = vpack.c.b16 %v784, %v783
    %v847 = vpack.c.b16 %v786, %v785
    %v848 = vpack.c.b16 %v788, %v787
    %v849 = vpack.c.b16 %v790, %v789
    %v850 = vpack.c.b16 %v792, %v791
    %v851 = vpack.c.b16 %v794, %v793
    %v852 = vpack.c.b16 %v796, %v795
    %v853 = vpack.c.b16 %v798, %v797
    %v854 = vpack.c.b16 %v800, %v799
    %v855 = vpack.c.b16 %v802, %v801
    %v856 = vpack.c.b16 %v804, %v803
    %v857 = vpack.c.b16 %v806, %v805
    %v858 = vpack.c.b16 %v808, %v807
    %v859 = vpack.c.b16 %v810, %v809
    %v860 = vpack.c.b16 %v812, %v811
    %v861 = vpack.c.b16 %v814, %v813
    %v862 = vpack.c.b16 %v816, %v815
    %v863 = vpack.c.b16 %v818, %v817
    %v864 = vpack.c.b16 %v820, %v819
    %v865 = vpack.c.b16 %v822, %v821
    %v866 = vpack.c.b16 %v824, %v823
    %v867 = vpack.c.b16 %v826, %v825
    %v868 = vpack.c.b16 %v828, %v827
    %v869 = vpack.c.b16 %v830, %v829
    %v870 = vpack.c.b16 %v832, %v831
    %v871 = vpack.c.b16 %v834, %v833
    %v872 = vpack.c.b16 %v836, %v835
    %v873 = vpack.c.b16 %v838, %v837
    %v874 = vpack.c.b16 %v840, %v839
    %v875 = vpack.c.b16 %v842, %v841
    %v876 = vpack.c.b16 %v844, %v843
    %v925 = vunpack.c.l.b16 %v92
    %v926 = vunpack.c.l.b16 %v93
    %v927 = vunpack.c.l.b16 %v94
    %v928 = vunpack.c.l.b16 %v95
    %v929 = vunpack.c.l.b16 %v96
    %v930 = vunpack.c.l.b16 %v97
    %v931 = vunpack.c.l.b16 %v98
    %v932 = vunpack.c.l.b16 %v99
    %v933 = vunpack.c.l.b16 %v100
    %v934 = vunpack.c.l.b16 %v101
    %v935 = vunpack.c.l.b16 %v102
    %v936 = vunpack.c.l.b16 %v103
    %v937 = vunpack.c.l.b16 %v104
    %v938 = vunpack.c.l.b16 %v105
    %v939 = vunpack.c.l.b16 %v106
    %v940 = vunpack.c.l.b16 %v107
    %v941 = vpack.c.b16 %v926, %v925
    %v942 = vpack.c.b16 %v928, %v927
    %v943 = vpack.c.b16 %v930, %v929
    %v944 = vpack.c.b16 %v932, %v931
    %v945 = vpack.c.b16 %v934, %v933
    %v946 = vpack.c.b16 %v936, %v935
    %v947 = vpack.c.b16 %v938, %v937
    %v948 = vpack.c.b16 %v940, %v939
    %957 = vmatprep.subr.bf16.mxu0 0
    %958 = vmatpush1.bf16.msra.mxu0 %v948
    %959 = vmatprep.subr.bf16.mxu0 0
    %960 = vmatpush1.bf16.msra.mxu0 %v947
    %961 = vmatprep.subr.bf16.mxu0 0
    %962 = vmatpush1.bf16.msra.mxu0 %v946
    %963 = vmatprep.subr.bf16.mxu0 0
    %964 = vmatpush1.bf16.msra.mxu0 %v945
    %965 = vmatprep.subr.bf16.mxu0 0
    %966 = vmatpush1.bf16.msra.mxu0 %v944
    %967 = vmatprep.subr.bf16.mxu0 0
    %968 = vmatpush1.bf16.msra.mxu0 %v943
    %969 = vmatprep.subr.bf16.mxu0 0
    %970 = vmatpush1.bf16.msra.mxu0 %v942
    %971 = vmatprep.subr.bf16.mxu0 0
    %972 = vmatpush1.bf16.msra.mxu0 %v941
    %973 = vmatprep.subr.bf16.mxu0 0
    %974 = vmatpush2.bf16.msra.mxu0 0
    %975 = vmatprep.subr.bf16.mxu0 0
    %976 = vmatpush2.bf16.msra.mxu0 0
    %977 = vmatprep.subr.bf16.mxu0 0
    %978 = vmatpush2.bf16.msra.mxu0 0
    %979 = vmatprep.subr.bf16.mxu0 0
    %980 = vmatpush2.bf16.msra.mxu0 0
    %981 = vmatprep.subr.bf16.mxu0 0
    %982 = vmatpush2.bf16.msra.mxu0 0
    %983 = vmatprep.subr.bf16.mxu0 0
    %984 = vmatpush2.bf16.msra.mxu0 0
    %985 = vmatprep.subr.bf16.mxu0 0
    %986 = vmatpush2.bf16.msra.mxu0 0
    %987 = vmatprep.subr.bf16.mxu0 0
    %988 = vmatpush2.bf16.msra.mxu0 0
    %989 = vmatprep.mubr.bf16.mxu0 0
    %990 = vmatmul.mubr.bf16.gmra.mxu0 %v845
    %v991 = vpop.f32.mrf.mxu0
    %v992 = vadd.f32 %v463, %v991
    %v993 = vpop.f32.mrf.mxu0
    %v994 = vpop.f32.mrf.mxu0
    %v995 = vadd.f32 %v466, %v994
    %v996 = vpop.f32.mrf.mxu0
    %997 = vmatprep.mubr.bf16.mxu0 0
    %998 = vmatmul.mubr.bf16.gmra.mxu0 %v846
    %v999 = vpop.f32.mrf.mxu0
    %v1000 = vadd.f32 %v471, %v999
    %v1001 = vpop.f32.mrf.mxu0
    %v1002 = vpop.f32.mrf.mxu0
    %v1003 = vadd.f32 %v474, %v1002
    %v1004 = vpop.f32.mrf.mxu0
    %1005 = vmatprep.mubr.bf16.mxu0 0
    %1006 = vmatmul.mubr.bf16.gmra.mxu0 %v847
    %v1007 = vpop.f32.mrf.mxu0
    %v1008 = vadd.f32 %v479, %v1007
    %v1009 = vpop.f32.mrf.mxu0
    %v1010 = vpop.f32.mrf.mxu0
    %v1011 = vadd.f32 %v482, %v1010
    %v1012 = vpop.f32.mrf.mxu0
    %1013 = vmatprep.mubr.bf16.mxu0 0
    %1014 = vmatmul.mubr.bf16.gmra.mxu0 %v848
    %v1015 = vpop.f32.mrf.mxu0
    %v1016 = vadd.f32 %v487, %v1015
    %v1017 = vpop.f32.mrf.mxu0
    %v1018 = vpop.f32.mrf.mxu0
    %v1019 = vadd.f32 %v490, %v1018
    %v1020 = vpop.f32.mrf.mxu0
    %1021 = vmatprep.mubr.bf16.mxu0 0
    %1022 = vmatmul.mubr.bf16.gmra.mxu0 %v849
    %v1023 = vpop.f32.mrf.mxu0
    %v1024 = vadd.f32 %v495, %v1023
    %v1025 = vpop.f32.mrf.mxu0
    %v1026 = vpop.f32.mrf.mxu0
    %v1027 = vadd.f32 %v498, %v1026
    %v1028 = vpop.f32.mrf.mxu0
    %1029 = vmatprep.mubr.bf16.mxu0 0
    %1030 = vmatmul.mubr.bf16.gmra.mxu0 %v850
    %v1031 = vpop.f32.mrf.mxu0
    %v1032 = vadd.f32 %v503, %v1031
    %v1033 = vpop.f32.mrf.mxu0
    %v1034 = vpop.f32.mrf.mxu0
    %v1035 = vadd.f32 %v506, %v1034
    %v1036 = vpop.f32.mrf.mxu0
    %1037 = vmatprep.mubr.bf16.mxu0 0
    %1038 = vmatmul.mubr.bf16.gmra.mxu0 %v851
    %v1039 = vpop.f32.mrf.mxu0
    %v1040 = vadd.f32 %v511, %v1039
    %v1041 = vpop.f32.mrf.mxu0
    %v1042 = vpop.f32.mrf.mxu0
    %v1043 = vadd.f32 %v514, %v1042
    %v1044 = vpop.f32.mrf.mxu0
    %1045 = vmatprep.mubr.bf16.mxu0 0
    %1046 = vmatmul.mubr.bf16.gmra.mxu0 %v852
    %v1047 = vpop.f32.mrf.mxu0
    %v1048 = vadd.f32 %v519, %v1047
    %v1049 = vpop.f32.mrf.mxu0
    %v1050 = vpop.f32.mrf.mxu0
    %v1051 = vadd.f32 %v522, %v1050
    %v1052 = vpop.f32.mrf.mxu0
    %1053 = vmatprep.mubr.bf16.mxu0 0
    %1054 = vmatmul.mubr.bf16.gmra.mxu0 %v853
    %v1055 = vpop.f32.mrf.mxu0
    %v1056 = vadd.f32 %v527, %v1055
    %v1057 = vpop.f32.mrf.mxu0
    %v1058 = vpop.f32.mrf.mxu0
    %v1059 = vadd.f32 %v530, %v1058
    %v1060 = vpop.f32.mrf.mxu0
    %1061 = vmatprep.mubr.bf16.mxu0 0
    %1062 = vmatmul.mubr.bf16.gmra.mxu0 %v854
    %v1063 = vpop.f32.mrf.mxu0
    %v1064 = vadd.f32 %v535, %v1063
    %v1065 = vpop.f32.mrf.mxu0
    %v1066 = vpop.f32.mrf.mxu0
    %v1067 = vadd.f32 %v538, %v1066
    %v1068 = vpop.f32.mrf.mxu0
    %1069 = vmatprep.mubr.bf16.mxu0 0
    %1070 = vmatmul.mubr.bf16.gmra.mxu0 %v855
    %v1071 = vpop.f32.mrf.mxu0
    %v1072 = vadd.f32 %v543, %v1071
    %v1073 = vpop.f32.mrf.mxu0
    %v1074 = vpop.f32.mrf.mxu0
    %v1075 = vadd.f32 %v546, %v1074
    %v1076 = vpop.f32.mrf.mxu0
    %1077 = vmatprep.mubr.bf16.mxu0 0
    %1078 = vmatmul.mubr.bf16.gmra.mxu0 %v856
    %v1079 = vpop.f32.mrf.mxu0
    %v1080 = vadd.f32 %v551, %v1079
    %v1081 = vpop.f32.mrf.mxu0
    %v1082 = vpop.f32.mrf.mxu0
    %v1083 = vadd.f32 %v554, %v1082
    %v1084 = vpop.f32.mrf.mxu0
    %1085 = vmatprep.mubr.bf16.mxu0 0
    %1086 = vmatmul.mubr.bf16.gmra.mxu0 %v857
    %v1087 = vpop.f32.mrf.mxu0
    %v1088 = vadd.f32 %v559, %v1087
    %v1089 = vpop.f32.mrf.mxu0
    %v1090 = vpop.f32.mrf.mxu0
    %v1091 = vadd.f32 %v562, %v1090
    %v1092 = vpop.f32.mrf.mxu0
    %1093 = vmatprep.mubr.bf16.mxu0 0
    %1094 = vmatmul.mubr.bf16.gmra.mxu0 %v858
    %v1095 = vpop.f32.mrf.mxu0
    %v1096 = vadd.f32 %v567, %v1095
    %v1097 = vpop.f32.mrf.mxu0
    %v1098 = vpop.f32.mrf.mxu0
    %v1099 = vadd.f32 %v570, %v1098
    %v1100 = vpop.f32.mrf.mxu0
    %1101 = vmatprep.mubr.bf16.mxu0 0
    %1102 = vmatmul.mubr.bf16.gmra.mxu0 %v859
    %v1103 = vpop.f32.mrf.mxu0
    %v1104 = vadd.f32 %v575, %v1103
    %v1105 = vpop.f32.mrf.mxu0
    %v1106 = vpop.f32.mrf.mxu0
    %v1107 = vadd.f32 %v578, %v1106
    %v1108 = vpop.f32.mrf.mxu0
    %1109 = vmatprep.mubr.bf16.mxu0 0
    %1110 = vmatmul.mubr.bf16.gmra.mxu0 %v860
    %v1111 = vpop.f32.mrf.mxu0
    %v1112 = vadd.f32 %v583, %v1111
    %v1113 = vpop.f32.mrf.mxu0
    %v1114 = vpop.f32.mrf.mxu0
    %v1115 = vadd.f32 %v586, %v1114
    %v1116 = vpop.f32.mrf.mxu0
    %1117 = vmatprep.mubr.bf16.mxu0 0
    %1118 = vmatmul.mubr.bf16.gmra.mxu0 %v861
    %v1119 = vpop.f32.mrf.mxu0
    %v1120 = vadd.f32 %v591, %v1119
    %v1121 = vpop.f32.mrf.mxu0
    %v1122 = vpop.f32.mrf.mxu0
    %v1123 = vadd.f32 %v594, %v1122
    %v1124 = vpop.f32.mrf.mxu0
    %1125 = vmatprep.mubr.bf16.mxu0 0
    %1126 = vmatmul.mubr.bf16.gmra.mxu0 %v862
    %v1127 = vpop.f32.mrf.mxu0
    %v1128 = vadd.f32 %v599, %v1127
    %v1129 = vpop.f32.mrf.mxu0
    %v1130 = vpop.f32.mrf.mxu0
    %v1131 = vadd.f32 %v602, %v1130
    %v1132 = vpop.f32.mrf.mxu0
    %1133 = vmatprep.mubr.bf16.mxu0 0
    %1134 = vmatmul.mubr.bf16.gmra.mxu0 %v863
    %v1135 = vpop.f32.mrf.mxu0
    %v1136 = vadd.f32 %v607, %v1135
    %v1137 = vpop.f32.mrf.mxu0
    %v1138 = vpop.f32.mrf.mxu0
    %v1139 = vadd.f32 %v610, %v1138
    %v1140 = vpop.f32.mrf.mxu0
    %1141 = vmatprep.mubr.bf16.mxu0 0
    %1142 = vmatmul.mubr.bf16.gmra.mxu0 %v864
    %v1143 = vpop.f32.mrf.mxu0
    %v1144 = vadd.f32 %v615, %v1143
    %v1145 = vpop.f32.mrf.mxu0
    %v1146 = vpop.f32.mrf.mxu0
    %v1147 = vadd.f32 %v618, %v1146
    %v1148 = vpop.f32.mrf.mxu0
    %1149 = vmatprep.mubr.bf16.mxu0 0
    %1150 = vmatmul.mubr.bf16.gmra.mxu0 %v865
    %v1151 = vpop.f32.mrf.mxu0
    %v1152 = vadd.f32 %v623, %v1151
    %v1153 = vpop.f32.mrf.mxu0
    %v1154 = vpop.f32.mrf.mxu0
    %v1155 = vadd.f32 %v626, %v1154
    %v1156 = vpop.f32.mrf.mxu0
    %1157 = vmatprep.mubr.bf16.mxu0 0
    %1158 = vmatmul.mubr.bf16.gmra.mxu0 %v866
    %v1159 = vpop.f32.mrf.mxu0
    %v1160 = vadd.f32 %v631, %v1159
    %v1161 = vpop.f32.mrf.mxu0
    %v1162 = vpop.f32.mrf.mxu0
    %v1163 = vadd.f32 %v634, %v1162
    %v1164 = vpop.f32.mrf.mxu0
    %1165 = vmatprep.mubr.bf16.mxu0 0
    %1166 = vmatmul.mubr.bf16.gmra.mxu0 %v867
    %v1167 = vpop.f32.mrf.mxu0
    %v1168 = vadd.f32 %v639, %v1167
    %v1169 = vpop.f32.mrf.mxu0
    %v1170 = vpop.f32.mrf.mxu0
    %v1171 = vadd.f32 %v642, %v1170
    %v1172 = vpop.f32.mrf.mxu0
    %1173 = vmatprep.mubr.bf16.mxu0 0
    %1174 = vmatmul.mubr.bf16.gmra.mxu0 %v868
    %v1175 = vpop.f32.mrf.mxu0
    %v1176 = vadd.f32 %v647, %v1175
    %v1177 = vpop.f32.mrf.mxu0
    %v1178 = vpop.f32.mrf.mxu0
    %v1179 = vadd.f32 %v650, %v1178
    %v1180 = vpop.f32.mrf.mxu0
    %1181 = vmatprep.mubr.bf16.mxu0 0
    %1182 = vmatmul.mubr.bf16.gmra.mxu0 %v869
    %v1183 = vpop.f32.mrf.mxu0
    %v1184 = vadd.f32 %v655, %v1183
    %v1185 = vpop.f32.mrf.mxu0
    %v1186 = vpop.f32.mrf.mxu0
    %v1187 = vadd.f32 %v658, %v1186
    %v1188 = vpop.f32.mrf.mxu0
    %1189 = vmatprep.mubr.bf16.mxu0 0
    %1190 = vmatmul.mubr.bf16.gmra.mxu0 %v870
    %v1191 = vpop.f32.mrf.mxu0
    %v1192 = vadd.f32 %v663, %v1191
    %v1193 = vpop.f32.mrf.mxu0
    %v1194 = vpop.f32.mrf.mxu0
    %v1195 = vadd.f32 %v666, %v1194
    %v1196 = vpop.f32.mrf.mxu0
    %1197 = vmatprep.mubr.bf16.mxu0 0
    %1198 = vmatmul.mubr.bf16.gmra.mxu0 %v871
    %v1199 = vpop.f32.mrf.mxu0
    %v1200 = vadd.f32 %v671, %v1199
    %v1201 = vpop.f32.mrf.mxu0
    %v1202 = vpop.f32.mrf.mxu0
    %v1203 = vadd.f32 %v674, %v1202
    %v1204 = vpop.f32.mrf.mxu0
    %1205 = vmatprep.mubr.bf16.mxu0 0
    %1206 = vmatmul.mubr.bf16.gmra.mxu0 %v872
    %v1207 = vpop.f32.mrf.mxu0
    %v1208 = vadd.f32 %v679, %v1207
    %v1209 = vpop.f32.mrf.mxu0
    %v1210 = vpop.f32.mrf.mxu0
    %v1211 = vadd.f32 %v682, %v1210
    %v1212 = vpop.f32.mrf.mxu0
    %1213 = vmatprep.mubr.bf16.mxu0 0
    %1214 = vmatmul.mubr.bf16.gmra.mxu0 %v873
    %v1215 = vpop.f32.mrf.mxu0
    %v1216 = vadd.f32 %v687, %v1215
    %v1217 = vpop.f32.mrf.mxu0
    %v1218 = vpop.f32.mrf.mxu0
    %v1219 = vadd.f32 %v690, %v1218
    %v1220 = vpop.f32.mrf.mxu0
    %1221 = vmatprep.mubr.bf16.mxu0 0
    %1222 = vmatmul.mubr.bf16.gmra.mxu0 %v874
    %v1223 = vpop.f32.mrf.mxu0
    %v1224 = vadd.f32 %v695, %v1223
    %v1225 = vpop.f32.mrf.mxu0
    %v1226 = vpop.f32.mrf.mxu0
    %v1227 = vadd.f32 %v698, %v1226
    %v1228 = vpop.f32.mrf.mxu0
    %1229 = vmatprep.mubr.bf16.mxu0 0
    %1230 = vmatmul.mubr.bf16.gmra.mxu0 %v875
    %v1231 = vpop.f32.mrf.mxu0
    %v1232 = vadd.f32 %v703, %v1231
    %v1233 = vpop.f32.mrf.mxu0
    %v1234 = vpop.f32.mrf.mxu0
    %v1235 = vadd.f32 %v706, %v1234
    %v1236 = vpop.f32.mrf.mxu0
    %1237 = vmatprep.mubr.bf16.mxu0 0
    %1238 = vmatmul.mubr.bf16.gmra.mxu0 %v876
    %v1239 = vpop.f32.mrf.mxu0
    %v1240 = vadd.f32 %v711, %v1239
    %v1241 = vpop.f32.mrf.mxu0
    %v1242 = vpop.f32.mrf.mxu0
    %v1243 = vadd.f32 %v714, %v1242
    %v1244 = vpop.f32.mrf.mxu0
    %1245 = vdwg.mxu0
    %v1246 = vld [vmem:[%s2] sm:$0xf]
    %v1247 = vld [vmem:[%s2 + $0x4] sm:$0xf]
    %v1248 = vld [vmem:[%s2 + $0x8] sm:$0xf]
    %v1249 = vld [vmem:[%s2 + $0xc] sm:$0xf]
    %v1250 = vld [vmem:[%s2 + $0x10] sm:$0xf]
    %v1251 = vld [vmem:[%s2 + $0x14] sm:$0xf]
    %v1252 = vld [vmem:[%s2 + $0x18] sm:$0xf]
    %v1253 = vld [vmem:[%s2 + $0x1c] sm:$0xf]
    %v1254 = vld [vmem:[%s2 + $0x20] sm:$0xf]
    %v1255 = vld [vmem:[%s2 + $0x24] sm:$0xf]
    %v1256 = vld [vmem:[%s2 + $0x28] sm:$0xf]
    %v1257 = vld [vmem:[%s2 + $0x2c] sm:$0xf]
    %v1258 = vld [vmem:[%s2 + $0x30] sm:$0xf]
    %v1259 = vld [vmem:[%s2 + $0x34] sm:$0xf]
    %v1260 = vld [vmem:[%s2 + $0x38] sm:$0xf]
    %v1261 = vld [vmem:[%s2 + $0x3c] sm:$0xf]
    %v1262 = vld [vmem:[%s2 + $0x40] sm:$0xf]
    %v1263 = vld [vmem:[%s2 + $0x44] sm:$0xf]
    %v1264 = vld [vmem:[%s2 + $0x48] sm:$0xf]
    %v1265 = vld [vmem:[%s2 + $0x4c] sm:$0xf]
    %v1266 = vld [vmem:[%s2 + $0x50] sm:$0xf]
    %v1267 = vld [vmem:[%s2 + $0x54] sm:$0xf]
    %v1268 = vld [vmem:[%s2 + $0x58] sm:$0xf]
    %v1269 = vld [vmem:[%s2 + $0x5c] sm:$0xf]
    %v1270 = vld [vmem:[%s2 + $0x60] sm:$0xf]
    %v1271 = vld [vmem:[%s2 + $0x64] sm:$0xf]
    %v1272 = vld [vmem:[%s2 + $0x68] sm:$0xf]
    %v1273 = vld [vmem:[%s2 + $0x6c] sm:$0xf]
    %v1274 = vld [vmem:[%s2 + $0x70] sm:$0xf]
    %v1275 = vld [vmem:[%s2 + $0x74] sm:$0xf]
    %v1276 = vld [vmem:[%s2 + $0x78] sm:$0xf]
    %v1277 = vld [vmem:[%s2 + $0x7c] sm:$0xf]
    %v1278 = vld [vmem:[%s2 + $0x80] sm:$0xf]
    %v1279 = vld [vmem:[%s2 + $0x84] sm:$0xf]
    %v1280 = vld [vmem:[%s2 + $0x88] sm:$0xf]
    %v1281 = vld [vmem:[%s2 + $0x8c] sm:$0xf]
    %v1282 = vld [vmem:[%s2 + $0x90] sm:$0xf]
    %v1283 = vld [vmem:[%s2 + $0x94] sm:$0xf]
    %v1284 = vld [vmem:[%s2 + $0x98] sm:$0xf]
    %v1285 = vld [vmem:[%s2 + $0x9c] sm:$0xf]
    %v1286 = vld [vmem:[%s2 + $0xa0] sm:$0xf]
    %v1287 = vld [vmem:[%s2 + $0xa4] sm:$0xf]
    %v1288 = vld [vmem:[%s2 + $0xa8] sm:$0xf]
    %v1289 = vld [vmem:[%s2 + $0xac] sm:$0xf]
    %v1290 = vld [vmem:[%s2 + $0xb0] sm:$0xf]
    %v1291 = vld [vmem:[%s2 + $0xb4] sm:$0xf]
    %v1292 = vld [vmem:[%s2 + $0xb8] sm:$0xf]
    %v1293 = vld [vmem:[%s2 + $0xbc] sm:$0xf]
    %v1294 = vld [vmem:[%s2 + $0xc0] sm:$0xf]
    %v1295 = vld [vmem:[%s2 + $0xc4] sm:$0xf]
    %v1296 = vld [vmem:[%s2 + $0xc8] sm:$0xf]
    %v1297 = vld [vmem:[%s2 + $0xcc] sm:$0xf]
    %v1298 = vld [vmem:[%s2 + $0xd0] sm:$0xf]
    %v1299 = vld [vmem:[%s2 + $0xd4] sm:$0xf]
    %v1300 = vld [vmem:[%s2 + $0xd8] sm:$0xf]
    %v1301 = vld [vmem:[%s2 + $0xdc] sm:$0xf]
    %v1302 = vld [vmem:[%s2 + $0xe0] sm:$0xf]
    %v1303 = vld [vmem:[%s2 + $0xe4] sm:$0xf]
    %v1304 = vld [vmem:[%s2 + $0xe8] sm:$0xf]
    %v1305 = vld [vmem:[%s2 + $0xec] sm:$0xf]
    %v1306 = vld [vmem:[%s2 + $0xf0] sm:$0xf]
    %v1307 = vld [vmem:[%s2 + $0xf4] sm:$0xf]
    %v1308 = vld [vmem:[%s2 + $0xf8] sm:$0xf]
    %v1309 = vld [vmem:[%s2 + $0xfc] sm:$0xf]
    %v1310 = vld [vmem:[%s5] sm:$0xf]
    %v1311 = vld [vmem:[%s5 + $0x4] sm:$0xf]
    %v1312 = vld [vmem:[%s5 + $0x8] sm:$0xf]
    %v1313 = vld [vmem:[%s5 + $0xc] sm:$0xf]
    %v1314 = vld [vmem:[%s5 + $0x10] sm:$0xf]
    %v1315 = vld [vmem:[%s5 + $0x14] sm:$0xf]
    %v1316 = vld [vmem:[%s5 + $0x18] sm:$0xf]
    %v1317 = vld [vmem:[%s5 + $0x1c] sm:$0xf]
    %v1318 = vld [vmem:[%s5 + $0x20] sm:$0xf]
    %v1319 = vld [vmem:[%s5 + $0x24] sm:$0xf]
    %v1320 = vld [vmem:[%s5 + $0x28] sm:$0xf]
    %v1321 = vld [vmem:[%s5 + $0x2c] sm:$0xf]
    %v1322 = vld [vmem:[%s5 + $0x30] sm:$0xf]
    %v1323 = vld [vmem:[%s5 + $0x34] sm:$0xf]
    %v1324 = vld [vmem:[%s5 + $0x38] sm:$0xf]
    %v1325 = vld [vmem:[%s5 + $0x3c] sm:$0xf]
    %v1390 = vunpack.c.l.b16 %v1246
    %v1391 = vunpack.c.l.b16 %v1247
    %v1392 = vunpack.c.l.b16 %v1248
    %v1393 = vunpack.c.l.b16 %v1249
    %v1394 = vunpack.c.l.b16 %v1250
    %v1395 = vunpack.c.l.b16 %v1251
    %v1396 = vunpack.c.l.b16 %v1252
    %v1397 = vunpack.c.l.b16 %v1253
    %v1398 = vunpack.c.l.b16 %v1254
    %v1399 = vunpack.c.l.b16 %v1255
    %v1400 = vunpack.c.l.b16 %v1256
    %v1401 = vunpack.c.l.b16 %v1257
    %v1402 = vunpack.c.l.b16 %v1258
    %v1403 = vunpack.c.l.b16 %v1259
    %v1404 = vunpack.c.l.b16 %v1260
    %v1405 = vunpack.c.l.b16 %v1261
    %v1406 = vunpack.c.l.b16 %v1262
    %v1407 = vunpack.c.l.b16 %v1263
    %v1408 = vunpack.c.l.b16 %v1264
    %v1409 = vunpack.c.l.b16 %v1265
    %v1410 = vunpack.c.l.b16 %v1266
    %v1411 = vunpack.c.l.b16 %v1267
    %v1412 = vunpack.c.l.b16 %v1268
    %v1413 = vunpack.c.l.b16 %v1269
    %v1414 = vunpack.c.l.b16 %v1270
    %v1415 = vunpack.c.l.b16 %v1271
    %v1416 = vunpack.c.l.b16 %v1272
    %v1417 = vunpack.c.l.b16 %v1273
    %v1418 = vunpack.c.l.b16 %v1274
    %v1419 = vunpack.c.l.b16 %v1275
    %v1420 = vunpack.c.l.b16 %v1276
    %v1421 = vunpack.c.l.b16 %v1277
    %v1422 = vunpack.c.l.b16 %v1278
    %v1423 = vunpack.c.l.b16 %v1279
    %v1424 = vunpack.c.l.b16 %v1280
    %v1425 = vunpack.c.l.b16 %v1281
    %v1426 = vunpack.c.l.b16 %v1282
    %v1427 = vunpack.c.l.b16 %v1283
    %v1428 = vunpack.c.l.b16 %v1284
    %v1429 = vunpack.c.l.b16 %v1285
    %v1430 = vunpack.c.l.b16 %v1286
    %v1431 = vunpack.c.l.b16 %v1287
    %v1432 = vunpack.c.l.b16 %v1288
    %v1433 = vunpack.c.l.b16 %v1289
    %v1434 = vunpack.c.l.b16 %v1290
    %v1435 = vunpack.c.l.b16 %v1291
    %v1436 = vunpack.c.l.b16 %v1292
    %v1437 = vunpack.c.l.b16 %v1293
    %v1438 = vunpack.c.l.b16 %v1294
    %v1439 = vunpack.c.l.b16 %v1295
    %v1440 = vunpack.c.l.b16 %v1296
    %v1441 = vunpack.c.l.b16 %v1297
    %v1442 = vunpack.c.l.b16 %v1298
    %v1443 = vunpack.c.l.b16 %v1299
    %v1444 = vunpack.c.l.b16 %v1300
    %v1445 = vunpack.c.l.b16 %v1301
    %v1446 = vunpack.c.l.b16 %v1302
    %v1447 = vunpack.c.l.b16 %v1303
    %v1448 = vunpack.c.l.b16 %v1304
    %v1449 = vunpack.c.l.b16 %v1305
    %v1450 = vunpack.c.l.b16 %v1306
    %v1451 = vunpack.c.l.b16 %v1307
    %v1452 = vunpack.c.l.b16 %v1308
    %v1453 = vunpack.c.l.b16 %v1309
    %v1454 = vpack.c.b16 %v1391, %v1390
    %v1455 = vpack.c.b16 %v1393, %v1392
    %v1456 = vpack.c.b16 %v1395, %v1394
    %v1457 = vpack.c.b16 %v1397, %v1396
    %v1458 = vpack.c.b16 %v1399, %v1398
    %v1459 = vpack.c.b16 %v1401, %v1400
    %v1460 = vpack.c.b16 %v1403, %v1402
    %v1461 = vpack.c.b16 %v1405, %v1404
    %v1462 = vpack.c.b16 %v1407, %v1406
    %v1463 = vpack.c.b16 %v1409, %v1408
    %v1464 = vpack.c.b16 %v1411, %v1410
    %v1465 = vpack.c.b16 %v1413, %v1412
    %v1466 = vpack.c.b16 %v1415, %v1414
    %v1467 = vpack.c.b16 %v1417, %v1416
    %v1468 = vpack.c.b16 %v1419, %v1418
    %v1469 = vpack.c.b16 %v1421, %v1420
    %v1470 = vpack.c.b16 %v1423, %v1422
    %v1471 = vpack.c.b16 %v1425, %v1424
    %v1472 = vpack.c.b16 %v1427, %v1426
    %v1473 = vpack.c.b16 %v1429, %v1428
    %v1474 = vpack.c.b16 %v1431, %v1430
    %v1475 = vpack.c.b16 %v1433, %v1432
    %v1476 = vpack.c.b16 %v1435, %v1434
    %v1477 = vpack.c.b16 %v1437, %v1436
    %v1478 = vpack.c.b16 %v1439, %v1438
    %v1479 = vpack.c.b16 %v1441, %v1440
    %v1480 = vpack.c.b16 %v1443, %v1442
    %v1481 = vpack.c.b16 %v1445, %v1444
    %v1482 = vpack.c.b16 %v1447, %v1446
    %v1483 = vpack.c.b16 %v1449, %v1448
    %v1484 = vpack.c.b16 %v1451, %v1450
    %v1485 = vpack.c.b16 %v1453, %v1452
    %v1534 = vunpack.c.l.b16 %v1310
    %v1535 = vunpack.c.l.b16 %v1311
    %v1536 = vunpack.c.l.b16 %v1312
    %v1537 = vunpack.c.l.b16 %v1313
    %v1538 = vunpack.c.l.b16 %v1314
    %v1539 = vunpack.c.l.b16 %v1315
    %v1540 = vunpack.c.l.b16 %v1316
    %v1541 = vunpack.c.l.b16 %v1317
    %v1542 = vunpack.c.l.b16 %v1318
    %v1543 = vunpack.c.l.b16 %v1319
    %v1544 = vunpack.c.l.b16 %v1320
    %v1545 = vunpack.c.l.b16 %v1321
    %v1546 = vunpack.c.l.b16 %v1322
    %v1547 = vunpack.c.l.b16 %v1323
    %v1548 = vunpack.c.l.b16 %v1324
    %v1549 = vunpack.c.l.b16 %v1325
    %v1550 = vpack.c.b16 %v1535, %v1534
    %v1551 = vpack.c.b16 %v1537, %v1536
    %v1552 = vpack.c.b16 %v1539, %v1538
    %v1553 = vpack.c.b16 %v1541, %v1540
    %v1554 = vpack.c.b16 %v1543, %v1542
    %v1555 = vpack.c.b16 %v1545, %v1544
    %v1556 = vpack.c.b16 %v1547, %v1546
    %v1557 = vpack.c.b16 %v1549, %v1548
    %1566 = vmatprep.subr.bf16.mxu0 0
    %1567 = vmatpush1.bf16.msra.mxu0 %v1557
    %1568 = vmatprep.subr.bf16.mxu0 0
    %1569 = vmatpush1.bf16.msra.mxu0 %v1556
    %1570 = vmatprep.subr.bf16.mxu0 0
    %1571 = vmatpush1.bf16.msra.mxu0 %v1555
    %1572 = vmatprep.subr.bf16.mxu0 0
    %1573 = vmatpush1.bf16.msra.mxu0 %v1554
    %1574 = vmatprep.subr.bf16.mxu0 0
    %1575 = vmatpush1.bf16.msra.mxu0 %v1553
    %1576 = vmatprep.subr.bf16.mxu0 0
    %1577 = vmatpush1.bf16.msra.mxu0 %v1552
    %1578 = vmatprep.subr.bf16.mxu0 0
    %1579 = vmatpush1.bf16.msra.mxu0 %v1551
    %1580 = vmatprep.subr.bf16.mxu0 0
    %1581 = vmatpush1.bf16.msra.mxu0 %v1550
    %1582 = vmatprep.subr.bf16.mxu0 0
    %1583 = vmatpush2.bf16.msra.mxu0 0
    %1584 = vmatprep.subr.bf16.mxu0 0
    %1585 = vmatpush2.bf16.msra.mxu0 0
    %1586 = vmatprep.subr.bf16.mxu0 0
    %1587 = vmatpush2.bf16.msra.mxu0 0
    %1588 = vmatprep.subr.bf16.mxu0 0
    %1589 = vmatpush2.bf16.msra.mxu0 0
    %1590 = vmatprep.subr.bf16.mxu0 0
    %1591 = vmatpush2.bf16.msra.mxu0 0
    %1592 = vmatprep.subr.bf16.mxu0 0
    %1593 = vmatpush2.bf16.msra.mxu0 0
    %1594 = vmatprep.subr.bf16.mxu0 0
    %1595 = vmatpush2.bf16.msra.mxu0 0
    %1596 = vmatprep.subr.bf16.mxu0 0
    %1597 = vmatpush2.bf16.msra.mxu0 0
    %1598 = vmatprep.mubr.bf16.mxu0 0
    %1599 = vmatmul.mubr.bf16.gmra.mxu0 %v1454
    %v1600 = vpop.f32.mrf.mxu0
    %v1601 = vadd.f32 0.0, %v1600
    %v1602 = vpop.f32.mrf.mxu0
    %v1603 = vpop.f32.mrf.mxu0
    %v1604 = vadd.f32 0.0, %v1603
    %v1605 = vpop.f32.mrf.mxu0
    %1606 = vmatprep.mubr.bf16.mxu0 0
    %1607 = vmatmul.mubr.bf16.gmra.mxu0 %v1455
    %v1608 = vpop.f32.mrf.mxu0
    %v1609 = vadd.f32 0.0, %v1608
    %v1610 = vpop.f32.mrf.mxu0
    %v1611 = vpop.f32.mrf.mxu0
    %v1612 = vadd.f32 0.0, %v1611
    %v1613 = vpop.f32.mrf.mxu0
    %1614 = vmatprep.mubr.bf16.mxu0 0
    %1615 = vmatmul.mubr.bf16.gmra.mxu0 %v1456
    %v1616 = vpop.f32.mrf.mxu0
    %v1617 = vadd.f32 0.0, %v1616
    %v1618 = vpop.f32.mrf.mxu0
    %v1619 = vpop.f32.mrf.mxu0
    %v1620 = vadd.f32 0.0, %v1619
    %v1621 = vpop.f32.mrf.mxu0
    %1622 = vmatprep.mubr.bf16.mxu0 0
    %1623 = vmatmul.mubr.bf16.gmra.mxu0 %v1457
    %v1624 = vpop.f32.mrf.mxu0
    %v1625 = vadd.f32 0.0, %v1624
    %v1626 = vpop.f32.mrf.mxu0
    %v1627 = vpop.f32.mrf.mxu0
    %v1628 = vadd.f32 0.0, %v1627
    %v1629 = vpop.f32.mrf.mxu0
    %1630 = vmatprep.mubr.bf16.mxu0 0
    %1631 = vmatmul.mubr.bf16.gmra.mxu0 %v1458
    %v1632 = vpop.f32.mrf.mxu0
    %v1633 = vadd.f32 0.0, %v1632
    %v1634 = vpop.f32.mrf.mxu0
    %v1635 = vpop.f32.mrf.mxu0
    %v1636 = vadd.f32 0.0, %v1635
    %v1637 = vpop.f32.mrf.mxu0
    %1638 = vmatprep.mubr.bf16.mxu0 0
    %1639 = vmatmul.mubr.bf16.gmra.mxu0 %v1459
    %v1640 = vpop.f32.mrf.mxu0
    %v1641 = vadd.f32 0.0, %v1640
    %v1642 = vpop.f32.mrf.mxu0
    %v1643 = vpop.f32.mrf.mxu0
    %v1644 = vadd.f32 0.0, %v1643
    %v1645 = vpop.f32.mrf.mxu0
    %1646 = vmatprep.mubr.bf16.mxu0 0
    %1647 = vmatmul.mubr.bf16.gmra.mxu0 %v1460
    %v1648 = vpop.f32.mrf.mxu0
    %v1649 = vadd.f32 0.0, %v1648
    %v1650 = vpop.f32.mrf.mxu0
    %v1651 = vpop.f32.mrf.mxu0
    %v1652 = vadd.f32 0.0, %v1651
    %v1653 = vpop.f32.mrf.mxu0
    %1654 = vmatprep.mubr.bf16.mxu0 0
    %1655 = vmatmul.mubr.bf16.gmra.mxu0 %v1461
    %v1656 = vpop.f32.mrf.mxu0
    %v1657 = vadd.f32 0.0, %v1656
    %v1658 = vpop.f32.mrf.mxu0
    %v1659 = vpop.f32.mrf.mxu0
    %v1660 = vadd.f32 0.0, %v1659
    %v1661 = vpop.f32.mrf.mxu0
    %1662 = vmatprep.mubr.bf16.mxu0 0
    %1663 = vmatmul.mubr.bf16.gmra.mxu0 %v1462
    %v1664 = vpop.f32.mrf.mxu0
    %v1665 = vadd.f32 0.0, %v1664
    %v1666 = vpop.f32.mrf.mxu0
    %v1667 = vpop.f32.mrf.mxu0
    %v1668 = vadd.f32 0.0, %v1667
    %v1669 = vpop.f32.mrf.mxu0
    %1670 = vmatprep.mubr.bf16.mxu0 0
    %1671 = vmatmul.mubr.bf16.gmra.mxu0 %v1463
    %v1672 = vpop.f32.mrf.mxu0
    %v1673 = vadd.f32 0.0, %v1672
    %v1674 = vpop.f32.mrf.mxu0
    %v1675 = vpop.f32.mrf.mxu0
    %v1676 = vadd.f32 0.0, %v1675
    %v1677 = vpop.f32.mrf.mxu0
    %1678 = vmatprep.mubr.bf16.mxu0 0
    %1679 = vmatmul.mubr.bf16.gmra.mxu0 %v1464
    %v1680 = vpop.f32.mrf.mxu0
    %v1681 = vadd.f32 0.0, %v1680
    %v1682 = vpop.f32.mrf.mxu0
    %v1683 = vpop.f32.mrf.mxu0
    %v1684 = vadd.f32 0.0, %v1683
    %v1685 = vpop.f32.mrf.mxu0
    %1686 = vmatprep.mubr.bf16.mxu0 0
    %1687 = vmatmul.mubr.bf16.gmra.mxu0 %v1465
    %v1688 = vpop.f32.mrf.mxu0
    %v1689 = vadd.f32 0.0, %v1688
    %v1690 = vpop.f32.mrf.mxu0
    %v1691 = vpop.f32.mrf.mxu0
    %v1692 = vadd.f32 0.0, %v1691
    %v1693 = vpop.f32.mrf.mxu0
    %1694 = vmatprep.mubr.bf16.mxu0 0
    %1695 = vmatmul.mubr.bf16.gmra.mxu0 %v1466
    %v1696 = vpop.f32.mrf.mxu0
    %v1697 = vadd.f32 0.0, %v1696
    %v1698 = vpop.f32.mrf.mxu0
    %v1699 = vpop.f32.mrf.mxu0
    %v1700 = vadd.f32 0.0, %v1699
    %v1701 = vpop.f32.mrf.mxu0
    %1702 = vmatprep.mubr.bf16.mxu0 0
    %1703 = vmatmul.mubr.bf16.gmra.mxu0 %v1467
    %v1704 = vpop.f32.mrf.mxu0
    %v1705 = vadd.f32 0.0, %v1704
    %v1706 = vpop.f32.mrf.mxu0
    %v1707 = vpop.f32.mrf.mxu0
    %v1708 = vadd.f32 0.0, %v1707
    %v1709 = vpop.f32.mrf.mxu0
    %1710 = vmatprep.mubr.bf16.mxu0 0
    %1711 = vmatmul.mubr.bf16.gmra.mxu0 %v1468
    %v1712 = vpop.f32.mrf.mxu0
    %v1713 = vadd.f32 0.0, %v1712
    %v1714 = vpop.f32.mrf.mxu0
    %v1715 = vpop.f32.mrf.mxu0
    %v1716 = vadd.f32 0.0, %v1715
    %v1717 = vpop.f32.mrf.mxu0
    %1718 = vmatprep.mubr.bf16.mxu0 0
    %1719 = vmatmul.mubr.bf16.gmra.mxu0 %v1469
    %v1720 = vpop.f32.mrf.mxu0
    %v1721 = vadd.f32 0.0, %v1720
    %v1722 = vpop.f32.mrf.mxu0
    %v1723 = vpop.f32.mrf.mxu0
    %v1724 = vadd.f32 0.0, %v1723
    %v1725 = vpop.f32.mrf.mxu0
    %1726 = vmatprep.mubr.bf16.mxu0 0
    %1727 = vmatmul.mubr.bf16.gmra.mxu0 %v1470
    %v1728 = vpop.f32.mrf.mxu0
    %v1729 = vadd.f32 0.0, %v1728
    %v1730 = vpop.f32.mrf.mxu0
    %v1731 = vpop.f32.mrf.mxu0
    %v1732 = vadd.f32 0.0, %v1731
    %v1733 = vpop.f32.mrf.mxu0
    %1734 = vmatprep.mubr.bf16.mxu0 0
    %1735 = vmatmul.mubr.bf16.gmra.mxu0 %v1471
    %v1736 = vpop.f32.mrf.mxu0
    %v1737 = vadd.f32 0.0, %v1736
    %v1738 = vpop.f32.mrf.mxu0
    %v1739 = vpop.f32.mrf.mxu0
    %v1740 = vadd.f32 0.0, %v1739
    %v1741 = vpop.f32.mrf.mxu0
    %1742 = vmatprep.mubr.bf16.mxu0 0
    %1743 = vmatmul.mubr.bf16.gmra.mxu0 %v1472
    %v1744 = vpop.f32.mrf.mxu0
    %v1745 = vadd.f32 0.0, %v1744
    %v1746 = vpop.f32.mrf.mxu0
    %v1747 = vpop.f32.mrf.mxu0
    %v1748 = vadd.f32 0.0, %v1747
    %v1749 = vpop.f32.mrf.mxu0
    %1750 = vmatprep.mubr.bf16.mxu0 0
    %1751 = vmatmul.mubr.bf16.gmra.mxu0 %v1473
    %v1752 = vpop.f32.mrf.mxu0
    %v1753 = vadd.f32 0.0, %v1752
    %v1754 = vpop.f32.mrf.mxu0
    %v1755 = vpop.f32.mrf.mxu0
    %v1756 = vadd.f32 0.0, %v1755
    %v1757 = vpop.f32.mrf.mxu0
    %1758 = vmatprep.mubr.bf16.mxu0 0
    %1759 = vmatmul.mubr.bf16.gmra.mxu0 %v1474
    %v1760 = vpop.f32.mrf.mxu0
    %v1761 = vadd.f32 0.0, %v1760
    %v1762 = vpop.f32.mrf.mxu0
    %v1763 = vpop.f32.mrf.mxu0
    %v1764 = vadd.f32 0.0, %v1763
    %v1765 = vpop.f32.mrf.mxu0
    %1766 = vmatprep.mubr.bf16.mxu0 0
    %1767 = vmatmul.mubr.bf16.gmra.mxu0 %v1475
    %v1768 = vpop.f32.mrf.mxu0
    %v1769 = vadd.f32 0.0, %v1768
    %v1770 = vpop.f32.mrf.mxu0
    %v1771 = vpop.f32.mrf.mxu0
    %v1772 = vadd.f32 0.0, %v1771
    %v1773 = vpop.f32.mrf.mxu0
    %1774 = vmatprep.mubr.bf16.mxu0 0
    %1775 = vmatmul.mubr.bf16.gmra.mxu0 %v1476
    %v1776 = vpop.f32.mrf.mxu0
    %v1777 = vadd.f32 0.0, %v1776
    %v1778 = vpop.f32.mrf.mxu0
    %v1779 = vpop.f32.mrf.mxu0
    %v1780 = vadd.f32 0.0, %v1779
    %v1781 = vpop.f32.mrf.mxu0
    %1782 = vmatprep.mubr.bf16.mxu0 0
    %1783 = vmatmul.mubr.bf16.gmra.mxu0 %v1477
    %v1784 = vpop.f32.mrf.mxu0
    %v1785 = vadd.f32 0.0, %v1784
    %v1786 = vpop.f32.mrf.mxu0
    %v1787 = vpop.f32.mrf.mxu0
    %v1788 = vadd.f32 0.0, %v1787
    %v1789 = vpop.f32.mrf.mxu0
    %1790 = vmatprep.mubr.bf16.mxu0 0
    %1791 = vmatmul.mubr.bf16.gmra.mxu0 %v1478
    %v1792 = vpop.f32.mrf.mxu0
    %v1793 = vadd.f32 0.0, %v1792
    %v1794 = vpop.f32.mrf.mxu0
    %v1795 = vpop.f32.mrf.mxu0
    %v1796 = vadd.f32 0.0, %v1795
    %v1797 = vpop.f32.mrf.mxu0
    %1798 = vmatprep.mubr.bf16.mxu0 0
    %1799 = vmatmul.mubr.bf16.gmra.mxu0 %v1479
    %v1800 = vpop.f32.mrf.mxu0
    %v1801 = vadd.f32 0.0, %v1800
    %v1802 = vpop.f32.mrf.mxu0
    %v1803 = vpop.f32.mrf.mxu0
    %v1804 = vadd.f32 0.0, %v1803
    %v1805 = vpop.f32.mrf.mxu0
    %1806 = vmatprep.mubr.bf16.mxu0 0
    %1807 = vmatmul.mubr.bf16.gmra.mxu0 %v1480
    %v1808 = vpop.f32.mrf.mxu0
    %v1809 = vadd.f32 0.0, %v1808
    %v1810 = vpop.f32.mrf.mxu0
    %v1811 = vpop.f32.mrf.mxu0
    %v1812 = vadd.f32 0.0, %v1811
    %v1813 = vpop.f32.mrf.mxu0
    %1814 = vmatprep.mubr.bf16.mxu0 0
    %1815 = vmatmul.mubr.bf16.gmra.mxu0 %v1481
    %v1816 = vpop.f32.mrf.mxu0
    %v1817 = vadd.f32 0.0, %v1816
    %v1818 = vpop.f32.mrf.mxu0
    %v1819 = vpop.f32.mrf.mxu0
    %v1820 = vadd.f32 0.0, %v1819
    %v1821 = vpop.f32.mrf.mxu0
    %1822 = vmatprep.mubr.bf16.mxu0 0
    %1823 = vmatmul.mubr.bf16.gmra.mxu0 %v1482
    %v1824 = vpop.f32.mrf.mxu0
    %v1825 = vadd.f32 0.0, %v1824
    %v1826 = vpop.f32.mrf.mxu0
    %v1827 = vpop.f32.mrf.mxu0
    %v1828 = vadd.f32 0.0, %v1827
    %v1829 = vpop.f32.mrf.mxu0
    %1830 = vmatprep.mubr.bf16.mxu0 0
    %1831 = vmatmul.mubr.bf16.gmra.mxu0 %v1483
    %v1832 = vpop.f32.mrf.mxu0
    %v1833 = vadd.f32 0.0, %v1832
    %v1834 = vpop.f32.mrf.mxu0
    %v1835 = vpop.f32.mrf.mxu0
    %v1836 = vadd.f32 0.0, %v1835
    %v1837 = vpop.f32.mrf.mxu0
    %1838 = vmatprep.mubr.bf16.mxu0 0
    %1839 = vmatmul.mubr.bf16.gmra.mxu0 %v1484
    %v1840 = vpop.f32.mrf.mxu0
    %v1841 = vadd.f32 0.0, %v1840
    %v1842 = vpop.f32.mrf.mxu0
    %v1843 = vpop.f32.mrf.mxu0
    %v1844 = vadd.f32 0.0, %v1843
    %v1845 = vpop.f32.mrf.mxu0
    %1846 = vmatprep.mubr.bf16.mxu0 0
    %1847 = vmatmul.mubr.bf16.gmra.mxu0 %v1485
    %v1848 = vpop.f32.mrf.mxu0
    %v1849 = vadd.f32 0.0, %v1848
    %v1850 = vpop.f32.mrf.mxu0
    %v1851 = vpop.f32.mrf.mxu0
    %v1852 = vadd.f32 0.0, %v1851
    %v1853 = vpop.f32.mrf.mxu0
    %1854 = vdwg.mxu0
    %v1855 = vadd.f32 %v992, %v1601
    %v1856 = vadd.f32 %v995, %v1604
    %v1857 = vadd.f32 %v1000, %v1609
    %v1858 = vadd.f32 %v1003, %v1612
    %v1859 = vadd.f32 %v1008, %v1617
    %v1860 = vadd.f32 %v1011, %v1620
    %v1861 = vadd.f32 %v1016, %v1625
    %v1862 = vadd.f32 %v1019, %v1628
    %v1863 = vadd.f32 %v1024, %v1633
    %v1864 = vadd.f32 %v1027, %v1636
    %v1865 = vadd.f32 %v1032, %v1641
    %v1866 = vadd.f32 %v1035, %v1644
    %v1867 = vadd.f32 %v1040, %v1649
    %v1868 = vadd.f32 %v1043, %v1652
    %v1869 = vadd.f32 %v1048, %v1657
    %v1870 = vadd.f32 %v1051, %v1660
    %v1871 = vadd.f32 %v1056, %v1665
    %v1872 = vadd.f32 %v1059, %v1668
    %v1873 = vadd.f32 %v1064, %v1673
    %v1874 = vadd.f32 %v1067, %v1676
    %v1875 = vadd.f32 %v1072, %v1681
    %v1876 = vadd.f32 %v1075, %v1684
    %v1877 = vadd.f32 %v1080, %v1689
    %v1878 = vadd.f32 %v1083, %v1692
    %v1879 = vadd.f32 %v1088, %v1697
    %v1880 = vadd.f32 %v1091, %v1700
    %v1881 = vadd.f32 %v1096, %v1705
    %v1882 = vadd.f32 %v1099, %v1708
    %v1883 = vadd.f32 %v1104, %v1713
    %v1884 = vadd.f32 %v1107, %v1716
    %v1885 = vadd.f32 %v1112, %v1721
    %v1886 = vadd.f32 %v1115, %v1724
    %v1887 = vadd.f32 %v1120, %v1729
    %v1888 = vadd.f32 %v1123, %v1732
    %v1889 = vadd.f32 %v1128, %v1737
    %v1890 = vadd.f32 %v1131, %v1740
    %v1891 = vadd.f32 %v1136, %v1745
    %v1892 = vadd.f32 %v1139, %v1748
    %v1893 = vadd.f32 %v1144, %v1753
    %v1894 = vadd.f32 %v1147, %v1756
    %v1895 = vadd.f32 %v1152, %v1761
    %v1896 = vadd.f32 %v1155, %v1764
    %v1897 = vadd.f32 %v1160, %v1769
    %v1898 = vadd.f32 %v1163, %v1772
    %v1899 = vadd.f32 %v1168, %v1777
    %v1900 = vadd.f32 %v1171, %v1780
    %v1901 = vadd.f32 %v1176, %v1785
    %v1902 = vadd.f32 %v1179, %v1788
    %v1903 = vadd.f32 %v1184, %v1793
    %v1904 = vadd.f32 %v1187, %v1796
    %v1905 = vadd.f32 %v1192, %v1801
    %v1906 = vadd.f32 %v1195, %v1804
    %v1907 = vadd.f32 %v1200, %v1809
    %v1908 = vadd.f32 %v1203, %v1812
    %v1909 = vadd.f32 %v1208, %v1817
    %v1910 = vadd.f32 %v1211, %v1820
    %v1911 = vadd.f32 %v1216, %v1825
    %v1912 = vadd.f32 %v1219, %v1828
    %v1913 = vadd.f32 %v1224, %v1833
    %v1914 = vadd.f32 %v1227, %v1836
    %v1915 = vadd.f32 %v1232, %v1841
    %v1916 = vadd.f32 %v1235, %v1844
    %v1917 = vadd.f32 %v1240, %v1849
    %v1918 = vadd.f32 %v1243, %v1852
    %v1919 = vld [vmem:[%s6] sm:$0x1]
    %v1921 = vlaneseq
    %v1922 = vshrl.u32 %v1921, 7
    %v1923 = vsub.s32 0, %v1922
    %v1924 = vrot.slane %v1919, %v1923
    %v1926 = vadd.f32 %v1855, %v1924
    %v1927 = vadd.f32 %v1856, %v1924
    %v1928 = vadd.f32 %v1857, %v1924
    %v1929 = vadd.f32 %v1858, %v1924
    %v1930 = vadd.f32 %v1859, %v1924
    %v1931 = vadd.f32 %v1860, %v1924
    %v1932 = vadd.f32 %v1861, %v1924
    %v1933 = vadd.f32 %v1862, %v1924
    %v1934 = vadd.f32 %v1863, %v1924
    %v1935 = vadd.f32 %v1864, %v1924
    %v1936 = vadd.f32 %v1865, %v1924
    %v1937 = vadd.f32 %v1866, %v1924
    %v1938 = vadd.f32 %v1867, %v1924
    %v1939 = vadd.f32 %v1868, %v1924
    %v1940 = vadd.f32 %v1869, %v1924
    %v1941 = vadd.f32 %v1870, %v1924
    %v1942 = vadd.f32 %v1871, %v1924
    %v1943 = vadd.f32 %v1872, %v1924
    %v1944 = vadd.f32 %v1873, %v1924
    %v1945 = vadd.f32 %v1874, %v1924
    %v1946 = vadd.f32 %v1875, %v1924
    %v1947 = vadd.f32 %v1876, %v1924
    %v1948 = vadd.f32 %v1877, %v1924
    %v1949 = vadd.f32 %v1878, %v1924
    %v1950 = vadd.f32 %v1879, %v1924
    %v1951 = vadd.f32 %v1880, %v1924
    %v1952 = vadd.f32 %v1881, %v1924
    %v1953 = vadd.f32 %v1882, %v1924
    %v1954 = vadd.f32 %v1883, %v1924
    %v1955 = vadd.f32 %v1884, %v1924
    %v1956 = vadd.f32 %v1885, %v1924
    %v1957 = vadd.f32 %v1886, %v1924
    %v1958 = vadd.f32 %v1887, %v1924
    %v1959 = vadd.f32 %v1888, %v1924
    %v1960 = vadd.f32 %v1889, %v1924
    %v1961 = vadd.f32 %v1890, %v1924
    %v1962 = vadd.f32 %v1891, %v1924
    %v1963 = vadd.f32 %v1892, %v1924
    %v1964 = vadd.f32 %v1893, %v1924
    %v1965 = vadd.f32 %v1894, %v1924
    %v1966 = vadd.f32 %v1895, %v1924
    %v1967 = vadd.f32 %v1896, %v1924
    %v1968 = vadd.f32 %v1897, %v1924
    %v1969 = vadd.f32 %v1898, %v1924
    %v1970 = vadd.f32 %v1899, %v1924
    %v1971 = vadd.f32 %v1900, %v1924
    %v1972 = vadd.f32 %v1901, %v1924
    %v1973 = vadd.f32 %v1902, %v1924
    %v1974 = vadd.f32 %v1903, %v1924
    %v1975 = vadd.f32 %v1904, %v1924
    %v1976 = vadd.f32 %v1905, %v1924
    %v1977 = vadd.f32 %v1906, %v1924
    %v1978 = vadd.f32 %v1907, %v1924
    %v1979 = vadd.f32 %v1908, %v1924
    %v1980 = vadd.f32 %v1909, %v1924
    %v1981 = vadd.f32 %v1910, %v1924
    %v1982 = vadd.f32 %v1911, %v1924
    %v1983 = vadd.f32 %v1912, %v1924
    %v1984 = vadd.f32 %v1913, %v1924
    %v1985 = vadd.f32 %v1914, %v1924
    %v1986 = vadd.f32 %v1915, %v1924
    %v1987 = vadd.f32 %v1916, %v1924
    %v1988 = vadd.f32 %v1917, %v1924
    %v1989 = vadd.f32 %v1918, %v1924
    %1990 = vst [vmem:[#allocation2] sm:$0xff] %v1926
    %1991 = vst [vmem:[#allocation2 + $0x8] sm:$0xff] %v1927
    %1992 = vst [vmem:[#allocation2 + $0x10] sm:$0xff] %v1928
    %1993 = vst [vmem:[#allocation2 + $0x18] sm:$0xff] %v1929
    %1994 = vst [vmem:[#allocation2 + $0x20] sm:$0xff] %v1930
    %1995 = vst [vmem:[#allocation2 + $0x28] sm:$0xff] %v1931
    %1996 = vst [vmem:[#allocation2 + $0x30] sm:$0xff] %v1932
    %1997 = vst [vmem:[#allocation2 + $0x38] sm:$0xff] %v1933
    %1998 = vst [vmem:[#allocation2 + $0x40] sm:$0xff] %v1934
    %1999 = vst [vmem:[#allocation2 + $0x48] sm:$0xff] %v1935
    %2000 = vst [vmem:[#allocation2 + $0x50] sm:$0xff] %v1936
    %2001 = vst [vmem:[#allocation2 + $0x58] sm:$0xff] %v1937
    %2002 = vst [vmem:[#allocation2 + $0x60] sm:$0xff] %v1938
    %2003 = vst [vmem:[#allocation2 + $0x68] sm:$0xff] %v1939
    %2004 = vst [vmem:[#allocation2 + $0x70] sm:$0xff] %v1940
    %2005 = vst [vmem:[#allocation2 + $0x78] sm:$0xff] %v1941
    %2006 = vst [vmem:[#allocation2 + $0x80] sm:$0xff] %v1942
    %2007 = vst [vmem:[#allocation2 + $0x88] sm:$0xff] %v1943
    %2008 = vst [vmem:[#allocation2 + $0x90] sm:$0xff] %v1944
    %2009 = vst [vmem:[#allocation2 + $0x98] sm:$0xff] %v1945
    %2010 = vst [vmem:[#allocation2 + $0xa0] sm:$0xff] %v1946
    %2011 = vst [vmem:[#allocation2 + $0xa8] sm:$0xff] %v1947
    %2012 = vst [vmem:[#allocation2 + $0xb0] sm:$0xff] %v1948
    %2013 = vst [vmem:[#allocation2 + $0xb8] sm:$0xff] %v1949
    %2014 = vst [vmem:[#allocation2 + $0xc0] sm:$0xff] %v1950
    %2015 = vst [vmem:[#allocation2 + $0xc8] sm:$0xff] %v1951
    %2016 = vst [vmem:[#allocation2 + $0xd0] sm:$0xff] %v1952
    %2017 = vst [vmem:[#allocation2 + $0xd8] sm:$0xff] %v1953
    %2018 = vst [vmem:[#allocation2 + $0xe0] sm:$0xff] %v1954
    %2019 = vst [vmem:[#allocation2 + $0xe8] sm:$0xff] %v1955
    %2020 = vst [vmem:[#allocation2 + $0xf0] sm:$0xff] %v1956
    %2021 = vst [vmem:[#allocation2 + $0xf8] sm:$0xff] %v1957
    %2022 = vst [vmem:[#allocation2 + $0x100] sm:$0xff] %v1958
    %2023 = vst [vmem:[#allocation2 + $0x108] sm:$0xff] %v1959
    %2024 = vst [vmem:[#allocation2 + $0x110] sm:$0xff] %v1960
    %2025 = vst [vmem:[#allocation2 + $0x118] sm:$0xff] %v1961
    %2026 = vst [vmem:[#allocation2 + $0x120] sm:$0xff] %v1962
    %2027 = vst [vmem:[#allocation2 + $0x128] sm:$0xff] %v1963
    %2028 = vst [vmem:[#allocation2 + $0x130] sm:$0xff] %v1964
    %2029 = vst [vmem:[#allocation2 + $0x138] sm:$0xff] %v1965
    %2030 = vst [vmem:[#allocation2 + $0x140] sm:$0xff] %v1966
    %2031 = vst [vmem:[#allocation2 + $0x148] sm:$0xff] %v1967
    %2032 = vst [vmem:[#allocation2 + $0x150] sm:$0xff] %v1968
    %2033 = vst [vmem:[#allocation2 + $0x158] sm:$0xff] %v1969
    %2034 = vst [vmem:[#allocation2 + $0x160] sm:$0xff] %v1970
    %2035 = vst [vmem:[#allocation2 + $0x168] sm:$0xff] %v1971
    %2036 = vst [vmem:[#allocation2 + $0x170] sm:$0xff] %v1972
    %2037 = vst [vmem:[#allocation2 + $0x178] sm:$0xff] %v1973
    %2038 = vst [vmem:[#allocation2 + $0x180] sm:$0xff] %v1974
    %2039 = vst [vmem:[#allocation2 + $0x188] sm:$0xff] %v1975
    %2040 = vst [vmem:[#allocation2 + $0x190] sm:$0xff] %v1976
    %2041 = vst [vmem:[#allocation2 + $0x198] sm:$0xff] %v1977
    %2042 = vst [vmem:[#allocation2 + $0x1a0] sm:$0xff] %v1978
    %2043 = vst [vmem:[#allocation2 + $0x1a8] sm:$0xff] %v1979
    %2044 = vst [vmem:[#allocation2 + $0x1b0] sm:$0xff] %v1980
    %2045 = vst [vmem:[#allocation2 + $0x1b8] sm:$0xff] %v1981
    %2046 = vst [vmem:[#allocation2 + $0x1c0] sm:$0xff] %v1982
    %2047 = vst [vmem:[#allocation2 + $0x1c8] sm:$0xff] %v1983
    %2048 = vst [vmem:[#allocation2 + $0x1d0] sm:$0xff] %v1984
    %2049 = vst [vmem:[#allocation2 + $0x1d8] sm:$0xff] %v1985
    %2050 = vst [vmem:[#allocation2 + $0x1e0] sm:$0xff] %v1986
    %2051 = vst [vmem:[#allocation2 + $0x1e8] sm:$0xff] %v1987
    %2052 = vst [vmem:[#allocation2 + $0x1f0] sm:$0xff] %v1988
    %2053 = vst [vmem:[#allocation2 + $0x1f8] sm:$0xff] %v1989
    // Predicated region
    $region30: #{aggregation_block.13} parent=1 // pred_check
      _
    $region31: #{aggregation_block.13} parent=1 // pred_check_branch
      %2055 = sbr.rel (0) target = $region33
    $region32: #{aggregation_block.13} parent=1 // pred_region
      %s2057 = ssub.s32 8192, 8192
      %2058 = vsyncadd [#allocation3], %s2057
      %s2059 = sshll.u32 [#allocation2], 4
      %s2060 = int_to_ptr.vmem [resolvable:$true] %s2059
      %2065 = dma.vmem_to_hbm [thread:$0]  %s2060, 8192, %s7, [#allocation3], 128, 128, 8
    $region33: #{aggregation_block.13} parent=1 // pred_fallthru
      _
    // Predicated region
    $region34: #{aggregation_block.13} parent=1 // pred_check
      _
    $region35: #{aggregation_block.13} parent=1 // pred_check_branch
      %2067 = sbr.rel (0) target = $region37
    $region36: #{aggregation_block.13} parent=1 // pred_region
      %2068 = dma.done [#allocation3], 8192
    $region37: #{aggregation_block.13} parent=1 // pred_fallthru
      _
    %2069 = vsyncpa [#allocation3], 1

// kernel: aggregation_block.10
$region0: #{aggregation_block.10}
  #allocation0 [shape = 'u32[]', space=smem, size = 0x4, offset = 0x4, fixed_abs, tag = 'smem constant byte address 0x4 - core index']
  #allocation1 [shape = 'u32[144,128]{1,0:T(1,128)}', space=vmem, size = 0x12000, scoped, tag = 'internal scratch']
  #allocation2 [shape = 'bf16[2,2,16,128]{3,2,1,0:T(8,128)(2,1)}', space=vmem, size = 0x4000, scoped, tag = 'scratch operand']
  #allocation3 [shape = 's32[4]{0}', space=sflag, size = 0x10, scoped, tag = 'scratch operand']
  #allocation4 [shape = 's32[]', space=sflag, size = 0x4, offset = 0, fixed_abs, tag = 'sflag constant byte address 0x0 - dummy sync flag']
  #allocation5 [shape = 's32[]', space=sflag, size = 0x4, offset = 0, fixed_abs, tag = 'sflag constant byte address 0x0 - dummy sync flag']
  #allocation6 [shape = 's32[]', space=sflag, size = 0x4, offset = 0, fixed_abs, tag = 'sflag constant byte address 0x0 - dummy sync flag']
  #allocation7 [shape = 's32[]', space=sflag, size = 0x4, offset = 0, fixed_abs, tag = 'sflag constant byte address 0x0 - dummy sync flag']
  %s0 = inlined_call_operand.vmem [shape: bf16[2,16,16,128], index: 0, kind: input, shape index: {}, may-alias: {0,2}]
  %s1 = inlined_call_operand.vmem [shape: bf16[2,16,16,128], index: 1, kind: input, shape index: {}, may-alias: {1,3}]
  %s2 = inlined_call_operand.vmem [shape: bf16[2,16,16,128], index: 2, kind: input, shape index: {}, may-alias: {0,2}]
  %s3 = inlined_call_operand.vmem [shape: bf16[2,16,16,128], index: 3, kind: input, shape index: {}, may-alias: {1,3}]
  %s4 = inlined_call_operand.vmem [shape: bf16[3,384,128], index: 4, kind: input, shape index: {}]
  %s5 = inlined_call_operand.vmem [shape: f32[1,1,128], index: 5, kind: input, shape index: {}]
  %s6 = inlined_call_operand.vmem [shape: f32[1,1,128], index: 6, kind: input, shape index: {}]
  %s7 = inlined_call_operand.vmem [shape: bf16[2,16,16,128], index: 7, kind: output, shape index: {}]
  %s8 = sld [smem:[#allocation0]]
  $region205: #{aggregation_block.10} parent=0
    _
  %s10 = ssub.s32 1, %s8
  %s11 = scalar_select 0, %s10, %s8
  loop: start=0, step=1, limit=6
  $region2: #{aggregation_block.10} parent=0 // loop_pre_header
    _
  $region3: #{aggregation_block.10} parent=0 // loop_header
    %s13 = sphi 0, %s17
    %p14 = scmp.ge.s32.totalorder %s13, 6
    %s20 = sphi 0, %s32
    %s21 = sphi 0, %s28
    %s22 = sphi 0, %s20
    %s23 = sphi 0, %s21
    %s24 = sphi 0, %s22
    %s25 = sphi 0, %s23
    %s37 = sphi 0, %s39
    %s40 = sphi 0, %s37
    %s41 = sphi 0, %s40
    %s57 = sphi 0, %s41
    %s65 = sphi 0, %s67
    %s68 = sphi 0, %s65
    %s69 = sphi 0, %s68
    %s85 = sphi 0, %s69
    %s89 = sphi 0, %s89
    %s91 = sphi 0, %s89
    %s92 = sphi 0, %s91
    %s106 = sphi 0, %s92
    %s110 = sphi 0, %s110
    %s112 = sphi 0, %s110
    %s113 = sphi 0, %s112
    %s127 = sphi 0, %s113
    %s131 = sphi 0, %s131
    %s133 = sphi 0, %s131
    %s134 = sphi 0, %s133
    %s148 = sphi 0, %s134
    %s156 = sphi 0, %s158
    %s159 = sphi 0, %s156
    %s160 = sphi 0, %s159
    %s176 = sphi 0, %s160
  $region4: #{aggregation_block.10} parent=0 // loop_header_branch
    %16 = sbr.rel (%p14) target = $region8
  $region5: #{aggregation_block.10} parent=0 // loop_body
    %s18 = ssub.s32 %s13, 1
    %s19 = ssub.s32 %s13, 2
    %s26 = sadd.s32 1, %s21
    %p27 = scmp.ge.s32.totalorder %s26, 2
    %s28 = scalar_select %p27, 0, %s26
    %s29 = sadd.s32 1, %s20
    %s30 = scalar_select %p27, %s29, %s20
    %p31 = scmp.ge.s32.totalorder %s30, 2
    %s32 = scalar_select %p31, 0, %s30
    %s33 = ssub.s32 %s20, %s32
    %s34 = ssub.s32 %s21, %s28
    %s35 = sor.u32 %s33, %s34
    %p36 = scmp.eq.s32.totalorder %s35, 0
    %s38 = sadd.s32 %s37, 1
    %s39 = scalar_select %p36, %s37, %s38
    %p42 = pneg %p36
    %p43 = scmp.eq.s32.totalorder %s13, 3
    %p44 = por %p42, %p43
    %p45 = scmp.ne.s32.totalorder %s37, %s40
    %p46 = scmp.eq.s32.totalorder %s13, 0
    %p47 = por %p45, %p46
    %p48 = scmp.ne.s32.totalorder %s37, %s40
    %p49 = scmp.eq.s32.totalorder %s18, 3
    %p50 = por %p48, %p49
    %p51 = scmp.ne.s32.totalorder %s40, %s41
    %p52 = scmp.eq.s32.totalorder %s18, 0
    %p53 = por %p51, %p52
    %p54 = scmp.ne.s32.totalorder %s40, %s41
    %p55 = scmp.eq.s32.totalorder %s19, 3
    %p56 = por %p54, %p55
    %p58 = scmp.ne.s32.totalorder %s41, %s57
    %p59 = scmp.eq.s32.totalorder %s19, 0
    %p60 = por %p58, %p59
    %s61 = ssub.s32 %s20, %s32
    %s62 = ssub.s32 %s21, %s28
    %s63 = sor.u32 %s61, %s62
    %p64 = scmp.eq.s32.totalorder %s63, 0
    %s66 = sadd.s32 %s65, 1
    %s67 = scalar_select %p64, %s65, %s66
    %p70 = pneg %p64
    %p71 = scmp.eq.s32.totalorder %s13, 3
    %p72 = por %p70, %p71
    %p73 = scmp.ne.s32.totalorder %s65, %s68
    %p74 = scmp.eq.s32.totalorder %s13, 0
    %p75 = por %p73, %p74
    %p76 = scmp.ne.s32.totalorder %s65, %s68
    %p77 = scmp.eq.s32.totalorder %s18, 3
    %p78 = por %p76, %p77
    %p79 = scmp.ne.s32.totalorder %s68, %s69
    %p80 = scmp.eq.s32.totalorder %s18, 0
    %p81 = por %p79, %p80
    %p82 = scmp.ne.s32.totalorder %s68, %s69
    %p83 = scmp.eq.s32.totalorder %s19, 3
    %p84 = por %p82, %p83
    %p86 = scmp.ne.s32.totalorder %s69, %s85
    %p87 = scmp.eq.s32.totalorder %s19, 0
    %p88 = por %p86, %p87
    %s90 = sadd.s32 %s89, 1
    %p93 = scmp.eq.s32.totalorder %s13, 3
    %p94 = scmp.ne.s32.totalorder %s89, %s91
    %p95 = scmp.eq.s32.totalorder %s13, 0
    %p96 = por %p94, %p95
    %p97 = scmp.ne.s32.totalorder %s89, %s91
    %p98 = scmp.eq.s32.totalorder %s18, 3
    %p99 = por %p97, %p98
    %p100 = scmp.ne.s32.totalorder %s91, %s92
    %p101 = scmp.eq.s32.totalorder %s18, 0
    %p102 = por %p100, %p101
    %p103 = scmp.ne.s32.totalorder %s91, %s92
    %p104 = scmp.eq.s32.totalorder %s19, 3
    %p105 = por %p103, %p104
    %p107 = scmp.ne.s32.totalorder %s92, %s106
    %p108 = scmp.eq.s32.totalorder %s19, 0
    %p109 = por %p107, %p108
    %s111 = sadd.s32 %s110, 1
    %p114 = scmp.eq.s32.totalorder %s13, 3
    %p115 = scmp.ne.s32.totalorder %s110, %s112
    %p116 = scmp.eq.s32.totalorder %s13, 0
    %p117 = por %p115, %p116
    %p118 = scmp.ne.s32.totalorder %s110, %s112
    %p119 = scmp.eq.s32.totalorder %s18, 3
    %p120 = por %p118, %p119
    %p121 = scmp.ne.s32.totalorder %s112, %s113
    %p122 = scmp.eq.s32.totalorder %s18, 0
    %p123 = por %p121, %p122
    %p124 = scmp.ne.s32.totalorder %s112, %s113
    %p125 = scmp.eq.s32.totalorder %s19, 3
    %p126 = por %p124, %p125
    %p128 = scmp.ne.s32.totalorder %s113, %s127
    %p129 = scmp.eq.s32.totalorder %s19, 0
    %p130 = por %p128, %p129
    %s132 = sadd.s32 %s131, 1
    %p135 = scmp.eq.s32.totalorder %s13, 3
    %p136 = scmp.ne.s32.totalorder %s131, %s133
    %p137 = scmp.eq.s32.totalorder %s13, 0
    %p138 = por %p136, %p137
    %p139 = scmp.ne.s32.totalorder %s131, %s133
    %p140 = scmp.eq.s32.totalorder %s18, 3
    %p141 = por %p139, %p140
    %p142 = scmp.ne.s32.totalorder %s133, %s134
    %p143 = scmp.eq.s32.totalorder %s18, 0
    %p144 = por %p142, %p143
    %p145 = scmp.ne.s32.totalorder %s133, %s134
    %p146 = scmp.eq.s32.totalorder %s19, 3
    %p147 = por %p145, %p146
    %p149 = scmp.ne.s32.totalorder %s134, %s148
    %p150 = scmp.eq.s32.totalorder %s19, 0
    %p151 = por %p149, %p150
    %s152 = ssub.s32 %s20, %s32
    %s153 = ssub.s32 %s21, %s28
    %s154 = sor.u32 %s152, %s153
    %p155 = scmp.eq.s32.totalorder %s154, 0
    %s157 = sadd.s32 %s156, 1
    %s158 = scalar_select %p155, %s156, %s157
    %p161 = pneg %p155
    %p162 = scmp.eq.s32.totalorder %s13, 3
    %p163 = por %p161, %p162
    %p164 = scmp.ne.s32.totalorder %s156, %s159
    %p165 = scmp.eq.s32.totalorder %s13, 0
    %p166 = por %p164, %p165
    %p167 = scmp.ne.s32.totalorder %s156, %s159
    %p168 = scmp.eq.s32.totalorder %s18, 3
    %p169 = por %p167, %p168
    %p170 = scmp.ne.s32.totalorder %s159, %s160
    %p171 = scmp.eq.s32.totalorder %s18, 0
    %p172 = por %p170, %p171
    %p173 = scmp.ne.s32.totalorder %s159, %s160
    %p174 = scmp.eq.s32.totalorder %s19, 3
    %p175 = por %p173, %p174
    %p177 = scmp.ne.s32.totalorder %s160, %s176
    %p178 = scmp.eq.s32.totalorder %s19, 0
    %p179 = por %p177, %p178
    %p180 = scmp.le.s32.totalorder 1, %s13
    %p181 = scmp.lt.s32.totalorder %s13, 5
    %p182 = pnand %p180, %p181
    %p183 = pneg %p182
    // Predicated region
    $region9: #{aggregation_block.10} parent=5 // pred_check
      _
    $region10: #{aggregation_block.10} parent=5 // pred_check_branch
      %185 = sbr.rel (%p182) target = $region12
    $region11: #{aggregation_block.10} parent=5 // pred_region
      %s186 = ssub.s32 %s13, 1
      // Predicated region
      $region13: #{aggregation_block.10} parent=11 // pred_check
        %p187 = pneg %p102
      $region14: #{aggregation_block.10} parent=11 // pred_check_branch
        %189 = sbr.rel (%p187) target = $region16
      $region15: #{aggregation_block.10} parent=11 // pred_region
        _
      $region16: #{aggregation_block.10} parent=11 // pred_fallthru
        _
      // Predicated region
      $region17: #{aggregation_block.10} parent=11 // pred_check
        %p190 = pneg %p123
      $region18: #{aggregation_block.10} parent=11 // pred_check_branch
        %192 = sbr.rel (%p190) target = $region20
      $region19: #{aggregation_block.10} parent=11 // pred_region
        _
      $region20: #{aggregation_block.10} parent=11 // pred_fallthru
        _
      // Predicated region
      $region21: #{aggregation_block.10} parent=11 // pred_check
        %p193 = pneg %p144
      $region22: #{aggregation_block.10} parent=11 // pred_check_branch
        %195 = sbr.rel (%p193) target = $region24
      $region23: #{aggregation_block.10} parent=11 // pred_region
        _
      $region24: #{aggregation_block.10} parent=11 // pred_fallthru
        _
    $region12: #{aggregation_block.10} parent=5 // pred_fallthru
      _
    %p196 = scmp.lt.s32.totalorder %s13, 4
    // Predicated region
    $region25: #{aggregation_block.10} parent=5 // pred_check
      %p197 = pneg %p196
    $region26: #{aggregation_block.10} parent=5 // pred_check_branch
      %199 = sbr.rel (%p197) target = $region28
    $region27: #{aggregation_block.10} parent=5 // pred_region
      // Predicated region
      $region29: #{aggregation_block.10} parent=27 // pred_check
        %p200 = pneg %p47
      $region30: #{aggregation_block.10} parent=27 // pred_check_branch
        %202 = sbr.rel (%p200) target = $region32
      $region31: #{aggregation_block.10} parent=27 // pred_region
        %s203 = smul.u32 8, %s21
        %p204 = scmp.lt.s32.totalorder %s20, 1
        %s205 = scalar_select %p204, %s20, 1
        %p206 = scmp.lt.s32.totalorder %s203, 15
        %s207 = scalar_select %p206, %s203, 15
        %s208 = smul.addr %s207, 2
        %s209 = smul.addr %s205, 32
        %s210 = sadd.s32 %s208, %s209
        %s211 = smul.addr %s210, 4
        %s212 = scalar_lea.vmem %s0, %s211
        %s213 = smul.u32 8, %s21
      $region32: #{aggregation_block.10} parent=27 // pred_fallthru
        _
      // Predicated region
      $region33: #{aggregation_block.10} parent=27 // pred_check
        %p214 = pneg %p75
      $region34: #{aggregation_block.10} parent=27 // pred_check_branch
        %216 = sbr.rel (%p214) target = $region36
      $region35: #{aggregation_block.10} parent=27 // pred_region
        %s217 = smul.u32 8, %s21
        %p218 = scmp.lt.s32.totalorder %s20, 1
        %s219 = scalar_select %p218, %s20, 1
        %p220 = scmp.lt.s32.totalorder %s217, 15
        %s221 = scalar_select %p220, %s217, 15
        %s222 = smul.addr %s221, 2
        %s223 = smul.addr %s219, 32
        %s224 = sadd.s32 %s222, %s223
        %s225 = smul.addr %s224, 4
        %s226 = scalar_lea.vmem %s1, %s225
        %s227 = smul.u32 8, %s21
      $region36: #{aggregation_block.10} parent=27 // pred_fallthru
        _
    $region28: #{aggregation_block.10} parent=5 // pred_fallthru
      _
    %p228 = scmp.le.s32.totalorder 1, %s13
    %p229 = scmp.lt.s32.totalorder %s13, 5
    %p230 = pnand %p228, %p229
    %p231 = pneg %p230
    // Predicated region
    $region37: #{aggregation_block.10} parent=5 // pred_check
      _
    $region38: #{aggregation_block.10} parent=5 // pred_check_branch
      %233 = sbr.rel (%p230) target = $region40
    $region39: #{aggregation_block.10} parent=5 // pred_region
      %s234 = ssub.s32 %s13, 1
      %s235 = smul.u32 8, %s23
      %p236 = scmp.lt.s32.totalorder %s22, 1
      %s237 = scalar_select %p236, %s22, 1
      %p238 = scmp.lt.s32.totalorder %s235, 15
      %s239 = scalar_select %p238, %s235, 15
      %s240 = smul.addr %s239, 2
      %s241 = smul.addr %s237, 32
      %s242 = sadd.s32 %s240, %s241
      %s243 = smul.addr %s242, 4
      %s244 = scalar_lea.vmem %s0, %s243
      %p245 = pneg %p53
      %p246 = pneg %p50
      %s247 = smul.u32 8, %s23
      %p248 = scmp.lt.s32.totalorder %s22, 1
      %s249 = scalar_select %p248, %s22, 1
      %p250 = scmp.lt.s32.totalorder %s247, 15
      %s251 = scalar_select %p250, %s247, 15
      %s252 = smul.addr %s251, 2
      %s253 = smul.addr %s249, 32
      %s254 = sadd.s32 %s252, %s253
      %s255 = smul.addr %s254, 4
      %s256 = scalar_lea.vmem %s1, %s255
      %p257 = pneg %p81
      %p258 = pneg %p78
      %p259 = pneg %p102
      %p260 = pneg %p99
      %p261 = pneg %p123
      %p262 = pneg %p120
      %p263 = pneg %p144
      %p264 = pneg %p141
      %p265 = pneg %p172
      %p266 = pneg %p169
      %s267 = smul.u32 8, %s23
      %p268 = scmp.lt.s32.totalorder %s22, 1
      %s269 = scalar_select %p268, %s22, 1
      %p270 = scmp.lt.s32.totalorder %s267, 15
      %s271 = scalar_select %p270, %s267, 15
      %s272 = smul.addr %s271, 2
      %s273 = smul.addr %s269, 32
      %s274 = sadd.s32 %s272, %s273
      %s275 = smul.addr %s274, 4
      %s276 = scalar_lea.vmem %s7, %s275
      %s277 = smul.u32 8, %s23
      %p278 = scmp.lt.s32.totalorder %s22, 1
      %s279 = scalar_select %p278, %s22, 1
      %p280 = scmp.lt.s32.totalorder %s277, 15
      %s281 = scalar_select %p280, %s277, 15
      %s282 = smul.addr %s281, 2
      %s283 = smul.addr %s279, 32
      %s284 = sadd.s32 %s282, %s283
      %s285 = smul.addr %s284, 4
      %s286 = scalar_lea.vmem %s0, %s285
      %s287 = smul.u32 8, %s23
      %s288 = smul.u32 8, %s23
      %p289 = scmp.lt.s32.totalorder %s22, 1
      %s290 = scalar_select %p289, %s22, 1
      %p291 = scmp.lt.s32.totalorder %s288, 15
      %s292 = scalar_select %p291, %s288, 15
      %s293 = smul.addr %s292, 2
      %s294 = smul.addr %s290, 32
      %s295 = sadd.s32 %s293, %s294
      %s296 = smul.addr %s295, 4
      %s297 = scalar_lea.vmem %s1, %s296
      %s298 = smul.u32 8, %s23
      %s299 = smul.u32 8, %s23
      %p300 = scmp.lt.s32.totalorder %s22, 1
      %s301 = scalar_select %p300, %s22, 1
      %p302 = scmp.lt.s32.totalorder %s299, 15
      %s303 = scalar_select %p302, %s299, 15
      %s304 = smul.addr %s303, 2
      %s305 = smul.addr %s301, 32
      %s306 = sadd.s32 %s304, %s305
      %s307 = smul.addr %s306, 4
      %s308 = scalar_lea.vmem %s7, %s307
      %s309 = smul.u32 8, %s23
      %p311 = scmp.gt.s32.totalorder %s23, 0
      // Predicated region
      $region41: #{aggregation_block.10} parent=39 // pred_check
        %p312 = pneg %p311
      $region42: #{aggregation_block.10} parent=39 // pred_check_branch
        %314 = sbr.rel (%p312) target = $region44
      $region43: #{aggregation_block.10} parent=39 // pred_region
        %s315 = smul.u32 %s23, 8
        %s316 = ssub.s32 %s315, 1
        %s317 = smul.u32 %s316, 2
        %s318 = smul.u32 %s22, 32
        %s319 = sadd.s32 %s317, %s318
        %s320 = smul.addr %s319, 4
        %s321 = scalar_lea.vmem %s2, %s320
        %p323 = scmp.lt.u32.totalorder 8, 8
        %p324 = pneg %p323
        // Predicated region
        $region45: #{aggregation_block.10} parent=43 // pred_check
          _
        $region46: #{aggregation_block.10} parent=43 // pred_check_branch
          %326 = sbr.rel (%p323) target = $region48
        $region47: #{aggregation_block.10} parent=43 // pred_region
          %s342 = sand.u32 8, 7
          %p343 = scmp.eq.s32.totalorder %s342, 0
          // Predicated region
          $region60: #{aggregation_block.10} parent=47 // pred_check
            %p344 = pneg %p343
          $region61: #{aggregation_block.10} parent=47 // pred_check_branch
            %346 = sbr.rel (%p344) target = $region63
          $region62: #{aggregation_block.10} parent=47 // pred_region
            loop: start=0, step=1, limit=1
            $region64: #{aggregation_block.10} parent=62 // loop_pre_header
              _
            $region65: #{aggregation_block.10} parent=62 // loop_header
              %s348 = sphi 0, %s352
              %p349 = scmp.ge.s32.totalorder %s348, 1
              %s353 = sphi %s321, %s321
              %s354 = sphi [#allocation2], [#allocation2]
            $region66: #{aggregation_block.10} parent=62 // loop_header_branch
              %351 = sbr.rel (%p349) target = $region70
            $region67: #{aggregation_block.10} parent=62 // loop_body
              %v355 = vld [vmem:[%s353] sm:$0xff]
              %356 = vst [vmem:[%s354] sm:$0xff] %v355
            $region68: #{aggregation_block.10} parent=62 // loop_footer
              %s352 = sadd.s32 1, %s348
            $region69: #{aggregation_block.10} parent=62 // loop_footer_branch
              %347 = sbr.rel target = $region65
            $region70: #{aggregation_block.10} parent=62 // loop_exit
              _
          $region63: #{aggregation_block.10} parent=47 // pred_fallthru
            _
          %p357 = pneg %p343
          // Predicated region
          $region71: #{aggregation_block.10} parent=47 // pred_check
            _
          $region72: #{aggregation_block.10} parent=47 // pred_check_branch
            %359 = sbr.rel (%p343) target = $region74
          $region73: #{aggregation_block.10} parent=47 // pred_region
            %s360 = sand.u32 8, 7
          $region74: #{aggregation_block.10} parent=47 // pred_fallthru
            _
        $region48: #{aggregation_block.10} parent=43 // pred_fallthru
          _
        // Predicated region
        $region49: #{aggregation_block.10} parent=43 // pred_check
          %p327 = pneg %p323
        $region50: #{aggregation_block.10} parent=43 // pred_check_branch
          %329 = sbr.rel (%p327) target = $region52
        $region51: #{aggregation_block.10} parent=43 // pred_region
          %s330 = sshll.u32 1, 8
          %s331 = ssub.s32 %s330, 1
          loop: start=0, step=1, limit=1
          $region53: #{aggregation_block.10} parent=51 // loop_pre_header
            _
          $region54: #{aggregation_block.10} parent=51 // loop_header
            %s333 = sphi 0, %s337
            %p334 = scmp.ge.s32.totalorder %s333, 1
            %s338 = sphi %s321, %s321
            %s339 = sphi [#allocation2], [#allocation2]
          $region55: #{aggregation_block.10} parent=51 // loop_header_branch
            %336 = sbr.rel (%p334) target = $region59
          $region56: #{aggregation_block.10} parent=51 // loop_body
            %v340 = vld [vmem:[%s338] sm:%s331]
            %341 = vst [vmem:[%s339] sm:%s331] %v340
          $region57: #{aggregation_block.10} parent=51 // loop_footer
            %s337 = sadd.s32 1, %s333
          $region58: #{aggregation_block.10} parent=51 // loop_footer_branch
            %332 = sbr.rel target = $region54
          $region59: #{aggregation_block.10} parent=51 // loop_exit
            _
        $region52: #{aggregation_block.10} parent=43 // pred_fallthru
          _
        // Predicated region
        $region75: #{aggregation_block.10} parent=43 // pred_check
          _
        $region76: #{aggregation_block.10} parent=43 // pred_check_branch
          %363 = sbr.rel (0) target = $region78
        $region77: #{aggregation_block.10} parent=43 // pred_region
          %364 = vsyncadd [#allocation3], 128
        $region78: #{aggregation_block.10} parent=43 // pred_fallthru
          _
        %s365 = smul.addr %s319, 4
        %s366 = scalar_lea.vmem %s3, %s365
        %s367 = scalar_lea.vmem [#allocation2], 8
        %s368 = scalar_lea.sflag [#allocation3], 1
        %p370 = scmp.lt.u32.totalorder 8, 8
        %p371 = pneg %p370
        // Predicated region
        $region79: #{aggregation_block.10} parent=43 // pred_check
          _
        $region80: #{aggregation_block.10} parent=43 // pred_check_branch
          %373 = sbr.rel (%p370) target = $region82
        $region81: #{aggregation_block.10} parent=43 // pred_region
          %s389 = sand.u32 8, 7
          %p390 = scmp.eq.s32.totalorder %s389, 0
          // Predicated region
          $region94: #{aggregation_block.10} parent=81 // pred_check
            %p391 = pneg %p390
          $region95: #{aggregation_block.10} parent=81 // pred_check_branch
            %393 = sbr.rel (%p391) target = $region97
          $region96: #{aggregation_block.10} parent=81 // pred_region
            loop: start=0, step=1, limit=1
            $region98: #{aggregation_block.10} parent=96 // loop_pre_header
              _
            $region99: #{aggregation_block.10} parent=96 // loop_header
              %s395 = sphi 0, %s399
              %p396 = scmp.ge.s32.totalorder %s395, 1
              %s400 = sphi %s366, %s366
              %s401 = sphi %s367, %s367
            $region100: #{aggregation_block.10} parent=96 // loop_header_branch
              %398 = sbr.rel (%p396) target = $region104
            $region101: #{aggregation_block.10} parent=96 // loop_body
              %v402 = vld [vmem:[%s400] sm:$0xff]
              %403 = vst [vmem:[%s401] sm:$0xff] %v402
            $region102: #{aggregation_block.10} parent=96 // loop_footer
              %s399 = sadd.s32 1, %s395
            $region103: #{aggregation_block.10} parent=96 // loop_footer_branch
              %394 = sbr.rel target = $region99
            $region104: #{aggregation_block.10} parent=96 // loop_exit
              _
          $region97: #{aggregation_block.10} parent=81 // pred_fallthru
            _
          %p404 = pneg %p390
          // Predicated region
          $region105: #{aggregation_block.10} parent=81 // pred_check
            _
          $region106: #{aggregation_block.10} parent=81 // pred_check_branch
            %406 = sbr.rel (%p390) target = $region108
          $region107: #{aggregation_block.10} parent=81 // pred_region
            %s407 = sand.u32 8, 7
          $region108: #{aggregation_block.10} parent=81 // pred_fallthru
            _
        $region82: #{aggregation_block.10} parent=43 // pred_fallthru
          _
        // Predicated region
        $region83: #{aggregation_block.10} parent=43 // pred_check
          %p374 = pneg %p370
        $region84: #{aggregation_block.10} parent=43 // pred_check_branch
          %376 = sbr.rel (%p374) target = $region86
        $region85: #{aggregation_block.10} parent=43 // pred_region
          %s377 = sshll.u32 1, 8
          %s378 = ssub.s32 %s377, 1
          loop: start=0, step=1, limit=1
          $region87: #{aggregation_block.10} parent=85 // loop_pre_header
            _
          $region88: #{aggregation_block.10} parent=85 // loop_header
            %s380 = sphi 0, %s384
            %p381 = scmp.ge.s32.totalorder %s380, 1
            %s385 = sphi %s366, %s366
            %s386 = sphi %s367, %s367
          $region89: #{aggregation_block.10} parent=85 // loop_header_branch
            %383 = sbr.rel (%p381) target = $region93
          $region90: #{aggregation_block.10} parent=85 // loop_body
            %v387 = vld [vmem:[%s385] sm:%s378]
            %388 = vst [vmem:[%s386] sm:%s378] %v387
          $region91: #{aggregation_block.10} parent=85 // loop_footer
            %s384 = sadd.s32 1, %s380
          $region92: #{aggregation_block.10} parent=85 // loop_footer_branch
            %379 = sbr.rel target = $region88
          $region93: #{aggregation_block.10} parent=85 // loop_exit
            _
        $region86: #{aggregation_block.10} parent=43 // pred_fallthru
          _
        // Predicated region
        $region109: #{aggregation_block.10} parent=43 // pred_check
          _
        $region110: #{aggregation_block.10} parent=43 // pred_check_branch
          %410 = sbr.rel (0) target = $region112
        $region111: #{aggregation_block.10} parent=43 // pred_region
          %411 = vsyncadd %s368, 128
        $region112: #{aggregation_block.10} parent=43 // pred_fallthru
          _
        %s412 = smul.u32 4, 2
        %s413 = smul.u32 %s412, 1
        %s414 = sshll.u32 %s413, 4
        %415 = dma.done [#allocation3], %s414
        %s416 = sshll.u32 %s413, 4
        %417 = dma.done %s368, %s416
      $region44: #{aggregation_block.10} parent=39 // pred_fallthru
        _
      %p418 = scmp.eq.s32.totalorder %s23, 0
      // Predicated region
      $region113: #{aggregation_block.10} parent=39 // pred_check
        %p419 = pneg %p418
      $region114: #{aggregation_block.10} parent=39 // pred_check_branch
        %421 = sbr.rel (%p419) target = $region116
      $region115: #{aggregation_block.10} parent=39 // pred_region
        %422 = vst [vmem:[#allocation2] sm:$0xf] 0
        %423 = vst [vmem:[#allocation2 + $0x4] sm:$0xf] 0
        %s424 = scalar_lea.vmem [#allocation2], 8
        %425 = vst [vmem:[%s424] sm:$0xf] 0
        %426 = vst [vmem:[%s424 + $0x4] sm:$0xf] 0
      $region116: #{aggregation_block.10} parent=39 // pred_fallthru
        _
      %p427 = scmp.lt.s32.totalorder %s23, 1
      // Predicated region
      $region117: #{aggregation_block.10} parent=39 // pred_check
        %p428 = pneg %p427
      $region118: #{aggregation_block.10} parent=39 // pred_check_branch
        %430 = sbr.rel (%p428) target = $region120
      $region119: #{aggregation_block.10} parent=39 // pred_region
        %s431 = sadd.s32 %s23, 1
        %s432 = smul.u32 %s431, 8
        %s433 = smul.u32 %s432, 2
        %s434 = smul.u32 %s22, 32
        %s435 = sadd.s32 %s433, %s434
        %s436 = smul.addr %s435, 4
        %s437 = scalar_lea.vmem %s2, %s436
        %s438 = scalar_lea.vmem [#allocation2], 16
        %s439 = scalar_lea.sflag [#allocation3], 2
        %p441 = scmp.lt.u32.totalorder 8, 8
        %p442 = pneg %p441
        // Predicated region
        $region121: #{aggregation_block.10} parent=119 // pred_check
          _
        $region122: #{aggregation_block.10} parent=119 // pred_check_branch
          %444 = sbr.rel (%p441) target = $region124
        $region123: #{aggregation_block.10} parent=119 // pred_region
          %s460 = sand.u32 8, 7
          %p461 = scmp.eq.s32.totalorder %s460, 0
          // Predicated region
          $region136: #{aggregation_block.10} parent=123 // pred_check
            %p462 = pneg %p461
          $region137: #{aggregation_block.10} parent=123 // pred_check_branch
            %464 = sbr.rel (%p462) target = $region139
          $region138: #{aggregation_block.10} parent=123 // pred_region
            loop: start=0, step=1, limit=1
            $region140: #{aggregation_block.10} parent=138 // loop_pre_header
              _
            $region141: #{aggregation_block.10} parent=138 // loop_header
              %s466 = sphi 0, %s470
              %p467 = scmp.ge.s32.totalorder %s466, 1
              %s471 = sphi %s437, %s437
              %s472 = sphi %s438, %s438
            $region142: #{aggregation_block.10} parent=138 // loop_header_branch
              %469 = sbr.rel (%p467) target = $region146
            $region143: #{aggregation_block.10} parent=138 // loop_body
              %v473 = vld [vmem:[%s471] sm:$0xff]
              %474 = vst [vmem:[%s472] sm:$0xff] %v473
            $region144: #{aggregation_block.10} parent=138 // loop_footer
              %s470 = sadd.s32 1, %s466
            $region145: #{aggregation_block.10} parent=138 // loop_footer_branch
              %465 = sbr.rel target = $region141
            $region146: #{aggregation_block.10} parent=138 // loop_exit
              _
          $region139: #{aggregation_block.10} parent=123 // pred_fallthru
            _
          %p475 = pneg %p461
          // Predicated region
          $region147: #{aggregation_block.10} parent=123 // pred_check
            _
          $region148: #{aggregation_block.10} parent=123 // pred_check_branch
            %477 = sbr.rel (%p461) target = $region150
          $region149: #{aggregation_block.10} parent=123 // pred_region
            %s478 = sand.u32 8, 7
          $region150: #{aggregation_block.10} parent=123 // pred_fallthru
            _
        $region124: #{aggregation_block.10} parent=119 // pred_fallthru
          _
        // Predicated region
        $region125: #{aggregation_block.10} parent=119 // pred_check
          %p445 = pneg %p441
        $region126: #{aggregation_block.10} parent=119 // pred_check_branch
          %447 = sbr.rel (%p445) target = $region128
        $region127: #{aggregation_block.10} parent=119 // pred_region
          %s448 = sshll.u32 1, 8
          %s449 = ssub.s32 %s448, 1
          loop: start=0, step=1, limit=1
          $region129: #{aggregation_block.10} parent=127 // loop_pre_header
            _
          $region130: #{aggregation_block.10} parent=127 // loop_header
            %s451 = sphi 0, %s455
            %p452 = scmp.ge.s32.totalorder %s451, 1
            %s456 = sphi %s437, %s437
            %s457 = sphi %s438, %s438
          $region131: #{aggregation_block.10} parent=127 // loop_header_branch
            %454 = sbr.rel (%p452) target = $region135
          $region132: #{aggregation_block.10} parent=127 // loop_body
            %v458 = vld [vmem:[%s456] sm:%s449]
            %459 = vst [vmem:[%s457] sm:%s449] %v458
          $region133: #{aggregation_block.10} parent=127 // loop_footer
            %s455 = sadd.s32 1, %s451
          $region134: #{aggregation_block.10} parent=127 // loop_footer_branch
            %450 = sbr.rel target = $region130
          $region135: #{aggregation_block.10} parent=127 // loop_exit
            _
        $region128: #{aggregation_block.10} parent=119 // pred_fallthru
          _
        // Predicated region
        $region151: #{aggregation_block.10} parent=119 // pred_check
          _
        $region152: #{aggregation_block.10} parent=119 // pred_check_branch
          %481 = sbr.rel (0) target = $region154
        $region153: #{aggregation_block.10} parent=119 // pred_region
          %482 = vsyncadd %s439, 128
        $region154: #{aggregation_block.10} parent=119 // pred_fallthru
          _
        %s483 = smul.addr %s435, 4
        %s484 = scalar_lea.vmem %s3, %s483
        %s485 = scalar_lea.vmem [#allocation2], 24
        %s486 = scalar_lea.sflag [#allocation3], 3
        %p488 = scmp.lt.u32.totalorder 8, 8
        %p489 = pneg %p488
        // Predicated region
        $region155: #{aggregation_block.10} parent=119 // pred_check
          _
        $region156: #{aggregation_block.10} parent=119 // pred_check_branch
          %491 = sbr.rel (%p488) target = $region158
        $region157: #{aggregation_block.10} parent=119 // pred_region
          %s507 = sand.u32 8, 7
          %p508 = scmp.eq.s32.totalorder %s507, 0
          // Predicated region
          $region170: #{aggregation_block.10} parent=157 // pred_check
            %p509 = pneg %p508
          $region171: #{aggregation_block.10} parent=157 // pred_check_branch
            %511 = sbr.rel (%p509) target = $region173
          $region172: #{aggregation_block.10} parent=157 // pred_region
            loop: start=0, step=1, limit=1
            $region174: #{aggregation_block.10} parent=172 // loop_pre_header
              _
            $region175: #{aggregation_block.10} parent=172 // loop_header
              %s513 = sphi 0, %s517
              %p514 = scmp.ge.s32.totalorder %s513, 1
              %s518 = sphi %s484, %s484
              %s519 = sphi %s485, %s485
            $region176: #{aggregation_block.10} parent=172 // loop_header_branch
              %516 = sbr.rel (%p514) target = $region180
            $region177: #{aggregation_block.10} parent=172 // loop_body
              %v520 = vld [vmem:[%s518] sm:$0xff]
              %521 = vst [vmem:[%s519] sm:$0xff] %v520
            $region178: #{aggregation_block.10} parent=172 // loop_footer
              %s517 = sadd.s32 1, %s513
            $region179: #{aggregation_block.10} parent=172 // loop_footer_branch
              %512 = sbr.rel target = $region175
            $region180: #{aggregation_block.10} parent=172 // loop_exit
              _
          $region173: #{aggregation_block.10} parent=157 // pred_fallthru
            _
          %p522 = pneg %p508
          // Predicated region
          $region181: #{aggregation_block.10} parent=157 // pred_check
            _
          $region182: #{aggregation_block.10} parent=157 // pred_check_branch
            %524 = sbr.rel (%p508) target = $region184
          $region183: #{aggregation_block.10} parent=157 // pred_region
            %s525 = sand.u32 8, 7
          $region184: #{aggregation_block.10} parent=157 // pred_fallthru
            _
        $region158: #{aggregation_block.10} parent=119 // pred_fallthru
          _
        // Predicated region
        $region159: #{aggregation_block.10} parent=119 // pred_check
          %p492 = pneg %p488
        $region160: #{aggregation_block.10} parent=119 // pred_check_branch
          %494 = sbr.rel (%p492) target = $region162
        $region161: #{aggregation_block.10} parent=119 // pred_region
          %s495 = sshll.u32 1, 8
          %s496 = ssub.s32 %s495, 1
          loop: start=0, step=1, limit=1
          $region163: #{aggregation_block.10} parent=161 // loop_pre_header
            _
          $region164: #{aggregation_block.10} parent=161 // loop_header
            %s498 = sphi 0, %s502
            %p499 = scmp.ge.s32.totalorder %s498, 1
            %s503 = sphi %s484, %s484
            %s504 = sphi %s485, %s485
          $region165: #{aggregation_block.10} parent=161 // loop_header_branch
            %501 = sbr.rel (%p499) target = $region169
          $region166: #{aggregation_block.10} parent=161 // loop_body
            %v505 = vld [vmem:[%s503] sm:%s496]
            %506 = vst [vmem:[%s504] sm:%s496] %v505
          $region167: #{aggregation_block.10} parent=161 // loop_footer
            %s502 = sadd.s32 1, %s498
          $region168: #{aggregation_block.10} parent=161 // loop_footer_branch
            %497 = sbr.rel target = $region164
          $region169: #{aggregation_block.10} parent=161 // loop_exit
            _
        $region162: #{aggregation_block.10} parent=119 // pred_fallthru
          _
        // Predicated region
        $region185: #{aggregation_block.10} parent=119 // pred_check
          _
        $region186: #{aggregation_block.10} parent=119 // pred_check_branch
          %528 = sbr.rel (0) target = $region188
        $region187: #{aggregation_block.10} parent=119 // pred_region
          %529 = vsyncadd %s486, 128
        $region188: #{aggregation_block.10} parent=119 // pred_fallthru
          _
        %s530 = smul.u32 4, 2
        %s531 = smul.u32 %s530, 1
        %s532 = sshll.u32 %s531, 4
        %533 = dma.done %s439, %s532
        %s534 = sshll.u32 %s531, 4
        %535 = dma.done %s486, %s534
      $region120: #{aggregation_block.10} parent=39 // pred_fallthru
        _
      %p536 = scmp.eq.s32.totalorder %s23, 1
      // Predicated region
      $region189: #{aggregation_block.10} parent=39 // pred_check
        %p537 = pneg %p536
      $region190: #{aggregation_block.10} parent=39 // pred_check_branch
        %539 = sbr.rel (%p537) target = $region192
      $region191: #{aggregation_block.10} parent=39 // pred_region
        %s540 = scalar_lea.vmem [#allocation2], 16
        %541 = vst [vmem:[%s540] sm:$0xf] 0
        %542 = vst [vmem:[%s540 + $0x4] sm:$0xf] 0
        %s543 = scalar_lea.vmem [#allocation2], 24
        %544 = vst [vmem:[%s543] sm:$0xf] 0
        %545 = vst [vmem:[%s543 + $0x4] sm:$0xf] 0
      $region192: #{aggregation_block.10} parent=39 // pred_fallthru
        _
      %v546 = vld [vmem:[%s286] sm:$0xf]
      %v547 = vld [vmem:[%s286 + $0x4] sm:$0xf]
      %v548 = vld [vmem:[%s286 + $0x8] sm:$0xf]
      %v549 = vld [vmem:[%s286 + $0xc] sm:$0xf]
      %v550 = vld [vmem:[%s286 + $0x10] sm:$0xf]
      %v551 = vld [vmem:[%s286 + $0x14] sm:$0xf]
      %v552 = vld [vmem:[%s286 + $0x18] sm:$0xf]
      %v553 = vld [vmem:[%s286 + $0x1c] sm:$0xf]
      %v554 = vld [vmem:[%s286 + $0x20] sm:$0xf]
      %v555 = vld [vmem:[%s286 + $0x24] sm:$0xf]
      %v556 = vld [vmem:[%s286 + $0x28] sm:$0xf]
      %v557 = vld [vmem:[%s286 + $0x2c] sm:$0xf]
      %v558 = vld [vmem:[%s286 + $0x30] sm:$0xf]
      %v559 = vld [vmem:[%s286 + $0x34] sm:$0xf]
      %v560 = vld [vmem:[%s286 + $0x38] sm:$0xf]
      %v561 = vld [vmem:[%s286 + $0x3c] sm:$0xf]
      %v562 = vld [vmem:[%s297] sm:$0xf]
      %v563 = vld [vmem:[%s297 + $0x4] sm:$0xf]
      %v564 = vld [vmem:[%s297 + $0x8] sm:$0xf]
      %v565 = vld [vmem:[%s297 + $0xc] sm:$0xf]
      %v566 = vld [vmem:[%s297 + $0x10] sm:$0xf]
      %v567 = vld [vmem:[%s297 + $0x14] sm:$0xf]
      %v568 = vld [vmem:[%s297 + $0x18] sm:$0xf]
      %v569 = vld [vmem:[%s297 + $0x1c] sm:$0xf]
      %v570 = vld [vmem:[%s297 + $0x20] sm:$0xf]
      %v571 = vld [vmem:[%s297 + $0x24] sm:$0xf]
      %v572 = vld [vmem:[%s297 + $0x28] sm:$0xf]
      %v573 = vld [vmem:[%s297 + $0x2c] sm:$0xf]
      %v574 = vld [vmem:[%s297 + $0x30] sm:$0xf]
      %v575 = vld [vmem:[%s297 + $0x34] sm:$0xf]
      %v576 = vld [vmem:[%s297 + $0x38] sm:$0xf]
      %v577 = vld [vmem:[%s297 + $0x3c] sm:$0xf]
      %v578 = vadd.bf16 %v546, %v562
      %v579 = vadd.bf16 %v547, %v563
      %v580 = vadd.bf16 %v548, %v564
      %v581 = vadd.bf16 %v549, %v565
      %v582 = vadd.bf16 %v550, %v566
      %v583 = vadd.bf16 %v551, %v567
      %v584 = vadd.bf16 %v552, %v568
      %v585 = vadd.bf16 %v553, %v569
      %v586 = vadd.bf16 %v554, %v570
      %v587 = vadd.bf16 %v555, %v571
      %v588 = vadd.bf16 %v556, %v572
      %v589 = vadd.bf16 %v557, %v573
      %v590 = vadd.bf16 %v558, %v574
      %v591 = vadd.bf16 %v559, %v575
      %v592 = vadd.bf16 %v560, %v576
      %v593 = vadd.bf16 %v561, %v577
      %v594 = vld [vmem:[#allocation2] sm:$0xf]
      %v595 = vld [vmem:[#allocation2 + $0x4] sm:$0xf]
      %s596 = scalar_lea.vmem [#allocation2], 8
      %v597 = vld [vmem:[%s596] sm:$0xf]
      %v598 = vld [vmem:[%s596 + $0x4] sm:$0xf]
      %v599 = vadd.bf16 %v594, %v597
      %v600 = vadd.bf16 %v595, %v598
      %s601 = scalar_lea.vmem [#allocation2], 16
      %v602 = vld [vmem:[%s601] sm:$0xf]
      %v603 = vld [vmem:[%s601 + $0x4] sm:$0xf]
      %s604 = scalar_lea.vmem [#allocation2], 24
      %v605 = vld [vmem:[%s604] sm:$0xf]
      %v606 = vld [vmem:[%s604 + $0x4] sm:$0xf]
      %v607 = vadd.bf16 %v602, %v605
      %v608 = vadd.bf16 %v603, %v606
      %v629 = vunpack.c.l.b16 %v599
      %v630 = vunpack.c.l.b16 %v600
      %v631 = vunpack.c.l.b16 %v578
      %v632 = vunpack.c.l.b16 %v579
      %v633 = vunpack.c.l.b16 %v580
      %v634 = vunpack.c.l.b16 %v581
      %v635 = vunpack.c.l.b16 %v582
      %v636 = vunpack.c.l.b16 %v583
      %v637 = vunpack.c.l.b16 %v584
      %v638 = vunpack.c.l.b16 %v585
      %v639 = vunpack.c.l.b16 %v586
      %v640 = vunpack.c.l.b16 %v587
      %v641 = vunpack.c.l.b16 %v588
      %v642 = vunpack.c.l.b16 %v589
      %v643 = vunpack.c.l.b16 %v590
      %v644 = vunpack.c.l.b16 %v591
      %v645 = vunpack.c.l.b16 %v592
      %v646 = vunpack.c.l.b16 %v593
      %v647 = vunpack.c.l.b16 %v607
      %v648 = vunpack.c.l.b16 %v608
      %v649 = vpack.c.b16 %v630, %v629
      %v650 = vpack.c.b16 %v632, %v631
      %v651 = vpack.c.b16 %v634, %v633
      %v652 = vpack.c.b16 %v636, %v635
      %v653 = vpack.c.b16 %v638, %v637
      %v654 = vpack.c.b16 %v640, %v639
      %v655 = vpack.c.b16 %v642, %v641
      %v656 = vpack.c.b16 %v644, %v643
      %v657 = vpack.c.b16 %v646, %v645
      %v658 = vpack.c.b16 %v648, %v647
      %v660 = vshrl.u32 %v649, 16
      %v662 = vrot.slane %v660, 7
      %v663 = vshll.u32 %v649, 16
      %v665 = vor.u32 %v662, %v663
      %v667 = vshrl.u32 %v650, 16
      %v669 = vrot.slane %v667, 7
      %v670 = vshll.u32 %v650, 16
      %v672 = vor.u32 %v669, %v670
      %v674 = vshrl.u32 %v651, 16
      %v676 = vrot.slane %v674, 7
      %v677 = vshll.u32 %v651, 16
      %v679 = vor.u32 %v676, %v677
      %v681 = vshrl.u32 %v652, 16
      %v683 = vrot.slane %v681, 7
      %v684 = vshll.u32 %v652, 16
      %v686 = vor.u32 %v683, %v684
      %v688 = vshrl.u32 %v653, 16
      %v690 = vrot.slane %v688, 7
      %v691 = vshll.u32 %v653, 16
      %v693 = vor.u32 %v690, %v691
      %v695 = vshrl.u32 %v654, 16
      %v697 = vrot.slane %v695, 7
      %v698 = vshll.u32 %v654, 16
      %v700 = vor.u32 %v697, %v698
      %v702 = vshrl.u32 %v655, 16
      %v704 = vrot.slane %v702, 7
      %v705 = vshll.u32 %v655, 16
      %v707 = vor.u32 %v704, %v705
      %v709 = vshrl.u32 %v656, 16
      %v711 = vrot.slane %v709, 7
      %v712 = vshll.u32 %v656, 16
      %v714 = vor.u32 %v711, %v712
      %v716 = vshrl.u32 %v657, 16
      %v718 = vrot.slane %v716, 7
      %v719 = vshll.u32 %v657, 16
      %v721 = vor.u32 %v718, %v719
      %v723 = vshrl.u32 %v658, 16
      %v725 = vrot.slane %v723, 7
      %v726 = vshll.u32 %v658, 16
      %v728 = vor.u32 %v725, %v726
      %vm749 = vcmask 1040384
      %vm750 = vsmask.f32 256
      %vm751 = vmand %vm749, %vm750
      %v752 = vsel %vm751, 0, %v665
      %v753 = vsel %vm751, 0, %v672
      %v754 = vsel %vm751, 0, %v679
      %v755 = vsel %vm751, 0, %v686
      %v756 = vsel %vm751, 0, %v693
      %v757 = vsel %vm751, 0, %v700
      %v758 = vsel %vm751, 0, %v707
      %v759 = vsel %vm751, 0, %v714
      %v760 = vsel %vm751, 0, %v721
      %v761 = vsel %vm751, 0, %v728
      %v762 = vsel %vm751, %v662, 0
      %v763 = vsel %vm751, %v669, 0
      %v764 = vsel %vm751, %v676, 0
      %v765 = vsel %vm751, %v683, 0
      %v766 = vsel %vm751, %v690, 0
      %v767 = vsel %vm751, %v697, 0
      %v768 = vsel %vm751, %v704, 0
      %v769 = vsel %vm751, %v711, 0
      %v770 = vsel %vm751, %v718, 0
      %v771 = vsel %vm751, %v725, 0
      %vm772 = vsmask.f32 7424
      %v774 = vshrl.u32 %v752, 16
      %v776 = vshll.u32 %v752, 16
      %v778 = vrot.slane %v776, 1
      %v779 = vor.u32 %v774, %v778
      %v781 = vshll.u32 %v762, 16
      %v783 = vrot.slane %v781, 1
      %v784 = vsel %vm772, %v779, %v783
      %v786 = vshrl.u32 %v753, 16
      %v788 = vshll.u32 %v753, 16
      %v790 = vrot.slane %v788, 1
      %v791 = vor.u32 %v786, %v790
      %v793 = vshll.u32 %v763, 16
      %v795 = vrot.slane %v793, 1
      %v796 = vsel %vm772, %v791, %v795
      %v798 = vshrl.u32 %v754, 16
      %v800 = vshll.u32 %v754, 16
      %v802 = vrot.slane %v800, 1
      %v803 = vor.u32 %v798, %v802
      %v805 = vshll.u32 %v764, 16
      %v807 = vrot.slane %v805, 1
      %v808 = vsel %vm772, %v803, %v807
      %v810 = vshrl.u32 %v755, 16
      %v812 = vshll.u32 %v755, 16
      %v814 = vrot.slane %v812, 1
      %v815 = vor.u32 %v810, %v814
      %v817 = vshll.u32 %v765, 16
      %v819 = vrot.slane %v817, 1
      %v820 = vsel %vm772, %v815, %v819
      %v822 = vshrl.u32 %v756, 16
      %v824 = vshll.u32 %v756, 16
      %v826 = vrot.slane %v824, 1
      %v827 = vor.u32 %v822, %v826
      %v829 = vshll.u32 %v766, 16
      %v831 = vrot.slane %v829, 1
      %v832 = vsel %vm772, %v827, %v831
      %v834 = vshrl.u32 %v757, 16
      %v836 = vshll.u32 %v757, 16
      %v838 = vrot.slane %v836, 1
      %v839 = vor.u32 %v834, %v838
      %v841 = vshll.u32 %v767, 16
      %v843 = vrot.slane %v841, 1
      %v844 = vsel %vm772, %v839, %v843
      %v846 = vshrl.u32 %v758, 16
      %v848 = vshll.u32 %v758, 16
      %v850 = vrot.slane %v848, 1
      %v851 = vor.u32 %v846, %v850
      %v853 = vshll.u32 %v768, 16
      %v855 = vrot.slane %v853, 1
      %v856 = vsel %vm772, %v851, %v855
      %v858 = vshrl.u32 %v759, 16
      %v860 = vshll.u32 %v759, 16
      %v862 = vrot.slane %v860, 1
      %v863 = vor.u32 %v858, %v862
      %v865 = vshll.u32 %v769, 16
      %v867 = vrot.slane %v865, 1
      %v868 = vsel %vm772, %v863, %v867
      %v870 = vshrl.u32 %v760, 16
      %v872 = vshll.u32 %v760, 16
      %v874 = vrot.slane %v872, 1
      %v875 = vor.u32 %v870, %v874
      %v877 = vshll.u32 %v770, 16
      %v879 = vrot.slane %v877, 1
      %v880 = vsel %vm772, %v875, %v879
      %v882 = vshrl.u32 %v761, 16
      %v884 = vshll.u32 %v761, 16
      %v886 = vrot.slane %v884, 1
      %v887 = vor.u32 %v882, %v886
      %v889 = vshll.u32 %v771, 16
      %v891 = vrot.slane %v889, 1
      %v892 = vsel %vm772, %v887, %v891
      %vm923 = vcmask 1046528
      %v924 = vrot.slane %v752, 1
      %v925 = vrot.slane %v762, 1
      %v926 = vsel %vm923, %v924, %v925
      %v927 = vrot.slane %v753, 1
      %v928 = vrot.slane %v763, 1
      %v929 = vsel %vm923, %v927, %v928
      %v930 = vrot.slane %v754, 1
      %v931 = vrot.slane %v764, 1
      %v932 = vsel %vm923, %v930, %v931
      %v933 = vrot.slane %v755, 1
      %v934 = vrot.slane %v765, 1
      %v935 = vsel %vm923, %v933, %v934
      %v936 = vrot.slane %v756, 1
      %v937 = vrot.slane %v766, 1
      %v938 = vsel %vm923, %v936, %v937
      %v939 = vrot.slane %v757, 1
      %v940 = vrot.slane %v767, 1
      %v941 = vsel %vm923, %v939, %v940
      %v942 = vrot.slane %v758, 1
      %v943 = vrot.slane %v768, 1
      %v944 = vsel %vm923, %v942, %v943
      %v945 = vrot.slane %v759, 1
      %v946 = vrot.slane %v769, 1
      %v947 = vsel %vm923, %v945, %v946
      %v948 = vrot.slane %v760, 1
      %v949 = vrot.slane %v770, 1
      %v950 = vsel %vm923, %v948, %v949
      %v951 = vrot.slane %v761, 1
      %v952 = vrot.slane %v771, 1
      %v953 = vsel %vm923, %v951, %v952
      %v964 = vld [vmem:[%s4] sm:$0xf]
      %v965 = vld [vmem:[%s4 + $0x4] sm:$0xf]
      %v966 = vld [vmem:[%s4 + $0x8] sm:$0xf]
      %v967 = vld [vmem:[%s4 + $0xc] sm:$0xf]
      %v968 = vld [vmem:[%s4 + $0x10] sm:$0xf]
      %v969 = vld [vmem:[%s4 + $0x14] sm:$0xf]
      %v970 = vld [vmem:[%s4 + $0x18] sm:$0xf]
      %v971 = vld [vmem:[%s4 + $0x1c] sm:$0xf]
      %v972 = vld [vmem:[%s4 + $0x20] sm:$0xf]
      %v973 = vld [vmem:[%s4 + $0x24] sm:$0xf]
      %v974 = vld [vmem:[%s4 + $0x28] sm:$0xf]
      %v975 = vld [vmem:[%s4 + $0x2c] sm:$0xf]
      %v976 = vld [vmem:[%s4 + $0x30] sm:$0xf]
      %v977 = vld [vmem:[%s4 + $0x34] sm:$0xf]
      %v978 = vld [vmem:[%s4 + $0x38] sm:$0xf]
      %v979 = vld [vmem:[%s4 + $0x3c] sm:$0xf]
      %v980 = vld [vmem:[%s4 + $0x40] sm:$0xf]
      %v981 = vld [vmem:[%s4 + $0x44] sm:$0xf]
      %v982 = vld [vmem:[%s4 + $0x48] sm:$0xf]
      %v983 = vld [vmem:[%s4 + $0x4c] sm:$0xf]
      %v984 = vld [vmem:[%s4 + $0x50] sm:$0xf]
      %v985 = vld [vmem:[%s4 + $0x54] sm:$0xf]
      %v986 = vld [vmem:[%s4 + $0x58] sm:$0xf]
      %v987 = vld [vmem:[%s4 + $0x5c] sm:$0xf]
      %v988 = vld [vmem:[%s4 + $0x60] sm:$0xf]
      %v989 = vld [vmem:[%s4 + $0x64] sm:$0xf]
      %v990 = vld [vmem:[%s4 + $0x68] sm:$0xf]
      %v991 = vld [vmem:[%s4 + $0x6c] sm:$0xf]
      %v992 = vld [vmem:[%s4 + $0x70] sm:$0xf]
      %v993 = vld [vmem:[%s4 + $0x74] sm:$0xf]
      %v994 = vld [vmem:[%s4 + $0x78] sm:$0xf]
      %v995 = vld [vmem:[%s4 + $0x7c] sm:$0xf]
      %v996 = vld [vmem:[%s4 + $0x80] sm:$0xf]
      %v997 = vld [vmem:[%s4 + $0x84] sm:$0xf]
      %v998 = vld [vmem:[%s4 + $0x88] sm:$0xf]
      %v999 = vld [vmem:[%s4 + $0x8c] sm:$0xf]
      %v1000 = vld [vmem:[%s4 + $0x90] sm:$0xf]
      %v1001 = vld [vmem:[%s4 + $0x94] sm:$0xf]
      %v1002 = vld [vmem:[%s4 + $0x98] sm:$0xf]
      %v1003 = vld [vmem:[%s4 + $0x9c] sm:$0xf]
      %v1004 = vld [vmem:[%s4 + $0xa0] sm:$0xf]
      %v1005 = vld [vmem:[%s4 + $0xa4] sm:$0xf]
      %v1006 = vld [vmem:[%s4 + $0xa8] sm:$0xf]
      %v1007 = vld [vmem:[%s4 + $0xac] sm:$0xf]
      %v1008 = vld [vmem:[%s4 + $0xb0] sm:$0xf]
      %v1009 = vld [vmem:[%s4 + $0xb4] sm:$0xf]
      %v1010 = vld [vmem:[%s4 + $0xb8] sm:$0xf]
      %v1011 = vld [vmem:[%s4 + $0xbc] sm:$0xf]
      %s1012 = scalar_lea.vmem %s4, 192
      %v1013 = vld [vmem:[%s1012] sm:$0xf]
      %v1014 = vld [vmem:[%s1012 + $0x4] sm:$0xf]
      %v1015 = vld [vmem:[%s1012 + $0x8] sm:$0xf]
      %v1016 = vld [vmem:[%s1012 + $0xc] sm:$0xf]
      %v1017 = vld [vmem:[%s1012 + $0x10] sm:$0xf]
      %v1018 = vld [vmem:[%s1012 + $0x14] sm:$0xf]
      %v1019 = vld [vmem:[%s1012 + $0x18] sm:$0xf]
      %v1020 = vld [vmem:[%s1012 + $0x1c] sm:$0xf]
      %v1021 = vld [vmem:[%s1012 + $0x20] sm:$0xf]
      %v1022 = vld [vmem:[%s1012 + $0x24] sm:$0xf]
      %v1023 = vld [vmem:[%s1012 + $0x28] sm:$0xf]
      %v1024 = vld [vmem:[%s1012 + $0x2c] sm:$0xf]
      %v1025 = vld [vmem:[%s1012 + $0x30] sm:$0xf]
      %v1026 = vld [vmem:[%s1012 + $0x34] sm:$0xf]
      %v1027 = vld [vmem:[%s1012 + $0x38] sm:$0xf]
      %v1028 = vld [vmem:[%s1012 + $0x3c] sm:$0xf]
      %v1029 = vld [vmem:[%s1012 + $0x40] sm:$0xf]
      %v1030 = vld [vmem:[%s1012 + $0x44] sm:$0xf]
      %v1031 = vld [vmem:[%s1012 + $0x48] sm:$0xf]
      %v1032 = vld [vmem:[%s1012 + $0x4c] sm:$0xf]
      %v1033 = vld [vmem:[%s1012 + $0x50] sm:$0xf]
      %v1034 = vld [vmem:[%s1012 + $0x54] sm:$0xf]
      %v1035 = vld [vmem:[%s1012 + $0x58] sm:$0xf]
      %v1036 = vld [vmem:[%s1012 + $0x5c] sm:$0xf]
      %v1037 = vld [vmem:[%s1012 + $0x60] sm:$0xf]
      %v1038 = vld [vmem:[%s1012 + $0x64] sm:$0xf]
      %v1039 = vld [vmem:[%s1012 + $0x68] sm:$0xf]
      %v1040 = vld [vmem:[%s1012 + $0x6c] sm:$0xf]
      %v1041 = vld [vmem:[%s1012 + $0x70] sm:$0xf]
      %v1042 = vld [vmem:[%s1012 + $0x74] sm:$0xf]
      %v1043 = vld [vmem:[%s1012 + $0x78] sm:$0xf]
      %v1044 = vld [vmem:[%s1012 + $0x7c] sm:$0xf]
      %v1045 = vld [vmem:[%s1012 + $0x80] sm:$0xf]
      %v1046 = vld [vmem:[%s1012 + $0x84] sm:$0xf]
      %v1047 = vld [vmem:[%s1012 + $0x88] sm:$0xf]
      %v1048 = vld [vmem:[%s1012 + $0x8c] sm:$0xf]
      %v1049 = vld [vmem:[%s1012 + $0x90] sm:$0xf]
      %v1050 = vld [vmem:[%s1012 + $0x94] sm:$0xf]
      %v1051 = vld [vmem:[%s1012 + $0x98] sm:$0xf]
      %v1052 = vld [vmem:[%s1012 + $0x9c] sm:$0xf]
      %v1053 = vld [vmem:[%s1012 + $0xa0] sm:$0xf]
      %v1054 = vld [vmem:[%s1012 + $0xa4] sm:$0xf]
      %v1055 = vld [vmem:[%s1012 + $0xa8] sm:$0xf]
      %v1056 = vld [vmem:[%s1012 + $0xac] sm:$0xf]
      %v1057 = vld [vmem:[%s1012 + $0xb0] sm:$0xf]
      %v1058 = vld [vmem:[%s1012 + $0xb4] sm:$0xf]
      %v1059 = vld [vmem:[%s1012 + $0xb8] sm:$0xf]
      %v1060 = vld [vmem:[%s1012 + $0xbc] sm:$0xf]
      %v1109 = vunpack.c.l.b16 %v1013
      %v1110 = vunpack.c.l.b16 %v1014
      %v1111 = vunpack.c.l.b16 %v1015
      %v1112 = vunpack.c.l.b16 %v1016
      %v1113 = vunpack.c.l.b16 %v1017
      %v1114 = vunpack.c.l.b16 %v1018
      %v1115 = vunpack.c.l.b16 %v1019
      %v1116 = vunpack.c.l.b16 %v1020
      %v1117 = vunpack.c.l.b16 %v1021
      %v1118 = vunpack.c.l.b16 %v1022
      %v1119 = vunpack.c.l.b16 %v1023
      %v1120 = vunpack.c.l.b16 %v1024
      %v1121 = vunpack.c.l.b16 %v1025
      %v1122 = vunpack.c.l.b16 %v1026
      %v1123 = vunpack.c.l.b16 %v1027
      %v1124 = vunpack.c.l.b16 %v1028
      %v1125 = vunpack.c.l.b16 %v1029
      %v1126 = vunpack.c.l.b16 %v1030
      %v1127 = vunpack.c.l.b16 %v1031
      %v1128 = vunpack.c.l.b16 %v1032
      %v1129 = vunpack.c.l.b16 %v1033
      %v1130 = vunpack.c.l.b16 %v1034
      %v1131 = vunpack.c.l.b16 %v1035
      %v1132 = vunpack.c.l.b16 %v1036
      %v1133 = vunpack.c.l.b16 %v1037
      %v1134 = vunpack.c.l.b16 %v1038
      %v1135 = vunpack.c.l.b16 %v1039
      %v1136 = vunpack.c.l.b16 %v1040
      %v1137 = vunpack.c.l.b16 %v1041
      %v1138 = vunpack.c.l.b16 %v1042
      %v1139 = vunpack.c.l.b16 %v1043
      %v1140 = vunpack.c.l.b16 %v1044
      %v1141 = vunpack.c.l.b16 %v1045
      %v1142 = vunpack.c.l.b16 %v1046
      %v1143 = vunpack.c.l.b16 %v1047
      %v1144 = vunpack.c.l.b16 %v1048
      %v1145 = vunpack.c.l.b16 %v1049
      %v1146 = vunpack.c.l.b16 %v1050
      %v1147 = vunpack.c.l.b16 %v1051
      %v1148 = vunpack.c.l.b16 %v1052
      %v1149 = vunpack.c.l.b16 %v1053
      %v1150 = vunpack.c.l.b16 %v1054
      %v1151 = vunpack.c.l.b16 %v1055
      %v1152 = vunpack.c.l.b16 %v1056
      %v1153 = vunpack.c.l.b16 %v1057
      %v1154 = vunpack.c.l.b16 %v1058
      %v1155 = vunpack.c.l.b16 %v1059
      %v1156 = vunpack.c.l.b16 %v1060
      %v1157 = vpack.c.b16 %v1110, %v1109
      %v1158 = vpack.c.b16 %v1112, %v1111
      %v1159 = vpack.c.b16 %v1114, %v1113
      %v1160 = vpack.c.b16 %v1116, %v1115
      %v1161 = vpack.c.b16 %v1118, %v1117
      %v1162 = vpack.c.b16 %v1120, %v1119
      %v1163 = vpack.c.b16 %v1122, %v1121
      %v1164 = vpack.c.b16 %v1124, %v1123
      %v1165 = vpack.c.b16 %v1126, %v1125
      %v1166 = vpack.c.b16 %v1128, %v1127
      %v1167 = vpack.c.b16 %v1130, %v1129
      %v1168 = vpack.c.b16 %v1132, %v1131
      %v1169 = vpack.c.b16 %v1134, %v1133
      %v1170 = vpack.c.b16 %v1136, %v1135
      %v1171 = vpack.c.b16 %v1138, %v1137
      %v1172 = vpack.c.b16 %v1140, %v1139
      %v1173 = vpack.c.b16 %v1142, %v1141
      %v1174 = vpack.c.b16 %v1144, %v1143
      %v1175 = vpack.c.b16 %v1146, %v1145
      %v1176 = vpack.c.b16 %v1148, %v1147
      %v1177 = vpack.c.b16 %v1150, %v1149
      %v1178 = vpack.c.b16 %v1152, %v1151
      %v1179 = vpack.c.b16 %v1154, %v1153
      %v1180 = vpack.c.b16 %v1156, %v1155
      %1205 = vmatprep.subr.bf16.mxu0 0
      %1206 = vmatpush1.bf16.msra.mxu0 %v1164
      %1207 = vmatprep.subr.bf16.mxu0 0
      %1208 = vmatpush1.bf16.msra.mxu0 %v1163
      %1209 = vmatprep.subr.bf16.mxu0 0
      %1210 = vmatpush1.bf16.msra.mxu0 %v1162
      %1211 = vmatprep.subr.bf16.mxu0 0
      %1212 = vmatpush1.bf16.msra.mxu0 %v1161
      %1213 = vmatprep.subr.bf16.mxu0 0
      %1214 = vmatpush1.bf16.msra.mxu0 %v1160
      %1215 = vmatprep.subr.bf16.mxu0 0
      %1216 = vmatpush1.bf16.msra.mxu0 %v1159
      %1217 = vmatprep.subr.bf16.mxu0 0
      %1218 = vmatpush1.bf16.msra.mxu0 %v1158
      %1219 = vmatprep.subr.bf16.mxu0 0
      %1220 = vmatpush1.bf16.msra.mxu0 %v1157
      %1221 = vmatprep.subr.bf16.mxu0 0
      %1222 = vmatpush2.bf16.msra.mxu0 %v1172
      %1223 = vmatprep.subr.bf16.mxu0 0
      %1224 = vmatpush2.bf16.msra.mxu0 %v1171
      %1225 = vmatprep.subr.bf16.mxu0 0
      %1226 = vmatpush2.bf16.msra.mxu0 %v1170
      %1227 = vmatprep.subr.bf16.mxu0 0
      %1228 = vmatpush2.bf16.msra.mxu0 %v1169
      %1229 = vmatprep.subr.bf16.mxu0 0
      %1230 = vmatpush2.bf16.msra.mxu0 %v1168
      %1231 = vmatprep.subr.bf16.mxu0 0
      %1232 = vmatpush2.bf16.msra.mxu0 %v1167
      %1233 = vmatprep.subr.bf16.mxu0 0
      %1234 = vmatpush2.bf16.msra.mxu0 %v1166
      %1235 = vmatprep.subr.bf16.mxu0 0
      %1236 = vmatpush2.bf16.msra.mxu0 %v1165
      %1237 = vmatprep.mubr.bf16.mxu0 %v796
      %1238 = vmatmul.mubr.bf16.gmra.mxu0 %v753
      %v1239 = vpop.f32.mrf.mxu0
      %v1240 = vadd.f32 0.0, %v1239
      %v1241 = vpop.f32.mrf.mxu0
      %v1242 = vpop.f32.mrf.mxu0
      %v1243 = vadd.f32 0.0, %v1242
      %v1244 = vpop.f32.mrf.mxu0
      %1245 = vmatprep.mubr.bf16.mxu0 %v808
      %1246 = vmatmul.mubr.bf16.gmra.mxu0 %v754
      %v1247 = vpop.f32.mrf.mxu0
      %v1248 = vadd.f32 0.0, %v1247
      %v1249 = vpop.f32.mrf.mxu0
      %v1250 = vpop.f32.mrf.mxu0
      %v1251 = vadd.f32 0.0, %v1250
      %v1252 = vpop.f32.mrf.mxu0
      %1253 = vmatprep.mubr.bf16.mxu0 %v820
      %1254 = vmatmul.mubr.bf16.gmra.mxu0 %v755
      %v1255 = vpop.f32.mrf.mxu0
      %v1256 = vadd.f32 0.0, %v1255
      %v1257 = vpop.f32.mrf.mxu0
      %v1258 = vpop.f32.mrf.mxu0
      %v1259 = vadd.f32 0.0, %v1258
      %v1260 = vpop.f32.mrf.mxu0
      %1261 = vmatprep.mubr.bf16.mxu0 %v832
      %1262 = vmatmul.mubr.bf16.gmra.mxu0 %v756
      %v1263 = vpop.f32.mrf.mxu0
      %v1264 = vadd.f32 0.0, %v1263
      %v1265 = vpop.f32.mrf.mxu0
      %v1266 = vpop.f32.mrf.mxu0
      %v1267 = vadd.f32 0.0, %v1266
      %v1268 = vpop.f32.mrf.mxu0
      %1269 = vmatprep.mubr.bf16.mxu0 %v844
      %1270 = vmatmul.mubr.bf16.gmra.mxu0 %v757
      %v1271 = vpop.f32.mrf.mxu0
      %v1272 = vadd.f32 0.0, %v1271
      %v1273 = vpop.f32.mrf.mxu0
      %v1274 = vpop.f32.mrf.mxu0
      %v1275 = vadd.f32 0.0, %v1274
      %v1276 = vpop.f32.mrf.mxu0
      %1277 = vmatprep.mubr.bf16.mxu0 %v856
      %1278 = vmatmul.mubr.bf16.gmra.mxu0 %v758
      %v1279 = vpop.f32.mrf.mxu0
      %v1280 = vadd.f32 0.0, %v1279
      %v1281 = vpop.f32.mrf.mxu0
      %v1282 = vpop.f32.mrf.mxu0
      %v1283 = vadd.f32 0.0, %v1282
      %v1284 = vpop.f32.mrf.mxu0
      %1285 = vmatprep.mubr.bf16.mxu0 %v868
      %1286 = vmatmul.mubr.bf16.gmra.mxu0 %v759
      %v1287 = vpop.f32.mrf.mxu0
      %v1288 = vadd.f32 0.0, %v1287
      %v1289 = vpop.f32.mrf.mxu0
      %v1290 = vpop.f32.mrf.mxu0
      %v1291 = vadd.f32 0.0, %v1290
      %v1292 = vpop.f32.mrf.mxu0
      %1293 = vmatprep.mubr.bf16.mxu0 %v880
      %1294 = vmatmul.mubr.bf16.gmra.mxu0 %v760
      %v1295 = vpop.f32.mrf.mxu0
      %v1296 = vadd.f32 0.0, %v1295
      %v1297 = vpop.f32.mrf.mxu0
      %v1298 = vpop.f32.mrf.mxu0
      %v1299 = vadd.f32 0.0, %v1298
      %v1300 = vpop.f32.mrf.mxu0
      %1301 = vdwg.mxu0
      %1302 = vmatprep.subr.bf16.mxu0 0
      %1303 = vmatpush1.bf16.msra.mxu0 %v1180
      %1304 = vmatprep.subr.bf16.mxu0 0
      %1305 = vmatpush1.bf16.msra.mxu0 %v1179
      %1306 = vmatprep.subr.bf16.mxu0 0
      %1307 = vmatpush1.bf16.msra.mxu0 %v1178
      %1308 = vmatprep.subr.bf16.mxu0 0
      %1309 = vmatpush1.bf16.msra.mxu0 %v1177
      %1310 = vmatprep.subr.bf16.mxu0 0
      %1311 = vmatpush1.bf16.msra.mxu0 %v1176
      %1312 = vmatprep.subr.bf16.mxu0 0
      %1313 = vmatpush1.bf16.msra.mxu0 %v1175
      %1314 = vmatprep.subr.bf16.mxu0 0
      %1315 = vmatpush1.bf16.msra.mxu0 %v1174
      %1316 = vmatprep.subr.bf16.mxu0 0
      %1317 = vmatpush1.bf16.msra.mxu0 %v1173
      %1318 = vmatprep.subr.bf16.mxu0 0
      %1319 = vmatpush2.bf16.msra.mxu0 0
      %1320 = vmatprep.subr.bf16.mxu0 0
      %1321 = vmatpush2.bf16.msra.mxu0 0
      %1322 = vmatprep.subr.bf16.mxu0 0
      %1323 = vmatpush2.bf16.msra.mxu0 0
      %1324 = vmatprep.subr.bf16.mxu0 0
      %1325 = vmatpush2.bf16.msra.mxu0 0
      %1326 = vmatprep.subr.bf16.mxu0 0
      %1327 = vmatpush2.bf16.msra.mxu0 0
      %1328 = vmatprep.subr.bf16.mxu0 0
      %1329 = vmatpush2.bf16.msra.mxu0 0
      %1330 = vmatprep.subr.bf16.mxu0 0
      %1331 = vmatpush2.bf16.msra.mxu0 0
      %1332 = vmatprep.subr.bf16.mxu0 0
      %1333 = vmatpush2.bf16.msra.mxu0 0
      %1334 = vmatprep.mubr.bf16.mxu0 0
      %1335 = vmatmul.mubr.bf16.gmra.mxu0 %v929
      %v1336 = vpop.f32.mrf.mxu0
      %v1337 = vadd.f32 %v1240, %v1336
      %v1338 = vpop.f32.mrf.mxu0
      %v1339 = vpop.f32.mrf.mxu0
      %v1340 = vadd.f32 %v1243, %v1339
      %v1341 = vpop.f32.mrf.mxu0
      %1342 = vmatprep.mubr.bf16.mxu0 0
      %1343 = vmatmul.mubr.bf16.gmra.mxu0 %v932
      %v1344 = vpop.f32.mrf.mxu0
      %v1345 = vadd.f32 %v1248, %v1344
      %v1346 = vpop.f32.mrf.mxu0
      %v1347 = vpop.f32.mrf.mxu0
      %v1348 = vadd.f32 %v1251, %v1347
      %v1349 = vpop.f32.mrf.mxu0
      %1350 = vmatprep.mubr.bf16.mxu0 0
      %1351 = vmatmul.mubr.bf16.gmra.mxu0 %v935
      %v1352 = vpop.f32.mrf.mxu0
      %v1353 = vadd.f32 %v1256, %v1352
      %v1354 = vpop.f32.mrf.mxu0
      %v1355 = vpop.f32.mrf.mxu0
      %v1356 = vadd.f32 %v1259, %v1355
      %v1357 = vpop.f32.mrf.mxu0
      %1358 = vmatprep.mubr.bf16.mxu0 0
      %1359 = vmatmul.mubr.bf16.gmra.mxu0 %v938
      %v1360 = vpop.f32.mrf.mxu0
      %v1361 = vadd.f32 %v1264, %v1360
      %v1362 = vpop.f32.mrf.mxu0
      %v1363 = vpop.f32.mrf.mxu0
      %v1364 = vadd.f32 %v1267, %v1363
      %v1365 = vpop.f32.mrf.mxu0
      %1366 = vmatprep.mubr.bf16.mxu0 0
      %1367 = vmatmul.mubr.bf16.gmra.mxu0 %v941
      %v1368 = vpop.f32.mrf.mxu0
      %v1369 = vadd.f32 %v1272, %v1368
      %v1370 = vpop.f32.mrf.mxu0
      %v1371 = vpop.f32.mrf.mxu0
      %v1372 = vadd.f32 %v1275, %v1371
      %v1373 = vpop.f32.mrf.mxu0
      %1374 = vmatprep.mubr.bf16.mxu0 0
      %1375 = vmatmul.mubr.bf16.gmra.mxu0 %v944
      %v1376 = vpop.f32.mrf.mxu0
      %v1377 = vadd.f32 %v1280, %v1376
      %v1378 = vpop.f32.mrf.mxu0
      %v1379 = vpop.f32.mrf.mxu0
      %v1380 = vadd.f32 %v1283, %v1379
      %v1381 = vpop.f32.mrf.mxu0
      %1382 = vmatprep.mubr.bf16.mxu0 0
      %1383 = vmatmul.mubr.bf16.gmra.mxu0 %v947
      %v1384 = vpop.f32.mrf.mxu0
      %v1385 = vadd.f32 %v1288, %v1384
      %v1386 = vpop.f32.mrf.mxu0
      %v1387 = vpop.f32.mrf.mxu0
      %v1388 = vadd.f32 %v1291, %v1387
      %v1389 = vpop.f32.mrf.mxu0
      %1390 = vmatprep.mubr.bf16.mxu0 0
      %1391 = vmatmul.mubr.bf16.gmra.mxu0 %v950
      %v1392 = vpop.f32.mrf.mxu0
      %v1393 = vadd.f32 %v1296, %v1392
      %v1394 = vpop.f32.mrf.mxu0
      %v1395 = vpop.f32.mrf.mxu0
      %v1396 = vadd.f32 %v1299, %v1395
      %v1397 = vpop.f32.mrf.mxu0
      %1398 = vdwg.mxu0
      %v1447 = vunpack.c.l.b16 %v964
      %v1448 = vunpack.c.l.b16 %v965
      %v1449 = vunpack.c.l.b16 %v966
      %v1450 = vunpack.c.l.b16 %v967
      %v1451 = vunpack.c.l.b16 %v968
      %v1452 = vunpack.c.l.b16 %v969
      %v1453 = vunpack.c.l.b16 %v970
      %v1454 = vunpack.c.l.b16 %v971
      %v1455 = vunpack.c.l.b16 %v972
      %v1456 = vunpack.c.l.b16 %v973
      %v1457 = vunpack.c.l.b16 %v974
      %v1458 = vunpack.c.l.b16 %v975
      %v1459 = vunpack.c.l.b16 %v976
      %v1460 = vunpack.c.l.b16 %v977
      %v1461 = vunpack.c.l.b16 %v978
      %v1462 = vunpack.c.l.b16 %v979
      %v1463 = vunpack.c.l.b16 %v980
      %v1464 = vunpack.c.l.b16 %v981
      %v1465 = vunpack.c.l.b16 %v982
      %v1466 = vunpack.c.l.b16 %v983
      %v1467 = vunpack.c.l.b16 %v984
      %v1468 = vunpack.c.l.b16 %v985
      %v1469 = vunpack.c.l.b16 %v986
      %v1470 = vunpack.c.l.b16 %v987
      %v1471 = vunpack.c.l.b16 %v988
      %v1472 = vunpack.c.l.b16 %v989
      %v1473 = vunpack.c.l.b16 %v990
      %v1474 = vunpack.c.l.b16 %v991
      %v1475 = vunpack.c.l.b16 %v992
      %v1476 = vunpack.c.l.b16 %v993
      %v1477 = vunpack.c.l.b16 %v994
      %v1478 = vunpack.c.l.b16 %v995
      %v1479 = vunpack.c.l.b16 %v996
      %v1480 = vunpack.c.l.b16 %v997
      %v1481 = vunpack.c.l.b16 %v998
      %v1482 = vunpack.c.l.b16 %v999
      %v1483 = vunpack.c.l.b16 %v1000
      %v1484 = vunpack.c.l.b16 %v1001
      %v1485 = vunpack.c.l.b16 %v1002
      %v1486 = vunpack.c.l.b16 %v1003
      %v1487 = vunpack.c.l.b16 %v1004
      %v1488 = vunpack.c.l.b16 %v1005
      %v1489 = vunpack.c.l.b16 %v1006
      %v1490 = vunpack.c.l.b16 %v1007
      %v1491 = vunpack.c.l.b16 %v1008
      %v1492 = vunpack.c.l.b16 %v1009
      %v1493 = vunpack.c.l.b16 %v1010
      %v1494 = vunpack.c.l.b16 %v1011
      %v1495 = vpack.c.b16 %v1448, %v1447
      %v1496 = vpack.c.b16 %v1450, %v1449
      %v1497 = vpack.c.b16 %v1452, %v1451
      %v1498 = vpack.c.b16 %v1454, %v1453
      %v1499 = vpack.c.b16 %v1456, %v1455
      %v1500 = vpack.c.b16 %v1458, %v1457
      %v1501 = vpack.c.b16 %v1460, %v1459
      %v1502 = vpack.c.b16 %v1462, %v1461
      %v1503 = vpack.c.b16 %v1464, %v1463
      %v1504 = vpack.c.b16 %v1466, %v1465
      %v1505 = vpack.c.b16 %v1468, %v1467
      %v1506 = vpack.c.b16 %v1470, %v1469
      %v1507 = vpack.c.b16 %v1472, %v1471
      %v1508 = vpack.c.b16 %v1474, %v1473
      %v1509 = vpack.c.b16 %v1476, %v1475
      %v1510 = vpack.c.b16 %v1478, %v1477
      %v1511 = vpack.c.b16 %v1480, %v1479
      %v1512 = vpack.c.b16 %v1482, %v1481
      %v1513 = vpack.c.b16 %v1484, %v1483
      %v1514 = vpack.c.b16 %v1486, %v1485
      %v1515 = vpack.c.b16 %v1488, %v1487
      %v1516 = vpack.c.b16 %v1490, %v1489
      %v1517 = vpack.c.b16 %v1492, %v1491
      %v1518 = vpack.c.b16 %v1494, %v1493
      %1543 = vmatprep.subr.bf16.mxu0 0
      %1544 = vmatpush1.bf16.msra.mxu0 %v1502
      %1545 = vmatprep.subr.bf16.mxu0 0
      %1546 = vmatpush1.bf16.msra.mxu0 %v1501
      %1547 = vmatprep.subr.bf16.mxu0 0
      %1548 = vmatpush1.bf16.msra.mxu0 %v1500
      %1549 = vmatprep.subr.bf16.mxu0 0
      %1550 = vmatpush1.bf16.msra.mxu0 %v1499
      %1551 = vmatprep.subr.bf16.mxu0 0
      %1552 = vmatpush1.bf16.msra.mxu0 %v1498
      %1553 = vmatprep.subr.bf16.mxu0 0
      %1554 = vmatpush1.bf16.msra.mxu0 %v1497
      %1555 = vmatprep.subr.bf16.mxu0 0
      %1556 = vmatpush1.bf16.msra.mxu0 %v1496
      %1557 = vmatprep.subr.bf16.mxu0 0
      %1558 = vmatpush1.bf16.msra.mxu0 %v1495
      %1559 = vmatprep.subr.bf16.mxu0 0
      %1560 = vmatpush2.bf16.msra.mxu0 %v1510
      %1561 = vmatprep.subr.bf16.mxu0 0
      %1562 = vmatpush2.bf16.msra.mxu0 %v1509
      %1563 = vmatprep.subr.bf16.mxu0 0
      %1564 = vmatpush2.bf16.msra.mxu0 %v1508
      %1565 = vmatprep.subr.bf16.mxu0 0
      %1566 = vmatpush2.bf16.msra.mxu0 %v1507
      %1567 = vmatprep.subr.bf16.mxu0 0
      %1568 = vmatpush2.bf16.msra.mxu0 %v1506
      %1569 = vmatprep.subr.bf16.mxu0 0
      %1570 = vmatpush2.bf16.msra.mxu0 %v1505
      %1571 = vmatprep.subr.bf16.mxu0 0
      %1572 = vmatpush2.bf16.msra.mxu0 %v1504
      %1573 = vmatprep.subr.bf16.mxu0 0
      %1574 = vmatpush2.bf16.msra.mxu0 %v1503
      %1575 = vmatprep.mubr.bf16.mxu0 %v784
      %1576 = vmatmul.mubr.bf16.gmra.mxu0 %v752
      %v1577 = vpop.f32.mrf.mxu0
      %v1578 = vadd.f32 %v1337, %v1577
      %v1579 = vpop.f32.mrf.mxu0
      %v1580 = vpop.f32.mrf.mxu0
      %v1581 = vadd.f32 %v1340, %v1580
      %v1582 = vpop.f32.mrf.mxu0
      %1583 = vmatprep.mubr.bf16.mxu0 %v796
      %1584 = vmatmul.mubr.bf16.gmra.mxu0 %v753
      %v1585 = vpop.f32.mrf.mxu0
      %v1586 = vadd.f32 %v1345, %v1585
      %v1587 = vpop.f32.mrf.mxu0
      %v1588 = vpop.f32.mrf.mxu0
      %v1589 = vadd.f32 %v1348, %v1588
      %v1590 = vpop.f32.mrf.mxu0
      %1591 = vmatprep.mubr.bf16.mxu0 %v808
      %1592 = vmatmul.mubr.bf16.gmra.mxu0 %v754
      %v1593 = vpop.f32.mrf.mxu0
      %v1594 = vadd.f32 %v1353, %v1593
      %v1595 = vpop.f32.mrf.mxu0
      %v1596 = vpop.f32.mrf.mxu0
      %v1597 = vadd.f32 %v1356, %v1596
      %v1598 = vpop.f32.mrf.mxu0
      %1599 = vmatprep.mubr.bf16.mxu0 %v820
      %1600 = vmatmul.mubr.bf16.gmra.mxu0 %v755
      %v1601 = vpop.f32.mrf.mxu0
      %v1602 = vadd.f32 %v1361, %v1601
      %v1603 = vpop.f32.mrf.mxu0
      %v1604 = vpop.f32.mrf.mxu0
      %v1605 = vadd.f32 %v1364, %v1604
      %v1606 = vpop.f32.mrf.mxu0
      %1607 = vmatprep.mubr.bf16.mxu0 %v832
      %1608 = vmatmul.mubr.bf16.gmra.mxu0 %v756
      %v1609 = vpop.f32.mrf.mxu0
      %v1610 = vadd.f32 %v1369, %v1609
      %v1611 = vpop.f32.mrf.mxu0
      %v1612 = vpop.f32.mrf.mxu0
      %v1613 = vadd.f32 %v1372, %v1612
      %v1614 = vpop.f32.mrf.mxu0
      %1615 = vmatprep.mubr.bf16.mxu0 %v844
      %1616 = vmatmul.mubr.bf16.gmra.mxu0 %v757
      %v1617 = vpop.f32.mrf.mxu0
      %v1618 = vadd.f32 %v1377, %v1617
      %v1619 = vpop.f32.mrf.mxu0
      %v1620 = vpop.f32.mrf.mxu0
      %v1621 = vadd.f32 %v1380, %v1620
      %v1622 = vpop.f32.mrf.mxu0
      %1623 = vmatprep.mubr.bf16.mxu0 %v856
      %1624 = vmatmul.mubr.bf16.gmra.mxu0 %v758
      %v1625 = vpop.f32.mrf.mxu0
      %v1626 = vadd.f32 %v1385, %v1625
      %v1627 = vpop.f32.mrf.mxu0
      %v1628 = vpop.f32.mrf.mxu0
      %v1629 = vadd.f32 %v1388, %v1628
      %v1630 = vpop.f32.mrf.mxu0
      %1631 = vmatprep.mubr.bf16.mxu0 %v868
      %1632 = vmatmul.mubr.bf16.gmra.mxu0 %v759
      %v1633 = vpop.f32.mrf.mxu0
      %v1634 = vadd.f32 %v1393, %v1633
      %v1635 = vpop.f32.mrf.mxu0
      %v1636 = vpop.f32.mrf.mxu0
      %v1637 = vadd.f32 %v1396, %v1636
      %v1638 = vpop.f32.mrf.mxu0
      %1639 = vdwg.mxu0
      %1640 = vmatprep.subr.bf16.mxu0 0
      %1641 = vmatpush1.bf16.msra.mxu0 %v1518
      %1642 = vmatprep.subr.bf16.mxu0 0
      %1643 = vmatpush1.bf16.msra.mxu0 %v1517
      %1644 = vmatprep.subr.bf16.mxu0 0
      %1645 = vmatpush1.bf16.msra.mxu0 %v1516
      %1646 = vmatprep.subr.bf16.mxu0 0
      %1647 = vmatpush1.bf16.msra.mxu0 %v1515
      %1648 = vmatprep.subr.bf16.mxu0 0
      %1649 = vmatpush1.bf16.msra.mxu0 %v1514
      %1650 = vmatprep.subr.bf16.mxu0 0
      %1651 = vmatpush1.bf16.msra.mxu0 %v1513
      %1652 = vmatprep.subr.bf16.mxu0 0
      %1653 = vmatpush1.bf16.msra.mxu0 %v1512
      %1654 = vmatprep.subr.bf16.mxu0 0
      %1655 = vmatpush1.bf16.msra.mxu0 %v1511
      %1656 = vmatprep.subr.bf16.mxu0 0
      %1657 = vmatpush2.bf16.msra.mxu0 0
      %1658 = vmatprep.subr.bf16.mxu0 0
      %1659 = vmatpush2.bf16.msra.mxu0 0
      %1660 = vmatprep.subr.bf16.mxu0 0
      %1661 = vmatpush2.bf16.msra.mxu0 0
      %1662 = vmatprep.subr.bf16.mxu0 0
      %1663 = vmatpush2.bf16.msra.mxu0 0
      %1664 = vmatprep.subr.bf16.mxu0 0
      %1665 = vmatpush2.bf16.msra.mxu0 0
      %1666 = vmatprep.subr.bf16.mxu0 0
      %1667 = vmatpush2.bf16.msra.mxu0 0
      %1668 = vmatprep.subr.bf16.mxu0 0
      %1669 = vmatpush2.bf16.msra.mxu0 0
      %1670 = vmatprep.subr.bf16.mxu0 0
      %1671 = vmatpush2.bf16.msra.mxu0 0
      %1672 = vmatprep.mubr.bf16.mxu0 0
      %1673 = vmatmul.mubr.bf16.gmra.mxu0 %v926
      %v1674 = vpop.f32.mrf.mxu0
      %v1675 = vadd.f32 %v1578, %v1674
      %v1676 = vpop.f32.mrf.mxu0
      %v1677 = vpop.f32.mrf.mxu0
      %v1678 = vadd.f32 %v1581, %v1677
      %v1679 = vpop.f32.mrf.mxu0
      %1680 = vmatprep.mubr.bf16.mxu0 0
      %1681 = vmatmul.mubr.bf16.gmra.mxu0 %v929
      %v1682 = vpop.f32.mrf.mxu0
      %v1683 = vadd.f32 %v1586, %v1682
      %v1684 = vpop.f32.mrf.mxu0
      %v1685 = vpop.f32.mrf.mxu0
      %v1686 = vadd.f32 %v1589, %v1685
      %v1687 = vpop.f32.mrf.mxu0
      %1688 = vmatprep.mubr.bf16.mxu0 0
      %1689 = vmatmul.mubr.bf16.gmra.mxu0 %v932
      %v1690 = vpop.f32.mrf.mxu0
      %v1691 = vadd.f32 %v1594, %v1690
      %v1692 = vpop.f32.mrf.mxu0
      %v1693 = vpop.f32.mrf.mxu0
      %v1694 = vadd.f32 %v1597, %v1693
      %v1695 = vpop.f32.mrf.mxu0
      %1696 = vmatprep.mubr.bf16.mxu0 0
      %1697 = vmatmul.mubr.bf16.gmra.mxu0 %v935
      %v1698 = vpop.f32.mrf.mxu0
      %v1699 = vadd.f32 %v1602, %v1698
      %v1700 = vpop.f32.mrf.mxu0
      %v1701 = vpop.f32.mrf.mxu0
      %v1702 = vadd.f32 %v1605, %v1701
      %v1703 = vpop.f32.mrf.mxu0
      %1704 = vmatprep.mubr.bf16.mxu0 0
      %1705 = vmatmul.mubr.bf16.gmra.mxu0 %v938
      %v1706 = vpop.f32.mrf.mxu0
      %v1707 = vadd.f32 %v1610, %v1706
      %v1708 = vpop.f32.mrf.mxu0
      %v1709 = vpop.f32.mrf.mxu0
      %v1710 = vadd.f32 %v1613, %v1709
      %v1711 = vpop.f32.mrf.mxu0
      %1712 = vmatprep.mubr.bf16.mxu0 0
      %1713 = vmatmul.mubr.bf16.gmra.mxu0 %v941
      %v1714 = vpop.f32.mrf.mxu0
      %v1715 = vadd.f32 %v1618, %v1714
      %v1716 = vpop.f32.mrf.mxu0
      %v1717 = vpop.f32.mrf.mxu0
      %v1718 = vadd.f32 %v1621, %v1717
      %v1719 = vpop.f32.mrf.mxu0
      %1720 = vmatprep.mubr.bf16.mxu0 0
      %1721 = vmatmul.mubr.bf16.gmra.mxu0 %v944
      %v1722 = vpop.f32.mrf.mxu0
      %v1723 = vadd.f32 %v1626, %v1722
      %v1724 = vpop.f32.mrf.mxu0
      %v1725 = vpop.f32.mrf.mxu0
      %v1726 = vadd.f32 %v1629, %v1725
      %v1727 = vpop.f32.mrf.mxu0
      %1728 = vmatprep.mubr.bf16.mxu0 0
      %1729 = vmatmul.mubr.bf16.gmra.mxu0 %v947
      %v1730 = vpop.f32.mrf.mxu0
      %v1731 = vadd.f32 %v1634, %v1730
      %v1732 = vpop.f32.mrf.mxu0
      %v1733 = vpop.f32.mrf.mxu0
      %v1734 = vadd.f32 %v1637, %v1733
      %v1735 = vpop.f32.mrf.mxu0
      %1736 = vdwg.mxu0
      %s1737 = scalar_lea.vmem %s4, 384
      %v1738 = vld [vmem:[%s1737] sm:$0xf]
      %v1739 = vld [vmem:[%s1737 + $0x4] sm:$0xf]
      %v1740 = vld [vmem:[%s1737 + $0x8] sm:$0xf]
      %v1741 = vld [vmem:[%s1737 + $0xc] sm:$0xf]
      %v1742 = vld [vmem:[%s1737 + $0x10] sm:$0xf]
      %v1743 = vld [vmem:[%s1737 + $0x14] sm:$0xf]
      %v1744 = vld [vmem:[%s1737 + $0x18] sm:$0xf]
      %v1745 = vld [vmem:[%s1737 + $0x1c] sm:$0xf]
      %v1746 = vld [vmem:[%s1737 + $0x20] sm:$0xf]
      %v1747 = vld [vmem:[%s1737 + $0x24] sm:$0xf]
      %v1748 = vld [vmem:[%s1737 + $0x28] sm:$0xf]
      %v1749 = vld [vmem:[%s1737 + $0x2c] sm:$0xf]
      %v1750 = vld [vmem:[%s1737 + $0x30] sm:$0xf]
      %v1751 = vld [vmem:[%s1737 + $0x34] sm:$0xf]
      %v1752 = vld [vmem:[%s1737 + $0x38] sm:$0xf]
      %v1753 = vld [vmem:[%s1737 + $0x3c] sm:$0xf]
      %v1754 = vld [vmem:[%s1737 + $0x40] sm:$0xf]
      %v1755 = vld [vmem:[%s1737 + $0x44] sm:$0xf]
      %v1756 = vld [vmem:[%s1737 + $0x48] sm:$0xf]
      %v1757 = vld [vmem:[%s1737 + $0x4c] sm:$0xf]
      %v1758 = vld [vmem:[%s1737 + $0x50] sm:$0xf]
      %v1759 = vld [vmem:[%s1737 + $0x54] sm:$0xf]
      %v1760 = vld [vmem:[%s1737 + $0x58] sm:$0xf]
      %v1761 = vld [vmem:[%s1737 + $0x5c] sm:$0xf]
      %v1762 = vld [vmem:[%s1737 + $0x60] sm:$0xf]
      %v1763 = vld [vmem:[%s1737 + $0x64] sm:$0xf]
      %v1764 = vld [vmem:[%s1737 + $0x68] sm:$0xf]
      %v1765 = vld [vmem:[%s1737 + $0x6c] sm:$0xf]
      %v1766 = vld [vmem:[%s1737 + $0x70] sm:$0xf]
      %v1767 = vld [vmem:[%s1737 + $0x74] sm:$0xf]
      %v1768 = vld [vmem:[%s1737 + $0x78] sm:$0xf]
      %v1769 = vld [vmem:[%s1737 + $0x7c] sm:$0xf]
      %v1770 = vld [vmem:[%s1737 + $0x80] sm:$0xf]
      %v1771 = vld [vmem:[%s1737 + $0x84] sm:$0xf]
      %v1772 = vld [vmem:[%s1737 + $0x88] sm:$0xf]
      %v1773 = vld [vmem:[%s1737 + $0x8c] sm:$0xf]
      %v1774 = vld [vmem:[%s1737 + $0x90] sm:$0xf]
      %v1775 = vld [vmem:[%s1737 + $0x94] sm:$0xf]
      %v1776 = vld [vmem:[%s1737 + $0x98] sm:$0xf]
      %v1777 = vld [vmem:[%s1737 + $0x9c] sm:$0xf]
      %v1778 = vld [vmem:[%s1737 + $0xa0] sm:$0xf]
      %v1779 = vld [vmem:[%s1737 + $0xa4] sm:$0xf]
      %v1780 = vld [vmem:[%s1737 + $0xa8] sm:$0xf]
      %v1781 = vld [vmem:[%s1737 + $0xac] sm:$0xf]
      %v1782 = vld [vmem:[%s1737 + $0xb0] sm:$0xf]
      %v1783 = vld [vmem:[%s1737 + $0xb4] sm:$0xf]
      %v1784 = vld [vmem:[%s1737 + $0xb8] sm:$0xf]
      %v1785 = vld [vmem:[%s1737 + $0xbc] sm:$0xf]
      %v1834 = vunpack.c.l.b16 %v1738
      %v1835 = vunpack.c.l.b16 %v1739
      %v1836 = vunpack.c.l.b16 %v1740
      %v1837 = vunpack.c.l.b16 %v1741
      %v1838 = vunpack.c.l.b16 %v1742
      %v1839 = vunpack.c.l.b16 %v1743
      %v1840 = vunpack.c.l.b16 %v1744
      %v1841 = vunpack.c.l.b16 %v1745
      %v1842 = vunpack.c.l.b16 %v1746
      %v1843 = vunpack.c.l.b16 %v1747
      %v1844 = vunpack.c.l.b16 %v1748
      %v1845 = vunpack.c.l.b16 %v1749
      %v1846 = vunpack.c.l.b16 %v1750
      %v1847 = vunpack.c.l.b16 %v1751
      %v1848 = vunpack.c.l.b16 %v1752
      %v1849 = vunpack.c.l.b16 %v1753
      %v1850 = vunpack.c.l.b16 %v1754
      %v1851 = vunpack.c.l.b16 %v1755
      %v1852 = vunpack.c.l.b16 %v1756
      %v1853 = vunpack.c.l.b16 %v1757
      %v1854 = vunpack.c.l.b16 %v1758
      %v1855 = vunpack.c.l.b16 %v1759
      %v1856 = vunpack.c.l.b16 %v1760
      %v1857 = vunpack.c.l.b16 %v1761
      %v1858 = vunpack.c.l.b16 %v1762
      %v1859 = vunpack.c.l.b16 %v1763
      %v1860 = vunpack.c.l.b16 %v1764
      %v1861 = vunpack.c.l.b16 %v1765
      %v1862 = vunpack.c.l.b16 %v1766
      %v1863 = vunpack.c.l.b16 %v1767
      %v1864 = vunpack.c.l.b16 %v1768
      %v1865 = vunpack.c.l.b16 %v1769
      %v1866 = vunpack.c.l.b16 %v1770
      %v1867 = vunpack.c.l.b16 %v1771
      %v1868 = vunpack.c.l.b16 %v1772
      %v1869 = vunpack.c.l.b16 %v1773
      %v1870 = vunpack.c.l.b16 %v1774
      %v1871 = vunpack.c.l.b16 %v1775
      %v1872 = vunpack.c.l.b16 %v1776
      %v1873 = vunpack.c.l.b16 %v1777
      %v1874 = vunpack.c.l.b16 %v1778
      %v1875 = vunpack.c.l.b16 %v1779
      %v1876 = vunpack.c.l.b16 %v1780
      %v1877 = vunpack.c.l.b16 %v1781
      %v1878 = vunpack.c.l.b16 %v1782
      %v1879 = vunpack.c.l.b16 %v1783
      %v1880 = vunpack.c.l.b16 %v1784
      %v1881 = vunpack.c.l.b16 %v1785
      %v1882 = vpack.c.b16 %v1835, %v1834
      %v1883 = vpack.c.b16 %v1837, %v1836
      %v1884 = vpack.c.b16 %v1839, %v1838
      %v1885 = vpack.c.b16 %v1841, %v1840
      %v1886 = vpack.c.b16 %v1843, %v1842
      %v1887 = vpack.c.b16 %v1845, %v1844
      %v1888 = vpack.c.b16 %v1847, %v1846
      %v1889 = vpack.c.b16 %v1849, %v1848
      %v1890 = vpack.c.b16 %v1851, %v1850
      %v1891 = vpack.c.b16 %v1853, %v1852
      %v1892 = vpack.c.b16 %v1855, %v1854
      %v1893 = vpack.c.b16 %v1857, %v1856
      %v1894 = vpack.c.b16 %v1859, %v1858
      %v1895 = vpack.c.b16 %v1861, %v1860
      %v1896 = vpack.c.b16 %v1863, %v1862
      %v1897 = vpack.c.b16 %v1865, %v1864
      %v1898 = vpack.c.b16 %v1867, %v1866
      %v1899 = vpack.c.b16 %v1869, %v1868
      %v1900 = vpack.c.b16 %v1871, %v1870
      %v1901 = vpack.c.b16 %v1873, %v1872
      %v1902 = vpack.c.b16 %v1875, %v1874
      %v1903 = vpack.c.b16 %v1877, %v1876
      %v1904 = vpack.c.b16 %v1879, %v1878
      %v1905 = vpack.c.b16 %v1881, %v1880
      %1930 = vmatprep.subr.bf16.mxu0 0
      %1931 = vmatpush1.bf16.msra.mxu0 %v1889
      %1932 = vmatprep.subr.bf16.mxu0 0
      %1933 = vmatpush1.bf16.msra.mxu0 %v1888
      %1934 = vmatprep.subr.bf16.mxu0 0
      %1935 = vmatpush1.bf16.msra.mxu0 %v1887
      %1936 = vmatprep.subr.bf16.mxu0 0
      %1937 = vmatpush1.bf16.msra.mxu0 %v1886
      %1938 = vmatprep.subr.bf16.mxu0 0
      %1939 = vmatpush1.bf16.msra.mxu0 %v1885
      %1940 = vmatprep.subr.bf16.mxu0 0
      %1941 = vmatpush1.bf16.msra.mxu0 %v1884
      %1942 = vmatprep.subr.bf16.mxu0 0
      %1943 = vmatpush1.bf16.msra.mxu0 %v1883
      %1944 = vmatprep.subr.bf16.mxu0 0
      %1945 = vmatpush1.bf16.msra.mxu0 %v1882
      %1946 = vmatprep.subr.bf16.mxu0 0
      %1947 = vmatpush2.bf16.msra.mxu0 %v1897
      %1948 = vmatprep.subr.bf16.mxu0 0
      %1949 = vmatpush2.bf16.msra.mxu0 %v1896
      %1950 = vmatprep.subr.bf16.mxu0 0
      %1951 = vmatpush2.bf16.msra.mxu0 %v1895
      %1952 = vmatprep.subr.bf16.mxu0 0
      %1953 = vmatpush2.bf16.msra.mxu0 %v1894
      %1954 = vmatprep.subr.bf16.mxu0 0
      %1955 = vmatpush2.bf16.msra.mxu0 %v1893
      %1956 = vmatprep.subr.bf16.mxu0 0
      %1957 = vmatpush2.bf16.msra.mxu0 %v1892
      %1958 = vmatprep.subr.bf16.mxu0 0
      %1959 = vmatpush2.bf16.msra.mxu0 %v1891
      %1960 = vmatprep.subr.bf16.mxu0 0
      %1961 = vmatpush2.bf16.msra.mxu0 %v1890
      %1962 = vmatprep.mubr.bf16.mxu0 %v808
      %1963 = vmatmul.mubr.bf16.gmra.mxu0 %v754
      %v1964 = vpop.f32.mrf.mxu0
      %v1965 = vadd.f32 0.0, %v1964
      %v1966 = vpop.f32.mrf.mxu0
      %v1967 = vpop.f32.mrf.mxu0
      %v1968 = vadd.f32 0.0, %v1967
      %v1969 = vpop.f32.mrf.mxu0
      %1970 = vmatprep.mubr.bf16.mxu0 %v820
      %1971 = vmatmul.mubr.bf16.gmra.mxu0 %v755
      %v1972 = vpop.f32.mrf.mxu0
      %v1973 = vadd.f32 0.0, %v1972
      %v1974 = vpop.f32.mrf.mxu0
      %v1975 = vpop.f32.mrf.mxu0
      %v1976 = vadd.f32 0.0, %v1975
      %v1977 = vpop.f32.mrf.mxu0
      %1978 = vmatprep.mubr.bf16.mxu0 %v832
      %1979 = vmatmul.mubr.bf16.gmra.mxu0 %v756
      %v1980 = vpop.f32.mrf.mxu0
      %v1981 = vadd.f32 0.0, %v1980
      %v1982 = vpop.f32.mrf.mxu0
      %v1983 = vpop.f32.mrf.mxu0
      %v1984 = vadd.f32 0.0, %v1983
      %v1985 = vpop.f32.mrf.mxu0
      %1986 = vmatprep.mubr.bf16.mxu0 %v844
      %1987 = vmatmul.mubr.bf16.gmra.mxu0 %v757
      %v1988 = vpop.f32.mrf.mxu0
      %v1989 = vadd.f32 0.0, %v1988
      %v1990 = vpop.f32.mrf.mxu0
      %v1991 = vpop.f32.mrf.mxu0
      %v1992 = vadd.f32 0.0, %v1991
      %v1993 = vpop.f32.mrf.mxu0
      %1994 = vmatprep.mubr.bf16.mxu0 %v856
      %1995 = vmatmul.mubr.bf16.gmra.mxu0 %v758
      %v1996 = vpop.f32.mrf.mxu0
      %v1997 = vadd.f32 0.0, %v1996
      %v1998 = vpop.f32.mrf.mxu0
      %v1999 = vpop.f32.mrf.mxu0
      %v2000 = vadd.f32 0.0, %v1999
      %v2001 = vpop.f32.mrf.mxu0
      %2002 = vmatprep.mubr.bf16.mxu0 %v868
      %2003 = vmatmul.mubr.bf16.gmra.mxu0 %v759
      %v2004 = vpop.f32.mrf.mxu0
      %v2005 = vadd.f32 0.0, %v2004
      %v2006 = vpop.f32.mrf.mxu0
      %v2007 = vpop.f32.mrf.mxu0
      %v2008 = vadd.f32 0.0, %v2007
      %v2009 = vpop.f32.mrf.mxu0
      %2010 = vmatprep.mubr.bf16.mxu0 %v880
      %2011 = vmatmul.mubr.bf16.gmra.mxu0 %v760
      %v2012 = vpop.f32.mrf.mxu0
      %v2013 = vadd.f32 0.0, %v2012
      %v2014 = vpop.f32.mrf.mxu0
      %v2015 = vpop.f32.mrf.mxu0
      %v2016 = vadd.f32 0.0, %v2015
      %v2017 = vpop.f32.mrf.mxu0
      %2018 = vmatprep.mubr.bf16.mxu0 %v892
      %2019 = vmatmul.mubr.bf16.gmra.mxu0 %v761
      %v2020 = vpop.f32.mrf.mxu0
      %v2021 = vadd.f32 0.0, %v2020
      %v2022 = vpop.f32.mrf.mxu0
      %v2023 = vpop.f32.mrf.mxu0
      %v2024 = vadd.f32 0.0, %v2023
      %v2025 = vpop.f32.mrf.mxu0
      %2026 = vdwg.mxu0
      %2027 = vmatprep.subr.bf16.mxu0 0
      %2028 = vmatpush1.bf16.msra.mxu0 %v1905
      %2029 = vmatprep.subr.bf16.mxu0 0
      %2030 = vmatpush1.bf16.msra.mxu0 %v1904
      %2031 = vmatprep.subr.bf16.mxu0 0
      %2032 = vmatpush1.bf16.msra.mxu0 %v1903
      %2033 = vmatprep.subr.bf16.mxu0 0
      %2034 = vmatpush1.bf16.msra.mxu0 %v1902
      %2035 = vmatprep.subr.bf16.mxu0 0
      %2036 = vmatpush1.bf16.msra.mxu0 %v1901
      %2037 = vmatprep.subr.bf16.mxu0 0
      %2038 = vmatpush1.bf16.msra.mxu0 %v1900
      %2039 = vmatprep.subr.bf16.mxu0 0
      %2040 = vmatpush1.bf16.msra.mxu0 %v1899
      %2041 = vmatprep.subr.bf16.mxu0 0
      %2042 = vmatpush1.bf16.msra.mxu0 %v1898
      %2043 = vmatprep.subr.bf16.mxu0 0
      %2044 = vmatpush2.bf16.msra.mxu0 0
      %2045 = vmatprep.subr.bf16.mxu0 0
      %2046 = vmatpush2.bf16.msra.mxu0 0
      %2047 = vmatprep.subr.bf16.mxu0 0
      %2048 = vmatpush2.bf16.msra.mxu0 0
      %2049 = vmatprep.subr.bf16.mxu0 0
      %2050 = vmatpush2.bf16.msra.mxu0 0
      %2051 = vmatprep.subr.bf16.mxu0 0
      %2052 = vmatpush2.bf16.msra.mxu0 0
      %2053 = vmatprep.subr.bf16.mxu0 0
      %2054 = vmatpush2.bf16.msra.mxu0 0
      %2055 = vmatprep.subr.bf16.mxu0 0
      %2056 = vmatpush2.bf16.msra.mxu0 0
      %2057 = vmatprep.subr.bf16.mxu0 0
      %2058 = vmatpush2.bf16.msra.mxu0 0
      %2059 = vmatprep.mubr.bf16.mxu0 0
      %2060 = vmatmul.mubr.bf16.gmra.mxu0 %v932
      %v2061 = vpop.f32.mrf.mxu0
      %v2062 = vadd.f32 %v1965, %v2061
      %v2063 = vpop.f32.mrf.mxu0
      %v2064 = vpop.f32.mrf.mxu0
      %v2065 = vadd.f32 %v1968, %v2064
      %v2066 = vpop.f32.mrf.mxu0
      %2067 = vmatprep.mubr.bf16.mxu0 0
      %2068 = vmatmul.mubr.bf16.gmra.mxu0 %v935
      %v2069 = vpop.f32.mrf.mxu0
      %v2070 = vadd.f32 %v1973, %v2069
      %v2071 = vpop.f32.mrf.mxu0
      %v2072 = vpop.f32.mrf.mxu0
      %v2073 = vadd.f32 %v1976, %v2072
      %v2074 = vpop.f32.mrf.mxu0
      %2075 = vmatprep.mubr.bf16.mxu0 0
      %2076 = vmatmul.mubr.bf16.gmra.mxu0 %v938
      %v2077 = vpop.f32.mrf.mxu0
      %v2078 = vadd.f32 %v1981, %v2077
      %v2079 = vpop.f32.mrf.mxu0
      %v2080 = vpop.f32.mrf.mxu0
      %v2081 = vadd.f32 %v1984, %v2080
      %v2082 = vpop.f32.mrf.mxu0
      %2083 = vmatprep.mubr.bf16.mxu0 0
      %2084 = vmatmul.mubr.bf16.gmra.mxu0 %v941
      %v2085 = vpop.f32.mrf.mxu0
      %v2086 = vadd.f32 %v1989, %v2085
      %v2087 = vpop.f32.mrf.mxu0
      %v2088 = vpop.f32.mrf.mxu0
      %v2089 = vadd.f32 %v1992, %v2088
      %v2090 = vpop.f32.mrf.mxu0
      %2091 = vmatprep.mubr.bf16.mxu0 0
      %2092 = vmatmul.mubr.bf16.gmra.mxu0 %v944
      %v2093 = vpop.f32.mrf.mxu0
      %v2094 = vadd.f32 %v1997, %v2093
      %v2095 = vpop.f32.mrf.mxu0
      %v2096 = vpop.f32.mrf.mxu0
      %v2097 = vadd.f32 %v2000, %v2096
      %v2098 = vpop.f32.mrf.mxu0
      %2099 = vmatprep.mubr.bf16.mxu0 0
      %2100 = vmatmul.mubr.bf16.gmra.mxu0 %v947
      %v2101 = vpop.f32.mrf.mxu0
      %v2102 = vadd.f32 %v2005, %v2101
      %v2103 = vpop.f32.mrf.mxu0
      %v2104 = vpop.f32.mrf.mxu0
      %v2105 = vadd.f32 %v2008, %v2104
      %v2106 = vpop.f32.mrf.mxu0
      %2107 = vmatprep.mubr.bf16.mxu0 0
      %2108 = vmatmul.mubr.bf16.gmra.mxu0 %v950
      %v2109 = vpop.f32.mrf.mxu0
      %v2110 = vadd.f32 %v2013, %v2109
      %v2111 = vpop.f32.mrf.mxu0
      %v2112 = vpop.f32.mrf.mxu0
      %v2113 = vadd.f32 %v2016, %v2112
      %v2114 = vpop.f32.mrf.mxu0
      %2115 = vmatprep.mubr.bf16.mxu0 0
      %2116 = vmatmul.mubr.bf16.gmra.mxu0 %v953
      %v2117 = vpop.f32.mrf.mxu0
      %v2118 = vadd.f32 %v2021, %v2117
      %v2119 = vpop.f32.mrf.mxu0
      %v2120 = vpop.f32.mrf.mxu0
      %v2121 = vadd.f32 %v2024, %v2120
      %v2122 = vpop.f32.mrf.mxu0
      %2123 = vdwg.mxu0
      %v2124 = vadd.f32 %v1675, %v2062
      %v2125 = vadd.f32 %v1678, %v2065
      %v2126 = vadd.f32 %v1683, %v2070
      %v2127 = vadd.f32 %v1686, %v2073
      %v2128 = vadd.f32 %v1691, %v2078
      %v2129 = vadd.f32 %v1694, %v2081
      %v2130 = vadd.f32 %v1699, %v2086
      %v2131 = vadd.f32 %v1702, %v2089
      %v2132 = vadd.f32 %v1707, %v2094
      %v2133 = vadd.f32 %v1710, %v2097
      %v2134 = vadd.f32 %v1715, %v2102
      %v2135 = vadd.f32 %v1718, %v2105
      %v2136 = vadd.f32 %v1723, %v2110
      %v2137 = vadd.f32 %v1726, %v2113
      %v2138 = vadd.f32 %v1731, %v2118
      %v2139 = vadd.f32 %v1734, %v2121
      %v2140 = vld [vmem:[%s5] sm:$0x1]
      %v2142 = vlaneseq
      %v2143 = vshrl.u32 %v2142, 7
      %v2144 = vsub.s32 0, %v2143
      %v2145 = vrot.slane %v2140, %v2144
      %v2147 = vmul.f32 %v2124, %v2145
      %v2148 = vmul.f32 %v2125, %v2145
      %v2149 = vmul.f32 %v2126, %v2145
      %v2150 = vmul.f32 %v2127, %v2145
      %v2151 = vmul.f32 %v2128, %v2145
      %v2152 = vmul.f32 %v2129, %v2145
      %v2153 = vmul.f32 %v2130, %v2145
      %v2154 = vmul.f32 %v2131, %v2145
      %v2155 = vmul.f32 %v2132, %v2145
      %v2156 = vmul.f32 %v2133, %v2145
      %v2157 = vmul.f32 %v2134, %v2145
      %v2158 = vmul.f32 %v2135, %v2145
      %v2159 = vmul.f32 %v2136, %v2145
      %v2160 = vmul.f32 %v2137, %v2145
      %v2161 = vmul.f32 %v2138, %v2145
      %v2162 = vmul.f32 %v2139, %v2145
      %v2163 = vld [vmem:[%s6] sm:$0x1]
      %v2165 = vlaneseq
      %v2166 = vshrl.u32 %v2165, 7
      %v2167 = vsub.s32 0, %v2166
      %v2168 = vrot.slane %v2163, %v2167
      %v2170 = vadd.f32 %v2147, %v2168
      %v2171 = vadd.f32 %v2148, %v2168
      %v2172 = vadd.f32 %v2149, %v2168
      %v2173 = vadd.f32 %v2150, %v2168
      %v2174 = vadd.f32 %v2151, %v2168
      %v2175 = vadd.f32 %v2152, %v2168
      %v2176 = vadd.f32 %v2153, %v2168
      %v2177 = vadd.f32 %v2154, %v2168
      %v2178 = vadd.f32 %v2155, %v2168
      %v2179 = vadd.f32 %v2156, %v2168
      %v2180 = vadd.f32 %v2157, %v2168
      %v2181 = vadd.f32 %v2158, %v2168
      %v2182 = vadd.f32 %v2159, %v2168
      %v2183 = vadd.f32 %v2160, %v2168
      %v2184 = vadd.f32 %v2161, %v2168
      %v2185 = vadd.f32 %v2162, %v2168
      %v2186 = vmax.f32 %v2170, 0.0
      %v2187 = vmax.f32 %v2171, 0.0
      %v2188 = vmax.f32 %v2172, 0.0
      %v2189 = vmax.f32 %v2173, 0.0
      %v2190 = vmax.f32 %v2174, 0.0
      %v2191 = vmax.f32 %v2175, 0.0
      %v2192 = vmax.f32 %v2176, 0.0
      %v2193 = vmax.f32 %v2177, 0.0
      %v2194 = vmax.f32 %v2178, 0.0
      %v2195 = vmax.f32 %v2179, 0.0
      %v2196 = vmax.f32 %v2180, 0.0
      %v2197 = vmax.f32 %v2181, 0.0
      %v2198 = vmax.f32 %v2182, 0.0
      %v2199 = vmax.f32 %v2183, 0.0
      %v2200 = vmax.f32 %v2184, 0.0
      %v2201 = vmax.f32 %v2185, 0.0
      %v2202 = vpack.c.bf16 %v2187, %v2186
      %v2203 = vpack.c.bf16 %v2189, %v2188
      %v2204 = vpack.c.bf16 %v2191, %v2190
      %v2205 = vpack.c.bf16 %v2193, %v2192
      %v2206 = vpack.c.bf16 %v2195, %v2194
      %v2207 = vpack.c.bf16 %v2197, %v2196
      %v2208 = vpack.c.bf16 %v2199, %v2198
      %v2209 = vpack.c.bf16 %v2201, %v2200
      %v2218 = vunpack.c.l.b16 %v2202
      %v2219 = vunpack.c.h.b16 %v2202
      %v2220 = vunpack.c.l.b16 %v2203
      %v2221 = vunpack.c.h.b16 %v2203
      %v2222 = vunpack.c.l.b16 %v2204
      %v2223 = vunpack.c.h.b16 %v2204
      %v2224 = vunpack.c.l.b16 %v2205
      %v2225 = vunpack.c.h.b16 %v2205
      %v2226 = vunpack.c.l.b16 %v2206
      %v2227 = vunpack.c.h.b16 %v2206
      %v2228 = vunpack.c.l.b16 %v2207
      %v2229 = vunpack.c.h.b16 %v2207
      %v2230 = vunpack.c.l.b16 %v2208
      %v2231 = vunpack.c.h.b16 %v2208
      %v2232 = vunpack.c.l.b16 %v2209
      %v2233 = vunpack.c.h.b16 %v2209
      %v2234 = vpack.c.b16 %v2218, %v2218
      %v2235 = vpack.c.b16 %v2219, %v2219
      %v2236 = vpack.c.b16 %v2220, %v2220
      %v2237 = vpack.c.b16 %v2221, %v2221
      %v2238 = vpack.c.b16 %v2222, %v2222
      %v2239 = vpack.c.b16 %v2223, %v2223
      %v2240 = vpack.c.b16 %v2224, %v2224
      %v2241 = vpack.c.b16 %v2225, %v2225
      %v2242 = vpack.c.b16 %v2226, %v2226
      %v2243 = vpack.c.b16 %v2227, %v2227
      %v2244 = vpack.c.b16 %v2228, %v2228
      %v2245 = vpack.c.b16 %v2229, %v2229
      %v2246 = vpack.c.b16 %v2230, %v2230
      %v2247 = vpack.c.b16 %v2231, %v2231
      %v2248 = vpack.c.b16 %v2232, %v2232
      %v2249 = vpack.c.b16 %v2233, %v2233
      %2266 = vst [vmem:[%s308] sm:$0xf] %v2234
      %2267 = vst [vmem:[%s308 + $0x4] sm:$0xf] %v2235
      %2268 = vst [vmem:[%s308 + $0x8] sm:$0xf] %v2236
      %2269 = vst [vmem:[%s308 + $0xc] sm:$0xf] %v2237
      %2270 = vst [vmem:[%s308 + $0x10] sm:$0xf] %v2238
      %2271 = vst [vmem:[%s308 + $0x14] sm:$0xf] %v2239
      %2272 = vst [vmem:[%s308 + $0x18] sm:$0xf] %v2240
      %2273 = vst [vmem:[%s308 + $0x1c] sm:$0xf] %v2241
      %2274 = vst [vmem:[%s308 + $0x20] sm:$0xf] %v2242
      %2275 = vst [vmem:[%s308 + $0x24] sm:$0xf] %v2243
      %2276 = vst [vmem:[%s308 + $0x28] sm:$0xf] %v2244
      %2277 = vst [vmem:[%s308 + $0x2c] sm:$0xf] %v2245
      %2278 = vst [vmem:[%s308 + $0x30] sm:$0xf] %v2246
      %2279 = vst [vmem:[%s308 + $0x34] sm:$0xf] %v2247
      %2280 = vst [vmem:[%s308 + $0x38] sm:$0xf] %v2248
      %2281 = vst [vmem:[%s308 + $0x3c] sm:$0xf] %v2249
      %s2282 = smul.u32 8, %s23
      %p2283 = scmp.lt.s32.totalorder %s22, 1
      %s2284 = scalar_select %p2283, %s22, 1
      %p2285 = scmp.lt.s32.totalorder %s2282, 15
      %s2286 = scalar_select %p2285, %s2282, 15
      %s2287 = smul.addr %s2286, 2
      %s2288 = smul.addr %s2284, 32
      %s2289 = sadd.s32 %s2287, %s2288
      %s2290 = smul.addr %s2289, 4
      %s2291 = scalar_lea.vmem %s7, %s2290
      // Predicated region
      $region193: #{aggregation_block.10} parent=39 // pred_check
        %p2292 = pneg %p169
      $region194: #{aggregation_block.10} parent=39 // pred_check_branch
        %2294 = sbr.rel (%p2292) target = $region196
      $region195: #{aggregation_block.10} parent=39 // pred_region
        %s2295 = smul.u32 8, %s23
      $region196: #{aggregation_block.10} parent=39 // pred_fallthru
        _
    $region40: #{aggregation_block.10} parent=5 // pred_fallthru
      _
    %p2296 = scmp.le.s32.totalorder 2, %s13
    // Predicated region
    $region197: #{aggregation_block.10} parent=5 // pred_check
      %p2297 = pneg %p2296
    $region198: #{aggregation_block.10} parent=5 // pred_check_branch
      %2299 = sbr.rel (%p2297) target = $region200
    $region199: #{aggregation_block.10} parent=5 // pred_region
      %s2300 = ssub.s32 %s13, 2
      // Predicated region
      $region201: #{aggregation_block.10} parent=199 // pred_check
        %p2301 = pneg %p175
      $region202: #{aggregation_block.10} parent=199 // pred_check_branch
        %2303 = sbr.rel (%p2301) target = $region204
      $region203: #{aggregation_block.10} parent=199 // pred_region
        %s2304 = smul.u32 8, %s25
        %p2305 = scmp.lt.s32.totalorder %s24, 1
        %s2306 = scalar_select %p2305, %s24, 1
        %p2307 = scmp.lt.s32.totalorder %s2304, 15
        %s2308 = scalar_select %p2307, %s2304, 15
        %s2309 = smul.addr %s2308, 2
        %s2310 = smul.addr %s2306, 32
        %s2311 = sadd.s32 %s2309, %s2310
        %s2312 = smul.addr %s2311, 4
        %s2313 = scalar_lea.vmem %s7, %s2312
      $region204: #{aggregation_block.10} parent=199 // pred_fallthru
        _
    $region200: #{aggregation_block.10} parent=5 // pred_fallthru
      _
  $region6: #{aggregation_block.10} parent=0 // loop_footer
    %s17 = sadd.s32 1, %s13
  $region7: #{aggregation_block.10} parent=0 // loop_footer_branch
    %12 = sbr.rel target = $region3
  $region8: #{aggregation_block.10} parent=0 // loop_exit
    _
  %2314 = vsyncmov [#allocation3]
  %s2315 = vpop.sfrf %2314
  %p2316 = scmp.eq.s32.totalorder %s2315, 0
  %p2317 = pneg %p2316
  %2319 = shalt.err (%p2317)
  %s2320 = scalar_lea.sflag [#allocation3], 1
  %2321 = vsyncmov %s2320
  %s2322 = vpop.sfrf %2321
  %p2323 = scmp.eq.s32.totalorder %s2322, 0
  %p2324 = pneg %p2323
  %2326 = shalt.err (%p2324)
  %s2327 = scalar_lea.sflag [#allocation3], 2
  %2328 = vsyncmov %s2327
  %s2329 = vpop.sfrf %2328
  %p2330 = scmp.eq.s32.totalorder %s2329, 0
  %p2331 = pneg %p2330
  %2333 = shalt.err (%p2331)
  %s2334 = scalar_lea.sflag [#allocation3], 3
  %2335 = vsyncmov %s2334
  %s2336 = vpop.sfrf %2335
  %p2337 = scmp.eq.s32.totalorder %s2336, 0
  %p2338 = pneg %p2337
  %2340 = shalt.err (%p2338)

</llo_original>
